<compile_context>
chip_gen: v5e
topology: v5e:2x2
jax: 0.10.0
libtpu: 0.0.40
codegen_flags: <defaults>
</compile_context>

<pallas_src>
import jax
import jax.numpy as jnp
from jax import lax
from jax.experimental import pallas as pl
from jax.experimental.pallas import tpu as pltpu


def _make_kernel(H, W, C, eps):
    WC = W * C

    def conv_gn_silu(x, sh_ref, w_ref, b_ref, g_ref, be_ref, p_ref):
        # x: (H, WC) f32, lane index = w*C + c.
        # Row shifts via tiny (H,H) shift-matrix matmuls (no unaligned sublane
        # slicing / concat / roll).
        x_m1 = jnp.dot(sh_ref[0], x, preferred_element_type=jnp.float32)  # row h -> x[h-1]
        x_p1 = jnp.dot(sh_ref[1], x, preferred_element_type=jnp.float32)  # row h -> x[h+1]

        md = w_ref.dtype  # f32, or bf16 for the MXU on v6e/v7x
        acc = jnp.dot(x_m1.astype(md), w_ref[0], preferred_element_type=jnp.float32)
        acc = acc + jnp.dot(x.astype(md), w_ref[1], preferred_element_type=jnp.float32)
        acc = acc + jnp.dot(x_p1.astype(md), w_ref[2], preferred_element_type=jnp.float32)
        y = acc + b_ref[...]                          # (H, WC) + (1, WC) bias

        # GroupNorm stats, lane-dense single pass: P averages over "my group"
        # (all spatial positions x channels-in-group), so
        #   mean_wc = sum_h (y @ P),  E[y^2]_wc = sum_h (y*y @ P)
        # land already broadcast per-channel along the lane axis.
        mean_wc = jnp.sum(
            jnp.dot(y, p_ref[...], preferred_element_type=jnp.float32),
            axis=0, keepdims=True)                    # (1, WC)
        ex2_wc = jnp.sum(
            jnp.dot(y * y, p_ref[...], preferred_element_type=jnp.float32),
            axis=0, keepdims=True)                    # (1, WC)
        var_wc = jnp.maximum(ex2_wc - mean_wc * mean_wc, 0.0)
        rstd_wc = lax.rsqrt(var_wc + eps)
        scale = g_ref[...] * rstd_wc                  # (1, WC)
        shift = be_ref[...] - mean_wc * scale
        yn = y * scale + shift
        return yn * jax.nn.sigmoid(yn)                # SiLU

    def kernel(x_ref, sh_ref, p_ref,
               w1_ref, b1_ref, g1_ref, be1_ref,
               w2_ref, b2_ref, g2_ref, be2_ref, out_ref):
        x = x_ref[0]                                  # (H, WC)
        h1 = conv_gn_silu(x, sh_ref, w1_ref, b1_ref, g1_ref, be1_ref, p_ref)
        h2 = conv_gn_silu(h1, sh_ref, w2_ref, b2_ref, g2_ref, be2_ref, p_ref)
        out_ref[0] = h2 + x                           # lane-dense (H, 512) store

    return kernel


def resblock_pallas(x_nchw, params, *, num_groups=32, eps=1e-5,
                    matmul_dtype=jnp.float32):
    """ResBlock forward. Set matmul_dtype=jnp.bfloat16 to feed the MXU bf16
    operands on v6e/v7x (accumulation stays f32)."""
    (w1, b1, g1, be1, w2, b2, g2, be2) = params
    B, C, H, W = x_nchw.shape
    WC = W * C
    Cg = C // num_groups

    # NCHW -> lane-dense (B, H, W*C); lane index = w*C + c. No padded HBM copy.
    x = jnp.transpose(x_nchw, (0, 2, 3, 1)).reshape(B, H, WC).astype(jnp.float32)

    def band(w):
        # (3,3,C,C) HWIO -> (3, WC, WC) block-banded matrices:
        # M_ky[w'*C+ci, w*C+co] = w[ky, (w-w')+1, ci, co] for |w-w'| <= 1, else 0
        # (kx taps + W-direction zero padding folded into the band).
        mats = []
        for ky in range(3):
            m = jnp.zeros((WC, WC), jnp.float32)
            for kx in range(3):
                m = m + jnp.kron(jnp.eye(W, k=1 - kx, dtype=jnp.float32),
                                 w[ky, kx].astype(jnp.float32))
            mats.append(m)
        return jnp.stack(mats).astype(matmul_dtype)

    def tile_c(v):  # per-channel (C,) -> (1, W*C) matching lane index w*C + c
        return jnp.tile(v.reshape(1, C).astype(jnp.float32), (1, W))

    # shifts[0] @ x -> row h holds x[h-1] (row 0 zero);  shifts[1] -> x[h+1].
    shifts = jnp.stack([jnp.eye(H, k=-1, dtype=jnp.float32),
                        jnp.eye(H, k=1, dtype=jnp.float32)])

    # Group-average matrix: P[l', l] = 1/(H*W*Cg) iff channel(l'), channel(l)
    # are in the same GroupNorm group.
    gid = (jnp.arange(WC) % C) // Cg
    P = (gid[:, None] == gid[None, :]).astype(jnp.float32) / float(H * W * Cg)

    kernel = _make_kernel(H, W, C, eps)

    def full_spec(shape):
        return pl.BlockSpec(shape, lambda b: (0,) * len(shape))

    out = pl.pallas_call(
        kernel,
        out_shape=jax.ShapeDtypeStruct((B, H, WC), jnp.float32),
        grid=(B,),
        in_specs=[
            pl.BlockSpec((1, H, WC), lambda b: (b, 0, 0)),
            full_spec((2, H, H)),                       # row-shift matrices
            full_spec((WC, WC)),                        # group-average matrix P
            full_spec((3, WC, WC)), full_spec((1, WC)), full_spec((1, WC)), full_spec((1, WC)),
            full_spec((3, WC, WC)), full_spec((1, WC)), full_spec((1, WC)), full_spec((1, WC)),
        ],
        out_specs=pl.BlockSpec((1, H, WC), lambda b: (b, 0, 0)),
        compiler_params=pltpu.CompilerParams(
            dimension_semantics=("parallel",),          # batch across v7x's 2 TCs
            vmem_limit_bytes=32 * 1024 * 1024),
    )(x, shifts, P,
      band(w1), tile_c(b1), tile_c(g1), tile_c(be1),
      band(w2), tile_c(b2), tile_c(g2), tile_c(be2))

    # lane-dense (B, H, W*C) -> NCHW
    return jnp.transpose(out.reshape(B, H, W, C), (0, 3, 1, 2))


# ----------------------- pure-JAX reference (for verification) ---------------
def _ref_conv_module(x_nchw, w_hwio, b, gamma, beta, num_groups=32, eps=1e-5):
    y = lax.conv_general_dilated(
        x_nchw, w_hwio, window_strides=(1, 1), padding="SAME",
        dimension_numbers=("NCHW", "HWIO", "NCHW"))
    y = y + b[None, :, None, None]
    B, C, H, W = y.shape
    yg = y.reshape(B, num_groups, C // num_groups, H, W)
    mean = yg.mean(axis=(2, 3, 4), keepdims=True)
    var = ((yg - mean) ** 2).mean(axis=(2, 3, 4), keepdims=True)
    yn = ((yg - mean) / jnp.sqrt(var + eps)).reshape(B, C, H, W)
    yn = yn * gamma[None, :, None, None] + beta[None, :, None, None]
    return yn * jax.nn.sigmoid(yn)


def _ref_resblock(x, params):
    (w1, b1, g1, be1, w2, b2, g2, be2) = params
    h = _ref_conv_module(x, w1, b1, g1, be1)
    h = _ref_conv_module(h, w2, b2, g2, be2)
    return h + x


# ------------------------------------------------------------------------------
if __name__ == "__main__":
    # GroupNorm(num_groups=32) requires channels % 32 == 0, and the residual add
    # requires in_dim == out_dim, so use C = 32.
    B, C, H, W = 2, 32, 16, 16

    key = jax.random.PRNGKey(0)
    ks = jax.random.split(key, 9)

    # Conv weights kept in HWIO layout (kH, kW, Cin, Cout); synthetic init.
    w1 = 0.05 * jax.random.normal(ks[0], (3, 3, C, C), jnp.float32)
    b1 = 0.10 * jax.random.normal(ks[1], (C,), jnp.float32)
    g1 = 1.0 + 0.10 * jax.random.normal(ks[2], (C,), jnp.float32)
    be1 = 0.10 * jax.random.normal(ks[3], (C,), jnp.float32)
    w2 = 0.05 * jax.random.normal(ks[4], (3, 3, C, C), jnp.float32)
    b2 = 0.10 * jax.random.normal(ks[5], (C,), jnp.float32)
    g2 = 1.0 + 0.10 * jax.random.normal(ks[6], (C,), jnp.float32)
    be2 = 0.10 * jax.random.normal(ks[7], (C,), jnp.float32)
    params = (w1, b1, g1, be1, w2, b2, g2, be2)

    x = jax.random.normal(ks[8], (B, C, H, W), jnp.float32)  # NCHW, like PyTorch

    fwd = jax.jit(resblock_pallas)
    out = jax.block_until_ready(fwd(x, params))
    ref = jax.block_until_ready(_ref_resblock(x, params))

    assert out.shape == (B, C, H, W)
    max_err = float(jnp.max(jnp.abs(out - ref)))
    assert jnp.allclose(out, ref, atol=2e-3, rtol=2e-3), max_err

    print("KERNEL_OK")
</pallas_src>

<mosaic_0001>
module attributes {stable_mosaic.version = 11 : i64} {
  func.func @kernel(%arg0: i32, %arg1: memref<1x16x512xf32, #tpu.memory_space<vmem>>, %arg2: memref<2x16x16xf32, #tpu.memory_space<vmem>>, %arg3: memref<512x512xf32, #tpu.memory_space<vmem>>, %arg4: memref<3x512x512xf32, #tpu.memory_space<vmem>>, %arg5: memref<1x512xf32, #tpu.memory_space<vmem>>, %arg6: memref<1x512xf32, #tpu.memory_space<vmem>>, %arg7: memref<1x512xf32, #tpu.memory_space<vmem>>, %arg8: memref<3x512x512xf32, #tpu.memory_space<vmem>>, %arg9: memref<1x512xf32, #tpu.memory_space<vmem>>, %arg10: memref<1x512xf32, #tpu.memory_space<vmem>>, %arg11: memref<1x512xf32, #tpu.memory_space<vmem>>, %arg12: memref<1x16x512xf32, #tpu.memory_space<vmem>>) attributes {dimension_semantics = [#tpu.dimension_semantics<parallel>], iteration_bounds = array<i64: 2>, scalar_prefetch = 0 : i64, scratch_operands = 0 : i64, tpu.core_type = #tpu.core_type<tc>, window_params = [{transform_indices = @transform_0, window_bounds = array<i64: 1, 16, 512>}, {pipeline_mode = #tpu.pipeline_mode<synchronous>, transform_indices = @transform_1, window_bounds = array<i64: 2, 16, 16>}, {pipeline_mode = #tpu.pipeline_mode<synchronous>, transform_indices = @transform_2, window_bounds = array<i64: 512, 512>}, {pipeline_mode = #tpu.pipeline_mode<synchronous>, transform_indices = @transform_3, window_bounds = array<i64: 3, 512, 512>}, {pipeline_mode = #tpu.pipeline_mode<synchronous>, transform_indices = @transform_4, window_bounds = array<i64: 1, 512>}, {pipeline_mode = #tpu.pipeline_mode<synchronous>, transform_indices = @transform_5, window_bounds = array<i64: 1, 512>}, {pipeline_mode = #tpu.pipeline_mode<synchronous>, transform_indices = @transform_6, window_bounds = array<i64: 1, 512>}, {pipeline_mode = #tpu.pipeline_mode<synchronous>, transform_indices = @transform_7, window_bounds = array<i64: 3, 512, 512>}, {pipeline_mode = #tpu.pipeline_mode<synchronous>, transform_indices = @transform_8, window_bounds = array<i64: 1, 512>}, {pipeline_mode = #tpu.pipeline_mode<synchronous>, transform_indices = @transform_9, window_bounds = array<i64: 1, 512>}, {pipeline_mode = #tpu.pipeline_mode<synchronous>, transform_indices = @transform_10, window_bounds = array<i64: 1, 512>}, {transform_indices = @transform_11, window_bounds = array<i64: 1, 16, 512>}]} {
    %c0 = arith.constant 0 : index
    %c0_0 = arith.constant 0 : index
    %c0_1 = arith.constant 0 : index
    %0 = vector.load %arg1[%c0, %c0_0, %c0_1] : memref<1x16x512xf32, #tpu.memory_space<vmem>>, vector<1x16x512xf32>
    %1 = vector.shape_cast %0 : vector<1x16x512xf32> to vector<16x512xf32>
    %c0_2 = arith.constant 0 : index
    %c0_3 = arith.constant 0 : index
    %c0_4 = arith.constant 0 : index
    %2 = vector.load %arg2[%c0_2, %c0_3, %c0_4] : memref<2x16x16xf32, #tpu.memory_space<vmem>>, vector<1x16x16xf32>
    %3 = vector.shape_cast %2 : vector<1x16x16xf32> to vector<16x16xf32>
    %cst = arith.constant dense<0.000000e+00> : vector<16x512xf32>
    %4 = tpu.matmul %3, %1, %cst {dimension_numbers = #tpu.dot_dimension_numbers<[1], [0], [0], [1], [0, 0, 1, 1], [], []>} : vector<16x16xf32>, vector<16x512xf32>, vector<16x512xf32> -> vector<16x512xf32>
    %c1 = arith.constant 1 : index
    %c0_5 = arith.constant 0 : index
    %c0_6 = arith.constant 0 : index
    %5 = vector.load %arg2[%c1, %c0_5, %c0_6] : memref<2x16x16xf32, #tpu.memory_space<vmem>>, vector<1x16x16xf32>
    %6 = vector.shape_cast %5 : vector<1x16x16xf32> to vector<16x16xf32>
    %cst_7 = arith.constant dense<0.000000e+00> : vector<16x512xf32>
    %7 = tpu.matmul %6, %1, %cst_7 {dimension_numbers = #tpu.dot_dimension_numbers<[1], [0], [0], [1], [0, 0, 1, 1], [], []>} : vector<16x16xf32>, vector<16x512xf32>, vector<16x512xf32> -> vector<16x512xf32>
    %c0_8 = arith.constant 0 : index
    %c0_9 = arith.constant 0 : index
    %c0_10 = arith.constant 0 : index
    %8 = vector.load %arg4[%c0_8, %c0_9, %c0_10] : memref<3x512x512xf32, #tpu.memory_space<vmem>>, vector<1x512x512xf32>
    %9 = vector.shape_cast %8 : vector<1x512x512xf32> to vector<512x512xf32>
    %cst_11 = arith.constant dense<0.000000e+00> : vector<16x512xf32>
    %10 = tpu.matmul %4, %9, %cst_11 {dimension_numbers = #tpu.dot_dimension_numbers<[1], [0], [0], [1], [0, 0, 1, 1], [], []>} : vector<16x512xf32>, vector<512x512xf32>, vector<16x512xf32> -> vector<16x512xf32>
    %c1_12 = arith.constant 1 : index
    %c0_13 = arith.constant 0 : index
    %c0_14 = arith.constant 0 : index
    %11 = vector.load %arg4[%c1_12, %c0_13, %c0_14] : memref<3x512x512xf32, #tpu.memory_space<vmem>>, vector<1x512x512xf32>
    %12 = vector.shape_cast %11 : vector<1x512x512xf32> to vector<512x512xf32>
    %cst_15 = arith.constant dense<0.000000e+00> : vector<16x512xf32>
    %13 = tpu.matmul %1, %12, %cst_15 {dimension_numbers = #tpu.dot_dimension_numbers<[1], [0], [0], [1], [0, 0, 1, 1], [], []>} : vector<16x512xf32>, vector<512x512xf32>, vector<16x512xf32> -> vector<16x512xf32>
    %14 = arith.addf %10, %13 : vector<16x512xf32>
    %c2 = arith.constant 2 : index
    %c0_16 = arith.constant 0 : index
    %c0_17 = arith.constant 0 : index
    %15 = vector.load %arg4[%c2, %c0_16, %c0_17] : memref<3x512x512xf32, #tpu.memory_space<vmem>>, vector<1x512x512xf32>
    %16 = vector.shape_cast %15 : vector<1x512x512xf32> to vector<512x512xf32>
    %cst_18 = arith.constant dense<0.000000e+00> : vector<16x512xf32>
    %17 = tpu.matmul %7, %16, %cst_18 {dimension_numbers = #tpu.dot_dimension_numbers<[1], [0], [0], [1], [0, 0, 1, 1], [], []>} : vector<16x512xf32>, vector<512x512xf32>, vector<16x512xf32> -> vector<16x512xf32>
    %18 = arith.addf %14, %17 : vector<16x512xf32>
    %c0_19 = arith.constant 0 : index
    %c0_20 = arith.constant 0 : index
    %19 = vector.load %arg5[%c0_19, %c0_20] : memref<1x512xf32, #tpu.memory_space<vmem>>, vector<1x512xf32>
    %20 = vector.broadcast %19 : vector<1x512xf32> to vector<16x512xf32>
    %21 = arith.addf %18, %20 : vector<16x512xf32>
    %c0_21 = arith.constant 0 : index
    %c0_22 = arith.constant 0 : index
    %22 = vector.load %arg3[%c0_21, %c0_22] : memref<512x512xf32, #tpu.memory_space<vmem>>, vector<512x512xf32>
    %cst_23 = arith.constant dense<0.000000e+00> : vector<16x512xf32>
    %23 = tpu.matmul %21, %22, %cst_23 {dimension_numbers = #tpu.dot_dimension_numbers<[1], [0], [0], [1], [0, 0, 1, 1], [], []>} : vector<16x512xf32>, vector<512x512xf32>, vector<16x512xf32> -> vector<16x512xf32>
    %cst_24 = arith.constant dense<0.000000e+00> : vector<512xf32>
    %24 = vector.multi_reduction <add>, %23, %cst_24 [0] : vector<16x512xf32> to vector<512xf32>
    %25 = vector.shape_cast %24 : vector<512xf32> to vector<1x512xf32>
    %26 = arith.mulf %21, %21 : vector<16x512xf32>
    %c0_25 = arith.constant 0 : index
    %c0_26 = arith.constant 0 : index
    %27 = vector.load %arg3[%c0_25, %c0_26] : memref<512x512xf32, #tpu.memory_space<vmem>>, vector<512x512xf32>
    %cst_27 = arith.constant dense<0.000000e+00> : vector<16x512xf32>
    %28 = tpu.matmul %26, %27, %cst_27 {dimension_numbers = #tpu.dot_dimension_numbers<[1], [0], [0], [1], [0, 0, 1, 1], [], []>} : vector<16x512xf32>, vector<512x512xf32>, vector<16x512xf32> -> vector<16x512xf32>
    %cst_28 = arith.constant dense<0.000000e+00> : vector<512xf32>
    %29 = vector.multi_reduction <add>, %28, %cst_28 [0] : vector<16x512xf32> to vector<512xf32>
    %30 = vector.shape_cast %29 : vector<512xf32> to vector<1x512xf32>
    %31 = arith.mulf %25, %25 : vector<1x512xf32>
    %32 = arith.subf %30, %31 : vector<1x512xf32>
    %cst_29 = arith.constant 0.000000e+00 : f32
    %33 = vector.broadcast %cst_29 : f32 to vector<1x512xf32>
    %34 = arith.maximumf %32, %33 : vector<1x512xf32>
    %cst_30 = arith.constant 9.99999974E-6 : f32
    %35 = vector.broadcast %cst_30 : f32 to vector<1x512xf32>
    %36 = arith.addf %34, %35 : vector<1x512xf32>
    %37 = math.rsqrt %36 : vector<1x512xf32>
    %c0_31 = arith.constant 0 : index
    %c0_32 = arith.constant 0 : index
    %38 = vector.load %arg6[%c0_31, %c0_32] : memref<1x512xf32, #tpu.memory_space<vmem>>, vector<1x512xf32>
    %39 = arith.mulf %38, %37 : vector<1x512xf32>
    %c0_33 = arith.constant 0 : index
    %c0_34 = arith.constant 0 : index
    %40 = vector.load %arg7[%c0_33, %c0_34] : memref<1x512xf32, #tpu.memory_space<vmem>>, vector<1x512xf32>
    %41 = arith.mulf %25, %39 : vector<1x512xf32>
    %42 = arith.subf %40, %41 : vector<1x512xf32>
    %43 = vector.broadcast %39 : vector<1x512xf32> to vector<16x512xf32>
    %44 = arith.mulf %21, %43 : vector<16x512xf32>
    %45 = vector.broadcast %42 : vector<1x512xf32> to vector<16x512xf32>
    %46 = arith.addf %44, %45 : vector<16x512xf32>
    %47 = arith.negf %46 : vector<16x512xf32>
    %48 = math.exp %47 : vector<16x512xf32>
    %cst_35 = arith.constant 1.000000e+00 : f32
    %49 = vector.broadcast %cst_35 : f32 to vector<16x512xf32>
    %50 = arith.addf %49, %48 : vector<16x512xf32>
    %51 = arith.divf %49, %50 : vector<16x512xf32>
    %52 = arith.mulf %46, %51 : vector<16x512xf32>
    %c0_36 = arith.constant 0 : index
    %c0_37 = arith.constant 0 : index
    %c0_38 = arith.constant 0 : index
    %53 = vector.load %arg2[%c0_36, %c0_37, %c0_38] : memref<2x16x16xf32, #tpu.memory_space<vmem>>, vector<1x16x16xf32>
    %54 = vector.shape_cast %53 : vector<1x16x16xf32> to vector<16x16xf32>
    %cst_39 = arith.constant dense<0.000000e+00> : vector<16x512xf32>
    %55 = tpu.matmul %54, %52, %cst_39 {dimension_numbers = #tpu.dot_dimension_numbers<[1], [0], [0], [1], [0, 0, 1, 1], [], []>} : vector<16x16xf32>, vector<16x512xf32>, vector<16x512xf32> -> vector<16x512xf32>
    %c1_40 = arith.constant 1 : index
    %c0_41 = arith.constant 0 : index
    %c0_42 = arith.constant 0 : index
    %56 = vector.load %arg2[%c1_40, %c0_41, %c0_42] : memref<2x16x16xf32, #tpu.memory_space<vmem>>, vector<1x16x16xf32>
    %57 = vector.shape_cast %56 : vector<1x16x16xf32> to vector<16x16xf32>
    %cst_43 = arith.constant dense<0.000000e+00> : vector<16x512xf32>
    %58 = tpu.matmul %57, %52, %cst_43 {dimension_numbers = #tpu.dot_dimension_numbers<[1], [0], [0], [1], [0, 0, 1, 1], [], []>} : vector<16x16xf32>, vector<16x512xf32>, vector<16x512xf32> -> vector<16x512xf32>
    %c0_44 = arith.constant 0 : index
    %c0_45 = arith.constant 0 : index
    %c0_46 = arith.constant 0 : index
    %59 = vector.load %arg8[%c0_44, %c0_45, %c0_46] : memref<3x512x512xf32, #tpu.memory_space<vmem>>, vector<1x512x512xf32>
    %60 = vector.shape_cast %59 : vector<1x512x512xf32> to vector<512x512xf32>
    %cst_47 = arith.constant dense<0.000000e+00> : vector<16x512xf32>
    %61 = tpu.matmul %55, %60, %cst_47 {dimension_numbers = #tpu.dot_dimension_numbers<[1], [0], [0], [1], [0, 0, 1, 1], [], []>} : vector<16x512xf32>, vector<512x512xf32>, vector<16x512xf32> -> vector<16x512xf32>
    %c1_48 = arith.constant 1 : index
    %c0_49 = arith.constant 0 : index
    %c0_50 = arith.constant 0 : index
    %62 = vector.load %arg8[%c1_48, %c0_49, %c0_50] : memref<3x512x512xf32, #tpu.memory_space<vmem>>, vector<1x512x512xf32>
    %63 = vector.shape_cast %62 : vector<1x512x512xf32> to vector<512x512xf32>
    %cst_51 = arith.constant dense<0.000000e+00> : vector<16x512xf32>
    %64 = tpu.matmul %52, %63, %cst_51 {dimension_numbers = #tpu.dot_dimension_numbers<[1], [0], [0], [1], [0, 0, 1, 1], [], []>} : vector<16x512xf32>, vector<512x512xf32>, vector<16x512xf32> -> vector<16x512xf32>
    %65 = arith.addf %61, %64 : vector<16x512xf32>
    %c2_52 = arith.constant 2 : index
    %c0_53 = arith.constant 0 : index
    %c0_54 = arith.constant 0 : index
    %66 = vector.load %arg8[%c2_52, %c0_53, %c0_54] : memref<3x512x512xf32, #tpu.memory_space<vmem>>, vector<1x512x512xf32>
    %67 = vector.shape_cast %66 : vector<1x512x512xf32> to vector<512x512xf32>
    %cst_55 = arith.constant dense<0.000000e+00> : vector<16x512xf32>
    %68 = tpu.matmul %58, %67, %cst_55 {dimension_numbers = #tpu.dot_dimension_numbers<[1], [0], [0], [1], [0, 0, 1, 1], [], []>} : vector<16x512xf32>, vector<512x512xf32>, vector<16x512xf32> -> vector<16x512xf32>
    %69 = arith.addf %65, %68 : vector<16x512xf32>
    %c0_56 = arith.constant 0 : index
    %c0_57 = arith.constant 0 : index
    %70 = vector.load %arg9[%c0_56, %c0_57] : memref<1x512xf32, #tpu.memory_space<vmem>>, vector<1x512xf32>
    %71 = vector.broadcast %70 : vector<1x512xf32> to vector<16x512xf32>
    %72 = arith.addf %69, %71 : vector<16x512xf32>
    %c0_58 = arith.constant 0 : index
    %c0_59 = arith.constant 0 : index
    %73 = vector.load %arg3[%c0_58, %c0_59] : memref<512x512xf32, #tpu.memory_space<vmem>>, vector<512x512xf32>
    %cst_60 = arith.constant dense<0.000000e+00> : vector<16x512xf32>
    %74 = tpu.matmul %72, %73, %cst_60 {dimension_numbers = #tpu.dot_dimension_numbers<[1], [0], [0], [1], [0, 0, 1, 1], [], []>} : vector<16x512xf32>, vector<512x512xf32>, vector<16x512xf32> -> vector<16x512xf32>
    %cst_61 = arith.constant dense<0.000000e+00> : vector<512xf32>
    %75 = vector.multi_reduction <add>, %74, %cst_61 [0] : vector<16x512xf32> to vector<512xf32>
    %76 = vector.shape_cast %75 : vector<512xf32> to vector<1x512xf32>
    %77 = arith.mulf %72, %72 : vector<16x512xf32>
    %c0_62 = arith.constant 0 : index
    %c0_63 = arith.constant 0 : index
    %78 = vector.load %arg3[%c0_62, %c0_63] : memref<512x512xf32, #tpu.memory_space<vmem>>, vector<512x512xf32>
    %cst_64 = arith.constant dense<0.000000e+00> : vector<16x512xf32>
    %79 = tpu.matmul %77, %78, %cst_64 {dimension_numbers = #tpu.dot_dimension_numbers<[1], [0], [0], [1], [0, 0, 1, 1], [], []>} : vector<16x512xf32>, vector<512x512xf32>, vector<16x512xf32> -> vector<16x512xf32>
    %cst_65 = arith.constant dense<0.000000e+00> : vector<512xf32>
    %80 = vector.multi_reduction <add>, %79, %cst_65 [0] : vector<16x512xf32> to vector<512xf32>
    %81 = vector.shape_cast %80 : vector<512xf32> to vector<1x512xf32>
    %82 = arith.mulf %76, %76 : vector<1x512xf32>
    %83 = arith.subf %81, %82 : vector<1x512xf32>
    %cst_66 = arith.constant 0.000000e+00 : f32
    %84 = vector.broadcast %cst_66 : f32 to vector<1x512xf32>
    %85 = arith.maximumf %83, %84 : vector<1x512xf32>
    %cst_67 = arith.constant 9.99999974E-6 : f32
    %86 = vector.broadcast %cst_67 : f32 to vector<1x512xf32>
    %87 = arith.addf %85, %86 : vector<1x512xf32>
    %88 = math.rsqrt %87 : vector<1x512xf32>
    %c0_68 = arith.constant 0 : index
    %c0_69 = arith.constant 0 : index
    %89 = vector.load %arg10[%c0_68, %c0_69] : memref<1x512xf32, #tpu.memory_space<vmem>>, vector<1x512xf32>
    %90 = arith.mulf %89, %88 : vector<1x512xf32>
    %c0_70 = arith.constant 0 : index
    %c0_71 = arith.constant 0 : index
    %91 = vector.load %arg11[%c0_70, %c0_71] : memref<1x512xf32, #tpu.memory_space<vmem>>, vector<1x512xf32>
    %92 = arith.mulf %76, %90 : vector<1x512xf32>
    %93 = arith.subf %91, %92 : vector<1x512xf32>
    %94 = vector.broadcast %90 : vector<1x512xf32> to vector<16x512xf32>
    %95 = arith.mulf %72, %94 : vector<16x512xf32>
    %96 = vector.broadcast %93 : vector<1x512xf32> to vector<16x512xf32>
    %97 = arith.addf %95, %96 : vector<16x512xf32>
    %98 = arith.negf %97 : vector<16x512xf32>
    %99 = math.exp %98 : vector<16x512xf32>
    %cst_72 = arith.constant 1.000000e+00 : f32
    %100 = vector.broadcast %cst_72 : f32 to vector<16x512xf32>
    %101 = arith.addf %100, %99 : vector<16x512xf32>
    %102 = arith.divf %100, %101 : vector<16x512xf32>
    %103 = arith.mulf %97, %102 : vector<16x512xf32>
    %104 = arith.addf %103, %1 : vector<16x512xf32>
    %c0_73 = arith.constant 0 : index
    %c0_74 = arith.constant 0 : index
    %c0_75 = arith.constant 0 : index
    %105 = vector.load %arg12[%c0_73, %c0_74, %c0_75] : memref<1x16x512xf32, #tpu.memory_space<vmem>>, vector<1x16x512xf32>
    %106 = vector.shape_cast %105 : vector<1x16x512xf32> to vector<16x512xf32>
    %107 = vector.shape_cast %104 : vector<16x512xf32> to vector<1x16x512xf32>
    tpu.vector_store %arg12[%c0_73, %c0_74, %c0_75], %107 {strides = array<i32>} : memref<1x16x512xf32, #tpu.memory_space<vmem>>, vector<1x16x512xf32>,
    return
  }
  func.func @transform_0(%arg0: i32) -> (i32, i32, i32) {
    %c0_i32 = arith.constant 0 : i32
    %c0_i32_0 = arith.constant 0 : i32
    %c0_i32_1 = arith.constant 0 : i32
    return %arg0, %c0_i32, %c0_i32_0 : i32, i32, i32
  }
  func.func @transform_1(%arg0: i32) -> (i32, i32, i32) {
    %c0_i32 = arith.constant 0 : i32
    %c0_i32_0 = arith.constant 0 : i32
    %c0_i32_1 = arith.constant 0 : i32
    %c0_i32_2 = arith.constant 0 : i32
    return %c0_i32, %c0_i32_0, %c0_i32_1 : i32, i32, i32
  }
  func.func @transform_2(%arg0: i32) -> (i32, i32) {
    %c0_i32 = arith.constant 0 : i32
    %c0_i32_0 = arith.constant 0 : i32
    %c0_i32_1 = arith.constant 0 : i32
    return %c0_i32, %c0_i32_0 : i32, i32
  }
  func.func @transform_3(%arg0: i32) -> (i32, i32, i32) {
    %c0_i32 = arith.constant 0 : i32
    %c0_i32_0 = arith.constant 0 : i32
    %c0_i32_1 = arith.constant 0 : i32
    %c0_i32_2 = arith.constant 0 : i32
    return %c0_i32, %c0_i32_0, %c0_i32_1 : i32, i32, i32
  }
  func.func @transform_4(%arg0: i32) -> (i32, i32) {
    %c0_i32 = arith.constant 0 : i32
    %c0_i32_0 = arith.constant 0 : i32
    %c0_i32_1 = arith.constant 0 : i32
    return %c0_i32, %c0_i32_0 : i32, i32
  }
  func.func @transform_5(%arg0: i32) -> (i32, i32) {
    %c0_i32 = arith.constant 0 : i32
    %c0_i32_0 = arith.constant 0 : i32
    %c0_i32_1 = arith.constant 0 : i32
    return %c0_i32, %c0_i32_0 : i32, i32
  }
  func.func @transform_6(%arg0: i32) -> (i32, i32) {
    %c0_i32 = arith.constant 0 : i32
    %c0_i32_0 = arith.constant 0 : i32
    %c0_i32_1 = arith.constant 0 : i32
    return %c0_i32, %c0_i32_0 : i32, i32
  }
  func.func @transform_7(%arg0: i32) -> (i32, i32, i32) {
    %c0_i32 = arith.constant 0 : i32
    %c0_i32_0 = arith.constant 0 : i32
    %c0_i32_1 = arith.constant 0 : i32
    %c0_i32_2 = arith.constant 0 : i32
    return %c0_i32, %c0_i32_0, %c0_i32_1 : i32, i32, i32
  }
  func.func @transform_8(%arg0: i32) -> (i32, i32) {
    %c0_i32 = arith.constant 0 : i32
    %c0_i32_0 = arith.constant 0 : i32
    %c0_i32_1 = arith.constant 0 : i32
    return %c0_i32, %c0_i32_0 : i32, i32
  }
  func.func @transform_9(%arg0: i32) -> (i32, i32) {
    %c0_i32 = arith.constant 0 : i32
    %c0_i32_0 = arith.constant 0 : i32
    %c0_i32_1 = arith.constant 0 : i32
    return %c0_i32, %c0_i32_0 : i32, i32
  }
  func.func @transform_10(%arg0: i32) -> (i32, i32) {
    %c0_i32 = arith.constant 0 : i32
    %c0_i32_0 = arith.constant 0 : i32
    %c0_i32_1 = arith.constant 0 : i32
    return %c0_i32, %c0_i32_0 : i32, i32
  }
  func.func @transform_11(%arg0: i32) -> (i32, i32, i32) {
    %c0_i32 = arith.constant 0 : i32
    %c0_i32_0 = arith.constant 0 : i32
    %c0_i32_1 = arith.constant 0 : i32
    return %arg0, %c0_i32, %c0_i32_0 : i32, i32, i32
  }
}

</mosaic_0001>

<llo_original>
// kernel: resblock_pallas.1
$region0: #{resblock_pallas.1}
  #allocation0 [shape = 'u32[]', space=smem, size = 0x4, offset = 0x4, fixed_abs, tag = 'smem constant byte address 0x4 - core index']
  #allocation1 [shape = 'u32[72,128]{1,0:T(1,128)}', space=vmem, size = 0x9000, scoped, tag = 'internal scratch']
  %s0 = inlined_call_operand.vmem [shape: f32[2,16,512], index: 0, kind: input, shape index: {}]
  %s1 = inlined_call_operand.vmem [shape: f32[2,16,16], index: 1, kind: input, shape index: {}]
  %s2 = inlined_call_operand.vmem [shape: f32[512,512], index: 2, kind: input, shape index: {}]
  %s3 = inlined_call_operand.vmem [shape: f32[3,512,512], index: 3, kind: input, shape index: {}]
  %s4 = inlined_call_operand.vmem [shape: f32[1,512], index: 4, kind: input, shape index: {}]
  %s5 = inlined_call_operand.vmem [shape: f32[1,512], index: 5, kind: input, shape index: {}]
  %s6 = inlined_call_operand.vmem [shape: f32[1,512], index: 6, kind: input, shape index: {}]
  %s7 = inlined_call_operand.vmem [shape: f32[3,512,512], index: 7, kind: input, shape index: {}]
  %s8 = inlined_call_operand.vmem [shape: f32[1,512], index: 8, kind: input, shape index: {}]
  %s9 = inlined_call_operand.vmem [shape: f32[1,512], index: 9, kind: input, shape index: {}]
  %s10 = inlined_call_operand.vmem [shape: f32[1,512], index: 10, kind: input, shape index: {}]
  %s11 = inlined_call_operand.vmem [shape: f32[2,16,512], index: 11, kind: output, shape index: {}]
  %s12 = sld [smem:[#allocation0]]
  $region77: #{resblock_pallas.1} parent=0
    _
  %s14 = ssub.s32 1, %s12
  %s15 = scalar_select 0, %s14, %s12
  loop: start=0, step=1, limit=4
  $region2: #{resblock_pallas.1} parent=0 // loop_pre_header
    _
  $region3: #{resblock_pallas.1} parent=0 // loop_header
    %s17 = sphi 0, %s21
    %p18 = scmp.ge.s32.totalorder %s17, 4
    %s27 = sphi 0, %s29
    %s30 = sphi 0, %s27
    %s31 = sphi 0, %s30
    %s47 = sphi 0, %s31
    %s51 = sphi 0, %s51
    %s53 = sphi 0, %s51
    %s54 = sphi 0, %s53
    %s68 = sphi 0, %s54
    %s72 = sphi 0, %s72
    %s74 = sphi 0, %s72
    %s75 = sphi 0, %s74
    %s89 = sphi 0, %s75
    %s93 = sphi 0, %s93
    %s95 = sphi 0, %s93
    %s96 = sphi 0, %s95
    %s110 = sphi 0, %s96
    %s114 = sphi 0, %s114
    %s116 = sphi 0, %s114
    %s117 = sphi 0, %s116
    %s131 = sphi 0, %s117
    %s135 = sphi 0, %s135
    %s137 = sphi 0, %s135
    %s138 = sphi 0, %s137
    %s152 = sphi 0, %s138
    %s156 = sphi 0, %s156
    %s158 = sphi 0, %s156
    %s159 = sphi 0, %s158
    %s173 = sphi 0, %s159
    %s177 = sphi 0, %s177
    %s179 = sphi 0, %s177
    %s180 = sphi 0, %s179
    %s194 = sphi 0, %s180
    %s198 = sphi 0, %s198
    %s200 = sphi 0, %s198
    %s201 = sphi 0, %s200
    %s215 = sphi 0, %s201
    %s219 = sphi 0, %s219
    %s221 = sphi 0, %s219
    %s222 = sphi 0, %s221
    %s236 = sphi 0, %s222
    %s240 = sphi 0, %s240
    %s242 = sphi 0, %s240
    %s243 = sphi 0, %s242
    %s257 = sphi 0, %s243
    %s263 = sphi 0, %s265
    %s266 = sphi 0, %s263
    %s267 = sphi 0, %s266
    %s283 = sphi 0, %s267
  $region4: #{resblock_pallas.1} parent=0 // loop_header_branch
    %20 = sbr.rel (%p18) target = $region8
  $region5: #{resblock_pallas.1} parent=0 // loop_body
    %s22 = ssub.s32 %s17, 1
    %s23 = ssub.s32 %s17, 2
    %s24 = sadd.s32 %s17, 1
    %s25 = ssub.s32 %s17, %s24
    %p26 = scmp.eq.s32.totalorder %s25, 0
    %s28 = sadd.s32 %s27, 1
    %s29 = scalar_select %p26, %s27, %s28
    %p32 = pneg %p26
    %p33 = scmp.eq.s32.totalorder %s17, 1
    %p34 = por %p32, %p33
    %p35 = scmp.ne.s32.totalorder %s27, %s30
    %p36 = scmp.eq.s32.totalorder %s17, 0
    %p37 = por %p35, %p36
    %p38 = scmp.ne.s32.totalorder %s27, %s30
    %p39 = scmp.eq.s32.totalorder %s22, 1
    %p40 = por %p38, %p39
    %p41 = scmp.ne.s32.totalorder %s30, %s31
    %p42 = scmp.eq.s32.totalorder %s22, 0
    %p43 = por %p41, %p42
    %p44 = scmp.ne.s32.totalorder %s30, %s31
    %p45 = scmp.eq.s32.totalorder %s23, 1
    %p46 = por %p44, %p45
    %p48 = scmp.ne.s32.totalorder %s31, %s47
    %p49 = scmp.eq.s32.totalorder %s23, 0
    %p50 = por %p48, %p49
    %s52 = sadd.s32 %s51, 1
    %p55 = scmp.eq.s32.totalorder %s17, 1
    %p56 = scmp.ne.s32.totalorder %s51, %s53
    %p57 = scmp.eq.s32.totalorder %s17, 0
    %p58 = por %p56, %p57
    %p59 = scmp.ne.s32.totalorder %s51, %s53
    %p60 = scmp.eq.s32.totalorder %s22, 1
    %p61 = por %p59, %p60
    %p62 = scmp.ne.s32.totalorder %s53, %s54
    %p63 = scmp.eq.s32.totalorder %s22, 0
    %p64 = por %p62, %p63
    %p65 = scmp.ne.s32.totalorder %s53, %s54
    %p66 = scmp.eq.s32.totalorder %s23, 1
    %p67 = por %p65, %p66
    %p69 = scmp.ne.s32.totalorder %s54, %s68
    %p70 = scmp.eq.s32.totalorder %s23, 0
    %p71 = por %p69, %p70
    %s73 = sadd.s32 %s72, 1
    %p76 = scmp.eq.s32.totalorder %s17, 1
    %p77 = scmp.ne.s32.totalorder %s72, %s74
    %p78 = scmp.eq.s32.totalorder %s17, 0
    %p79 = por %p77, %p78
    %p80 = scmp.ne.s32.totalorder %s72, %s74
    %p81 = scmp.eq.s32.totalorder %s22, 1
    %p82 = por %p80, %p81
    %p83 = scmp.ne.s32.totalorder %s74, %s75
    %p84 = scmp.eq.s32.totalorder %s22, 0
    %p85 = por %p83, %p84
    %p86 = scmp.ne.s32.totalorder %s74, %s75
    %p87 = scmp.eq.s32.totalorder %s23, 1
    %p88 = por %p86, %p87
    %p90 = scmp.ne.s32.totalorder %s75, %s89
    %p91 = scmp.eq.s32.totalorder %s23, 0
    %p92 = por %p90, %p91
    %s94 = sadd.s32 %s93, 1
    %p97 = scmp.eq.s32.totalorder %s17, 1
    %p98 = scmp.ne.s32.totalorder %s93, %s95
    %p99 = scmp.eq.s32.totalorder %s17, 0
    %p100 = por %p98, %p99
    %p101 = scmp.ne.s32.totalorder %s93, %s95
    %p102 = scmp.eq.s32.totalorder %s22, 1
    %p103 = por %p101, %p102
    %p104 = scmp.ne.s32.totalorder %s95, %s96
    %p105 = scmp.eq.s32.totalorder %s22, 0
    %p106 = por %p104, %p105
    %p107 = scmp.ne.s32.totalorder %s95, %s96
    %p108 = scmp.eq.s32.totalorder %s23, 1
    %p109 = por %p107, %p108
    %p111 = scmp.ne.s32.totalorder %s96, %s110
    %p112 = scmp.eq.s32.totalorder %s23, 0
    %p113 = por %p111, %p112
    %s115 = sadd.s32 %s114, 1
    %p118 = scmp.eq.s32.totalorder %s17, 1
    %p119 = scmp.ne.s32.totalorder %s114, %s116
    %p120 = scmp.eq.s32.totalorder %s17, 0
    %p121 = por %p119, %p120
    %p122 = scmp.ne.s32.totalorder %s114, %s116
    %p123 = scmp.eq.s32.totalorder %s22, 1
    %p124 = por %p122, %p123
    %p125 = scmp.ne.s32.totalorder %s116, %s117
    %p126 = scmp.eq.s32.totalorder %s22, 0
    %p127 = por %p125, %p126
    %p128 = scmp.ne.s32.totalorder %s116, %s117
    %p129 = scmp.eq.s32.totalorder %s23, 1
    %p130 = por %p128, %p129
    %p132 = scmp.ne.s32.totalorder %s117, %s131
    %p133 = scmp.eq.s32.totalorder %s23, 0
    %p134 = por %p132, %p133
    %s136 = sadd.s32 %s135, 1
    %p139 = scmp.eq.s32.totalorder %s17, 1
    %p140 = scmp.ne.s32.totalorder %s135, %s137
    %p141 = scmp.eq.s32.totalorder %s17, 0
    %p142 = por %p140, %p141
    %p143 = scmp.ne.s32.totalorder %s135, %s137
    %p144 = scmp.eq.s32.totalorder %s22, 1
    %p145 = por %p143, %p144
    %p146 = scmp.ne.s32.totalorder %s137, %s138
    %p147 = scmp.eq.s32.totalorder %s22, 0
    %p148 = por %p146, %p147
    %p149 = scmp.ne.s32.totalorder %s137, %s138
    %p150 = scmp.eq.s32.totalorder %s23, 1
    %p151 = por %p149, %p150
    %p153 = scmp.ne.s32.totalorder %s138, %s152
    %p154 = scmp.eq.s32.totalorder %s23, 0
    %p155 = por %p153, %p154
    %s157 = sadd.s32 %s156, 1
    %p160 = scmp.eq.s32.totalorder %s17, 1
    %p161 = scmp.ne.s32.totalorder %s156, %s158
    %p162 = scmp.eq.s32.totalorder %s17, 0
    %p163 = por %p161, %p162
    %p164 = scmp.ne.s32.totalorder %s156, %s158
    %p165 = scmp.eq.s32.totalorder %s22, 1
    %p166 = por %p164, %p165
    %p167 = scmp.ne.s32.totalorder %s158, %s159
    %p168 = scmp.eq.s32.totalorder %s22, 0
    %p169 = por %p167, %p168
    %p170 = scmp.ne.s32.totalorder %s158, %s159
    %p171 = scmp.eq.s32.totalorder %s23, 1
    %p172 = por %p170, %p171
    %p174 = scmp.ne.s32.totalorder %s159, %s173
    %p175 = scmp.eq.s32.totalorder %s23, 0
    %p176 = por %p174, %p175
    %s178 = sadd.s32 %s177, 1
    %p181 = scmp.eq.s32.totalorder %s17, 1
    %p182 = scmp.ne.s32.totalorder %s177, %s179
    %p183 = scmp.eq.s32.totalorder %s17, 0
    %p184 = por %p182, %p183
    %p185 = scmp.ne.s32.totalorder %s177, %s179
    %p186 = scmp.eq.s32.totalorder %s22, 1
    %p187 = por %p185, %p186
    %p188 = scmp.ne.s32.totalorder %s179, %s180
    %p189 = scmp.eq.s32.totalorder %s22, 0
    %p190 = por %p188, %p189
    %p191 = scmp.ne.s32.totalorder %s179, %s180
    %p192 = scmp.eq.s32.totalorder %s23, 1
    %p193 = por %p191, %p192
    %p195 = scmp.ne.s32.totalorder %s180, %s194
    %p196 = scmp.eq.s32.totalorder %s23, 0
    %p197 = por %p195, %p196
    %s199 = sadd.s32 %s198, 1
    %p202 = scmp.eq.s32.totalorder %s17, 1
    %p203 = scmp.ne.s32.totalorder %s198, %s200
    %p204 = scmp.eq.s32.totalorder %s17, 0
    %p205 = por %p203, %p204
    %p206 = scmp.ne.s32.totalorder %s198, %s200
    %p207 = scmp.eq.s32.totalorder %s22, 1
    %p208 = por %p206, %p207
    %p209 = scmp.ne.s32.totalorder %s200, %s201
    %p210 = scmp.eq.s32.totalorder %s22, 0
    %p211 = por %p209, %p210
    %p212 = scmp.ne.s32.totalorder %s200, %s201
    %p213 = scmp.eq.s32.totalorder %s23, 1
    %p214 = por %p212, %p213
    %p216 = scmp.ne.s32.totalorder %s201, %s215
    %p217 = scmp.eq.s32.totalorder %s23, 0
    %p218 = por %p216, %p217
    %s220 = sadd.s32 %s219, 1
    %p223 = scmp.eq.s32.totalorder %s17, 1
    %p224 = scmp.ne.s32.totalorder %s219, %s221
    %p225 = scmp.eq.s32.totalorder %s17, 0
    %p226 = por %p224, %p225
    %p227 = scmp.ne.s32.totalorder %s219, %s221
    %p228 = scmp.eq.s32.totalorder %s22, 1
    %p229 = por %p227, %p228
    %p230 = scmp.ne.s32.totalorder %s221, %s222
    %p231 = scmp.eq.s32.totalorder %s22, 0
    %p232 = por %p230, %p231
    %p233 = scmp.ne.s32.totalorder %s221, %s222
    %p234 = scmp.eq.s32.totalorder %s23, 1
    %p235 = por %p233, %p234
    %p237 = scmp.ne.s32.totalorder %s222, %s236
    %p238 = scmp.eq.s32.totalorder %s23, 0
    %p239 = por %p237, %p238
    %s241 = sadd.s32 %s240, 1
    %p244 = scmp.eq.s32.totalorder %s17, 1
    %p245 = scmp.ne.s32.totalorder %s240, %s242
    %p246 = scmp.eq.s32.totalorder %s17, 0
    %p247 = por %p245, %p246
    %p248 = scmp.ne.s32.totalorder %s240, %s242
    %p249 = scmp.eq.s32.totalorder %s22, 1
    %p250 = por %p248, %p249
    %p251 = scmp.ne.s32.totalorder %s242, %s243
    %p252 = scmp.eq.s32.totalorder %s22, 0
    %p253 = por %p251, %p252
    %p254 = scmp.ne.s32.totalorder %s242, %s243
    %p255 = scmp.eq.s32.totalorder %s23, 1
    %p256 = por %p254, %p255
    %p258 = scmp.ne.s32.totalorder %s243, %s257
    %p259 = scmp.eq.s32.totalorder %s23, 0
    %p260 = por %p258, %p259
    %s261 = ssub.s32 %s17, %s24
    %p262 = scmp.eq.s32.totalorder %s261, 0
    %s264 = sadd.s32 %s263, 1
    %s265 = scalar_select %p262, %s263, %s264
    %p268 = pneg %p262
    %p269 = scmp.eq.s32.totalorder %s17, 1
    %p270 = por %p268, %p269
    %p271 = scmp.ne.s32.totalorder %s263, %s266
    %p272 = scmp.eq.s32.totalorder %s17, 0
    %p273 = por %p271, %p272
    %p274 = scmp.ne.s32.totalorder %s263, %s266
    %p275 = scmp.eq.s32.totalorder %s22, 1
    %p276 = por %p274, %p275
    %p277 = scmp.ne.s32.totalorder %s266, %s267
    %p278 = scmp.eq.s32.totalorder %s22, 0
    %p279 = por %p277, %p278
    %p280 = scmp.ne.s32.totalorder %s266, %s267
    %p281 = scmp.eq.s32.totalorder %s23, 1
    %p282 = por %p280, %p281
    %p284 = scmp.ne.s32.totalorder %s267, %s283
    %p285 = scmp.eq.s32.totalorder %s23, 0
    %p286 = por %p284, %p285
    %p287 = scmp.le.s32.totalorder 1, %s17
    %p288 = scmp.lt.s32.totalorder %s17, 3
    %p289 = pnand %p287, %p288
    %p290 = pneg %p289
    // Predicated region
    $region9: #{resblock_pallas.1} parent=5 // pred_check
      _
    $region10: #{resblock_pallas.1} parent=5 // pred_check_branch
      %292 = sbr.rel (%p289) target = $region12
    $region11: #{resblock_pallas.1} parent=5 // pred_region
      %s293 = ssub.s32 %s17, 1
      // Predicated region
      $region13: #{resblock_pallas.1} parent=11 // pred_check
        %p294 = pneg %p64
      $region14: #{resblock_pallas.1} parent=11 // pred_check_branch
        %296 = sbr.rel (%p294) target = $region16
      $region15: #{resblock_pallas.1} parent=11 // pred_region
        _
      $region16: #{resblock_pallas.1} parent=11 // pred_fallthru
        _
      // Predicated region
      $region17: #{resblock_pallas.1} parent=11 // pred_check
        %p297 = pneg %p85
      $region18: #{resblock_pallas.1} parent=11 // pred_check_branch
        %299 = sbr.rel (%p297) target = $region20
      $region19: #{resblock_pallas.1} parent=11 // pred_region
        _
      $region20: #{resblock_pallas.1} parent=11 // pred_fallthru
        _
      // Predicated region
      $region21: #{resblock_pallas.1} parent=11 // pred_check
        %p300 = pneg %p106
      $region22: #{resblock_pallas.1} parent=11 // pred_check_branch
        %302 = sbr.rel (%p300) target = $region24
      $region23: #{resblock_pallas.1} parent=11 // pred_region
        _
      $region24: #{resblock_pallas.1} parent=11 // pred_fallthru
        _
      // Predicated region
      $region25: #{resblock_pallas.1} parent=11 // pred_check
        %p303 = pneg %p127
      $region26: #{resblock_pallas.1} parent=11 // pred_check_branch
        %305 = sbr.rel (%p303) target = $region28
      $region27: #{resblock_pallas.1} parent=11 // pred_region
        _
      $region28: #{resblock_pallas.1} parent=11 // pred_fallthru
        _
      // Predicated region
      $region29: #{resblock_pallas.1} parent=11 // pred_check
        %p306 = pneg %p148
      $region30: #{resblock_pallas.1} parent=11 // pred_check_branch
        %308 = sbr.rel (%p306) target = $region32
      $region31: #{resblock_pallas.1} parent=11 // pred_region
        _
      $region32: #{resblock_pallas.1} parent=11 // pred_fallthru
        _
      // Predicated region
      $region33: #{resblock_pallas.1} parent=11 // pred_check
        %p309 = pneg %p169
      $region34: #{resblock_pallas.1} parent=11 // pred_check_branch
        %311 = sbr.rel (%p309) target = $region36
      $region35: #{resblock_pallas.1} parent=11 // pred_region
        _
      $region36: #{resblock_pallas.1} parent=11 // pred_fallthru
        _
      // Predicated region
      $region37: #{resblock_pallas.1} parent=11 // pred_check
        %p312 = pneg %p190
      $region38: #{resblock_pallas.1} parent=11 // pred_check_branch
        %314 = sbr.rel (%p312) target = $region40
      $region39: #{resblock_pallas.1} parent=11 // pred_region
        _
      $region40: #{resblock_pallas.1} parent=11 // pred_fallthru
        _
      // Predicated region
      $region41: #{resblock_pallas.1} parent=11 // pred_check
        %p315 = pneg %p211
      $region42: #{resblock_pallas.1} parent=11 // pred_check_branch
        %317 = sbr.rel (%p315) target = $region44
      $region43: #{resblock_pallas.1} parent=11 // pred_region
        _
      $region44: #{resblock_pallas.1} parent=11 // pred_fallthru
        _
      // Predicated region
      $region45: #{resblock_pallas.1} parent=11 // pred_check
        %p318 = pneg %p232
      $region46: #{resblock_pallas.1} parent=11 // pred_check_branch
        %320 = sbr.rel (%p318) target = $region48
      $region47: #{resblock_pallas.1} parent=11 // pred_region
        _
      $region48: #{resblock_pallas.1} parent=11 // pred_fallthru
        _
      // Predicated region
      $region49: #{resblock_pallas.1} parent=11 // pred_check
        %p321 = pneg %p253
      $region50: #{resblock_pallas.1} parent=11 // pred_check_branch
        %323 = sbr.rel (%p321) target = $region52
      $region51: #{resblock_pallas.1} parent=11 // pred_region
        _
      $region52: #{resblock_pallas.1} parent=11 // pred_fallthru
        _
    $region12: #{resblock_pallas.1} parent=5 // pred_fallthru
      _
    %p324 = scmp.lt.s32.totalorder %s17, 2
    // Predicated region
    $region53: #{resblock_pallas.1} parent=5 // pred_check
      %p325 = pneg %p324
    $region54: #{resblock_pallas.1} parent=5 // pred_check_branch
      %327 = sbr.rel (%p325) target = $region56
    $region55: #{resblock_pallas.1} parent=5 // pred_region
      // Predicated region
      $region57: #{resblock_pallas.1} parent=55 // pred_check
        %p328 = pneg %p37
      $region58: #{resblock_pallas.1} parent=55 // pred_check_branch
        %330 = sbr.rel (%p328) target = $region60
      $region59: #{resblock_pallas.1} parent=55 // pred_region
        %p331 = scmp.lt.s32.totalorder %s17, 1
        %s332 = scalar_select %p331, %s17, 1
        %s333 = smul.addr %s332, 8
        %s334 = smul.addr %s333, 8
        %s335 = scalar_lea.vmem %s0, %s334
      $region60: #{resblock_pallas.1} parent=55 // pred_fallthru
        _
    $region56: #{resblock_pallas.1} parent=5 // pred_fallthru
      _
    %p336 = scmp.le.s32.totalorder 1, %s17
    %p337 = scmp.lt.s32.totalorder %s17, 3
    %p338 = pnand %p336, %p337
    %p339 = pneg %p338
    // Predicated region
    $region61: #{resblock_pallas.1} parent=5 // pred_check
      _
    $region62: #{resblock_pallas.1} parent=5 // pred_check_branch
      %341 = sbr.rel (%p338) target = $region64
    $region63: #{resblock_pallas.1} parent=5 // pred_region
      %s342 = ssub.s32 %s17, 1
      %p343 = scmp.lt.s32.totalorder %s22, 1
      %s344 = scalar_select %p343, %s22, 1
      %s345 = smul.addr %s344, 8
      %s346 = smul.addr %s345, 8
      %s347 = scalar_lea.vmem %s0, %s346
      %p348 = pneg %p43
      %p349 = pneg %p40
      %p350 = pneg %p64
      %p351 = pneg %p61
      %p352 = pneg %p85
      %p353 = pneg %p82
      %p354 = pneg %p106
      %p355 = pneg %p103
      %p356 = pneg %p127
      %p357 = pneg %p124
      %p358 = pneg %p148
      %p359 = pneg %p145
      %p360 = pneg %p169
      %p361 = pneg %p166
      %p362 = pneg %p190
      %p363 = pneg %p187
      %p364 = pneg %p211
      %p365 = pneg %p208
      %p366 = pneg %p232
      %p367 = pneg %p229
      %p368 = pneg %p253
      %p369 = pneg %p250
      %p370 = pneg %p279
      %p371 = pneg %p276
      %p372 = scmp.lt.s32.totalorder %s22, 1
      %s373 = scalar_select %p372, %s22, 1
      %s374 = smul.addr %s373, 8
      %s375 = smul.addr %s374, 8
      %s376 = scalar_lea.vmem %s11, %s375
      %p377 = scmp.lt.s32.totalorder %s22, 1
      %s378 = scalar_select %p377, %s22, 1
      %s379 = smul.addr %s378, 8
      %s380 = smul.addr %s379, 8
      %s381 = scalar_lea.vmem %s0, %s380
      %p382 = scmp.lt.s32.totalorder %s22, 1
      %s383 = scalar_select %p382, %s22, 1
      %s384 = smul.addr %s383, 8
      %s385 = smul.addr %s384, 8
      %s386 = scalar_lea.vmem %s11, %s385
      %v387 = vld [vmem:[%s381] sm:$0xff]
      %v388 = vld [vmem:[%s381 + $0x8] sm:$0xff]
      %v389 = vld [vmem:[%s381 + $0x10] sm:$0xff]
      %v390 = vld [vmem:[%s381 + $0x18] sm:$0xff]
      %v391 = vld [vmem:[%s381 + $0x20] sm:$0xff]
      %v392 = vld [vmem:[%s381 + $0x28] sm:$0xff]
      %v393 = vld [vmem:[%s381 + $0x30] sm:$0xff]
      %v394 = vld [vmem:[%s381 + $0x38] sm:$0xff]
      %v395 = vld [vmem:[%s1] sm:$0xff]
      %v396 = vld [vmem:[%s1 + $0x8] sm:$0xff]
      %vm397 = vcmask 130048
      %v399 = vsel %vm397, %v395, 0
      %v402 = vsel %vm397, %v396, 0
      %404 = vmatpush.msra.mxu0 0.0
      %405 = vmatpush.msra.mxu0 0.0
      %406 = vmatpush.msra.mxu0 0.0
      %407 = vmatpush.msra.mxu0 0.0
      %408 = vmatpush.msra.mxu0 0.0
      %409 = vmatpush.msra.mxu0 0.0
      %410 = vmatpush.msra.mxu0 0.0
      %411 = vmatpush.msra.mxu0 0.0
      %412 = vmatpush.msra.mxu0 0.0
      %413 = vmatpush.msra.mxu0 0.0
      %414 = vmatpush.msra.mxu0 0.0
      %415 = vmatpush.msra.mxu0 0.0
      %416 = vmatpush.msra.mxu0 0.0
      %417 = vmatpush.msra.mxu0 0.0
      %418 = vmatpush.msra.mxu0 %v391
      %419 = vmatpush.msra.mxu0 %v387
      %420 = vmatmul.f32.gmra.mxu0 %v399
      %v421 = vpop.f32.mrf.mxu0
      %v422 = vadd.f32 0.0, %v421
      %423 = vmatmul.f32.gmra.mxu0 %v402
      %v424 = vpop.f32.mrf.mxu0
      %v425 = vadd.f32 0.0, %v424
      %426 = vdwg.mxu0
      %427 = vmatpush.msra.mxu0 0.0
      %428 = vmatpush.msra.mxu0 0.0
      %429 = vmatpush.msra.mxu0 0.0
      %430 = vmatpush.msra.mxu0 0.0
      %431 = vmatpush.msra.mxu0 0.0
      %432 = vmatpush.msra.mxu0 0.0
      %433 = vmatpush.msra.mxu0 0.0
      %434 = vmatpush.msra.mxu0 0.0
      %435 = vmatpush.msra.mxu0 0.0
      %436 = vmatpush.msra.mxu0 0.0
      %437 = vmatpush.msra.mxu0 0.0
      %438 = vmatpush.msra.mxu0 0.0
      %439 = vmatpush.msra.mxu0 0.0
      %440 = vmatpush.msra.mxu0 0.0
      %441 = vmatpush.msra.mxu0 %v392
      %442 = vmatpush.msra.mxu0 %v388
      %443 = vmatmul.f32.gmra.mxu0 %v399
      %v444 = vpop.f32.mrf.mxu0
      %v445 = vadd.f32 0.0, %v444
      %446 = vmatmul.f32.gmra.mxu0 %v402
      %v447 = vpop.f32.mrf.mxu0
      %v448 = vadd.f32 0.0, %v447
      %449 = vdwg.mxu0
      %450 = vmatpush.msra.mxu0 0.0
      %451 = vmatpush.msra.mxu0 0.0
      %452 = vmatpush.msra.mxu0 0.0
      %453 = vmatpush.msra.mxu0 0.0
      %454 = vmatpush.msra.mxu0 0.0
      %455 = vmatpush.msra.mxu0 0.0
      %456 = vmatpush.msra.mxu0 0.0
      %457 = vmatpush.msra.mxu0 0.0
      %458 = vmatpush.msra.mxu0 0.0
      %459 = vmatpush.msra.mxu0 0.0
      %460 = vmatpush.msra.mxu0 0.0
      %461 = vmatpush.msra.mxu0 0.0
      %462 = vmatpush.msra.mxu0 0.0
      %463 = vmatpush.msra.mxu0 0.0
      %464 = vmatpush.msra.mxu0 %v393
      %465 = vmatpush.msra.mxu0 %v389
      %466 = vmatmul.f32.gmra.mxu0 %v399
      %v467 = vpop.f32.mrf.mxu0
      %v468 = vadd.f32 0.0, %v467
      %469 = vmatmul.f32.gmra.mxu0 %v402
      %v470 = vpop.f32.mrf.mxu0
      %v471 = vadd.f32 0.0, %v470
      %472 = vdwg.mxu0
      %473 = vmatpush.msra.mxu0 0.0
      %474 = vmatpush.msra.mxu0 0.0
      %475 = vmatpush.msra.mxu0 0.0
      %476 = vmatpush.msra.mxu0 0.0
      %477 = vmatpush.msra.mxu0 0.0
      %478 = vmatpush.msra.mxu0 0.0
      %479 = vmatpush.msra.mxu0 0.0
      %480 = vmatpush.msra.mxu0 0.0
      %481 = vmatpush.msra.mxu0 0.0
      %482 = vmatpush.msra.mxu0 0.0
      %483 = vmatpush.msra.mxu0 0.0
      %484 = vmatpush.msra.mxu0 0.0
      %485 = vmatpush.msra.mxu0 0.0
      %486 = vmatpush.msra.mxu0 0.0
      %487 = vmatpush.msra.mxu0 %v394
      %488 = vmatpush.msra.mxu0 %v390
      %489 = vmatmul.f32.gmra.mxu0 %v399
      %v490 = vpop.f32.mrf.mxu0
      %v491 = vadd.f32 0.0, %v490
      %492 = vmatmul.f32.gmra.mxu0 %v402
      %v493 = vpop.f32.mrf.mxu0
      %v494 = vadd.f32 0.0, %v493
      %495 = vdwg.mxu0
      %s496 = scalar_lea.vmem %s1, 16
      %v497 = vld [vmem:[%s496] sm:$0xff]
      %v498 = vld [vmem:[%s496 + $0x8] sm:$0xff]
      %v500 = vsel %vm397, %v497, 0
      %v503 = vsel %vm397, %v498, 0
      %505 = vmatpush.msra.mxu0 0.0
      %506 = vmatpush.msra.mxu0 0.0
      %507 = vmatpush.msra.mxu0 0.0
      %508 = vmatpush.msra.mxu0 0.0
      %509 = vmatpush.msra.mxu0 0.0
      %510 = vmatpush.msra.mxu0 0.0
      %511 = vmatpush.msra.mxu0 0.0
      %512 = vmatpush.msra.mxu0 0.0
      %513 = vmatpush.msra.mxu0 0.0
      %514 = vmatpush.msra.mxu0 0.0
      %515 = vmatpush.msra.mxu0 0.0
      %516 = vmatpush.msra.mxu0 0.0
      %517 = vmatpush.msra.mxu0 0.0
      %518 = vmatpush.msra.mxu0 0.0
      %519 = vmatpush.msra.mxu0 %v391
      %520 = vmatpush.msra.mxu0 %v387
      %521 = vmatmul.f32.gmra.mxu0 %v500
      %v522 = vpop.f32.mrf.mxu0
      %v523 = vadd.f32 0.0, %v522
      %524 = vmatmul.f32.gmra.mxu0 %v503
      %v525 = vpop.f32.mrf.mxu0
      %v526 = vadd.f32 0.0, %v525
      %527 = vdwg.mxu0
      %528 = vmatpush.msra.mxu0 0.0
      %529 = vmatpush.msra.mxu0 0.0
      %530 = vmatpush.msra.mxu0 0.0
      %531 = vmatpush.msra.mxu0 0.0
      %532 = vmatpush.msra.mxu0 0.0
      %533 = vmatpush.msra.mxu0 0.0
      %534 = vmatpush.msra.mxu0 0.0
      %535 = vmatpush.msra.mxu0 0.0
      %536 = vmatpush.msra.mxu0 0.0
      %537 = vmatpush.msra.mxu0 0.0
      %538 = vmatpush.msra.mxu0 0.0
      %539 = vmatpush.msra.mxu0 0.0
      %540 = vmatpush.msra.mxu0 0.0
      %541 = vmatpush.msra.mxu0 0.0
      %542 = vmatpush.msra.mxu0 %v392
      %543 = vmatpush.msra.mxu0 %v388
      %544 = vmatmul.f32.gmra.mxu0 %v500
      %v545 = vpop.f32.mrf.mxu0
      %v546 = vadd.f32 0.0, %v545
      %547 = vmatmul.f32.gmra.mxu0 %v503
      %v548 = vpop.f32.mrf.mxu0
      %v549 = vadd.f32 0.0, %v548
      %550 = vdwg.mxu0
      %551 = vmatpush.msra.mxu0 0.0
      %552 = vmatpush.msra.mxu0 0.0
      %553 = vmatpush.msra.mxu0 0.0
      %554 = vmatpush.msra.mxu0 0.0
      %555 = vmatpush.msra.mxu0 0.0
      %556 = vmatpush.msra.mxu0 0.0
      %557 = vmatpush.msra.mxu0 0.0
      %558 = vmatpush.msra.mxu0 0.0
      %559 = vmatpush.msra.mxu0 0.0
      %560 = vmatpush.msra.mxu0 0.0
      %561 = vmatpush.msra.mxu0 0.0
      %562 = vmatpush.msra.mxu0 0.0
      %563 = vmatpush.msra.mxu0 0.0
      %564 = vmatpush.msra.mxu0 0.0
      %565 = vmatpush.msra.mxu0 %v393
      %566 = vmatpush.msra.mxu0 %v389
      %567 = vmatmul.f32.gmra.mxu0 %v500
      %v568 = vpop.f32.mrf.mxu0
      %v569 = vadd.f32 0.0, %v568
      %570 = vmatmul.f32.gmra.mxu0 %v503
      %v571 = vpop.f32.mrf.mxu0
      %v572 = vadd.f32 0.0, %v571
      %573 = vdwg.mxu0
      %574 = vmatpush.msra.mxu0 0.0
      %575 = vmatpush.msra.mxu0 0.0
      %576 = vmatpush.msra.mxu0 0.0
      %577 = vmatpush.msra.mxu0 0.0
      %578 = vmatpush.msra.mxu0 0.0
      %579 = vmatpush.msra.mxu0 0.0
      %580 = vmatpush.msra.mxu0 0.0
      %581 = vmatpush.msra.mxu0 0.0
      %582 = vmatpush.msra.mxu0 0.0
      %583 = vmatpush.msra.mxu0 0.0
      %584 = vmatpush.msra.mxu0 0.0
      %585 = vmatpush.msra.mxu0 0.0
      %586 = vmatpush.msra.mxu0 0.0
      %587 = vmatpush.msra.mxu0 0.0
      %588 = vmatpush.msra.mxu0 %v394
      %589 = vmatpush.msra.mxu0 %v390
      %590 = vmatmul.f32.gmra.mxu0 %v500
      %v591 = vpop.f32.mrf.mxu0
      %v592 = vadd.f32 0.0, %v591
      %593 = vmatmul.f32.gmra.mxu0 %v503
      %v594 = vpop.f32.mrf.mxu0
      %v595 = vadd.f32 0.0, %v594
      %596 = vdwg.mxu0
      %v597 = vld [vmem:[%s3] sm:$0xff]
      %v598 = vld [vmem:[%s3 + $0x8] sm:$0xff]
      %v599 = vld [vmem:[%s3 + $0x10] sm:$0xff]
      %v600 = vld [vmem:[%s3 + $0x18] sm:$0xff]
      %v601 = vld [vmem:[%s3 + $0x20] sm:$0xff]
      %v602 = vld [vmem:[%s3 + $0x28] sm:$0xff]
      %v603 = vld [vmem:[%s3 + $0x30] sm:$0xff]
      %v604 = vld [vmem:[%s3 + $0x38] sm:$0xff]
      %v605 = vld [vmem:[%s3 + $0x40] sm:$0xff]
      %v606 = vld [vmem:[%s3 + $0x48] sm:$0xff]
      %v607 = vld [vmem:[%s3 + $0x50] sm:$0xff]
      %v608 = vld [vmem:[%s3 + $0x58] sm:$0xff]
      %v609 = vld [vmem:[%s3 + $0x60] sm:$0xff]
      %v610 = vld [vmem:[%s3 + $0x68] sm:$0xff]
      %v611 = vld [vmem:[%s3 + $0x70] sm:$0xff]
      %v612 = vld [vmem:[%s3 + $0x78] sm:$0xff]
      %v613 = vld [vmem:[%s3 + $0x80] sm:$0xff]
      %v614 = vld [vmem:[%s3 + $0x88] sm:$0xff]
      %v615 = vld [vmem:[%s3 + $0x90] sm:$0xff]
      %v616 = vld [vmem:[%s3 + $0x98] sm:$0xff]
      %v617 = vld [vmem:[%s3 + $0xa0] sm:$0xff]
      %v618 = vld [vmem:[%s3 + $0xa8] sm:$0xff]
      %v619 = vld [vmem:[%s3 + $0xb0] sm:$0xff]
      %v620 = vld [vmem:[%s3 + $0xb8] sm:$0xff]
      %v621 = vld [vmem:[%s3 + $0xc0] sm:$0xff]
      %v622 = vld [vmem:[%s3 + $0xc8] sm:$0xff]
      %v623 = vld [vmem:[%s3 + $0xd0] sm:$0xff]
      %v624 = vld [vmem:[%s3 + $0xd8] sm:$0xff]
      %v625 = vld [vmem:[%s3 + $0xe0] sm:$0xff]
      %v626 = vld [vmem:[%s3 + $0xe8] sm:$0xff]
      %v627 = vld [vmem:[%s3 + $0xf0] sm:$0xff]
      %v628 = vld [vmem:[%s3 + $0xf8] sm:$0xff]
      %v629 = vld [vmem:[%s3 + $0x100] sm:$0xff]
      %v630 = vld [vmem:[%s3 + $0x108] sm:$0xff]
      %v631 = vld [vmem:[%s3 + $0x110] sm:$0xff]
      %v632 = vld [vmem:[%s3 + $0x118] sm:$0xff]
      %v633 = vld [vmem:[%s3 + $0x120] sm:$0xff]
      %v634 = vld [vmem:[%s3 + $0x128] sm:$0xff]
      %v635 = vld [vmem:[%s3 + $0x130] sm:$0xff]
      %v636 = vld [vmem:[%s3 + $0x138] sm:$0xff]
      %v637 = vld [vmem:[%s3 + $0x140] sm:$0xff]
      %v638 = vld [vmem:[%s3 + $0x148] sm:$0xff]
      %v639 = vld [vmem:[%s3 + $0x150] sm:$0xff]
      %v640 = vld [vmem:[%s3 + $0x158] sm:$0xff]
      %v641 = vld [vmem:[%s3 + $0x160] sm:$0xff]
      %v642 = vld [vmem:[%s3 + $0x168] sm:$0xff]
      %v643 = vld [vmem:[%s3 + $0x170] sm:$0xff]
      %v644 = vld [vmem:[%s3 + $0x178] sm:$0xff]
      %v645 = vld [vmem:[%s3 + $0x180] sm:$0xff]
      %v646 = vld [vmem:[%s3 + $0x188] sm:$0xff]
      %v647 = vld [vmem:[%s3 + $0x190] sm:$0xff]
      %v648 = vld [vmem:[%s3 + $0x198] sm:$0xff]
      %v649 = vld [vmem:[%s3 + $0x1a0] sm:$0xff]
      %v650 = vld [vmem:[%s3 + $0x1a8] sm:$0xff]
      %v651 = vld [vmem:[%s3 + $0x1b0] sm:$0xff]
      %v652 = vld [vmem:[%s3 + $0x1b8] sm:$0xff]
      %v653 = vld [vmem:[%s3 + $0x1c0] sm:$0xff]
      %v654 = vld [vmem:[%s3 + $0x1c8] sm:$0xff]
      %v655 = vld [vmem:[%s3 + $0x1d0] sm:$0xff]
      %v656 = vld [vmem:[%s3 + $0x1d8] sm:$0xff]
      %v657 = vld [vmem:[%s3 + $0x1e0] sm:$0xff]
      %v658 = vld [vmem:[%s3 + $0x1e8] sm:$0xff]
      %v659 = vld [vmem:[%s3 + $0x1f0] sm:$0xff]
      %v660 = vld [vmem:[%s3 + $0x1f8] sm:$0xff]
      %v661 = vld [vmem:[%s3 + $0x200] sm:$0xff]
      %v662 = vld [vmem:[%s3 + $0x208] sm:$0xff]
      %v663 = vld [vmem:[%s3 + $0x210] sm:$0xff]
      %v664 = vld [vmem:[%s3 + $0x218] sm:$0xff]
      %v665 = vld [vmem:[%s3 + $0x220] sm:$0xff]
      %v666 = vld [vmem:[%s3 + $0x228] sm:$0xff]
      %v667 = vld [vmem:[%s3 + $0x230] sm:$0xff]
      %v668 = vld [vmem:[%s3 + $0x238] sm:$0xff]
      %v669 = vld [vmem:[%s3 + $0x240] sm:$0xff]
      %v670 = vld [vmem:[%s3 + $0x248] sm:$0xff]
      %v671 = vld [vmem:[%s3 + $0x250] sm:$0xff]
      %v672 = vld [vmem:[%s3 + $0x258] sm:$0xff]
      %v673 = vld [vmem:[%s3 + $0x260] sm:$0xff]
      %v674 = vld [vmem:[%s3 + $0x268] sm:$0xff]
      %v675 = vld [vmem:[%s3 + $0x270] sm:$0xff]
      %v676 = vld [vmem:[%s3 + $0x278] sm:$0xff]
      %v677 = vld [vmem:[%s3 + $0x280] sm:$0xff]
      %v678 = vld [vmem:[%s3 + $0x288] sm:$0xff]
      %v679 = vld [vmem:[%s3 + $0x290] sm:$0xff]
      %v680 = vld [vmem:[%s3 + $0x298] sm:$0xff]
      %v681 = vld [vmem:[%s3 + $0x2a0] sm:$0xff]
      %v682 = vld [vmem:[%s3 + $0x2a8] sm:$0xff]
      %v683 = vld [vmem:[%s3 + $0x2b0] sm:$0xff]
      %v684 = vld [vmem:[%s3 + $0x2b8] sm:$0xff]
      %v685 = vld [vmem:[%s3 + $0x2c0] sm:$0xff]
      %v686 = vld [vmem:[%s3 + $0x2c8] sm:$0xff]
      %v687 = vld [vmem:[%s3 + $0x2d0] sm:$0xff]
      %v688 = vld [vmem:[%s3 + $0x2d8] sm:$0xff]
      %v689 = vld [vmem:[%s3 + $0x2e0] sm:$0xff]
      %v690 = vld [vmem:[%s3 + $0x2e8] sm:$0xff]
      %v691 = vld [vmem:[%s3 + $0x2f0] sm:$0xff]
      %v692 = vld [vmem:[%s3 + $0x2f8] sm:$0xff]
      %v693 = vld [vmem:[%s3 + $0x300] sm:$0xff]
      %v694 = vld [vmem:[%s3 + $0x308] sm:$0xff]
      %v695 = vld [vmem:[%s3 + $0x310] sm:$0xff]
      %v696 = vld [vmem:[%s3 + $0x318] sm:$0xff]
      %v697 = vld [vmem:[%s3 + $0x320] sm:$0xff]
      %v698 = vld [vmem:[%s3 + $0x328] sm:$0xff]
      %v699 = vld [vmem:[%s3 + $0x330] sm:$0xff]
      %v700 = vld [vmem:[%s3 + $0x338] sm:$0xff]
      %v701 = vld [vmem:[%s3 + $0x340] sm:$0xff]
      %v702 = vld [vmem:[%s3 + $0x348] sm:$0xff]
      %v703 = vld [vmem:[%s3 + $0x350] sm:$0xff]
      %v704 = vld [vmem:[%s3 + $0x358] sm:$0xff]
      %v705 = vld [vmem:[%s3 + $0x360] sm:$0xff]
      %v706 = vld [vmem:[%s3 + $0x368] sm:$0xff]
      %v707 = vld [vmem:[%s3 + $0x370] sm:$0xff]
      %v708 = vld [vmem:[%s3 + $0x378] sm:$0xff]
      %v709 = vld [vmem:[%s3 + $0x380] sm:$0xff]
      %v710 = vld [vmem:[%s3 + $0x388] sm:$0xff]
      %v711 = vld [vmem:[%s3 + $0x390] sm:$0xff]
      %v712 = vld [vmem:[%s3 + $0x398] sm:$0xff]
      %v713 = vld [vmem:[%s3 + $0x3a0] sm:$0xff]
      %v714 = vld [vmem:[%s3 + $0x3a8] sm:$0xff]
      %v715 = vld [vmem:[%s3 + $0x3b0] sm:$0xff]
      %v716 = vld [vmem:[%s3 + $0x3b8] sm:$0xff]
      %v717 = vld [vmem:[%s3 + $0x3c0] sm:$0xff]
      %v718 = vld [vmem:[%s3 + $0x3c8] sm:$0xff]
      %v719 = vld [vmem:[%s3 + $0x3d0] sm:$0xff]
      %v720 = vld [vmem:[%s3 + $0x3d8] sm:$0xff]
      %v721 = vld [vmem:[%s3 + $0x3e0] sm:$0xff]
      %v722 = vld [vmem:[%s3 + $0x3e8] sm:$0xff]
      %v723 = vld [vmem:[%s3 + $0x3f0] sm:$0xff]
      %v724 = vld [vmem:[%s3 + $0x3f8] sm:$0xff]
      %v725 = vld [vmem:[%s3 + $0x400] sm:$0xff]
      %v726 = vld [vmem:[%s3 + $0x408] sm:$0xff]
      %v727 = vld [vmem:[%s3 + $0x410] sm:$0xff]
      %v728 = vld [vmem:[%s3 + $0x418] sm:$0xff]
      %v729 = vld [vmem:[%s3 + $0x420] sm:$0xff]
      %v730 = vld [vmem:[%s3 + $0x428] sm:$0xff]
      %v731 = vld [vmem:[%s3 + $0x430] sm:$0xff]
      %v732 = vld [vmem:[%s3 + $0x438] sm:$0xff]
      %v733 = vld [vmem:[%s3 + $0x440] sm:$0xff]
      %v734 = vld [vmem:[%s3 + $0x448] sm:$0xff]
      %v735 = vld [vmem:[%s3 + $0x450] sm:$0xff]
      %v736 = vld [vmem:[%s3 + $0x458] sm:$0xff]
      %v737 = vld [vmem:[%s3 + $0x460] sm:$0xff]
      %v738 = vld [vmem:[%s3 + $0x468] sm:$0xff]
      %v739 = vld [vmem:[%s3 + $0x470] sm:$0xff]
      %v740 = vld [vmem:[%s3 + $0x478] sm:$0xff]
      %v741 = vld [vmem:[%s3 + $0x480] sm:$0xff]
      %v742 = vld [vmem:[%s3 + $0x488] sm:$0xff]
      %v743 = vld [vmem:[%s3 + $0x490] sm:$0xff]
      %v744 = vld [vmem:[%s3 + $0x498] sm:$0xff]
      %v745 = vld [vmem:[%s3 + $0x4a0] sm:$0xff]
      %v746 = vld [vmem:[%s3 + $0x4a8] sm:$0xff]
      %v747 = vld [vmem:[%s3 + $0x4b0] sm:$0xff]
      %v748 = vld [vmem:[%s3 + $0x4b8] sm:$0xff]
      %v749 = vld [vmem:[%s3 + $0x4c0] sm:$0xff]
      %v750 = vld [vmem:[%s3 + $0x4c8] sm:$0xff]
      %v751 = vld [vmem:[%s3 + $0x4d0] sm:$0xff]
      %v752 = vld [vmem:[%s3 + $0x4d8] sm:$0xff]
      %v753 = vld [vmem:[%s3 + $0x4e0] sm:$0xff]
      %v754 = vld [vmem:[%s3 + $0x4e8] sm:$0xff]
      %v755 = vld [vmem:[%s3 + $0x4f0] sm:$0xff]
      %v756 = vld [vmem:[%s3 + $0x4f8] sm:$0xff]
      %v757 = vld [vmem:[%s3 + $0x500] sm:$0xff]
      %v758 = vld [vmem:[%s3 + $0x508] sm:$0xff]
      %v759 = vld [vmem:[%s3 + $0x510] sm:$0xff]
      %v760 = vld [vmem:[%s3 + $0x518] sm:$0xff]
      %v761 = vld [vmem:[%s3 + $0x520] sm:$0xff]
      %v762 = vld [vmem:[%s3 + $0x528] sm:$0xff]
      %v763 = vld [vmem:[%s3 + $0x530] sm:$0xff]
      %v764 = vld [vmem:[%s3 + $0x538] sm:$0xff]
      %v765 = vld [vmem:[%s3 + $0x540] sm:$0xff]
      %v766 = vld [vmem:[%s3 + $0x548] sm:$0xff]
      %v767 = vld [vmem:[%s3 + $0x550] sm:$0xff]
      %v768 = vld [vmem:[%s3 + $0x558] sm:$0xff]
      %v769 = vld [vmem:[%s3 + $0x560] sm:$0xff]
      %v770 = vld [vmem:[%s3 + $0x568] sm:$0xff]
      %v771 = vld [vmem:[%s3 + $0x570] sm:$0xff]
      %v772 = vld [vmem:[%s3 + $0x578] sm:$0xff]
      %v773 = vld [vmem:[%s3 + $0x580] sm:$0xff]
      %v774 = vld [vmem:[%s3 + $0x588] sm:$0xff]
      %v775 = vld [vmem:[%s3 + $0x590] sm:$0xff]
      %v776 = vld [vmem:[%s3 + $0x598] sm:$0xff]
      %v777 = vld [vmem:[%s3 + $0x5a0] sm:$0xff]
      %v778 = vld [vmem:[%s3 + $0x5a8] sm:$0xff]
      %v779 = vld [vmem:[%s3 + $0x5b0] sm:$0xff]
      %v780 = vld [vmem:[%s3 + $0x5b8] sm:$0xff]
      %v781 = vld [vmem:[%s3 + $0x5c0] sm:$0xff]
      %v782 = vld [vmem:[%s3 + $0x5c8] sm:$0xff]
      %v783 = vld [vmem:[%s3 + $0x5d0] sm:$0xff]
      %v784 = vld [vmem:[%s3 + $0x5d8] sm:$0xff]
      %v785 = vld [vmem:[%s3 + $0x5e0] sm:$0xff]
      %v786 = vld [vmem:[%s3 + $0x5e8] sm:$0xff]
      %v787 = vld [vmem:[%s3 + $0x5f0] sm:$0xff]
      %v788 = vld [vmem:[%s3 + $0x5f8] sm:$0xff]
      %v789 = vld [vmem:[%s3 + $0x600] sm:$0xff]
      %v790 = vld [vmem:[%s3 + $0x608] sm:$0xff]
      %v791 = vld [vmem:[%s3 + $0x610] sm:$0xff]
      %v792 = vld [vmem:[%s3 + $0x618] sm:$0xff]
      %v793 = vld [vmem:[%s3 + $0x620] sm:$0xff]
      %v794 = vld [vmem:[%s3 + $0x628] sm:$0xff]
      %v795 = vld [vmem:[%s3 + $0x630] sm:$0xff]
      %v796 = vld [vmem:[%s3 + $0x638] sm:$0xff]
      %v797 = vld [vmem:[%s3 + $0x640] sm:$0xff]
      %v798 = vld [vmem:[%s3 + $0x648] sm:$0xff]
      %v799 = vld [vmem:[%s3 + $0x650] sm:$0xff]
      %v800 = vld [vmem:[%s3 + $0x658] sm:$0xff]
      %v801 = vld [vmem:[%s3 + $0x660] sm:$0xff]
      %v802 = vld [vmem:[%s3 + $0x668] sm:$0xff]
      %v803 = vld [vmem:[%s3 + $0x670] sm:$0xff]
      %v804 = vld [vmem:[%s3 + $0x678] sm:$0xff]
      %v805 = vld [vmem:[%s3 + $0x680] sm:$0xff]
      %v806 = vld [vmem:[%s3 + $0x688] sm:$0xff]
      %v807 = vld [vmem:[%s3 + $0x690] sm:$0xff]
      %v808 = vld [vmem:[%s3 + $0x698] sm:$0xff]
      %v809 = vld [vmem:[%s3 + $0x6a0] sm:$0xff]
      %v810 = vld [vmem:[%s3 + $0x6a8] sm:$0xff]
      %v811 = vld [vmem:[%s3 + $0x6b0] sm:$0xff]
      %v812 = vld [vmem:[%s3 + $0x6b8] sm:$0xff]
      %v813 = vld [vmem:[%s3 + $0x6c0] sm:$0xff]
      %v814 = vld [vmem:[%s3 + $0x6c8] sm:$0xff]
      %v815 = vld [vmem:[%s3 + $0x6d0] sm:$0xff]
      %v816 = vld [vmem:[%s3 + $0x6d8] sm:$0xff]
      %v817 = vld [vmem:[%s3 + $0x6e0] sm:$0xff]
      %v818 = vld [vmem:[%s3 + $0x6e8] sm:$0xff]
      %v819 = vld [vmem:[%s3 + $0x6f0] sm:$0xff]
      %v820 = vld [vmem:[%s3 + $0x6f8] sm:$0xff]
      %v821 = vld [vmem:[%s3 + $0x700] sm:$0xff]
      %v822 = vld [vmem:[%s3 + $0x708] sm:$0xff]
      %v823 = vld [vmem:[%s3 + $0x710] sm:$0xff]
      %v824 = vld [vmem:[%s3 + $0x718] sm:$0xff]
      %v825 = vld [vmem:[%s3 + $0x720] sm:$0xff]
      %v826 = vld [vmem:[%s3 + $0x728] sm:$0xff]
      %v827 = vld [vmem:[%s3 + $0x730] sm:$0xff]
      %v828 = vld [vmem:[%s3 + $0x738] sm:$0xff]
      %v829 = vld [vmem:[%s3 + $0x740] sm:$0xff]
      %v830 = vld [vmem:[%s3 + $0x748] sm:$0xff]
      %v831 = vld [vmem:[%s3 + $0x750] sm:$0xff]
      %v832 = vld [vmem:[%s3 + $0x758] sm:$0xff]
      %v833 = vld [vmem:[%s3 + $0x760] sm:$0xff]
      %v834 = vld [vmem:[%s3 + $0x768] sm:$0xff]
      %v835 = vld [vmem:[%s3 + $0x770] sm:$0xff]
      %v836 = vld [vmem:[%s3 + $0x778] sm:$0xff]
      %v837 = vld [vmem:[%s3 + $0x780] sm:$0xff]
      %v838 = vld [vmem:[%s3 + $0x788] sm:$0xff]
      %v839 = vld [vmem:[%s3 + $0x790] sm:$0xff]
      %v840 = vld [vmem:[%s3 + $0x798] sm:$0xff]
      %v841 = vld [vmem:[%s3 + $0x7a0] sm:$0xff]
      %v842 = vld [vmem:[%s3 + $0x7a8] sm:$0xff]
      %v843 = vld [vmem:[%s3 + $0x7b0] sm:$0xff]
      %v844 = vld [vmem:[%s3 + $0x7b8] sm:$0xff]
      %v845 = vld [vmem:[%s3 + $0x7c0] sm:$0xff]
      %v846 = vld [vmem:[%s3 + $0x7c8] sm:$0xff]
      %v847 = vld [vmem:[%s3 + $0x7d0] sm:$0xff]
      %v848 = vld [vmem:[%s3 + $0x7d8] sm:$0xff]
      %v849 = vld [vmem:[%s3 + $0x7e0] sm:$0xff]
      %v850 = vld [vmem:[%s3 + $0x7e8] sm:$0xff]
      %v851 = vld [vmem:[%s3 + $0x7f0] sm:$0xff]
      %v852 = vld [vmem:[%s3 + $0x7f8] sm:$0xff]
      %s853 = scalar_lea.vmem %s3, 2048
      %v854 = vld [vmem:[%s853] sm:$0xff]
      %v855 = vld [vmem:[%s853 + $0x8] sm:$0xff]
      %v856 = vld [vmem:[%s853 + $0x10] sm:$0xff]
      %v857 = vld [vmem:[%s853 + $0x18] sm:$0xff]
      %v858 = vld [vmem:[%s853 + $0x20] sm:$0xff]
      %v859 = vld [vmem:[%s853 + $0x28] sm:$0xff]
      %v860 = vld [vmem:[%s853 + $0x30] sm:$0xff]
      %v861 = vld [vmem:[%s853 + $0x38] sm:$0xff]
      %v862 = vld [vmem:[%s853 + $0x40] sm:$0xff]
      %v863 = vld [vmem:[%s853 + $0x48] sm:$0xff]
      %v864 = vld [vmem:[%s853 + $0x50] sm:$0xff]
      %v865 = vld [vmem:[%s853 + $0x58] sm:$0xff]
      %v866 = vld [vmem:[%s853 + $0x60] sm:$0xff]
      %v867 = vld [vmem:[%s853 + $0x68] sm:$0xff]
      %v868 = vld [vmem:[%s853 + $0x70] sm:$0xff]
      %v869 = vld [vmem:[%s853 + $0x78] sm:$0xff]
      %v870 = vld [vmem:[%s853 + $0x80] sm:$0xff]
      %v871 = vld [vmem:[%s853 + $0x88] sm:$0xff]
      %v872 = vld [vmem:[%s853 + $0x90] sm:$0xff]
      %v873 = vld [vmem:[%s853 + $0x98] sm:$0xff]
      %v874 = vld [vmem:[%s853 + $0xa0] sm:$0xff]
      %v875 = vld [vmem:[%s853 + $0xa8] sm:$0xff]
      %v876 = vld [vmem:[%s853 + $0xb0] sm:$0xff]
      %v877 = vld [vmem:[%s853 + $0xb8] sm:$0xff]
      %v878 = vld [vmem:[%s853 + $0xc0] sm:$0xff]
      %v879 = vld [vmem:[%s853 + $0xc8] sm:$0xff]
      %v880 = vld [vmem:[%s853 + $0xd0] sm:$0xff]
      %v881 = vld [vmem:[%s853 + $0xd8] sm:$0xff]
      %v882 = vld [vmem:[%s853 + $0xe0] sm:$0xff]
      %v883 = vld [vmem:[%s853 + $0xe8] sm:$0xff]
      %v884 = vld [vmem:[%s853 + $0xf0] sm:$0xff]
      %v885 = vld [vmem:[%s853 + $0xf8] sm:$0xff]
      %v886 = vld [vmem:[%s853 + $0x100] sm:$0xff]
      %v887 = vld [vmem:[%s853 + $0x108] sm:$0xff]
      %v888 = vld [vmem:[%s853 + $0x110] sm:$0xff]
      %v889 = vld [vmem:[%s853 + $0x118] sm:$0xff]
      %v890 = vld [vmem:[%s853 + $0x120] sm:$0xff]
      %v891 = vld [vmem:[%s853 + $0x128] sm:$0xff]
      %v892 = vld [vmem:[%s853 + $0x130] sm:$0xff]
      %v893 = vld [vmem:[%s853 + $0x138] sm:$0xff]
      %v894 = vld [vmem:[%s853 + $0x140] sm:$0xff]
      %v895 = vld [vmem:[%s853 + $0x148] sm:$0xff]
      %v896 = vld [vmem:[%s853 + $0x150] sm:$0xff]
      %v897 = vld [vmem:[%s853 + $0x158] sm:$0xff]
      %v898 = vld [vmem:[%s853 + $0x160] sm:$0xff]
      %v899 = vld [vmem:[%s853 + $0x168] sm:$0xff]
      %v900 = vld [vmem:[%s853 + $0x170] sm:$0xff]
      %v901 = vld [vmem:[%s853 + $0x178] sm:$0xff]
      %v902 = vld [vmem:[%s853 + $0x180] sm:$0xff]
      %v903 = vld [vmem:[%s853 + $0x188] sm:$0xff]
      %v904 = vld [vmem:[%s853 + $0x190] sm:$0xff]
      %v905 = vld [vmem:[%s853 + $0x198] sm:$0xff]
      %v906 = vld [vmem:[%s853 + $0x1a0] sm:$0xff]
      %v907 = vld [vmem:[%s853 + $0x1a8] sm:$0xff]
      %v908 = vld [vmem:[%s853 + $0x1b0] sm:$0xff]
      %v909 = vld [vmem:[%s853 + $0x1b8] sm:$0xff]
      %v910 = vld [vmem:[%s853 + $0x1c0] sm:$0xff]
      %v911 = vld [vmem:[%s853 + $0x1c8] sm:$0xff]
      %v912 = vld [vmem:[%s853 + $0x1d0] sm:$0xff]
      %v913 = vld [vmem:[%s853 + $0x1d8] sm:$0xff]
      %v914 = vld [vmem:[%s853 + $0x1e0] sm:$0xff]
      %v915 = vld [vmem:[%s853 + $0x1e8] sm:$0xff]
      %v916 = vld [vmem:[%s853 + $0x1f0] sm:$0xff]
      %v917 = vld [vmem:[%s853 + $0x1f8] sm:$0xff]
      %v918 = vld [vmem:[%s853 + $0x200] sm:$0xff]
      %v919 = vld [vmem:[%s853 + $0x208] sm:$0xff]
      %v920 = vld [vmem:[%s853 + $0x210] sm:$0xff]
      %v921 = vld [vmem:[%s853 + $0x218] sm:$0xff]
      %v922 = vld [vmem:[%s853 + $0x220] sm:$0xff]
      %v923 = vld [vmem:[%s853 + $0x228] sm:$0xff]
      %v924 = vld [vmem:[%s853 + $0x230] sm:$0xff]
      %v925 = vld [vmem:[%s853 + $0x238] sm:$0xff]
      %v926 = vld [vmem:[%s853 + $0x240] sm:$0xff]
      %v927 = vld [vmem:[%s853 + $0x248] sm:$0xff]
      %v928 = vld [vmem:[%s853 + $0x250] sm:$0xff]
      %v929 = vld [vmem:[%s853 + $0x258] sm:$0xff]
      %v930 = vld [vmem:[%s853 + $0x260] sm:$0xff]
      %v931 = vld [vmem:[%s853 + $0x268] sm:$0xff]
      %v932 = vld [vmem:[%s853 + $0x270] sm:$0xff]
      %v933 = vld [vmem:[%s853 + $0x278] sm:$0xff]
      %v934 = vld [vmem:[%s853 + $0x280] sm:$0xff]
      %v935 = vld [vmem:[%s853 + $0x288] sm:$0xff]
      %v936 = vld [vmem:[%s853 + $0x290] sm:$0xff]
      %v937 = vld [vmem:[%s853 + $0x298] sm:$0xff]
      %v938 = vld [vmem:[%s853 + $0x2a0] sm:$0xff]
      %v939 = vld [vmem:[%s853 + $0x2a8] sm:$0xff]
      %v940 = vld [vmem:[%s853 + $0x2b0] sm:$0xff]
      %v941 = vld [vmem:[%s853 + $0x2b8] sm:$0xff]
      %v942 = vld [vmem:[%s853 + $0x2c0] sm:$0xff]
      %v943 = vld [vmem:[%s853 + $0x2c8] sm:$0xff]
      %v944 = vld [vmem:[%s853 + $0x2d0] sm:$0xff]
      %v945 = vld [vmem:[%s853 + $0x2d8] sm:$0xff]
      %v946 = vld [vmem:[%s853 + $0x2e0] sm:$0xff]
      %v947 = vld [vmem:[%s853 + $0x2e8] sm:$0xff]
      %v948 = vld [vmem:[%s853 + $0x2f0] sm:$0xff]
      %v949 = vld [vmem:[%s853 + $0x2f8] sm:$0xff]
      %v950 = vld [vmem:[%s853 + $0x300] sm:$0xff]
      %v951 = vld [vmem:[%s853 + $0x308] sm:$0xff]
      %v952 = vld [vmem:[%s853 + $0x310] sm:$0xff]
      %v953 = vld [vmem:[%s853 + $0x318] sm:$0xff]
      %v954 = vld [vmem:[%s853 + $0x320] sm:$0xff]
      %v955 = vld [vmem:[%s853 + $0x328] sm:$0xff]
      %v956 = vld [vmem:[%s853 + $0x330] sm:$0xff]
      %v957 = vld [vmem:[%s853 + $0x338] sm:$0xff]
      %v958 = vld [vmem:[%s853 + $0x340] sm:$0xff]
      %v959 = vld [vmem:[%s853 + $0x348] sm:$0xff]
      %v960 = vld [vmem:[%s853 + $0x350] sm:$0xff]
      %v961 = vld [vmem:[%s853 + $0x358] sm:$0xff]
      %v962 = vld [vmem:[%s853 + $0x360] sm:$0xff]
      %v963 = vld [vmem:[%s853 + $0x368] sm:$0xff]
      %v964 = vld [vmem:[%s853 + $0x370] sm:$0xff]
      %v965 = vld [vmem:[%s853 + $0x378] sm:$0xff]
      %v966 = vld [vmem:[%s853 + $0x380] sm:$0xff]
      %v967 = vld [vmem:[%s853 + $0x388] sm:$0xff]
      %v968 = vld [vmem:[%s853 + $0x390] sm:$0xff]
      %v969 = vld [vmem:[%s853 + $0x398] sm:$0xff]
      %v970 = vld [vmem:[%s853 + $0x3a0] sm:$0xff]
      %v971 = vld [vmem:[%s853 + $0x3a8] sm:$0xff]
      %v972 = vld [vmem:[%s853 + $0x3b0] sm:$0xff]
      %v973 = vld [vmem:[%s853 + $0x3b8] sm:$0xff]
      %v974 = vld [vmem:[%s853 + $0x3c0] sm:$0xff]
      %v975 = vld [vmem:[%s853 + $0x3c8] sm:$0xff]
      %v976 = vld [vmem:[%s853 + $0x3d0] sm:$0xff]
      %v977 = vld [vmem:[%s853 + $0x3d8] sm:$0xff]
      %v978 = vld [vmem:[%s853 + $0x3e0] sm:$0xff]
      %v979 = vld [vmem:[%s853 + $0x3e8] sm:$0xff]
      %v980 = vld [vmem:[%s853 + $0x3f0] sm:$0xff]
      %v981 = vld [vmem:[%s853 + $0x3f8] sm:$0xff]
      %v982 = vld [vmem:[%s853 + $0x400] sm:$0xff]
      %v983 = vld [vmem:[%s853 + $0x408] sm:$0xff]
      %v984 = vld [vmem:[%s853 + $0x410] sm:$0xff]
      %v985 = vld [vmem:[%s853 + $0x418] sm:$0xff]
      %v986 = vld [vmem:[%s853 + $0x420] sm:$0xff]
      %v987 = vld [vmem:[%s853 + $0x428] sm:$0xff]
      %v988 = vld [vmem:[%s853 + $0x430] sm:$0xff]
      %v989 = vld [vmem:[%s853 + $0x438] sm:$0xff]
      %v990 = vld [vmem:[%s853 + $0x440] sm:$0xff]
      %v991 = vld [vmem:[%s853 + $0x448] sm:$0xff]
      %v992 = vld [vmem:[%s853 + $0x450] sm:$0xff]
      %v993 = vld [vmem:[%s853 + $0x458] sm:$0xff]
      %v994 = vld [vmem:[%s853 + $0x460] sm:$0xff]
      %v995 = vld [vmem:[%s853 + $0x468] sm:$0xff]
      %v996 = vld [vmem:[%s853 + $0x470] sm:$0xff]
      %v997 = vld [vmem:[%s853 + $0x478] sm:$0xff]
      %v998 = vld [vmem:[%s853 + $0x480] sm:$0xff]
      %v999 = vld [vmem:[%s853 + $0x488] sm:$0xff]
      %v1000 = vld [vmem:[%s853 + $0x490] sm:$0xff]
      %v1001 = vld [vmem:[%s853 + $0x498] sm:$0xff]
      %v1002 = vld [vmem:[%s853 + $0x4a0] sm:$0xff]
      %v1003 = vld [vmem:[%s853 + $0x4a8] sm:$0xff]
      %v1004 = vld [vmem:[%s853 + $0x4b0] sm:$0xff]
      %v1005 = vld [vmem:[%s853 + $0x4b8] sm:$0xff]
      %v1006 = vld [vmem:[%s853 + $0x4c0] sm:$0xff]
      %v1007 = vld [vmem:[%s853 + $0x4c8] sm:$0xff]
      %v1008 = vld [vmem:[%s853 + $0x4d0] sm:$0xff]
      %v1009 = vld [vmem:[%s853 + $0x4d8] sm:$0xff]
      %v1010 = vld [vmem:[%s853 + $0x4e0] sm:$0xff]
      %v1011 = vld [vmem:[%s853 + $0x4e8] sm:$0xff]
      %v1012 = vld [vmem:[%s853 + $0x4f0] sm:$0xff]
      %v1013 = vld [vmem:[%s853 + $0x4f8] sm:$0xff]
      %v1014 = vld [vmem:[%s853 + $0x500] sm:$0xff]
      %v1015 = vld [vmem:[%s853 + $0x508] sm:$0xff]
      %v1016 = vld [vmem:[%s853 + $0x510] sm:$0xff]
      %v1017 = vld [vmem:[%s853 + $0x518] sm:$0xff]
      %v1018 = vld [vmem:[%s853 + $0x520] sm:$0xff]
      %v1019 = vld [vmem:[%s853 + $0x528] sm:$0xff]
      %v1020 = vld [vmem:[%s853 + $0x530] sm:$0xff]
      %v1021 = vld [vmem:[%s853 + $0x538] sm:$0xff]
      %v1022 = vld [vmem:[%s853 + $0x540] sm:$0xff]
      %v1023 = vld [vmem:[%s853 + $0x548] sm:$0xff]
      %v1024 = vld [vmem:[%s853 + $0x550] sm:$0xff]
      %v1025 = vld [vmem:[%s853 + $0x558] sm:$0xff]
      %v1026 = vld [vmem:[%s853 + $0x560] sm:$0xff]
      %v1027 = vld [vmem:[%s853 + $0x568] sm:$0xff]
      %v1028 = vld [vmem:[%s853 + $0x570] sm:$0xff]
      %v1029 = vld [vmem:[%s853 + $0x578] sm:$0xff]
      %v1030 = vld [vmem:[%s853 + $0x580] sm:$0xff]
      %v1031 = vld [vmem:[%s853 + $0x588] sm:$0xff]
      %v1032 = vld [vmem:[%s853 + $0x590] sm:$0xff]
      %v1033 = vld [vmem:[%s853 + $0x598] sm:$0xff]
      %v1034 = vld [vmem:[%s853 + $0x5a0] sm:$0xff]
      %v1035 = vld [vmem:[%s853 + $0x5a8] sm:$0xff]
      %v1036 = vld [vmem:[%s853 + $0x5b0] sm:$0xff]
      %v1037 = vld [vmem:[%s853 + $0x5b8] sm:$0xff]
      %v1038 = vld [vmem:[%s853 + $0x5c0] sm:$0xff]
      %v1039 = vld [vmem:[%s853 + $0x5c8] sm:$0xff]
      %v1040 = vld [vmem:[%s853 + $0x5d0] sm:$0xff]
      %v1041 = vld [vmem:[%s853 + $0x5d8] sm:$0xff]
      %v1042 = vld [vmem:[%s853 + $0x5e0] sm:$0xff]
      %v1043 = vld [vmem:[%s853 + $0x5e8] sm:$0xff]
      %v1044 = vld [vmem:[%s853 + $0x5f0] sm:$0xff]
      %v1045 = vld [vmem:[%s853 + $0x5f8] sm:$0xff]
      %v1046 = vld [vmem:[%s853 + $0x600] sm:$0xff]
      %v1047 = vld [vmem:[%s853 + $0x608] sm:$0xff]
      %v1048 = vld [vmem:[%s853 + $0x610] sm:$0xff]
      %v1049 = vld [vmem:[%s853 + $0x618] sm:$0xff]
      %v1050 = vld [vmem:[%s853 + $0x620] sm:$0xff]
      %v1051 = vld [vmem:[%s853 + $0x628] sm:$0xff]
      %v1052 = vld [vmem:[%s853 + $0x630] sm:$0xff]
      %v1053 = vld [vmem:[%s853 + $0x638] sm:$0xff]
      %v1054 = vld [vmem:[%s853 + $0x640] sm:$0xff]
      %v1055 = vld [vmem:[%s853 + $0x648] sm:$0xff]
      %v1056 = vld [vmem:[%s853 + $0x650] sm:$0xff]
      %v1057 = vld [vmem:[%s853 + $0x658] sm:$0xff]
      %v1058 = vld [vmem:[%s853 + $0x660] sm:$0xff]
      %v1059 = vld [vmem:[%s853 + $0x668] sm:$0xff]
      %v1060 = vld [vmem:[%s853 + $0x670] sm:$0xff]
      %v1061 = vld [vmem:[%s853 + $0x678] sm:$0xff]
      %v1062 = vld [vmem:[%s853 + $0x680] sm:$0xff]
      %v1063 = vld [vmem:[%s853 + $0x688] sm:$0xff]
      %v1064 = vld [vmem:[%s853 + $0x690] sm:$0xff]
      %v1065 = vld [vmem:[%s853 + $0x698] sm:$0xff]
      %v1066 = vld [vmem:[%s853 + $0x6a0] sm:$0xff]
      %v1067 = vld [vmem:[%s853 + $0x6a8] sm:$0xff]
      %v1068 = vld [vmem:[%s853 + $0x6b0] sm:$0xff]
      %v1069 = vld [vmem:[%s853 + $0x6b8] sm:$0xff]
      %v1070 = vld [vmem:[%s853 + $0x6c0] sm:$0xff]
      %v1071 = vld [vmem:[%s853 + $0x6c8] sm:$0xff]
      %v1072 = vld [vmem:[%s853 + $0x6d0] sm:$0xff]
      %v1073 = vld [vmem:[%s853 + $0x6d8] sm:$0xff]
      %v1074 = vld [vmem:[%s853 + $0x6e0] sm:$0xff]
      %v1075 = vld [vmem:[%s853 + $0x6e8] sm:$0xff]
      %v1076 = vld [vmem:[%s853 + $0x6f0] sm:$0xff]
      %v1077 = vld [vmem:[%s853 + $0x6f8] sm:$0xff]
      %v1078 = vld [vmem:[%s853 + $0x700] sm:$0xff]
      %v1079 = vld [vmem:[%s853 + $0x708] sm:$0xff]
      %v1080 = vld [vmem:[%s853 + $0x710] sm:$0xff]
      %v1081 = vld [vmem:[%s853 + $0x718] sm:$0xff]
      %v1082 = vld [vmem:[%s853 + $0x720] sm:$0xff]
      %v1083 = vld [vmem:[%s853 + $0x728] sm:$0xff]
      %v1084 = vld [vmem:[%s853 + $0x730] sm:$0xff]
      %v1085 = vld [vmem:[%s853 + $0x738] sm:$0xff]
      %v1086 = vld [vmem:[%s853 + $0x740] sm:$0xff]
      %v1087 = vld [vmem:[%s853 + $0x748] sm:$0xff]
      %v1088 = vld [vmem:[%s853 + $0x750] sm:$0xff]
      %v1089 = vld [vmem:[%s853 + $0x758] sm:$0xff]
      %v1090 = vld [vmem:[%s853 + $0x760] sm:$0xff]
      %v1091 = vld [vmem:[%s853 + $0x768] sm:$0xff]
      %v1092 = vld [vmem:[%s853 + $0x770] sm:$0xff]
      %v1093 = vld [vmem:[%s853 + $0x778] sm:$0xff]
      %v1094 = vld [vmem:[%s853 + $0x780] sm:$0xff]
      %v1095 = vld [vmem:[%s853 + $0x788] sm:$0xff]
      %v1096 = vld [vmem:[%s853 + $0x790] sm:$0xff]
      %v1097 = vld [vmem:[%s853 + $0x798] sm:$0xff]
      %v1098 = vld [vmem:[%s853 + $0x7a0] sm:$0xff]
      %v1099 = vld [vmem:[%s853 + $0x7a8] sm:$0xff]
      %v1100 = vld [vmem:[%s853 + $0x7b0] sm:$0xff]
      %v1101 = vld [vmem:[%s853 + $0x7b8] sm:$0xff]
      %v1102 = vld [vmem:[%s853 + $0x7c0] sm:$0xff]
      %v1103 = vld [vmem:[%s853 + $0x7c8] sm:$0xff]
      %v1104 = vld [vmem:[%s853 + $0x7d0] sm:$0xff]
      %v1105 = vld [vmem:[%s853 + $0x7d8] sm:$0xff]
      %v1106 = vld [vmem:[%s853 + $0x7e0] sm:$0xff]
      %v1107 = vld [vmem:[%s853 + $0x7e8] sm:$0xff]
      %v1108 = vld [vmem:[%s853 + $0x7f0] sm:$0xff]
      %v1109 = vld [vmem:[%s853 + $0x7f8] sm:$0xff]
      %1110 = vmatpush.msra.mxu0 %v914
      %1111 = vmatpush.msra.mxu0 %v910
      %1112 = vmatpush.msra.mxu0 %v906
      %1113 = vmatpush.msra.mxu0 %v902
      %1114 = vmatpush.msra.mxu0 %v898
      %1115 = vmatpush.msra.mxu0 %v894
      %1116 = vmatpush.msra.mxu0 %v890
      %1117 = vmatpush.msra.mxu0 %v886
      %1118 = vmatpush.msra.mxu0 %v882
      %1119 = vmatpush.msra.mxu0 %v878
      %1120 = vmatpush.msra.mxu0 %v874
      %1121 = vmatpush.msra.mxu0 %v870
      %1122 = vmatpush.msra.mxu0 %v866
      %1123 = vmatpush.msra.mxu0 %v862
      %1124 = vmatpush.msra.mxu0 %v858
      %1125 = vmatpush.msra.mxu0 %v854
      %1126 = vmatmul.f32.gmra.mxu0 %v387
      %v1127 = vpop.f32.mrf.mxu0
      %v1128 = vadd.f32 0.0, %v1127
      %1129 = vmatmul.f32.gmra.mxu0 %v391
      %v1130 = vpop.f32.mrf.mxu0
      %v1131 = vadd.f32 0.0, %v1130
      %1132 = vdwg.mxu0
      %1133 = vmatpush.msra.mxu0 %v978
      %1134 = vmatpush.msra.mxu0 %v974
      %1135 = vmatpush.msra.mxu0 %v970
      %1136 = vmatpush.msra.mxu0 %v966
      %1137 = vmatpush.msra.mxu0 %v962
      %1138 = vmatpush.msra.mxu0 %v958
      %1139 = vmatpush.msra.mxu0 %v954
      %1140 = vmatpush.msra.mxu0 %v950
      %1141 = vmatpush.msra.mxu0 %v946
      %1142 = vmatpush.msra.mxu0 %v942
      %1143 = vmatpush.msra.mxu0 %v938
      %1144 = vmatpush.msra.mxu0 %v934
      %1145 = vmatpush.msra.mxu0 %v930
      %1146 = vmatpush.msra.mxu0 %v926
      %1147 = vmatpush.msra.mxu0 %v922
      %1148 = vmatpush.msra.mxu0 %v918
      %1149 = vmatmul.f32.gmra.mxu0 %v388
      %v1150 = vpop.f32.mrf.mxu0
      %v1151 = vadd.f32 %v1128, %v1150
      %1152 = vmatmul.f32.gmra.mxu0 %v392
      %v1153 = vpop.f32.mrf.mxu0
      %v1154 = vadd.f32 %v1131, %v1153
      %1155 = vdwg.mxu0
      %1156 = vmatpush.msra.mxu0 %v1042
      %1157 = vmatpush.msra.mxu0 %v1038
      %1158 = vmatpush.msra.mxu0 %v1034
      %1159 = vmatpush.msra.mxu0 %v1030
      %1160 = vmatpush.msra.mxu0 %v1026
      %1161 = vmatpush.msra.mxu0 %v1022
      %1162 = vmatpush.msra.mxu0 %v1018
      %1163 = vmatpush.msra.mxu0 %v1014
      %1164 = vmatpush.msra.mxu0 %v1010
      %1165 = vmatpush.msra.mxu0 %v1006
      %1166 = vmatpush.msra.mxu0 %v1002
      %1167 = vmatpush.msra.mxu0 %v998
      %1168 = vmatpush.msra.mxu0 %v994
      %1169 = vmatpush.msra.mxu0 %v990
      %1170 = vmatpush.msra.mxu0 %v986
      %1171 = vmatpush.msra.mxu0 %v982
      %1172 = vmatmul.f32.gmra.mxu0 %v389
      %v1173 = vpop.f32.mrf.mxu0
      %v1174 = vadd.f32 %v1151, %v1173
      %1175 = vmatmul.f32.gmra.mxu0 %v393
      %v1176 = vpop.f32.mrf.mxu0
      %v1177 = vadd.f32 %v1154, %v1176
      %1178 = vdwg.mxu0
      %1179 = vmatpush.msra.mxu0 %v1106
      %1180 = vmatpush.msra.mxu0 %v1102
      %1181 = vmatpush.msra.mxu0 %v1098
      %1182 = vmatpush.msra.mxu0 %v1094
      %1183 = vmatpush.msra.mxu0 %v1090
      %1184 = vmatpush.msra.mxu0 %v1086
      %1185 = vmatpush.msra.mxu0 %v1082
      %1186 = vmatpush.msra.mxu0 %v1078
      %1187 = vmatpush.msra.mxu0 %v1074
      %1188 = vmatpush.msra.mxu0 %v1070
      %1189 = vmatpush.msra.mxu0 %v1066
      %1190 = vmatpush.msra.mxu0 %v1062
      %1191 = vmatpush.msra.mxu0 %v1058
      %1192 = vmatpush.msra.mxu0 %v1054
      %1193 = vmatpush.msra.mxu0 %v1050
      %1194 = vmatpush.msra.mxu0 %v1046
      %1195 = vmatmul.f32.gmra.mxu0 %v390
      %v1196 = vpop.f32.mrf.mxu0
      %v1197 = vadd.f32 %v1174, %v1196
      %1198 = vmatmul.f32.gmra.mxu0 %v394
      %v1199 = vpop.f32.mrf.mxu0
      %v1200 = vadd.f32 %v1177, %v1199
      %1201 = vdwg.mxu0
      %1202 = vmatpush.msra.mxu0 %v915
      %1203 = vmatpush.msra.mxu0 %v911
      %1204 = vmatpush.msra.mxu0 %v907
      %1205 = vmatpush.msra.mxu0 %v903
      %1206 = vmatpush.msra.mxu0 %v899
      %1207 = vmatpush.msra.mxu0 %v895
      %1208 = vmatpush.msra.mxu0 %v891
      %1209 = vmatpush.msra.mxu0 %v887
      %1210 = vmatpush.msra.mxu0 %v883
      %1211 = vmatpush.msra.mxu0 %v879
      %1212 = vmatpush.msra.mxu0 %v875
      %1213 = vmatpush.msra.mxu0 %v871
      %1214 = vmatpush.msra.mxu0 %v867
      %1215 = vmatpush.msra.mxu0 %v863
      %1216 = vmatpush.msra.mxu0 %v859
      %1217 = vmatpush.msra.mxu0 %v855
      %1218 = vmatmul.f32.gmra.mxu0 %v387
      %v1219 = vpop.f32.mrf.mxu0
      %v1220 = vadd.f32 0.0, %v1219
      %1221 = vmatmul.f32.gmra.mxu0 %v391
      %v1222 = vpop.f32.mrf.mxu0
      %v1223 = vadd.f32 0.0, %v1222
      %1224 = vdwg.mxu0
      %1225 = vmatpush.msra.mxu0 %v979
      %1226 = vmatpush.msra.mxu0 %v975
      %1227 = vmatpush.msra.mxu0 %v971
      %1228 = vmatpush.msra.mxu0 %v967
      %1229 = vmatpush.msra.mxu0 %v963
      %1230 = vmatpush.msra.mxu0 %v959
      %1231 = vmatpush.msra.mxu0 %v955
      %1232 = vmatpush.msra.mxu0 %v951
      %1233 = vmatpush.msra.mxu0 %v947
      %1234 = vmatpush.msra.mxu0 %v943
      %1235 = vmatpush.msra.mxu0 %v939
      %1236 = vmatpush.msra.mxu0 %v935
      %1237 = vmatpush.msra.mxu0 %v931
      %1238 = vmatpush.msra.mxu0 %v927
      %1239 = vmatpush.msra.mxu0 %v923
      %1240 = vmatpush.msra.mxu0 %v919
      %1241 = vmatmul.f32.gmra.mxu0 %v388
      %v1242 = vpop.f32.mrf.mxu0
      %v1243 = vadd.f32 %v1220, %v1242
      %1244 = vmatmul.f32.gmra.mxu0 %v392
      %v1245 = vpop.f32.mrf.mxu0
      %v1246 = vadd.f32 %v1223, %v1245
      %1247 = vdwg.mxu0
      %1248 = vmatpush.msra.mxu0 %v1043
      %1249 = vmatpush.msra.mxu0 %v1039
      %1250 = vmatpush.msra.mxu0 %v1035
      %1251 = vmatpush.msra.mxu0 %v1031
      %1252 = vmatpush.msra.mxu0 %v1027
      %1253 = vmatpush.msra.mxu0 %v1023
      %1254 = vmatpush.msra.mxu0 %v1019
      %1255 = vmatpush.msra.mxu0 %v1015
      %1256 = vmatpush.msra.mxu0 %v1011
      %1257 = vmatpush.msra.mxu0 %v1007
      %1258 = vmatpush.msra.mxu0 %v1003
      %1259 = vmatpush.msra.mxu0 %v999
      %1260 = vmatpush.msra.mxu0 %v995
      %1261 = vmatpush.msra.mxu0 %v991
      %1262 = vmatpush.msra.mxu0 %v987
      %1263 = vmatpush.msra.mxu0 %v983
      %1264 = vmatmul.f32.gmra.mxu0 %v389
      %v1265 = vpop.f32.mrf.mxu0
      %v1266 = vadd.f32 %v1243, %v1265
      %1267 = vmatmul.f32.gmra.mxu0 %v393
      %v1268 = vpop.f32.mrf.mxu0
      %v1269 = vadd.f32 %v1246, %v1268
      %1270 = vdwg.mxu0
      %1271 = vmatpush.msra.mxu0 %v1107
      %1272 = vmatpush.msra.mxu0 %v1103
      %1273 = vmatpush.msra.mxu0 %v1099
      %1274 = vmatpush.msra.mxu0 %v1095
      %1275 = vmatpush.msra.mxu0 %v1091
      %1276 = vmatpush.msra.mxu0 %v1087
      %1277 = vmatpush.msra.mxu0 %v1083
      %1278 = vmatpush.msra.mxu0 %v1079
      %1279 = vmatpush.msra.mxu0 %v1075
      %1280 = vmatpush.msra.mxu0 %v1071
      %1281 = vmatpush.msra.mxu0 %v1067
      %1282 = vmatpush.msra.mxu0 %v1063
      %1283 = vmatpush.msra.mxu0 %v1059
      %1284 = vmatpush.msra.mxu0 %v1055
      %1285 = vmatpush.msra.mxu0 %v1051
      %1286 = vmatpush.msra.mxu0 %v1047
      %1287 = vmatmul.f32.gmra.mxu0 %v390
      %v1288 = vpop.f32.mrf.mxu0
      %v1289 = vadd.f32 %v1266, %v1288
      %1290 = vmatmul.f32.gmra.mxu0 %v394
      %v1291 = vpop.f32.mrf.mxu0
      %v1292 = vadd.f32 %v1269, %v1291
      %1293 = vdwg.mxu0
      %1294 = vmatpush.msra.mxu0 %v916
      %1295 = vmatpush.msra.mxu0 %v912
      %1296 = vmatpush.msra.mxu0 %v908
      %1297 = vmatpush.msra.mxu0 %v904
      %1298 = vmatpush.msra.mxu0 %v900
      %1299 = vmatpush.msra.mxu0 %v896
      %1300 = vmatpush.msra.mxu0 %v892
      %1301 = vmatpush.msra.mxu0 %v888
      %1302 = vmatpush.msra.mxu0 %v884
      %1303 = vmatpush.msra.mxu0 %v880
      %1304 = vmatpush.msra.mxu0 %v876
      %1305 = vmatpush.msra.mxu0 %v872
      %1306 = vmatpush.msra.mxu0 %v868
      %1307 = vmatpush.msra.mxu0 %v864
      %1308 = vmatpush.msra.mxu0 %v860
      %1309 = vmatpush.msra.mxu0 %v856
      %1310 = vmatmul.f32.gmra.mxu0 %v387
      %v1311 = vpop.f32.mrf.mxu0
      %v1312 = vadd.f32 0.0, %v1311
      %1313 = vmatmul.f32.gmra.mxu0 %v391
      %v1314 = vpop.f32.mrf.mxu0
      %v1315 = vadd.f32 0.0, %v1314
      %1316 = vdwg.mxu0
      %1317 = vmatpush.msra.mxu0 %v980
      %1318 = vmatpush.msra.mxu0 %v976
      %1319 = vmatpush.msra.mxu0 %v972
      %1320 = vmatpush.msra.mxu0 %v968
      %1321 = vmatpush.msra.mxu0 %v964
      %1322 = vmatpush.msra.mxu0 %v960
      %1323 = vmatpush.msra.mxu0 %v956
      %1324 = vmatpush.msra.mxu0 %v952
      %1325 = vmatpush.msra.mxu0 %v948
      %1326 = vmatpush.msra.mxu0 %v944
      %1327 = vmatpush.msra.mxu0 %v940
      %1328 = vmatpush.msra.mxu0 %v936
      %1329 = vmatpush.msra.mxu0 %v932
      %1330 = vmatpush.msra.mxu0 %v928
      %1331 = vmatpush.msra.mxu0 %v924
      %1332 = vmatpush.msra.mxu0 %v920
      %1333 = vmatmul.f32.gmra.mxu0 %v388
      %v1334 = vpop.f32.mrf.mxu0
      %v1335 = vadd.f32 %v1312, %v1334
      %1336 = vmatmul.f32.gmra.mxu0 %v392
      %v1337 = vpop.f32.mrf.mxu0
      %v1338 = vadd.f32 %v1315, %v1337
      %1339 = vdwg.mxu0
      %1340 = vmatpush.msra.mxu0 %v1044
      %1341 = vmatpush.msra.mxu0 %v1040
      %1342 = vmatpush.msra.mxu0 %v1036
      %1343 = vmatpush.msra.mxu0 %v1032
      %1344 = vmatpush.msra.mxu0 %v1028
      %1345 = vmatpush.msra.mxu0 %v1024
      %1346 = vmatpush.msra.mxu0 %v1020
      %1347 = vmatpush.msra.mxu0 %v1016
      %1348 = vmatpush.msra.mxu0 %v1012
      %1349 = vmatpush.msra.mxu0 %v1008
      %1350 = vmatpush.msra.mxu0 %v1004
      %1351 = vmatpush.msra.mxu0 %v1000
      %1352 = vmatpush.msra.mxu0 %v996
      %1353 = vmatpush.msra.mxu0 %v992
      %1354 = vmatpush.msra.mxu0 %v988
      %1355 = vmatpush.msra.mxu0 %v984
      %1356 = vmatmul.f32.gmra.mxu0 %v389
      %v1357 = vpop.f32.mrf.mxu0
      %v1358 = vadd.f32 %v1335, %v1357
      %1359 = vmatmul.f32.gmra.mxu0 %v393
      %v1360 = vpop.f32.mrf.mxu0
      %v1361 = vadd.f32 %v1338, %v1360
      %1362 = vdwg.mxu0
      %1363 = vmatpush.msra.mxu0 %v1108
      %1364 = vmatpush.msra.mxu0 %v1104
      %1365 = vmatpush.msra.mxu0 %v1100
      %1366 = vmatpush.msra.mxu0 %v1096
      %1367 = vmatpush.msra.mxu0 %v1092
      %1368 = vmatpush.msra.mxu0 %v1088
      %1369 = vmatpush.msra.mxu0 %v1084
      %1370 = vmatpush.msra.mxu0 %v1080
      %1371 = vmatpush.msra.mxu0 %v1076
      %1372 = vmatpush.msra.mxu0 %v1072
      %1373 = vmatpush.msra.mxu0 %v1068
      %1374 = vmatpush.msra.mxu0 %v1064
      %1375 = vmatpush.msra.mxu0 %v1060
      %1376 = vmatpush.msra.mxu0 %v1056
      %1377 = vmatpush.msra.mxu0 %v1052
      %1378 = vmatpush.msra.mxu0 %v1048
      %1379 = vmatmul.f32.gmra.mxu0 %v390
      %v1380 = vpop.f32.mrf.mxu0
      %v1381 = vadd.f32 %v1358, %v1380
      %1382 = vmatmul.f32.gmra.mxu0 %v394
      %v1383 = vpop.f32.mrf.mxu0
      %v1384 = vadd.f32 %v1361, %v1383
      %1385 = vdwg.mxu0
      %1386 = vmatpush.msra.mxu0 %v917
      %1387 = vmatpush.msra.mxu0 %v913
      %1388 = vmatpush.msra.mxu0 %v909
      %1389 = vmatpush.msra.mxu0 %v905
      %1390 = vmatpush.msra.mxu0 %v901
      %1391 = vmatpush.msra.mxu0 %v897
      %1392 = vmatpush.msra.mxu0 %v893
      %1393 = vmatpush.msra.mxu0 %v889
      %1394 = vmatpush.msra.mxu0 %v885
      %1395 = vmatpush.msra.mxu0 %v881
      %1396 = vmatpush.msra.mxu0 %v877
      %1397 = vmatpush.msra.mxu0 %v873
      %1398 = vmatpush.msra.mxu0 %v869
      %1399 = vmatpush.msra.mxu0 %v865
      %1400 = vmatpush.msra.mxu0 %v861
      %1401 = vmatpush.msra.mxu0 %v857
      %1402 = vmatmul.f32.gmra.mxu0 %v387
      %v1403 = vpop.f32.mrf.mxu0
      %v1404 = vadd.f32 0.0, %v1403
      %1405 = vmatmul.f32.gmra.mxu0 %v391
      %v1406 = vpop.f32.mrf.mxu0
      %v1407 = vadd.f32 0.0, %v1406
      %1408 = vdwg.mxu0
      %1409 = vmatpush.msra.mxu0 %v981
      %1410 = vmatpush.msra.mxu0 %v977
      %1411 = vmatpush.msra.mxu0 %v973
      %1412 = vmatpush.msra.mxu0 %v969
      %1413 = vmatpush.msra.mxu0 %v965
      %1414 = vmatpush.msra.mxu0 %v961
      %1415 = vmatpush.msra.mxu0 %v957
      %1416 = vmatpush.msra.mxu0 %v953
      %1417 = vmatpush.msra.mxu0 %v949
      %1418 = vmatpush.msra.mxu0 %v945
      %1419 = vmatpush.msra.mxu0 %v941
      %1420 = vmatpush.msra.mxu0 %v937
      %1421 = vmatpush.msra.mxu0 %v933
      %1422 = vmatpush.msra.mxu0 %v929
      %1423 = vmatpush.msra.mxu0 %v925
      %1424 = vmatpush.msra.mxu0 %v921
      %1425 = vmatmul.f32.gmra.mxu0 %v388
      %v1426 = vpop.f32.mrf.mxu0
      %v1427 = vadd.f32 %v1404, %v1426
      %1428 = vmatmul.f32.gmra.mxu0 %v392
      %v1429 = vpop.f32.mrf.mxu0
      %v1430 = vadd.f32 %v1407, %v1429
      %1431 = vdwg.mxu0
      %1432 = vmatpush.msra.mxu0 %v1045
      %1433 = vmatpush.msra.mxu0 %v1041
      %1434 = vmatpush.msra.mxu0 %v1037
      %1435 = vmatpush.msra.mxu0 %v1033
      %1436 = vmatpush.msra.mxu0 %v1029
      %1437 = vmatpush.msra.mxu0 %v1025
      %1438 = vmatpush.msra.mxu0 %v1021
      %1439 = vmatpush.msra.mxu0 %v1017
      %1440 = vmatpush.msra.mxu0 %v1013
      %1441 = vmatpush.msra.mxu0 %v1009
      %1442 = vmatpush.msra.mxu0 %v1005
      %1443 = vmatpush.msra.mxu0 %v1001
      %1444 = vmatpush.msra.mxu0 %v997
      %1445 = vmatpush.msra.mxu0 %v993
      %1446 = vmatpush.msra.mxu0 %v989
      %1447 = vmatpush.msra.mxu0 %v985
      %1448 = vmatmul.f32.gmra.mxu0 %v389
      %v1449 = vpop.f32.mrf.mxu0
      %v1450 = vadd.f32 %v1427, %v1449
      %1451 = vmatmul.f32.gmra.mxu0 %v393
      %v1452 = vpop.f32.mrf.mxu0
      %v1453 = vadd.f32 %v1430, %v1452
      %1454 = vdwg.mxu0
      %1455 = vmatpush.msra.mxu0 %v1109
      %1456 = vmatpush.msra.mxu0 %v1105
      %1457 = vmatpush.msra.mxu0 %v1101
      %1458 = vmatpush.msra.mxu0 %v1097
      %1459 = vmatpush.msra.mxu0 %v1093
      %1460 = vmatpush.msra.mxu0 %v1089
      %1461 = vmatpush.msra.mxu0 %v1085
      %1462 = vmatpush.msra.mxu0 %v1081
      %1463 = vmatpush.msra.mxu0 %v1077
      %1464 = vmatpush.msra.mxu0 %v1073
      %1465 = vmatpush.msra.mxu0 %v1069
      %1466 = vmatpush.msra.mxu0 %v1065
      %1467 = vmatpush.msra.mxu0 %v1061
      %1468 = vmatpush.msra.mxu0 %v1057
      %1469 = vmatpush.msra.mxu0 %v1053
      %1470 = vmatpush.msra.mxu0 %v1049
      %1471 = vmatmul.f32.gmra.mxu0 %v390
      %v1472 = vpop.f32.mrf.mxu0
      %v1473 = vadd.f32 %v1450, %v1472
      %1474 = vmatmul.f32.gmra.mxu0 %v394
      %v1475 = vpop.f32.mrf.mxu0
      %v1476 = vadd.f32 %v1453, %v1475
      %1477 = vdwg.mxu0
      %1478 = vmatpush.msra.mxu0 %v657
      %1479 = vmatpush.msra.mxu0 %v653
      %1480 = vmatpush.msra.mxu0 %v649
      %1481 = vmatpush.msra.mxu0 %v645
      %1482 = vmatpush.msra.mxu0 %v641
      %1483 = vmatpush.msra.mxu0 %v637
      %1484 = vmatpush.msra.mxu0 %v633
      %1485 = vmatpush.msra.mxu0 %v629
      %1486 = vmatpush.msra.mxu0 %v625
      %1487 = vmatpush.msra.mxu0 %v621
      %1488 = vmatpush.msra.mxu0 %v617
      %1489 = vmatpush.msra.mxu0 %v613
      %1490 = vmatpush.msra.mxu0 %v609
      %1491 = vmatpush.msra.mxu0 %v605
      %1492 = vmatpush.msra.mxu0 %v601
      %1493 = vmatpush.msra.mxu0 %v597
      %1494 = vmatmul.f32.gmra.mxu0 %v422
      %v1495 = vpop.f32.mrf.mxu0
      %v1496 = vadd.f32 %v1197, %v1495
      %1497 = vmatmul.f32.gmra.mxu0 %v425
      %v1498 = vpop.f32.mrf.mxu0
      %v1499 = vadd.f32 %v1200, %v1498
      %1500 = vdwg.mxu0
      %1501 = vmatpush.msra.mxu0 %v721
      %1502 = vmatpush.msra.mxu0 %v717
      %1503 = vmatpush.msra.mxu0 %v713
      %1504 = vmatpush.msra.mxu0 %v709
      %1505 = vmatpush.msra.mxu0 %v705
      %1506 = vmatpush.msra.mxu0 %v701
      %1507 = vmatpush.msra.mxu0 %v697
      %1508 = vmatpush.msra.mxu0 %v693
      %1509 = vmatpush.msra.mxu0 %v689
      %1510 = vmatpush.msra.mxu0 %v685
      %1511 = vmatpush.msra.mxu0 %v681
      %1512 = vmatpush.msra.mxu0 %v677
      %1513 = vmatpush.msra.mxu0 %v673
      %1514 = vmatpush.msra.mxu0 %v669
      %1515 = vmatpush.msra.mxu0 %v665
      %1516 = vmatpush.msra.mxu0 %v661
      %1517 = vmatmul.f32.gmra.mxu0 %v445
      %v1518 = vpop.f32.mrf.mxu0
      %v1519 = vadd.f32 %v1496, %v1518
      %1520 = vmatmul.f32.gmra.mxu0 %v448
      %v1521 = vpop.f32.mrf.mxu0
      %v1522 = vadd.f32 %v1499, %v1521
      %1523 = vdwg.mxu0
      %1524 = vmatpush.msra.mxu0 %v785
      %1525 = vmatpush.msra.mxu0 %v781
      %1526 = vmatpush.msra.mxu0 %v777
      %1527 = vmatpush.msra.mxu0 %v773
      %1528 = vmatpush.msra.mxu0 %v769
      %1529 = vmatpush.msra.mxu0 %v765
      %1530 = vmatpush.msra.mxu0 %v761
      %1531 = vmatpush.msra.mxu0 %v757
      %1532 = vmatpush.msra.mxu0 %v753
      %1533 = vmatpush.msra.mxu0 %v749
      %1534 = vmatpush.msra.mxu0 %v745
      %1535 = vmatpush.msra.mxu0 %v741
      %1536 = vmatpush.msra.mxu0 %v737
      %1537 = vmatpush.msra.mxu0 %v733
      %1538 = vmatpush.msra.mxu0 %v729
      %1539 = vmatpush.msra.mxu0 %v725
      %1540 = vmatmul.f32.gmra.mxu0 %v468
      %v1541 = vpop.f32.mrf.mxu0
      %v1542 = vadd.f32 %v1519, %v1541
      %1543 = vmatmul.f32.gmra.mxu0 %v471
      %v1544 = vpop.f32.mrf.mxu0
      %v1545 = vadd.f32 %v1522, %v1544
      %1546 = vdwg.mxu0
      %1547 = vmatpush.msra.mxu0 %v849
      %1548 = vmatpush.msra.mxu0 %v845
      %1549 = vmatpush.msra.mxu0 %v841
      %1550 = vmatpush.msra.mxu0 %v837
      %1551 = vmatpush.msra.mxu0 %v833
      %1552 = vmatpush.msra.mxu0 %v829
      %1553 = vmatpush.msra.mxu0 %v825
      %1554 = vmatpush.msra.mxu0 %v821
      %1555 = vmatpush.msra.mxu0 %v817
      %1556 = vmatpush.msra.mxu0 %v813
      %1557 = vmatpush.msra.mxu0 %v809
      %1558 = vmatpush.msra.mxu0 %v805
      %1559 = vmatpush.msra.mxu0 %v801
      %1560 = vmatpush.msra.mxu0 %v797
      %1561 = vmatpush.msra.mxu0 %v793
      %1562 = vmatpush.msra.mxu0 %v789
      %1563 = vmatmul.f32.gmra.mxu0 %v491
      %v1564 = vpop.f32.mrf.mxu0
      %v1565 = vadd.f32 %v1542, %v1564
      %1566 = vmatmul.f32.gmra.mxu0 %v494
      %v1567 = vpop.f32.mrf.mxu0
      %v1568 = vadd.f32 %v1545, %v1567
      %1569 = vdwg.mxu0
      %1570 = vmatpush.msra.mxu0 %v658
      %1571 = vmatpush.msra.mxu0 %v654
      %1572 = vmatpush.msra.mxu0 %v650
      %1573 = vmatpush.msra.mxu0 %v646
      %1574 = vmatpush.msra.mxu0 %v642
      %1575 = vmatpush.msra.mxu0 %v638
      %1576 = vmatpush.msra.mxu0 %v634
      %1577 = vmatpush.msra.mxu0 %v630
      %1578 = vmatpush.msra.mxu0 %v626
      %1579 = vmatpush.msra.mxu0 %v622
      %1580 = vmatpush.msra.mxu0 %v618
      %1581 = vmatpush.msra.mxu0 %v614
      %1582 = vmatpush.msra.mxu0 %v610
      %1583 = vmatpush.msra.mxu0 %v606
      %1584 = vmatpush.msra.mxu0 %v602
      %1585 = vmatpush.msra.mxu0 %v598
      %1586 = vmatmul.f32.gmra.mxu0 %v422
      %v1587 = vpop.f32.mrf.mxu0
      %v1588 = vadd.f32 %v1289, %v1587
      %1589 = vmatmul.f32.gmra.mxu0 %v425
      %v1590 = vpop.f32.mrf.mxu0
      %v1591 = vadd.f32 %v1292, %v1590
      %1592 = vdwg.mxu0
      %1593 = vmatpush.msra.mxu0 %v722
      %1594 = vmatpush.msra.mxu0 %v718
      %1595 = vmatpush.msra.mxu0 %v714
      %1596 = vmatpush.msra.mxu0 %v710
      %1597 = vmatpush.msra.mxu0 %v706
      %1598 = vmatpush.msra.mxu0 %v702
      %1599 = vmatpush.msra.mxu0 %v698
      %1600 = vmatpush.msra.mxu0 %v694
      %1601 = vmatpush.msra.mxu0 %v690
      %1602 = vmatpush.msra.mxu0 %v686
      %1603 = vmatpush.msra.mxu0 %v682
      %1604 = vmatpush.msra.mxu0 %v678
      %1605 = vmatpush.msra.mxu0 %v674
      %1606 = vmatpush.msra.mxu0 %v670
      %1607 = vmatpush.msra.mxu0 %v666
      %1608 = vmatpush.msra.mxu0 %v662
      %1609 = vmatmul.f32.gmra.mxu0 %v445
      %v1610 = vpop.f32.mrf.mxu0
      %v1611 = vadd.f32 %v1588, %v1610
      %1612 = vmatmul.f32.gmra.mxu0 %v448
      %v1613 = vpop.f32.mrf.mxu0
      %v1614 = vadd.f32 %v1591, %v1613
      %1615 = vdwg.mxu0
      %1616 = vmatpush.msra.mxu0 %v786
      %1617 = vmatpush.msra.mxu0 %v782
      %1618 = vmatpush.msra.mxu0 %v778
      %1619 = vmatpush.msra.mxu0 %v774
      %1620 = vmatpush.msra.mxu0 %v770
      %1621 = vmatpush.msra.mxu0 %v766
      %1622 = vmatpush.msra.mxu0 %v762
      %1623 = vmatpush.msra.mxu0 %v758
      %1624 = vmatpush.msra.mxu0 %v754
      %1625 = vmatpush.msra.mxu0 %v750
      %1626 = vmatpush.msra.mxu0 %v746
      %1627 = vmatpush.msra.mxu0 %v742
      %1628 = vmatpush.msra.mxu0 %v738
      %1629 = vmatpush.msra.mxu0 %v734
      %1630 = vmatpush.msra.mxu0 %v730
      %1631 = vmatpush.msra.mxu0 %v726
      %1632 = vmatmul.f32.gmra.mxu0 %v468
      %v1633 = vpop.f32.mrf.mxu0
      %v1634 = vadd.f32 %v1611, %v1633
      %1635 = vmatmul.f32.gmra.mxu0 %v471
      %v1636 = vpop.f32.mrf.mxu0
      %v1637 = vadd.f32 %v1614, %v1636
      %1638 = vdwg.mxu0
      %1639 = vmatpush.msra.mxu0 %v850
      %1640 = vmatpush.msra.mxu0 %v846
      %1641 = vmatpush.msra.mxu0 %v842
      %1642 = vmatpush.msra.mxu0 %v838
      %1643 = vmatpush.msra.mxu0 %v834
      %1644 = vmatpush.msra.mxu0 %v830
      %1645 = vmatpush.msra.mxu0 %v826
      %1646 = vmatpush.msra.mxu0 %v822
      %1647 = vmatpush.msra.mxu0 %v818
      %1648 = vmatpush.msra.mxu0 %v814
      %1649 = vmatpush.msra.mxu0 %v810
      %1650 = vmatpush.msra.mxu0 %v806
      %1651 = vmatpush.msra.mxu0 %v802
      %1652 = vmatpush.msra.mxu0 %v798
      %1653 = vmatpush.msra.mxu0 %v794
      %1654 = vmatpush.msra.mxu0 %v790
      %1655 = vmatmul.f32.gmra.mxu0 %v491
      %v1656 = vpop.f32.mrf.mxu0
      %v1657 = vadd.f32 %v1634, %v1656
      %1658 = vmatmul.f32.gmra.mxu0 %v494
      %v1659 = vpop.f32.mrf.mxu0
      %v1660 = vadd.f32 %v1637, %v1659
      %1661 = vdwg.mxu0
      %1662 = vmatpush.msra.mxu0 %v659
      %1663 = vmatpush.msra.mxu0 %v655
      %1664 = vmatpush.msra.mxu0 %v651
      %1665 = vmatpush.msra.mxu0 %v647
      %1666 = vmatpush.msra.mxu0 %v643
      %1667 = vmatpush.msra.mxu0 %v639
      %1668 = vmatpush.msra.mxu0 %v635
      %1669 = vmatpush.msra.mxu0 %v631
      %1670 = vmatpush.msra.mxu0 %v627
      %1671 = vmatpush.msra.mxu0 %v623
      %1672 = vmatpush.msra.mxu0 %v619
      %1673 = vmatpush.msra.mxu0 %v615
      %1674 = vmatpush.msra.mxu0 %v611
      %1675 = vmatpush.msra.mxu0 %v607
      %1676 = vmatpush.msra.mxu0 %v603
      %1677 = vmatpush.msra.mxu0 %v599
      %1678 = vmatmul.f32.gmra.mxu0 %v422
      %v1679 = vpop.f32.mrf.mxu0
      %v1680 = vadd.f32 %v1381, %v1679
      %1681 = vmatmul.f32.gmra.mxu0 %v425
      %v1682 = vpop.f32.mrf.mxu0
      %v1683 = vadd.f32 %v1384, %v1682
      %1684 = vdwg.mxu0
      %1685 = vmatpush.msra.mxu0 %v723
      %1686 = vmatpush.msra.mxu0 %v719
      %1687 = vmatpush.msra.mxu0 %v715
      %1688 = vmatpush.msra.mxu0 %v711
      %1689 = vmatpush.msra.mxu0 %v707
      %1690 = vmatpush.msra.mxu0 %v703
      %1691 = vmatpush.msra.mxu0 %v699
      %1692 = vmatpush.msra.mxu0 %v695
      %1693 = vmatpush.msra.mxu0 %v691
      %1694 = vmatpush.msra.mxu0 %v687
      %1695 = vmatpush.msra.mxu0 %v683
      %1696 = vmatpush.msra.mxu0 %v679
      %1697 = vmatpush.msra.mxu0 %v675
      %1698 = vmatpush.msra.mxu0 %v671
      %1699 = vmatpush.msra.mxu0 %v667
      %1700 = vmatpush.msra.mxu0 %v663
      %1701 = vmatmul.f32.gmra.mxu0 %v445
      %v1702 = vpop.f32.mrf.mxu0
      %v1703 = vadd.f32 %v1680, %v1702
      %1704 = vmatmul.f32.gmra.mxu0 %v448
      %v1705 = vpop.f32.mrf.mxu0
      %v1706 = vadd.f32 %v1683, %v1705
      %1707 = vdwg.mxu0
      %1708 = vmatpush.msra.mxu0 %v787
      %1709 = vmatpush.msra.mxu0 %v783
      %1710 = vmatpush.msra.mxu0 %v779
      %1711 = vmatpush.msra.mxu0 %v775
      %1712 = vmatpush.msra.mxu0 %v771
      %1713 = vmatpush.msra.mxu0 %v767
      %1714 = vmatpush.msra.mxu0 %v763
      %1715 = vmatpush.msra.mxu0 %v759
      %1716 = vmatpush.msra.mxu0 %v755
      %1717 = vmatpush.msra.mxu0 %v751
      %1718 = vmatpush.msra.mxu0 %v747
      %1719 = vmatpush.msra.mxu0 %v743
      %1720 = vmatpush.msra.mxu0 %v739
      %1721 = vmatpush.msra.mxu0 %v735
      %1722 = vmatpush.msra.mxu0 %v731
      %1723 = vmatpush.msra.mxu0 %v727
      %1724 = vmatmul.f32.gmra.mxu0 %v468
      %v1725 = vpop.f32.mrf.mxu0
      %v1726 = vadd.f32 %v1703, %v1725
      %1727 = vmatmul.f32.gmra.mxu0 %v471
      %v1728 = vpop.f32.mrf.mxu0
      %v1729 = vadd.f32 %v1706, %v1728
      %1730 = vdwg.mxu0
      %1731 = vmatpush.msra.mxu0 %v851
      %1732 = vmatpush.msra.mxu0 %v847
      %1733 = vmatpush.msra.mxu0 %v843
      %1734 = vmatpush.msra.mxu0 %v839
      %1735 = vmatpush.msra.mxu0 %v835
      %1736 = vmatpush.msra.mxu0 %v831
      %1737 = vmatpush.msra.mxu0 %v827
      %1738 = vmatpush.msra.mxu0 %v823
      %1739 = vmatpush.msra.mxu0 %v819
      %1740 = vmatpush.msra.mxu0 %v815
      %1741 = vmatpush.msra.mxu0 %v811
      %1742 = vmatpush.msra.mxu0 %v807
      %1743 = vmatpush.msra.mxu0 %v803
      %1744 = vmatpush.msra.mxu0 %v799
      %1745 = vmatpush.msra.mxu0 %v795
      %1746 = vmatpush.msra.mxu0 %v791
      %1747 = vmatmul.f32.gmra.mxu0 %v491
      %v1748 = vpop.f32.mrf.mxu0
      %v1749 = vadd.f32 %v1726, %v1748
      %1750 = vmatmul.f32.gmra.mxu0 %v494
      %v1751 = vpop.f32.mrf.mxu0
      %v1752 = vadd.f32 %v1729, %v1751
      %1753 = vdwg.mxu0
      %1754 = vmatpush.msra.mxu0 %v660
      %1755 = vmatpush.msra.mxu0 %v656
      %1756 = vmatpush.msra.mxu0 %v652
      %1757 = vmatpush.msra.mxu0 %v648
      %1758 = vmatpush.msra.mxu0 %v644
      %1759 = vmatpush.msra.mxu0 %v640
      %1760 = vmatpush.msra.mxu0 %v636
      %1761 = vmatpush.msra.mxu0 %v632
      %1762 = vmatpush.msra.mxu0 %v628
      %1763 = vmatpush.msra.mxu0 %v624
      %1764 = vmatpush.msra.mxu0 %v620
      %1765 = vmatpush.msra.mxu0 %v616
      %1766 = vmatpush.msra.mxu0 %v612
      %1767 = vmatpush.msra.mxu0 %v608
      %1768 = vmatpush.msra.mxu0 %v604
      %1769 = vmatpush.msra.mxu0 %v600
      %1770 = vmatmul.f32.gmra.mxu0 %v422
      %v1771 = vpop.f32.mrf.mxu0
      %v1772 = vadd.f32 %v1473, %v1771
      %1773 = vmatmul.f32.gmra.mxu0 %v425
      %v1774 = vpop.f32.mrf.mxu0
      %v1775 = vadd.f32 %v1476, %v1774
      %1776 = vdwg.mxu0
      %1777 = vmatpush.msra.mxu0 %v724
      %1778 = vmatpush.msra.mxu0 %v720
      %1779 = vmatpush.msra.mxu0 %v716
      %1780 = vmatpush.msra.mxu0 %v712
      %1781 = vmatpush.msra.mxu0 %v708
      %1782 = vmatpush.msra.mxu0 %v704
      %1783 = vmatpush.msra.mxu0 %v700
      %1784 = vmatpush.msra.mxu0 %v696
      %1785 = vmatpush.msra.mxu0 %v692
      %1786 = vmatpush.msra.mxu0 %v688
      %1787 = vmatpush.msra.mxu0 %v684
      %1788 = vmatpush.msra.mxu0 %v680
      %1789 = vmatpush.msra.mxu0 %v676
      %1790 = vmatpush.msra.mxu0 %v672
      %1791 = vmatpush.msra.mxu0 %v668
      %1792 = vmatpush.msra.mxu0 %v664
      %1793 = vmatmul.f32.gmra.mxu0 %v445
      %v1794 = vpop.f32.mrf.mxu0
      %v1795 = vadd.f32 %v1772, %v1794
      %1796 = vmatmul.f32.gmra.mxu0 %v448
      %v1797 = vpop.f32.mrf.mxu0
      %v1798 = vadd.f32 %v1775, %v1797
      %1799 = vdwg.mxu0
      %1800 = vmatpush.msra.mxu0 %v788
      %1801 = vmatpush.msra.mxu0 %v784
      %1802 = vmatpush.msra.mxu0 %v780
      %1803 = vmatpush.msra.mxu0 %v776
      %1804 = vmatpush.msra.mxu0 %v772
      %1805 = vmatpush.msra.mxu0 %v768
      %1806 = vmatpush.msra.mxu0 %v764
      %1807 = vmatpush.msra.mxu0 %v760
      %1808 = vmatpush.msra.mxu0 %v756
      %1809 = vmatpush.msra.mxu0 %v752
      %1810 = vmatpush.msra.mxu0 %v748
      %1811 = vmatpush.msra.mxu0 %v744
      %1812 = vmatpush.msra.mxu0 %v740
      %1813 = vmatpush.msra.mxu0 %v736
      %1814 = vmatpush.msra.mxu0 %v732
      %1815 = vmatpush.msra.mxu0 %v728
      %1816 = vmatmul.f32.gmra.mxu0 %v468
      %v1817 = vpop.f32.mrf.mxu0
      %v1818 = vadd.f32 %v1795, %v1817
      %1819 = vmatmul.f32.gmra.mxu0 %v471
      %v1820 = vpop.f32.mrf.mxu0
      %v1821 = vadd.f32 %v1798, %v1820
      %1822 = vdwg.mxu0
      %1823 = vmatpush.msra.mxu0 %v852
      %1824 = vmatpush.msra.mxu0 %v848
      %1825 = vmatpush.msra.mxu0 %v844
      %1826 = vmatpush.msra.mxu0 %v840
      %1827 = vmatpush.msra.mxu0 %v836
      %1828 = vmatpush.msra.mxu0 %v832
      %1829 = vmatpush.msra.mxu0 %v828
      %1830 = vmatpush.msra.mxu0 %v824
      %1831 = vmatpush.msra.mxu0 %v820
      %1832 = vmatpush.msra.mxu0 %v816
      %1833 = vmatpush.msra.mxu0 %v812
      %1834 = vmatpush.msra.mxu0 %v808
      %1835 = vmatpush.msra.mxu0 %v804
      %1836 = vmatpush.msra.mxu0 %v800
      %1837 = vmatpush.msra.mxu0 %v796
      %1838 = vmatpush.msra.mxu0 %v792
      %1839 = vmatmul.f32.gmra.mxu0 %v491
      %v1840 = vpop.f32.mrf.mxu0
      %v1841 = vadd.f32 %v1818, %v1840
      %1842 = vmatmul.f32.gmra.mxu0 %v494
      %v1843 = vpop.f32.mrf.mxu0
      %v1844 = vadd.f32 %v1821, %v1843
      %1845 = vdwg.mxu0
      %s1846 = scalar_lea.vmem %s3, 4096
      %v1847 = vld [vmem:[%s1846] sm:$0xff]
      %v1848 = vld [vmem:[%s1846 + $0x8] sm:$0xff]
      %v1849 = vld [vmem:[%s1846 + $0x10] sm:$0xff]
      %v1850 = vld [vmem:[%s1846 + $0x18] sm:$0xff]
      %v1851 = vld [vmem:[%s1846 + $0x20] sm:$0xff]
      %v1852 = vld [vmem:[%s1846 + $0x28] sm:$0xff]
      %v1853 = vld [vmem:[%s1846 + $0x30] sm:$0xff]
      %v1854 = vld [vmem:[%s1846 + $0x38] sm:$0xff]
      %v1855 = vld [vmem:[%s1846 + $0x40] sm:$0xff]
      %v1856 = vld [vmem:[%s1846 + $0x48] sm:$0xff]
      %v1857 = vld [vmem:[%s1846 + $0x50] sm:$0xff]
      %v1858 = vld [vmem:[%s1846 + $0x58] sm:$0xff]
      %v1859 = vld [vmem:[%s1846 + $0x60] sm:$0xff]
      %v1860 = vld [vmem:[%s1846 + $0x68] sm:$0xff]
      %v1861 = vld [vmem:[%s1846 + $0x70] sm:$0xff]
      %v1862 = vld [vmem:[%s1846 + $0x78] sm:$0xff]
      %v1863 = vld [vmem:[%s1846 + $0x80] sm:$0xff]
      %v1864 = vld [vmem:[%s1846 + $0x88] sm:$0xff]
      %v1865 = vld [vmem:[%s1846 + $0x90] sm:$0xff]
      %v1866 = vld [vmem:[%s1846 + $0x98] sm:$0xff]
      %v1867 = vld [vmem:[%s1846 + $0xa0] sm:$0xff]
      %v1868 = vld [vmem:[%s1846 + $0xa8] sm:$0xff]
      %v1869 = vld [vmem:[%s1846 + $0xb0] sm:$0xff]
      %v1870 = vld [vmem:[%s1846 + $0xb8] sm:$0xff]
      %v1871 = vld [vmem:[%s1846 + $0xc0] sm:$0xff]
      %v1872 = vld [vmem:[%s1846 + $0xc8] sm:$0xff]
      %v1873 = vld [vmem:[%s1846 + $0xd0] sm:$0xff]
      %v1874 = vld [vmem:[%s1846 + $0xd8] sm:$0xff]
      %v1875 = vld [vmem:[%s1846 + $0xe0] sm:$0xff]
      %v1876 = vld [vmem:[%s1846 + $0xe8] sm:$0xff]
      %v1877 = vld [vmem:[%s1846 + $0xf0] sm:$0xff]
      %v1878 = vld [vmem:[%s1846 + $0xf8] sm:$0xff]
      %v1879 = vld [vmem:[%s1846 + $0x100] sm:$0xff]
      %v1880 = vld [vmem:[%s1846 + $0x108] sm:$0xff]
      %v1881 = vld [vmem:[%s1846 + $0x110] sm:$0xff]
      %v1882 = vld [vmem:[%s1846 + $0x118] sm:$0xff]
      %v1883 = vld [vmem:[%s1846 + $0x120] sm:$0xff]
      %v1884 = vld [vmem:[%s1846 + $0x128] sm:$0xff]
      %v1885 = vld [vmem:[%s1846 + $0x130] sm:$0xff]
      %v1886 = vld [vmem:[%s1846 + $0x138] sm:$0xff]
      %v1887 = vld [vmem:[%s1846 + $0x140] sm:$0xff]
      %v1888 = vld [vmem:[%s1846 + $0x148] sm:$0xff]
      %v1889 = vld [vmem:[%s1846 + $0x150] sm:$0xff]
      %v1890 = vld [vmem:[%s1846 + $0x158] sm:$0xff]
      %v1891 = vld [vmem:[%s1846 + $0x160] sm:$0xff]
      %v1892 = vld [vmem:[%s1846 + $0x168] sm:$0xff]
      %v1893 = vld [vmem:[%s1846 + $0x170] sm:$0xff]
      %v1894 = vld [vmem:[%s1846 + $0x178] sm:$0xff]
      %v1895 = vld [vmem:[%s1846 + $0x180] sm:$0xff]
      %v1896 = vld [vmem:[%s1846 + $0x188] sm:$0xff]
      %v1897 = vld [vmem:[%s1846 + $0x190] sm:$0xff]
      %v1898 = vld [vmem:[%s1846 + $0x198] sm:$0xff]
      %v1899 = vld [vmem:[%s1846 + $0x1a0] sm:$0xff]
      %v1900 = vld [vmem:[%s1846 + $0x1a8] sm:$0xff]
      %v1901 = vld [vmem:[%s1846 + $0x1b0] sm:$0xff]
      %v1902 = vld [vmem:[%s1846 + $0x1b8] sm:$0xff]
      %v1903 = vld [vmem:[%s1846 + $0x1c0] sm:$0xff]
      %v1904 = vld [vmem:[%s1846 + $0x1c8] sm:$0xff]
      %v1905 = vld [vmem:[%s1846 + $0x1d0] sm:$0xff]
      %v1906 = vld [vmem:[%s1846 + $0x1d8] sm:$0xff]
      %v1907 = vld [vmem:[%s1846 + $0x1e0] sm:$0xff]
      %v1908 = vld [vmem:[%s1846 + $0x1e8] sm:$0xff]
      %v1909 = vld [vmem:[%s1846 + $0x1f0] sm:$0xff]
      %v1910 = vld [vmem:[%s1846 + $0x1f8] sm:$0xff]
      %v1911 = vld [vmem:[%s1846 + $0x200] sm:$0xff]
      %v1912 = vld [vmem:[%s1846 + $0x208] sm:$0xff]
      %v1913 = vld [vmem:[%s1846 + $0x210] sm:$0xff]
      %v1914 = vld [vmem:[%s1846 + $0x218] sm:$0xff]
      %v1915 = vld [vmem:[%s1846 + $0x220] sm:$0xff]
      %v1916 = vld [vmem:[%s1846 + $0x228] sm:$0xff]
      %v1917 = vld [vmem:[%s1846 + $0x230] sm:$0xff]
      %v1918 = vld [vmem:[%s1846 + $0x238] sm:$0xff]
      %v1919 = vld [vmem:[%s1846 + $0x240] sm:$0xff]
      %v1920 = vld [vmem:[%s1846 + $0x248] sm:$0xff]
      %v1921 = vld [vmem:[%s1846 + $0x250] sm:$0xff]
      %v1922 = vld [vmem:[%s1846 + $0x258] sm:$0xff]
      %v1923 = vld [vmem:[%s1846 + $0x260] sm:$0xff]
      %v1924 = vld [vmem:[%s1846 + $0x268] sm:$0xff]
      %v1925 = vld [vmem:[%s1846 + $0x270] sm:$0xff]
      %v1926 = vld [vmem:[%s1846 + $0x278] sm:$0xff]
      %v1927 = vld [vmem:[%s1846 + $0x280] sm:$0xff]
      %v1928 = vld [vmem:[%s1846 + $0x288] sm:$0xff]
      %v1929 = vld [vmem:[%s1846 + $0x290] sm:$0xff]
      %v1930 = vld [vmem:[%s1846 + $0x298] sm:$0xff]
      %v1931 = vld [vmem:[%s1846 + $0x2a0] sm:$0xff]
      %v1932 = vld [vmem:[%s1846 + $0x2a8] sm:$0xff]
      %v1933 = vld [vmem:[%s1846 + $0x2b0] sm:$0xff]
      %v1934 = vld [vmem:[%s1846 + $0x2b8] sm:$0xff]
      %v1935 = vld [vmem:[%s1846 + $0x2c0] sm:$0xff]
      %v1936 = vld [vmem:[%s1846 + $0x2c8] sm:$0xff]
      %v1937 = vld [vmem:[%s1846 + $0x2d0] sm:$0xff]
      %v1938 = vld [vmem:[%s1846 + $0x2d8] sm:$0xff]
      %v1939 = vld [vmem:[%s1846 + $0x2e0] sm:$0xff]
      %v1940 = vld [vmem:[%s1846 + $0x2e8] sm:$0xff]
      %v1941 = vld [vmem:[%s1846 + $0x2f0] sm:$0xff]
      %v1942 = vld [vmem:[%s1846 + $0x2f8] sm:$0xff]
      %v1943 = vld [vmem:[%s1846 + $0x300] sm:$0xff]
      %v1944 = vld [vmem:[%s1846 + $0x308] sm:$0xff]
      %v1945 = vld [vmem:[%s1846 + $0x310] sm:$0xff]
      %v1946 = vld [vmem:[%s1846 + $0x318] sm:$0xff]
      %v1947 = vld [vmem:[%s1846 + $0x320] sm:$0xff]
      %v1948 = vld [vmem:[%s1846 + $0x328] sm:$0xff]
      %v1949 = vld [vmem:[%s1846 + $0x330] sm:$0xff]
      %v1950 = vld [vmem:[%s1846 + $0x338] sm:$0xff]
      %v1951 = vld [vmem:[%s1846 + $0x340] sm:$0xff]
      %v1952 = vld [vmem:[%s1846 + $0x348] sm:$0xff]
      %v1953 = vld [vmem:[%s1846 + $0x350] sm:$0xff]
      %v1954 = vld [vmem:[%s1846 + $0x358] sm:$0xff]
      %v1955 = vld [vmem:[%s1846 + $0x360] sm:$0xff]
      %v1956 = vld [vmem:[%s1846 + $0x368] sm:$0xff]
      %v1957 = vld [vmem:[%s1846 + $0x370] sm:$0xff]
      %v1958 = vld [vmem:[%s1846 + $0x378] sm:$0xff]
      %v1959 = vld [vmem:[%s1846 + $0x380] sm:$0xff]
      %v1960 = vld [vmem:[%s1846 + $0x388] sm:$0xff]
      %v1961 = vld [vmem:[%s1846 + $0x390] sm:$0xff]
      %v1962 = vld [vmem:[%s1846 + $0x398] sm:$0xff]
      %v1963 = vld [vmem:[%s1846 + $0x3a0] sm:$0xff]
      %v1964 = vld [vmem:[%s1846 + $0x3a8] sm:$0xff]
      %v1965 = vld [vmem:[%s1846 + $0x3b0] sm:$0xff]
      %v1966 = vld [vmem:[%s1846 + $0x3b8] sm:$0xff]
      %v1967 = vld [vmem:[%s1846 + $0x3c0] sm:$0xff]
      %v1968 = vld [vmem:[%s1846 + $0x3c8] sm:$0xff]
      %v1969 = vld [vmem:[%s1846 + $0x3d0] sm:$0xff]
      %v1970 = vld [vmem:[%s1846 + $0x3d8] sm:$0xff]
      %v1971 = vld [vmem:[%s1846 + $0x3e0] sm:$0xff]
      %v1972 = vld [vmem:[%s1846 + $0x3e8] sm:$0xff]
      %v1973 = vld [vmem:[%s1846 + $0x3f0] sm:$0xff]
      %v1974 = vld [vmem:[%s1846 + $0x3f8] sm:$0xff]
      %v1975 = vld [vmem:[%s1846 + $0x400] sm:$0xff]
      %v1976 = vld [vmem:[%s1846 + $0x408] sm:$0xff]
      %v1977 = vld [vmem:[%s1846 + $0x410] sm:$0xff]
      %v1978 = vld [vmem:[%s1846 + $0x418] sm:$0xff]
      %v1979 = vld [vmem:[%s1846 + $0x420] sm:$0xff]
      %v1980 = vld [vmem:[%s1846 + $0x428] sm:$0xff]
      %v1981 = vld [vmem:[%s1846 + $0x430] sm:$0xff]
      %v1982 = vld [vmem:[%s1846 + $0x438] sm:$0xff]
      %v1983 = vld [vmem:[%s1846 + $0x440] sm:$0xff]
      %v1984 = vld [vmem:[%s1846 + $0x448] sm:$0xff]
      %v1985 = vld [vmem:[%s1846 + $0x450] sm:$0xff]
      %v1986 = vld [vmem:[%s1846 + $0x458] sm:$0xff]
      %v1987 = vld [vmem:[%s1846 + $0x460] sm:$0xff]
      %v1988 = vld [vmem:[%s1846 + $0x468] sm:$0xff]
      %v1989 = vld [vmem:[%s1846 + $0x470] sm:$0xff]
      %v1990 = vld [vmem:[%s1846 + $0x478] sm:$0xff]
      %v1991 = vld [vmem:[%s1846 + $0x480] sm:$0xff]
      %v1992 = vld [vmem:[%s1846 + $0x488] sm:$0xff]
      %v1993 = vld [vmem:[%s1846 + $0x490] sm:$0xff]
      %v1994 = vld [vmem:[%s1846 + $0x498] sm:$0xff]
      %v1995 = vld [vmem:[%s1846 + $0x4a0] sm:$0xff]
      %v1996 = vld [vmem:[%s1846 + $0x4a8] sm:$0xff]
      %v1997 = vld [vmem:[%s1846 + $0x4b0] sm:$0xff]
      %v1998 = vld [vmem:[%s1846 + $0x4b8] sm:$0xff]
      %v1999 = vld [vmem:[%s1846 + $0x4c0] sm:$0xff]
      %v2000 = vld [vmem:[%s1846 + $0x4c8] sm:$0xff]
      %v2001 = vld [vmem:[%s1846 + $0x4d0] sm:$0xff]
      %v2002 = vld [vmem:[%s1846 + $0x4d8] sm:$0xff]
      %v2003 = vld [vmem:[%s1846 + $0x4e0] sm:$0xff]
      %v2004 = vld [vmem:[%s1846 + $0x4e8] sm:$0xff]
      %v2005 = vld [vmem:[%s1846 + $0x4f0] sm:$0xff]
      %v2006 = vld [vmem:[%s1846 + $0x4f8] sm:$0xff]
      %v2007 = vld [vmem:[%s1846 + $0x500] sm:$0xff]
      %v2008 = vld [vmem:[%s1846 + $0x508] sm:$0xff]
      %v2009 = vld [vmem:[%s1846 + $0x510] sm:$0xff]
      %v2010 = vld [vmem:[%s1846 + $0x518] sm:$0xff]
      %v2011 = vld [vmem:[%s1846 + $0x520] sm:$0xff]
      %v2012 = vld [vmem:[%s1846 + $0x528] sm:$0xff]
      %v2013 = vld [vmem:[%s1846 + $0x530] sm:$0xff]
      %v2014 = vld [vmem:[%s1846 + $0x538] sm:$0xff]
      %v2015 = vld [vmem:[%s1846 + $0x540] sm:$0xff]
      %v2016 = vld [vmem:[%s1846 + $0x548] sm:$0xff]
      %v2017 = vld [vmem:[%s1846 + $0x550] sm:$0xff]
      %v2018 = vld [vmem:[%s1846 + $0x558] sm:$0xff]
      %v2019 = vld [vmem:[%s1846 + $0x560] sm:$0xff]
      %v2020 = vld [vmem:[%s1846 + $0x568] sm:$0xff]
      %v2021 = vld [vmem:[%s1846 + $0x570] sm:$0xff]
      %v2022 = vld [vmem:[%s1846 + $0x578] sm:$0xff]
      %v2023 = vld [vmem:[%s1846 + $0x580] sm:$0xff]
      %v2024 = vld [vmem:[%s1846 + $0x588] sm:$0xff]
      %v2025 = vld [vmem:[%s1846 + $0x590] sm:$0xff]
      %v2026 = vld [vmem:[%s1846 + $0x598] sm:$0xff]
      %v2027 = vld [vmem:[%s1846 + $0x5a0] sm:$0xff]
      %v2028 = vld [vmem:[%s1846 + $0x5a8] sm:$0xff]
      %v2029 = vld [vmem:[%s1846 + $0x5b0] sm:$0xff]
      %v2030 = vld [vmem:[%s1846 + $0x5b8] sm:$0xff]
      %v2031 = vld [vmem:[%s1846 + $0x5c0] sm:$0xff]
      %v2032 = vld [vmem:[%s1846 + $0x5c8] sm:$0xff]
      %v2033 = vld [vmem:[%s1846 + $0x5d0] sm:$0xff]
      %v2034 = vld [vmem:[%s1846 + $0x5d8] sm:$0xff]
      %v2035 = vld [vmem:[%s1846 + $0x5e0] sm:$0xff]
      %v2036 = vld [vmem:[%s1846 + $0x5e8] sm:$0xff]
      %v2037 = vld [vmem:[%s1846 + $0x5f0] sm:$0xff]
      %v2038 = vld [vmem:[%s1846 + $0x5f8] sm:$0xff]
      %v2039 = vld [vmem:[%s1846 + $0x600] sm:$0xff]
      %v2040 = vld [vmem:[%s1846 + $0x608] sm:$0xff]
      %v2041 = vld [vmem:[%s1846 + $0x610] sm:$0xff]
      %v2042 = vld [vmem:[%s1846 + $0x618] sm:$0xff]
      %v2043 = vld [vmem:[%s1846 + $0x620] sm:$0xff]
      %v2044 = vld [vmem:[%s1846 + $0x628] sm:$0xff]
      %v2045 = vld [vmem:[%s1846 + $0x630] sm:$0xff]
      %v2046 = vld [vmem:[%s1846 + $0x638] sm:$0xff]
      %v2047 = vld [vmem:[%s1846 + $0x640] sm:$0xff]
      %v2048 = vld [vmem:[%s1846 + $0x648] sm:$0xff]
      %v2049 = vld [vmem:[%s1846 + $0x650] sm:$0xff]
      %v2050 = vld [vmem:[%s1846 + $0x658] sm:$0xff]
      %v2051 = vld [vmem:[%s1846 + $0x660] sm:$0xff]
      %v2052 = vld [vmem:[%s1846 + $0x668] sm:$0xff]
      %v2053 = vld [vmem:[%s1846 + $0x670] sm:$0xff]
      %v2054 = vld [vmem:[%s1846 + $0x678] sm:$0xff]
      %v2055 = vld [vmem:[%s1846 + $0x680] sm:$0xff]
      %v2056 = vld [vmem:[%s1846 + $0x688] sm:$0xff]
      %v2057 = vld [vmem:[%s1846 + $0x690] sm:$0xff]
      %v2058 = vld [vmem:[%s1846 + $0x698] sm:$0xff]
      %v2059 = vld [vmem:[%s1846 + $0x6a0] sm:$0xff]
      %v2060 = vld [vmem:[%s1846 + $0x6a8] sm:$0xff]
      %v2061 = vld [vmem:[%s1846 + $0x6b0] sm:$0xff]
      %v2062 = vld [vmem:[%s1846 + $0x6b8] sm:$0xff]
      %v2063 = vld [vmem:[%s1846 + $0x6c0] sm:$0xff]
      %v2064 = vld [vmem:[%s1846 + $0x6c8] sm:$0xff]
      %v2065 = vld [vmem:[%s1846 + $0x6d0] sm:$0xff]
      %v2066 = vld [vmem:[%s1846 + $0x6d8] sm:$0xff]
      %v2067 = vld [vmem:[%s1846 + $0x6e0] sm:$0xff]
      %v2068 = vld [vmem:[%s1846 + $0x6e8] sm:$0xff]
      %v2069 = vld [vmem:[%s1846 + $0x6f0] sm:$0xff]
      %v2070 = vld [vmem:[%s1846 + $0x6f8] sm:$0xff]
      %v2071 = vld [vmem:[%s1846 + $0x700] sm:$0xff]
      %v2072 = vld [vmem:[%s1846 + $0x708] sm:$0xff]
      %v2073 = vld [vmem:[%s1846 + $0x710] sm:$0xff]
      %v2074 = vld [vmem:[%s1846 + $0x718] sm:$0xff]
      %v2075 = vld [vmem:[%s1846 + $0x720] sm:$0xff]
      %v2076 = vld [vmem:[%s1846 + $0x728] sm:$0xff]
      %v2077 = vld [vmem:[%s1846 + $0x730] sm:$0xff]
      %v2078 = vld [vmem:[%s1846 + $0x738] sm:$0xff]
      %v2079 = vld [vmem:[%s1846 + $0x740] sm:$0xff]
      %v2080 = vld [vmem:[%s1846 + $0x748] sm:$0xff]
      %v2081 = vld [vmem:[%s1846 + $0x750] sm:$0xff]
      %v2082 = vld [vmem:[%s1846 + $0x758] sm:$0xff]
      %v2083 = vld [vmem:[%s1846 + $0x760] sm:$0xff]
      %v2084 = vld [vmem:[%s1846 + $0x768] sm:$0xff]
      %v2085 = vld [vmem:[%s1846 + $0x770] sm:$0xff]
      %v2086 = vld [vmem:[%s1846 + $0x778] sm:$0xff]
      %v2087 = vld [vmem:[%s1846 + $0x780] sm:$0xff]
      %v2088 = vld [vmem:[%s1846 + $0x788] sm:$0xff]
      %v2089 = vld [vmem:[%s1846 + $0x790] sm:$0xff]
      %v2090 = vld [vmem:[%s1846 + $0x798] sm:$0xff]
      %v2091 = vld [vmem:[%s1846 + $0x7a0] sm:$0xff]
      %v2092 = vld [vmem:[%s1846 + $0x7a8] sm:$0xff]
      %v2093 = vld [vmem:[%s1846 + $0x7b0] sm:$0xff]
      %v2094 = vld [vmem:[%s1846 + $0x7b8] sm:$0xff]
      %v2095 = vld [vmem:[%s1846 + $0x7c0] sm:$0xff]
      %v2096 = vld [vmem:[%s1846 + $0x7c8] sm:$0xff]
      %v2097 = vld [vmem:[%s1846 + $0x7d0] sm:$0xff]
      %v2098 = vld [vmem:[%s1846 + $0x7d8] sm:$0xff]
      %v2099 = vld [vmem:[%s1846 + $0x7e0] sm:$0xff]
      %v2100 = vld [vmem:[%s1846 + $0x7e8] sm:$0xff]
      %v2101 = vld [vmem:[%s1846 + $0x7f0] sm:$0xff]
      %v2102 = vld [vmem:[%s1846 + $0x7f8] sm:$0xff]
      %2103 = vmatpush.msra.mxu0 %v1907
      %2104 = vmatpush.msra.mxu0 %v1903
      %2105 = vmatpush.msra.mxu0 %v1899
      %2106 = vmatpush.msra.mxu0 %v1895
      %2107 = vmatpush.msra.mxu0 %v1891
      %2108 = vmatpush.msra.mxu0 %v1887
      %2109 = vmatpush.msra.mxu0 %v1883
      %2110 = vmatpush.msra.mxu0 %v1879
      %2111 = vmatpush.msra.mxu0 %v1875
      %2112 = vmatpush.msra.mxu0 %v1871
      %2113 = vmatpush.msra.mxu0 %v1867
      %2114 = vmatpush.msra.mxu0 %v1863
      %2115 = vmatpush.msra.mxu0 %v1859
      %2116 = vmatpush.msra.mxu0 %v1855
      %2117 = vmatpush.msra.mxu0 %v1851
      %2118 = vmatpush.msra.mxu0 %v1847
      %2119 = vmatmul.f32.gmra.mxu0 %v523
      %v2120 = vpop.f32.mrf.mxu0
      %v2121 = vadd.f32 0.0, %v2120
      %2122 = vmatmul.f32.gmra.mxu0 %v526
      %v2123 = vpop.f32.mrf.mxu0
      %v2124 = vadd.f32 0.0, %v2123
      %2125 = vdwg.mxu0
      %2126 = vmatpush.msra.mxu0 %v1971
      %2127 = vmatpush.msra.mxu0 %v1967
      %2128 = vmatpush.msra.mxu0 %v1963
      %2129 = vmatpush.msra.mxu0 %v1959
      %2130 = vmatpush.msra.mxu0 %v1955
      %2131 = vmatpush.msra.mxu0 %v1951
      %2132 = vmatpush.msra.mxu0 %v1947
      %2133 = vmatpush.msra.mxu0 %v1943
      %2134 = vmatpush.msra.mxu0 %v1939
      %2135 = vmatpush.msra.mxu0 %v1935
      %2136 = vmatpush.msra.mxu0 %v1931
      %2137 = vmatpush.msra.mxu0 %v1927
      %2138 = vmatpush.msra.mxu0 %v1923
      %2139 = vmatpush.msra.mxu0 %v1919
      %2140 = vmatpush.msra.mxu0 %v1915
      %2141 = vmatpush.msra.mxu0 %v1911
      %2142 = vmatmul.f32.gmra.mxu0 %v546
      %v2143 = vpop.f32.mrf.mxu0
      %v2144 = vadd.f32 %v2121, %v2143
      %2145 = vmatmul.f32.gmra.mxu0 %v549
      %v2146 = vpop.f32.mrf.mxu0
      %v2147 = vadd.f32 %v2124, %v2146
      %2148 = vdwg.mxu0
      %2149 = vmatpush.msra.mxu0 %v2035
      %2150 = vmatpush.msra.mxu0 %v2031
      %2151 = vmatpush.msra.mxu0 %v2027
      %2152 = vmatpush.msra.mxu0 %v2023
      %2153 = vmatpush.msra.mxu0 %v2019
      %2154 = vmatpush.msra.mxu0 %v2015
      %2155 = vmatpush.msra.mxu0 %v2011
      %2156 = vmatpush.msra.mxu0 %v2007
      %2157 = vmatpush.msra.mxu0 %v2003
      %2158 = vmatpush.msra.mxu0 %v1999
      %2159 = vmatpush.msra.mxu0 %v1995
      %2160 = vmatpush.msra.mxu0 %v1991
      %2161 = vmatpush.msra.mxu0 %v1987
      %2162 = vmatpush.msra.mxu0 %v1983
      %2163 = vmatpush.msra.mxu0 %v1979
      %2164 = vmatpush.msra.mxu0 %v1975
      %2165 = vmatmul.f32.gmra.mxu0 %v569
      %v2166 = vpop.f32.mrf.mxu0
      %v2167 = vadd.f32 %v2144, %v2166
      %2168 = vmatmul.f32.gmra.mxu0 %v572
      %v2169 = vpop.f32.mrf.mxu0
      %v2170 = vadd.f32 %v2147, %v2169
      %2171 = vdwg.mxu0
      %2172 = vmatpush.msra.mxu0 %v2099
      %2173 = vmatpush.msra.mxu0 %v2095
      %2174 = vmatpush.msra.mxu0 %v2091
      %2175 = vmatpush.msra.mxu0 %v2087
      %2176 = vmatpush.msra.mxu0 %v2083
      %2177 = vmatpush.msra.mxu0 %v2079
      %2178 = vmatpush.msra.mxu0 %v2075
      %2179 = vmatpush.msra.mxu0 %v2071
      %2180 = vmatpush.msra.mxu0 %v2067
      %2181 = vmatpush.msra.mxu0 %v2063
      %2182 = vmatpush.msra.mxu0 %v2059
      %2183 = vmatpush.msra.mxu0 %v2055
      %2184 = vmatpush.msra.mxu0 %v2051
      %2185 = vmatpush.msra.mxu0 %v2047
      %2186 = vmatpush.msra.mxu0 %v2043
      %2187 = vmatpush.msra.mxu0 %v2039
      %2188 = vmatmul.f32.gmra.mxu0 %v592
      %v2189 = vpop.f32.mrf.mxu0
      %v2190 = vadd.f32 %v2167, %v2189
      %2191 = vmatmul.f32.gmra.mxu0 %v595
      %v2192 = vpop.f32.mrf.mxu0
      %v2193 = vadd.f32 %v2170, %v2192
      %2194 = vdwg.mxu0
      %2195 = vmatpush.msra.mxu0 %v1908
      %2196 = vmatpush.msra.mxu0 %v1904
      %2197 = vmatpush.msra.mxu0 %v1900
      %2198 = vmatpush.msra.mxu0 %v1896
      %2199 = vmatpush.msra.mxu0 %v1892
      %2200 = vmatpush.msra.mxu0 %v1888
      %2201 = vmatpush.msra.mxu0 %v1884
      %2202 = vmatpush.msra.mxu0 %v1880
      %2203 = vmatpush.msra.mxu0 %v1876
      %2204 = vmatpush.msra.mxu0 %v1872
      %2205 = vmatpush.msra.mxu0 %v1868
      %2206 = vmatpush.msra.mxu0 %v1864
      %2207 = vmatpush.msra.mxu0 %v1860
      %2208 = vmatpush.msra.mxu0 %v1856
      %2209 = vmatpush.msra.mxu0 %v1852
      %2210 = vmatpush.msra.mxu0 %v1848
      %2211 = vmatmul.f32.gmra.mxu0 %v523
      %v2212 = vpop.f32.mrf.mxu0
      %v2213 = vadd.f32 0.0, %v2212
      %2214 = vmatmul.f32.gmra.mxu0 %v526
      %v2215 = vpop.f32.mrf.mxu0
      %v2216 = vadd.f32 0.0, %v2215
      %2217 = vdwg.mxu0
      %2218 = vmatpush.msra.mxu0 %v1972
      %2219 = vmatpush.msra.mxu0 %v1968
      %2220 = vmatpush.msra.mxu0 %v1964
      %2221 = vmatpush.msra.mxu0 %v1960
      %2222 = vmatpush.msra.mxu0 %v1956
      %2223 = vmatpush.msra.mxu0 %v1952
      %2224 = vmatpush.msra.mxu0 %v1948
      %2225 = vmatpush.msra.mxu0 %v1944
      %2226 = vmatpush.msra.mxu0 %v1940
      %2227 = vmatpush.msra.mxu0 %v1936
      %2228 = vmatpush.msra.mxu0 %v1932
      %2229 = vmatpush.msra.mxu0 %v1928
      %2230 = vmatpush.msra.mxu0 %v1924
      %2231 = vmatpush.msra.mxu0 %v1920
      %2232 = vmatpush.msra.mxu0 %v1916
      %2233 = vmatpush.msra.mxu0 %v1912
      %2234 = vmatmul.f32.gmra.mxu0 %v546
      %v2235 = vpop.f32.mrf.mxu0
      %v2236 = vadd.f32 %v2213, %v2235
      %2237 = vmatmul.f32.gmra.mxu0 %v549
      %v2238 = vpop.f32.mrf.mxu0
      %v2239 = vadd.f32 %v2216, %v2238
      %2240 = vdwg.mxu0
      %2241 = vmatpush.msra.mxu0 %v2036
      %2242 = vmatpush.msra.mxu0 %v2032
      %2243 = vmatpush.msra.mxu0 %v2028
      %2244 = vmatpush.msra.mxu0 %v2024
      %2245 = vmatpush.msra.mxu0 %v2020
      %2246 = vmatpush.msra.mxu0 %v2016
      %2247 = vmatpush.msra.mxu0 %v2012
      %2248 = vmatpush.msra.mxu0 %v2008
      %2249 = vmatpush.msra.mxu0 %v2004
      %2250 = vmatpush.msra.mxu0 %v2000
      %2251 = vmatpush.msra.mxu0 %v1996
      %2252 = vmatpush.msra.mxu0 %v1992
      %2253 = vmatpush.msra.mxu0 %v1988
      %2254 = vmatpush.msra.mxu0 %v1984
      %2255 = vmatpush.msra.mxu0 %v1980
      %2256 = vmatpush.msra.mxu0 %v1976
      %2257 = vmatmul.f32.gmra.mxu0 %v569
      %v2258 = vpop.f32.mrf.mxu0
      %v2259 = vadd.f32 %v2236, %v2258
      %2260 = vmatmul.f32.gmra.mxu0 %v572
      %v2261 = vpop.f32.mrf.mxu0
      %v2262 = vadd.f32 %v2239, %v2261
      %2263 = vdwg.mxu0
      %2264 = vmatpush.msra.mxu0 %v2100
      %2265 = vmatpush.msra.mxu0 %v2096
      %2266 = vmatpush.msra.mxu0 %v2092
      %2267 = vmatpush.msra.mxu0 %v2088
      %2268 = vmatpush.msra.mxu0 %v2084
      %2269 = vmatpush.msra.mxu0 %v2080
      %2270 = vmatpush.msra.mxu0 %v2076
      %2271 = vmatpush.msra.mxu0 %v2072
      %2272 = vmatpush.msra.mxu0 %v2068
      %2273 = vmatpush.msra.mxu0 %v2064
      %2274 = vmatpush.msra.mxu0 %v2060
      %2275 = vmatpush.msra.mxu0 %v2056
      %2276 = vmatpush.msra.mxu0 %v2052
      %2277 = vmatpush.msra.mxu0 %v2048
      %2278 = vmatpush.msra.mxu0 %v2044
      %2279 = vmatpush.msra.mxu0 %v2040
      %2280 = vmatmul.f32.gmra.mxu0 %v592
      %v2281 = vpop.f32.mrf.mxu0
      %v2282 = vadd.f32 %v2259, %v2281
      %2283 = vmatmul.f32.gmra.mxu0 %v595
      %v2284 = vpop.f32.mrf.mxu0
      %v2285 = vadd.f32 %v2262, %v2284
      %2286 = vdwg.mxu0
      %2287 = vmatpush.msra.mxu0 %v1909
      %2288 = vmatpush.msra.mxu0 %v1905
      %2289 = vmatpush.msra.mxu0 %v1901
      %2290 = vmatpush.msra.mxu0 %v1897
      %2291 = vmatpush.msra.mxu0 %v1893
      %2292 = vmatpush.msra.mxu0 %v1889
      %2293 = vmatpush.msra.mxu0 %v1885
      %2294 = vmatpush.msra.mxu0 %v1881
      %2295 = vmatpush.msra.mxu0 %v1877
      %2296 = vmatpush.msra.mxu0 %v1873
      %2297 = vmatpush.msra.mxu0 %v1869
      %2298 = vmatpush.msra.mxu0 %v1865
      %2299 = vmatpush.msra.mxu0 %v1861
      %2300 = vmatpush.msra.mxu0 %v1857
      %2301 = vmatpush.msra.mxu0 %v1853
      %2302 = vmatpush.msra.mxu0 %v1849
      %2303 = vmatmul.f32.gmra.mxu0 %v523
      %v2304 = vpop.f32.mrf.mxu0
      %v2305 = vadd.f32 0.0, %v2304
      %2306 = vmatmul.f32.gmra.mxu0 %v526
      %v2307 = vpop.f32.mrf.mxu0
      %v2308 = vadd.f32 0.0, %v2307
      %2309 = vdwg.mxu0
      %2310 = vmatpush.msra.mxu0 %v1973
      %2311 = vmatpush.msra.mxu0 %v1969
      %2312 = vmatpush.msra.mxu0 %v1965
      %2313 = vmatpush.msra.mxu0 %v1961
      %2314 = vmatpush.msra.mxu0 %v1957
      %2315 = vmatpush.msra.mxu0 %v1953
      %2316 = vmatpush.msra.mxu0 %v1949
      %2317 = vmatpush.msra.mxu0 %v1945
      %2318 = vmatpush.msra.mxu0 %v1941
      %2319 = vmatpush.msra.mxu0 %v1937
      %2320 = vmatpush.msra.mxu0 %v1933
      %2321 = vmatpush.msra.mxu0 %v1929
      %2322 = vmatpush.msra.mxu0 %v1925
      %2323 = vmatpush.msra.mxu0 %v1921
      %2324 = vmatpush.msra.mxu0 %v1917
      %2325 = vmatpush.msra.mxu0 %v1913
      %2326 = vmatmul.f32.gmra.mxu0 %v546
      %v2327 = vpop.f32.mrf.mxu0
      %v2328 = vadd.f32 %v2305, %v2327
      %2329 = vmatmul.f32.gmra.mxu0 %v549
      %v2330 = vpop.f32.mrf.mxu0
      %v2331 = vadd.f32 %v2308, %v2330
      %2332 = vdwg.mxu0
      %2333 = vmatpush.msra.mxu0 %v2037
      %2334 = vmatpush.msra.mxu0 %v2033
      %2335 = vmatpush.msra.mxu0 %v2029
      %2336 = vmatpush.msra.mxu0 %v2025
      %2337 = vmatpush.msra.mxu0 %v2021
      %2338 = vmatpush.msra.mxu0 %v2017
      %2339 = vmatpush.msra.mxu0 %v2013
      %2340 = vmatpush.msra.mxu0 %v2009
      %2341 = vmatpush.msra.mxu0 %v2005
      %2342 = vmatpush.msra.mxu0 %v2001
      %2343 = vmatpush.msra.mxu0 %v1997
      %2344 = vmatpush.msra.mxu0 %v1993
      %2345 = vmatpush.msra.mxu0 %v1989
      %2346 = vmatpush.msra.mxu0 %v1985
      %2347 = vmatpush.msra.mxu0 %v1981
      %2348 = vmatpush.msra.mxu0 %v1977
      %2349 = vmatmul.f32.gmra.mxu0 %v569
      %v2350 = vpop.f32.mrf.mxu0
      %v2351 = vadd.f32 %v2328, %v2350
      %2352 = vmatmul.f32.gmra.mxu0 %v572
      %v2353 = vpop.f32.mrf.mxu0
      %v2354 = vadd.f32 %v2331, %v2353
      %2355 = vdwg.mxu0
      %2356 = vmatpush.msra.mxu0 %v2101
      %2357 = vmatpush.msra.mxu0 %v2097
      %2358 = vmatpush.msra.mxu0 %v2093
      %2359 = vmatpush.msra.mxu0 %v2089
      %2360 = vmatpush.msra.mxu0 %v2085
      %2361 = vmatpush.msra.mxu0 %v2081
      %2362 = vmatpush.msra.mxu0 %v2077
      %2363 = vmatpush.msra.mxu0 %v2073
      %2364 = vmatpush.msra.mxu0 %v2069
      %2365 = vmatpush.msra.mxu0 %v2065
      %2366 = vmatpush.msra.mxu0 %v2061
      %2367 = vmatpush.msra.mxu0 %v2057
      %2368 = vmatpush.msra.mxu0 %v2053
      %2369 = vmatpush.msra.mxu0 %v2049
      %2370 = vmatpush.msra.mxu0 %v2045
      %2371 = vmatpush.msra.mxu0 %v2041
      %2372 = vmatmul.f32.gmra.mxu0 %v592
      %v2373 = vpop.f32.mrf.mxu0
      %v2374 = vadd.f32 %v2351, %v2373
      %2375 = vmatmul.f32.gmra.mxu0 %v595
      %v2376 = vpop.f32.mrf.mxu0
      %v2377 = vadd.f32 %v2354, %v2376
      %2378 = vdwg.mxu0
      %2379 = vmatpush.msra.mxu0 %v1910
      %2380 = vmatpush.msra.mxu0 %v1906
      %2381 = vmatpush.msra.mxu0 %v1902
      %2382 = vmatpush.msra.mxu0 %v1898
      %2383 = vmatpush.msra.mxu0 %v1894
      %2384 = vmatpush.msra.mxu0 %v1890
      %2385 = vmatpush.msra.mxu0 %v1886
      %2386 = vmatpush.msra.mxu0 %v1882
      %2387 = vmatpush.msra.mxu0 %v1878
      %2388 = vmatpush.msra.mxu0 %v1874
      %2389 = vmatpush.msra.mxu0 %v1870
      %2390 = vmatpush.msra.mxu0 %v1866
      %2391 = vmatpush.msra.mxu0 %v1862
      %2392 = vmatpush.msra.mxu0 %v1858
      %2393 = vmatpush.msra.mxu0 %v1854
      %2394 = vmatpush.msra.mxu0 %v1850
      %2395 = vmatmul.f32.gmra.mxu0 %v523
      %v2396 = vpop.f32.mrf.mxu0
      %v2397 = vadd.f32 0.0, %v2396
      %2398 = vmatmul.f32.gmra.mxu0 %v526
      %v2399 = vpop.f32.mrf.mxu0
      %v2400 = vadd.f32 0.0, %v2399
      %2401 = vdwg.mxu0
      %2402 = vmatpush.msra.mxu0 %v1974
      %2403 = vmatpush.msra.mxu0 %v1970
      %2404 = vmatpush.msra.mxu0 %v1966
      %2405 = vmatpush.msra.mxu0 %v1962
      %2406 = vmatpush.msra.mxu0 %v1958
      %2407 = vmatpush.msra.mxu0 %v1954
      %2408 = vmatpush.msra.mxu0 %v1950
      %2409 = vmatpush.msra.mxu0 %v1946
      %2410 = vmatpush.msra.mxu0 %v1942
      %2411 = vmatpush.msra.mxu0 %v1938
      %2412 = vmatpush.msra.mxu0 %v1934
      %2413 = vmatpush.msra.mxu0 %v1930
      %2414 = vmatpush.msra.mxu0 %v1926
      %2415 = vmatpush.msra.mxu0 %v1922
      %2416 = vmatpush.msra.mxu0 %v1918
      %2417 = vmatpush.msra.mxu0 %v1914
      %2418 = vmatmul.f32.gmra.mxu0 %v546
      %v2419 = vpop.f32.mrf.mxu0
      %v2420 = vadd.f32 %v2397, %v2419
      %2421 = vmatmul.f32.gmra.mxu0 %v549
      %v2422 = vpop.f32.mrf.mxu0
      %v2423 = vadd.f32 %v2400, %v2422
      %2424 = vdwg.mxu0
      %2425 = vmatpush.msra.mxu0 %v2038
      %2426 = vmatpush.msra.mxu0 %v2034
      %2427 = vmatpush.msra.mxu0 %v2030
      %2428 = vmatpush.msra.mxu0 %v2026
      %2429 = vmatpush.msra.mxu0 %v2022
      %2430 = vmatpush.msra.mxu0 %v2018
      %2431 = vmatpush.msra.mxu0 %v2014
      %2432 = vmatpush.msra.mxu0 %v2010
      %2433 = vmatpush.msra.mxu0 %v2006
      %2434 = vmatpush.msra.mxu0 %v2002
      %2435 = vmatpush.msra.mxu0 %v1998
      %2436 = vmatpush.msra.mxu0 %v1994
      %2437 = vmatpush.msra.mxu0 %v1990
      %2438 = vmatpush.msra.mxu0 %v1986
      %2439 = vmatpush.msra.mxu0 %v1982
      %2440 = vmatpush.msra.mxu0 %v1978
      %2441 = vmatmul.f32.gmra.mxu0 %v569
      %v2442 = vpop.f32.mrf.mxu0
      %v2443 = vadd.f32 %v2420, %v2442
      %2444 = vmatmul.f32.gmra.mxu0 %v572
      %v2445 = vpop.f32.mrf.mxu0
      %v2446 = vadd.f32 %v2423, %v2445
      %2447 = vdwg.mxu0
      %2448 = vmatpush.msra.mxu0 %v2102
      %2449 = vmatpush.msra.mxu0 %v2098
      %2450 = vmatpush.msra.mxu0 %v2094
      %2451 = vmatpush.msra.mxu0 %v2090
      %2452 = vmatpush.msra.mxu0 %v2086
      %2453 = vmatpush.msra.mxu0 %v2082
      %2454 = vmatpush.msra.mxu0 %v2078
      %2455 = vmatpush.msra.mxu0 %v2074
      %2456 = vmatpush.msra.mxu0 %v2070
      %2457 = vmatpush.msra.mxu0 %v2066
      %2458 = vmatpush.msra.mxu0 %v2062
      %2459 = vmatpush.msra.mxu0 %v2058
      %2460 = vmatpush.msra.mxu0 %v2054
      %2461 = vmatpush.msra.mxu0 %v2050
      %2462 = vmatpush.msra.mxu0 %v2046
      %2463 = vmatpush.msra.mxu0 %v2042
      %2464 = vmatmul.f32.gmra.mxu0 %v592
      %v2465 = vpop.f32.mrf.mxu0
      %v2466 = vadd.f32 %v2443, %v2465
      %2467 = vmatmul.f32.gmra.mxu0 %v595
      %v2468 = vpop.f32.mrf.mxu0
      %v2469 = vadd.f32 %v2446, %v2468
      %2470 = vdwg.mxu0
      %v2471 = vadd.f32 %v1565, %v2190
      %v2472 = vadd.f32 %v1657, %v2282
      %v2473 = vadd.f32 %v1749, %v2374
      %v2474 = vadd.f32 %v1841, %v2466
      %v2475 = vadd.f32 %v1568, %v2193
      %v2476 = vadd.f32 %v1660, %v2285
      %v2477 = vadd.f32 %v1752, %v2377
      %v2478 = vadd.f32 %v1844, %v2469
      %v2479 = vld [vmem:[%s4] sm:$0xf]
      %v2481 = vperm.slane %v2479, 0
      %v2482 = vperm.slane %v2479, 1
      %v2483 = vperm.slane %v2479, 2
      %v2484 = vperm.slane %v2479, 3
      %v2489 = vadd.f32 %v2471, %v2481
      %v2490 = vadd.f32 %v2472, %v2482
      %v2491 = vadd.f32 %v2473, %v2483
      %v2492 = vadd.f32 %v2474, %v2484
      %v2493 = vadd.f32 %v2475, %v2481
      %v2494 = vadd.f32 %v2476, %v2482
      %v2495 = vadd.f32 %v2477, %v2483
      %v2496 = vadd.f32 %v2478, %v2484
      %v2497 = vld [vmem:[%s2] sm:$0xff]
      %v2498 = vld [vmem:[%s2 + $0x8] sm:$0xff]
      %v2499 = vld [vmem:[%s2 + $0x10] sm:$0xff]
      %v2500 = vld [vmem:[%s2 + $0x18] sm:$0xff]
      %v2501 = vld [vmem:[%s2 + $0x20] sm:$0xff]
      %v2502 = vld [vmem:[%s2 + $0x28] sm:$0xff]
      %v2503 = vld [vmem:[%s2 + $0x30] sm:$0xff]
      %v2504 = vld [vmem:[%s2 + $0x38] sm:$0xff]
      %v2505 = vld [vmem:[%s2 + $0x40] sm:$0xff]
      %v2506 = vld [vmem:[%s2 + $0x48] sm:$0xff]
      %v2507 = vld [vmem:[%s2 + $0x50] sm:$0xff]
      %v2508 = vld [vmem:[%s2 + $0x58] sm:$0xff]
      %v2509 = vld [vmem:[%s2 + $0x60] sm:$0xff]
      %v2510 = vld [vmem:[%s2 + $0x68] sm:$0xff]
      %v2511 = vld [vmem:[%s2 + $0x70] sm:$0xff]
      %v2512 = vld [vmem:[%s2 + $0x78] sm:$0xff]
      %v2513 = vld [vmem:[%s2 + $0x80] sm:$0xff]
      %v2514 = vld [vmem:[%s2 + $0x88] sm:$0xff]
      %v2515 = vld [vmem:[%s2 + $0x90] sm:$0xff]
      %v2516 = vld [vmem:[%s2 + $0x98] sm:$0xff]
      %v2517 = vld [vmem:[%s2 + $0xa0] sm:$0xff]
      %v2518 = vld [vmem:[%s2 + $0xa8] sm:$0xff]
      %v2519 = vld [vmem:[%s2 + $0xb0] sm:$0xff]
      %v2520 = vld [vmem:[%s2 + $0xb8] sm:$0xff]
      %v2521 = vld [vmem:[%s2 + $0xc0] sm:$0xff]
      %v2522 = vld [vmem:[%s2 + $0xc8] sm:$0xff]
      %v2523 = vld [vmem:[%s2 + $0xd0] sm:$0xff]
      %v2524 = vld [vmem:[%s2 + $0xd8] sm:$0xff]
      %v2525 = vld [vmem:[%s2 + $0xe0] sm:$0xff]
      %v2526 = vld [vmem:[%s2 + $0xe8] sm:$0xff]
      %v2527 = vld [vmem:[%s2 + $0xf0] sm:$0xff]
      %v2528 = vld [vmem:[%s2 + $0xf8] sm:$0xff]
      %v2529 = vld [vmem:[%s2 + $0x100] sm:$0xff]
      %v2530 = vld [vmem:[%s2 + $0x108] sm:$0xff]
      %v2531 = vld [vmem:[%s2 + $0x110] sm:$0xff]
      %v2532 = vld [vmem:[%s2 + $0x118] sm:$0xff]
      %v2533 = vld [vmem:[%s2 + $0x120] sm:$0xff]
      %v2534 = vld [vmem:[%s2 + $0x128] sm:$0xff]
      %v2535 = vld [vmem:[%s2 + $0x130] sm:$0xff]
      %v2536 = vld [vmem:[%s2 + $0x138] sm:$0xff]
      %v2537 = vld [vmem:[%s2 + $0x140] sm:$0xff]
      %v2538 = vld [vmem:[%s2 + $0x148] sm:$0xff]
      %v2539 = vld [vmem:[%s2 + $0x150] sm:$0xff]
      %v2540 = vld [vmem:[%s2 + $0x158] sm:$0xff]
      %v2541 = vld [vmem:[%s2 + $0x160] sm:$0xff]
      %v2542 = vld [vmem:[%s2 + $0x168] sm:$0xff]
      %v2543 = vld [vmem:[%s2 + $0x170] sm:$0xff]
      %v2544 = vld [vmem:[%s2 + $0x178] sm:$0xff]
      %v2545 = vld [vmem:[%s2 + $0x180] sm:$0xff]
      %v2546 = vld [vmem:[%s2 + $0x188] sm:$0xff]
      %v2547 = vld [vmem:[%s2 + $0x190] sm:$0xff]
      %v2548 = vld [vmem:[%s2 + $0x198] sm:$0xff]
      %v2549 = vld [vmem:[%s2 + $0x1a0] sm:$0xff]
      %v2550 = vld [vmem:[%s2 + $0x1a8] sm:$0xff]
      %v2551 = vld [vmem:[%s2 + $0x1b0] sm:$0xff]
      %v2552 = vld [vmem:[%s2 + $0x1b8] sm:$0xff]
      %v2553 = vld [vmem:[%s2 + $0x1c0] sm:$0xff]
      %v2554 = vld [vmem:[%s2 + $0x1c8] sm:$0xff]
      %v2555 = vld [vmem:[%s2 + $0x1d0] sm:$0xff]
      %v2556 = vld [vmem:[%s2 + $0x1d8] sm:$0xff]
      %v2557 = vld [vmem:[%s2 + $0x1e0] sm:$0xff]
      %v2558 = vld [vmem:[%s2 + $0x1e8] sm:$0xff]
      %v2559 = vld [vmem:[%s2 + $0x1f0] sm:$0xff]
      %v2560 = vld [vmem:[%s2 + $0x1f8] sm:$0xff]
      %v2561 = vld [vmem:[%s2 + $0x200] sm:$0xff]
      %v2562 = vld [vmem:[%s2 + $0x208] sm:$0xff]
      %v2563 = vld [vmem:[%s2 + $0x210] sm:$0xff]
      %v2564 = vld [vmem:[%s2 + $0x218] sm:$0xff]
      %v2565 = vld [vmem:[%s2 + $0x220] sm:$0xff]
      %v2566 = vld [vmem:[%s2 + $0x228] sm:$0xff]
      %v2567 = vld [vmem:[%s2 + $0x230] sm:$0xff]
      %v2568 = vld [vmem:[%s2 + $0x238] sm:$0xff]
      %v2569 = vld [vmem:[%s2 + $0x240] sm:$0xff]
      %v2570 = vld [vmem:[%s2 + $0x248] sm:$0xff]
      %v2571 = vld [vmem:[%s2 + $0x250] sm:$0xff]
      %v2572 = vld [vmem:[%s2 + $0x258] sm:$0xff]
      %v2573 = vld [vmem:[%s2 + $0x260] sm:$0xff]
      %v2574 = vld [vmem:[%s2 + $0x268] sm:$0xff]
      %v2575 = vld [vmem:[%s2 + $0x270] sm:$0xff]
      %v2576 = vld [vmem:[%s2 + $0x278] sm:$0xff]
      %v2577 = vld [vmem:[%s2 + $0x280] sm:$0xff]
      %v2578 = vld [vmem:[%s2 + $0x288] sm:$0xff]
      %v2579 = vld [vmem:[%s2 + $0x290] sm:$0xff]
      %v2580 = vld [vmem:[%s2 + $0x298] sm:$0xff]
      %v2581 = vld [vmem:[%s2 + $0x2a0] sm:$0xff]
      %v2582 = vld [vmem:[%s2 + $0x2a8] sm:$0xff]
      %v2583 = vld [vmem:[%s2 + $0x2b0] sm:$0xff]
      %v2584 = vld [vmem:[%s2 + $0x2b8] sm:$0xff]
      %v2585 = vld [vmem:[%s2 + $0x2c0] sm:$0xff]
      %v2586 = vld [vmem:[%s2 + $0x2c8] sm:$0xff]
      %v2587 = vld [vmem:[%s2 + $0x2d0] sm:$0xff]
      %v2588 = vld [vmem:[%s2 + $0x2d8] sm:$0xff]
      %v2589 = vld [vmem:[%s2 + $0x2e0] sm:$0xff]
      %v2590 = vld [vmem:[%s2 + $0x2e8] sm:$0xff]
      %v2591 = vld [vmem:[%s2 + $0x2f0] sm:$0xff]
      %v2592 = vld [vmem:[%s2 + $0x2f8] sm:$0xff]
      %v2593 = vld [vmem:[%s2 + $0x300] sm:$0xff]
      %v2594 = vld [vmem:[%s2 + $0x308] sm:$0xff]
      %v2595 = vld [vmem:[%s2 + $0x310] sm:$0xff]
      %v2596 = vld [vmem:[%s2 + $0x318] sm:$0xff]
      %v2597 = vld [vmem:[%s2 + $0x320] sm:$0xff]
      %v2598 = vld [vmem:[%s2 + $0x328] sm:$0xff]
      %v2599 = vld [vmem:[%s2 + $0x330] sm:$0xff]
      %v2600 = vld [vmem:[%s2 + $0x338] sm:$0xff]
      %v2601 = vld [vmem:[%s2 + $0x340] sm:$0xff]
      %v2602 = vld [vmem:[%s2 + $0x348] sm:$0xff]
      %v2603 = vld [vmem:[%s2 + $0x350] sm:$0xff]
      %v2604 = vld [vmem:[%s2 + $0x358] sm:$0xff]
      %v2605 = vld [vmem:[%s2 + $0x360] sm:$0xff]
      %v2606 = vld [vmem:[%s2 + $0x368] sm:$0xff]
      %v2607 = vld [vmem:[%s2 + $0x370] sm:$0xff]
      %v2608 = vld [vmem:[%s2 + $0x378] sm:$0xff]
      %v2609 = vld [vmem:[%s2 + $0x380] sm:$0xff]
      %v2610 = vld [vmem:[%s2 + $0x388] sm:$0xff]
      %v2611 = vld [vmem:[%s2 + $0x390] sm:$0xff]
      %v2612 = vld [vmem:[%s2 + $0x398] sm:$0xff]
      %v2613 = vld [vmem:[%s2 + $0x3a0] sm:$0xff]
      %v2614 = vld [vmem:[%s2 + $0x3a8] sm:$0xff]
      %v2615 = vld [vmem:[%s2 + $0x3b0] sm:$0xff]
      %v2616 = vld [vmem:[%s2 + $0x3b8] sm:$0xff]
      %v2617 = vld [vmem:[%s2 + $0x3c0] sm:$0xff]
      %v2618 = vld [vmem:[%s2 + $0x3c8] sm:$0xff]
      %v2619 = vld [vmem:[%s2 + $0x3d0] sm:$0xff]
      %v2620 = vld [vmem:[%s2 + $0x3d8] sm:$0xff]
      %v2621 = vld [vmem:[%s2 + $0x3e0] sm:$0xff]
      %v2622 = vld [vmem:[%s2 + $0x3e8] sm:$0xff]
      %v2623 = vld [vmem:[%s2 + $0x3f0] sm:$0xff]
      %v2624 = vld [vmem:[%s2 + $0x3f8] sm:$0xff]
      %v2625 = vld [vmem:[%s2 + $0x400] sm:$0xff]
      %v2626 = vld [vmem:[%s2 + $0x408] sm:$0xff]
      %v2627 = vld [vmem:[%s2 + $0x410] sm:$0xff]
      %v2628 = vld [vmem:[%s2 + $0x418] sm:$0xff]
      %v2629 = vld [vmem:[%s2 + $0x420] sm:$0xff]
      %v2630 = vld [vmem:[%s2 + $0x428] sm:$0xff]
      %v2631 = vld [vmem:[%s2 + $0x430] sm:$0xff]
      %v2632 = vld [vmem:[%s2 + $0x438] sm:$0xff]
      %v2633 = vld [vmem:[%s2 + $0x440] sm:$0xff]
      %v2634 = vld [vmem:[%s2 + $0x448] sm:$0xff]
      %v2635 = vld [vmem:[%s2 + $0x450] sm:$0xff]
      %v2636 = vld [vmem:[%s2 + $0x458] sm:$0xff]
      %v2637 = vld [vmem:[%s2 + $0x460] sm:$0xff]
      %v2638 = vld [vmem:[%s2 + $0x468] sm:$0xff]
      %v2639 = vld [vmem:[%s2 + $0x470] sm:$0xff]
      %v2640 = vld [vmem:[%s2 + $0x478] sm:$0xff]
      %v2641 = vld [vmem:[%s2 + $0x480] sm:$0xff]
      %v2642 = vld [vmem:[%s2 + $0x488] sm:$0xff]
      %v2643 = vld [vmem:[%s2 + $0x490] sm:$0xff]
      %v2644 = vld [vmem:[%s2 + $0x498] sm:$0xff]
      %v2645 = vld [vmem:[%s2 + $0x4a0] sm:$0xff]
      %v2646 = vld [vmem:[%s2 + $0x4a8] sm:$0xff]
      %v2647 = vld [vmem:[%s2 + $0x4b0] sm:$0xff]
      %v2648 = vld [vmem:[%s2 + $0x4b8] sm:$0xff]
      %v2649 = vld [vmem:[%s2 + $0x4c0] sm:$0xff]
      %v2650 = vld [vmem:[%s2 + $0x4c8] sm:$0xff]
      %v2651 = vld [vmem:[%s2 + $0x4d0] sm:$0xff]
      %v2652 = vld [vmem:[%s2 + $0x4d8] sm:$0xff]
      %v2653 = vld [vmem:[%s2 + $0x4e0] sm:$0xff]
      %v2654 = vld [vmem:[%s2 + $0x4e8] sm:$0xff]
      %v2655 = vld [vmem:[%s2 + $0x4f0] sm:$0xff]
      %v2656 = vld [vmem:[%s2 + $0x4f8] sm:$0xff]
      %v2657 = vld [vmem:[%s2 + $0x500] sm:$0xff]
      %v2658 = vld [vmem:[%s2 + $0x508] sm:$0xff]
      %v2659 = vld [vmem:[%s2 + $0x510] sm:$0xff]
      %v2660 = vld [vmem:[%s2 + $0x518] sm:$0xff]
      %v2661 = vld [vmem:[%s2 + $0x520] sm:$0xff]
      %v2662 = vld [vmem:[%s2 + $0x528] sm:$0xff]
      %v2663 = vld [vmem:[%s2 + $0x530] sm:$0xff]
      %v2664 = vld [vmem:[%s2 + $0x538] sm:$0xff]
      %v2665 = vld [vmem:[%s2 + $0x540] sm:$0xff]
      %v2666 = vld [vmem:[%s2 + $0x548] sm:$0xff]
      %v2667 = vld [vmem:[%s2 + $0x550] sm:$0xff]
      %v2668 = vld [vmem:[%s2 + $0x558] sm:$0xff]
      %v2669 = vld [vmem:[%s2 + $0x560] sm:$0xff]
      %v2670 = vld [vmem:[%s2 + $0x568] sm:$0xff]
      %v2671 = vld [vmem:[%s2 + $0x570] sm:$0xff]
      %v2672 = vld [vmem:[%s2 + $0x578] sm:$0xff]
      %v2673 = vld [vmem:[%s2 + $0x580] sm:$0xff]
      %v2674 = vld [vmem:[%s2 + $0x588] sm:$0xff]
      %v2675 = vld [vmem:[%s2 + $0x590] sm:$0xff]
      %v2676 = vld [vmem:[%s2 + $0x598] sm:$0xff]
      %v2677 = vld [vmem:[%s2 + $0x5a0] sm:$0xff]
      %v2678 = vld [vmem:[%s2 + $0x5a8] sm:$0xff]
      %v2679 = vld [vmem:[%s2 + $0x5b0] sm:$0xff]
      %v2680 = vld [vmem:[%s2 + $0x5b8] sm:$0xff]
      %v2681 = vld [vmem:[%s2 + $0x5c0] sm:$0xff]
      %v2682 = vld [vmem:[%s2 + $0x5c8] sm:$0xff]
      %v2683 = vld [vmem:[%s2 + $0x5d0] sm:$0xff]
      %v2684 = vld [vmem:[%s2 + $0x5d8] sm:$0xff]
      %v2685 = vld [vmem:[%s2 + $0x5e0] sm:$0xff]
      %v2686 = vld [vmem:[%s2 + $0x5e8] sm:$0xff]
      %v2687 = vld [vmem:[%s2 + $0x5f0] sm:$0xff]
      %v2688 = vld [vmem:[%s2 + $0x5f8] sm:$0xff]
      %v2689 = vld [vmem:[%s2 + $0x600] sm:$0xff]
      %v2690 = vld [vmem:[%s2 + $0x608] sm:$0xff]
      %v2691 = vld [vmem:[%s2 + $0x610] sm:$0xff]
      %v2692 = vld [vmem:[%s2 + $0x618] sm:$0xff]
      %v2693 = vld [vmem:[%s2 + $0x620] sm:$0xff]
      %v2694 = vld [vmem:[%s2 + $0x628] sm:$0xff]
      %v2695 = vld [vmem:[%s2 + $0x630] sm:$0xff]
      %v2696 = vld [vmem:[%s2 + $0x638] sm:$0xff]
      %v2697 = vld [vmem:[%s2 + $0x640] sm:$0xff]
      %v2698 = vld [vmem:[%s2 + $0x648] sm:$0xff]
      %v2699 = vld [vmem:[%s2 + $0x650] sm:$0xff]
      %v2700 = vld [vmem:[%s2 + $0x658] sm:$0xff]
      %v2701 = vld [vmem:[%s2 + $0x660] sm:$0xff]
      %v2702 = vld [vmem:[%s2 + $0x668] sm:$0xff]
      %v2703 = vld [vmem:[%s2 + $0x670] sm:$0xff]
      %v2704 = vld [vmem:[%s2 + $0x678] sm:$0xff]
      %v2705 = vld [vmem:[%s2 + $0x680] sm:$0xff]
      %v2706 = vld [vmem:[%s2 + $0x688] sm:$0xff]
      %v2707 = vld [vmem:[%s2 + $0x690] sm:$0xff]
      %v2708 = vld [vmem:[%s2 + $0x698] sm:$0xff]
      %v2709 = vld [vmem:[%s2 + $0x6a0] sm:$0xff]
      %v2710 = vld [vmem:[%s2 + $0x6a8] sm:$0xff]
      %v2711 = vld [vmem:[%s2 + $0x6b0] sm:$0xff]
      %v2712 = vld [vmem:[%s2 + $0x6b8] sm:$0xff]
      %v2713 = vld [vmem:[%s2 + $0x6c0] sm:$0xff]
      %v2714 = vld [vmem:[%s2 + $0x6c8] sm:$0xff]
      %v2715 = vld [vmem:[%s2 + $0x6d0] sm:$0xff]
      %v2716 = vld [vmem:[%s2 + $0x6d8] sm:$0xff]
      %v2717 = vld [vmem:[%s2 + $0x6e0] sm:$0xff]
      %v2718 = vld [vmem:[%s2 + $0x6e8] sm:$0xff]
      %v2719 = vld [vmem:[%s2 + $0x6f0] sm:$0xff]
      %v2720 = vld [vmem:[%s2 + $0x6f8] sm:$0xff]
      %v2721 = vld [vmem:[%s2 + $0x700] sm:$0xff]
      %v2722 = vld [vmem:[%s2 + $0x708] sm:$0xff]
      %v2723 = vld [vmem:[%s2 + $0x710] sm:$0xff]
      %v2724 = vld [vmem:[%s2 + $0x718] sm:$0xff]
      %v2725 = vld [vmem:[%s2 + $0x720] sm:$0xff]
      %v2726 = vld [vmem:[%s2 + $0x728] sm:$0xff]
      %v2727 = vld [vmem:[%s2 + $0x730] sm:$0xff]
      %v2728 = vld [vmem:[%s2 + $0x738] sm:$0xff]
      %v2729 = vld [vmem:[%s2 + $0x740] sm:$0xff]
      %v2730 = vld [vmem:[%s2 + $0x748] sm:$0xff]
      %v2731 = vld [vmem:[%s2 + $0x750] sm:$0xff]
      %v2732 = vld [vmem:[%s2 + $0x758] sm:$0xff]
      %v2733 = vld [vmem:[%s2 + $0x760] sm:$0xff]
      %v2734 = vld [vmem:[%s2 + $0x768] sm:$0xff]
      %v2735 = vld [vmem:[%s2 + $0x770] sm:$0xff]
      %v2736 = vld [vmem:[%s2 + $0x778] sm:$0xff]
      %v2737 = vld [vmem:[%s2 + $0x780] sm:$0xff]
      %v2738 = vld [vmem:[%s2 + $0x788] sm:$0xff]
      %v2739 = vld [vmem:[%s2 + $0x790] sm:$0xff]
      %v2740 = vld [vmem:[%s2 + $0x798] sm:$0xff]
      %v2741 = vld [vmem:[%s2 + $0x7a0] sm:$0xff]
      %v2742 = vld [vmem:[%s2 + $0x7a8] sm:$0xff]
      %v2743 = vld [vmem:[%s2 + $0x7b0] sm:$0xff]
      %v2744 = vld [vmem:[%s2 + $0x7b8] sm:$0xff]
      %v2745 = vld [vmem:[%s2 + $0x7c0] sm:$0xff]
      %v2746 = vld [vmem:[%s2 + $0x7c8] sm:$0xff]
      %v2747 = vld [vmem:[%s2 + $0x7d0] sm:$0xff]
      %v2748 = vld [vmem:[%s2 + $0x7d8] sm:$0xff]
      %v2749 = vld [vmem:[%s2 + $0x7e0] sm:$0xff]
      %v2750 = vld [vmem:[%s2 + $0x7e8] sm:$0xff]
      %v2751 = vld [vmem:[%s2 + $0x7f0] sm:$0xff]
      %v2752 = vld [vmem:[%s2 + $0x7f8] sm:$0xff]
      %2753 = vmatpush.msra.mxu0 %v2557
      %2754 = vmatpush.msra.mxu0 %v2553
      %2755 = vmatpush.msra.mxu0 %v2549
      %2756 = vmatpush.msra.mxu0 %v2545
      %2757 = vmatpush.msra.mxu0 %v2541
      %2758 = vmatpush.msra.mxu0 %v2537
      %2759 = vmatpush.msra.mxu0 %v2533
      %2760 = vmatpush.msra.mxu0 %v2529
      %2761 = vmatpush.msra.mxu0 %v2525
      %2762 = vmatpush.msra.mxu0 %v2521
      %2763 = vmatpush.msra.mxu0 %v2517
      %2764 = vmatpush.msra.mxu0 %v2513
      %2765 = vmatpush.msra.mxu0 %v2509
      %2766 = vmatpush.msra.mxu0 %v2505
      %2767 = vmatpush.msra.mxu0 %v2501
      %2768 = vmatpush.msra.mxu0 %v2497
      %2769 = vmatmul.f32.gmra.mxu0 %v2489
      %v2770 = vpop.f32.mrf.mxu0
      %v2771 = vadd.f32 0.0, %v2770
      %2772 = vmatmul.f32.gmra.mxu0 %v2493
      %v2773 = vpop.f32.mrf.mxu0
      %v2774 = vadd.f32 0.0, %v2773
      %2775 = vdwg.mxu0
      %2776 = vmatpush.msra.mxu0 %v2621
      %2777 = vmatpush.msra.mxu0 %v2617
      %2778 = vmatpush.msra.mxu0 %v2613
      %2779 = vmatpush.msra.mxu0 %v2609
      %2780 = vmatpush.msra.mxu0 %v2605
      %2781 = vmatpush.msra.mxu0 %v2601
      %2782 = vmatpush.msra.mxu0 %v2597
      %2783 = vmatpush.msra.mxu0 %v2593
      %2784 = vmatpush.msra.mxu0 %v2589
      %2785 = vmatpush.msra.mxu0 %v2585
      %2786 = vmatpush.msra.mxu0 %v2581
      %2787 = vmatpush.msra.mxu0 %v2577
      %2788 = vmatpush.msra.mxu0 %v2573
      %2789 = vmatpush.msra.mxu0 %v2569
      %2790 = vmatpush.msra.mxu0 %v2565
      %2791 = vmatpush.msra.mxu0 %v2561
      %2792 = vmatmul.f32.gmra.mxu0 %v2490
      %v2793 = vpop.f32.mrf.mxu0
      %v2794 = vadd.f32 %v2771, %v2793
      %2795 = vmatmul.f32.gmra.mxu0 %v2494
      %v2796 = vpop.f32.mrf.mxu0
      %v2797 = vadd.f32 %v2774, %v2796
      %2798 = vdwg.mxu0
      %2799 = vmatpush.msra.mxu0 %v2685
      %2800 = vmatpush.msra.mxu0 %v2681
      %2801 = vmatpush.msra.mxu0 %v2677
      %2802 = vmatpush.msra.mxu0 %v2673
      %2803 = vmatpush.msra.mxu0 %v2669
      %2804 = vmatpush.msra.mxu0 %v2665
      %2805 = vmatpush.msra.mxu0 %v2661
      %2806 = vmatpush.msra.mxu0 %v2657
      %2807 = vmatpush.msra.mxu0 %v2653
      %2808 = vmatpush.msra.mxu0 %v2649
      %2809 = vmatpush.msra.mxu0 %v2645
      %2810 = vmatpush.msra.mxu0 %v2641
      %2811 = vmatpush.msra.mxu0 %v2637
      %2812 = vmatpush.msra.mxu0 %v2633
      %2813 = vmatpush.msra.mxu0 %v2629
      %2814 = vmatpush.msra.mxu0 %v2625
      %2815 = vmatmul.f32.gmra.mxu0 %v2491
      %v2816 = vpop.f32.mrf.mxu0
      %v2817 = vadd.f32 %v2794, %v2816
      %2818 = vmatmul.f32.gmra.mxu0 %v2495
      %v2819 = vpop.f32.mrf.mxu0
      %v2820 = vadd.f32 %v2797, %v2819
      %2821 = vdwg.mxu0
      %2822 = vmatpush.msra.mxu0 %v2749
      %2823 = vmatpush.msra.mxu0 %v2745
      %2824 = vmatpush.msra.mxu0 %v2741
      %2825 = vmatpush.msra.mxu0 %v2737
      %2826 = vmatpush.msra.mxu0 %v2733
      %2827 = vmatpush.msra.mxu0 %v2729
      %2828 = vmatpush.msra.mxu0 %v2725
      %2829 = vmatpush.msra.mxu0 %v2721
      %2830 = vmatpush.msra.mxu0 %v2717
      %2831 = vmatpush.msra.mxu0 %v2713
      %2832 = vmatpush.msra.mxu0 %v2709
      %2833 = vmatpush.msra.mxu0 %v2705
      %2834 = vmatpush.msra.mxu0 %v2701
      %2835 = vmatpush.msra.mxu0 %v2697
      %2836 = vmatpush.msra.mxu0 %v2693
      %2837 = vmatpush.msra.mxu0 %v2689
      %2838 = vmatmul.f32.gmra.mxu0 %v2492
      %v2839 = vpop.f32.mrf.mxu0
      %v2840 = vadd.f32 %v2817, %v2839
      %2841 = vmatmul.f32.gmra.mxu0 %v2496
      %v2842 = vpop.f32.mrf.mxu0
      %v2843 = vadd.f32 %v2820, %v2842
      %2844 = vdwg.mxu0
      %2845 = vmatpush.msra.mxu0 %v2558
      %2846 = vmatpush.msra.mxu0 %v2554
      %2847 = vmatpush.msra.mxu0 %v2550
      %2848 = vmatpush.msra.mxu0 %v2546
      %2849 = vmatpush.msra.mxu0 %v2542
      %2850 = vmatpush.msra.mxu0 %v2538
      %2851 = vmatpush.msra.mxu0 %v2534
      %2852 = vmatpush.msra.mxu0 %v2530
      %2853 = vmatpush.msra.mxu0 %v2526
      %2854 = vmatpush.msra.mxu0 %v2522
      %2855 = vmatpush.msra.mxu0 %v2518
      %2856 = vmatpush.msra.mxu0 %v2514
      %2857 = vmatpush.msra.mxu0 %v2510
      %2858 = vmatpush.msra.mxu0 %v2506
      %2859 = vmatpush.msra.mxu0 %v2502
      %2860 = vmatpush.msra.mxu0 %v2498
      %2861 = vmatmul.f32.gmra.mxu0 %v2489
      %v2862 = vpop.f32.mrf.mxu0
      %v2863 = vadd.f32 0.0, %v2862
      %2864 = vmatmul.f32.gmra.mxu0 %v2493
      %v2865 = vpop.f32.mrf.mxu0
      %v2866 = vadd.f32 0.0, %v2865
      %2867 = vdwg.mxu0
      %2868 = vmatpush.msra.mxu0 %v2622
      %2869 = vmatpush.msra.mxu0 %v2618
      %2870 = vmatpush.msra.mxu0 %v2614
      %2871 = vmatpush.msra.mxu0 %v2610
      %2872 = vmatpush.msra.mxu0 %v2606
      %2873 = vmatpush.msra.mxu0 %v2602
      %2874 = vmatpush.msra.mxu0 %v2598
      %2875 = vmatpush.msra.mxu0 %v2594
      %2876 = vmatpush.msra.mxu0 %v2590
      %2877 = vmatpush.msra.mxu0 %v2586
      %2878 = vmatpush.msra.mxu0 %v2582
      %2879 = vmatpush.msra.mxu0 %v2578
      %2880 = vmatpush.msra.mxu0 %v2574
      %2881 = vmatpush.msra.mxu0 %v2570
      %2882 = vmatpush.msra.mxu0 %v2566
      %2883 = vmatpush.msra.mxu0 %v2562
      %2884 = vmatmul.f32.gmra.mxu0 %v2490
      %v2885 = vpop.f32.mrf.mxu0
      %v2886 = vadd.f32 %v2863, %v2885
      %2887 = vmatmul.f32.gmra.mxu0 %v2494
      %v2888 = vpop.f32.mrf.mxu0
      %v2889 = vadd.f32 %v2866, %v2888
      %2890 = vdwg.mxu0
      %2891 = vmatpush.msra.mxu0 %v2686
      %2892 = vmatpush.msra.mxu0 %v2682
      %2893 = vmatpush.msra.mxu0 %v2678
      %2894 = vmatpush.msra.mxu0 %v2674
      %2895 = vmatpush.msra.mxu0 %v2670
      %2896 = vmatpush.msra.mxu0 %v2666
      %2897 = vmatpush.msra.mxu0 %v2662
      %2898 = vmatpush.msra.mxu0 %v2658
      %2899 = vmatpush.msra.mxu0 %v2654
      %2900 = vmatpush.msra.mxu0 %v2650
      %2901 = vmatpush.msra.mxu0 %v2646
      %2902 = vmatpush.msra.mxu0 %v2642
      %2903 = vmatpush.msra.mxu0 %v2638
      %2904 = vmatpush.msra.mxu0 %v2634
      %2905 = vmatpush.msra.mxu0 %v2630
      %2906 = vmatpush.msra.mxu0 %v2626
      %2907 = vmatmul.f32.gmra.mxu0 %v2491
      %v2908 = vpop.f32.mrf.mxu0
      %v2909 = vadd.f32 %v2886, %v2908
      %2910 = vmatmul.f32.gmra.mxu0 %v2495
      %v2911 = vpop.f32.mrf.mxu0
      %v2912 = vadd.f32 %v2889, %v2911
      %2913 = vdwg.mxu0
      %2914 = vmatpush.msra.mxu0 %v2750
      %2915 = vmatpush.msra.mxu0 %v2746
      %2916 = vmatpush.msra.mxu0 %v2742
      %2917 = vmatpush.msra.mxu0 %v2738
      %2918 = vmatpush.msra.mxu0 %v2734
      %2919 = vmatpush.msra.mxu0 %v2730
      %2920 = vmatpush.msra.mxu0 %v2726
      %2921 = vmatpush.msra.mxu0 %v2722
      %2922 = vmatpush.msra.mxu0 %v2718
      %2923 = vmatpush.msra.mxu0 %v2714
      %2924 = vmatpush.msra.mxu0 %v2710
      %2925 = vmatpush.msra.mxu0 %v2706
      %2926 = vmatpush.msra.mxu0 %v2702
      %2927 = vmatpush.msra.mxu0 %v2698
      %2928 = vmatpush.msra.mxu0 %v2694
      %2929 = vmatpush.msra.mxu0 %v2690
      %2930 = vmatmul.f32.gmra.mxu0 %v2492
      %v2931 = vpop.f32.mrf.mxu0
      %v2932 = vadd.f32 %v2909, %v2931
      %2933 = vmatmul.f32.gmra.mxu0 %v2496
      %v2934 = vpop.f32.mrf.mxu0
      %v2935 = vadd.f32 %v2912, %v2934
      %2936 = vdwg.mxu0
      %2937 = vmatpush.msra.mxu0 %v2559
      %2938 = vmatpush.msra.mxu0 %v2555
      %2939 = vmatpush.msra.mxu0 %v2551
      %2940 = vmatpush.msra.mxu0 %v2547
      %2941 = vmatpush.msra.mxu0 %v2543
      %2942 = vmatpush.msra.mxu0 %v2539
      %2943 = vmatpush.msra.mxu0 %v2535
      %2944 = vmatpush.msra.mxu0 %v2531
      %2945 = vmatpush.msra.mxu0 %v2527
      %2946 = vmatpush.msra.mxu0 %v2523
      %2947 = vmatpush.msra.mxu0 %v2519
      %2948 = vmatpush.msra.mxu0 %v2515
      %2949 = vmatpush.msra.mxu0 %v2511
      %2950 = vmatpush.msra.mxu0 %v2507
      %2951 = vmatpush.msra.mxu0 %v2503
      %2952 = vmatpush.msra.mxu0 %v2499
      %2953 = vmatmul.f32.gmra.mxu0 %v2489
      %v2954 = vpop.f32.mrf.mxu0
      %v2955 = vadd.f32 0.0, %v2954
      %2956 = vmatmul.f32.gmra.mxu0 %v2493
      %v2957 = vpop.f32.mrf.mxu0
      %v2958 = vadd.f32 0.0, %v2957
      %2959 = vdwg.mxu0
      %2960 = vmatpush.msra.mxu0 %v2623
      %2961 = vmatpush.msra.mxu0 %v2619
      %2962 = vmatpush.msra.mxu0 %v2615
      %2963 = vmatpush.msra.mxu0 %v2611
      %2964 = vmatpush.msra.mxu0 %v2607
      %2965 = vmatpush.msra.mxu0 %v2603
      %2966 = vmatpush.msra.mxu0 %v2599
      %2967 = vmatpush.msra.mxu0 %v2595
      %2968 = vmatpush.msra.mxu0 %v2591
      %2969 = vmatpush.msra.mxu0 %v2587
      %2970 = vmatpush.msra.mxu0 %v2583
      %2971 = vmatpush.msra.mxu0 %v2579
      %2972 = vmatpush.msra.mxu0 %v2575
      %2973 = vmatpush.msra.mxu0 %v2571
      %2974 = vmatpush.msra.mxu0 %v2567
      %2975 = vmatpush.msra.mxu0 %v2563
      %2976 = vmatmul.f32.gmra.mxu0 %v2490
      %v2977 = vpop.f32.mrf.mxu0
      %v2978 = vadd.f32 %v2955, %v2977
      %2979 = vmatmul.f32.gmra.mxu0 %v2494
      %v2980 = vpop.f32.mrf.mxu0
      %v2981 = vadd.f32 %v2958, %v2980
      %2982 = vdwg.mxu0
      %2983 = vmatpush.msra.mxu0 %v2687
      %2984 = vmatpush.msra.mxu0 %v2683
      %2985 = vmatpush.msra.mxu0 %v2679
      %2986 = vmatpush.msra.mxu0 %v2675
      %2987 = vmatpush.msra.mxu0 %v2671
      %2988 = vmatpush.msra.mxu0 %v2667
      %2989 = vmatpush.msra.mxu0 %v2663
      %2990 = vmatpush.msra.mxu0 %v2659
      %2991 = vmatpush.msra.mxu0 %v2655
      %2992 = vmatpush.msra.mxu0 %v2651
      %2993 = vmatpush.msra.mxu0 %v2647
      %2994 = vmatpush.msra.mxu0 %v2643
      %2995 = vmatpush.msra.mxu0 %v2639
      %2996 = vmatpush.msra.mxu0 %v2635
      %2997 = vmatpush.msra.mxu0 %v2631
      %2998 = vmatpush.msra.mxu0 %v2627
      %2999 = vmatmul.f32.gmra.mxu0 %v2491
      %v3000 = vpop.f32.mrf.mxu0
      %v3001 = vadd.f32 %v2978, %v3000
      %3002 = vmatmul.f32.gmra.mxu0 %v2495
      %v3003 = vpop.f32.mrf.mxu0
      %v3004 = vadd.f32 %v2981, %v3003
      %3005 = vdwg.mxu0
      %3006 = vmatpush.msra.mxu0 %v2751
      %3007 = vmatpush.msra.mxu0 %v2747
      %3008 = vmatpush.msra.mxu0 %v2743
      %3009 = vmatpush.msra.mxu0 %v2739
      %3010 = vmatpush.msra.mxu0 %v2735
      %3011 = vmatpush.msra.mxu0 %v2731
      %3012 = vmatpush.msra.mxu0 %v2727
      %3013 = vmatpush.msra.mxu0 %v2723
      %3014 = vmatpush.msra.mxu0 %v2719
      %3015 = vmatpush.msra.mxu0 %v2715
      %3016 = vmatpush.msra.mxu0 %v2711
      %3017 = vmatpush.msra.mxu0 %v2707
      %3018 = vmatpush.msra.mxu0 %v2703
      %3019 = vmatpush.msra.mxu0 %v2699
      %3020 = vmatpush.msra.mxu0 %v2695
      %3021 = vmatpush.msra.mxu0 %v2691
      %3022 = vmatmul.f32.gmra.mxu0 %v2492
      %v3023 = vpop.f32.mrf.mxu0
      %v3024 = vadd.f32 %v3001, %v3023
      %3025 = vmatmul.f32.gmra.mxu0 %v2496
      %v3026 = vpop.f32.mrf.mxu0
      %v3027 = vadd.f32 %v3004, %v3026
      %3028 = vdwg.mxu0
      %3029 = vmatpush.msra.mxu0 %v2560
      %3030 = vmatpush.msra.mxu0 %v2556
      %3031 = vmatpush.msra.mxu0 %v2552
      %3032 = vmatpush.msra.mxu0 %v2548
      %3033 = vmatpush.msra.mxu0 %v2544
      %3034 = vmatpush.msra.mxu0 %v2540
      %3035 = vmatpush.msra.mxu0 %v2536
      %3036 = vmatpush.msra.mxu0 %v2532
      %3037 = vmatpush.msra.mxu0 %v2528
      %3038 = vmatpush.msra.mxu0 %v2524
      %3039 = vmatpush.msra.mxu0 %v2520
      %3040 = vmatpush.msra.mxu0 %v2516
      %3041 = vmatpush.msra.mxu0 %v2512
      %3042 = vmatpush.msra.mxu0 %v2508
      %3043 = vmatpush.msra.mxu0 %v2504
      %3044 = vmatpush.msra.mxu0 %v2500
      %3045 = vmatmul.f32.gmra.mxu0 %v2489
      %v3046 = vpop.f32.mrf.mxu0
      %v3047 = vadd.f32 0.0, %v3046
      %3048 = vmatmul.f32.gmra.mxu0 %v2493
      %v3049 = vpop.f32.mrf.mxu0
      %v3050 = vadd.f32 0.0, %v3049
      %3051 = vdwg.mxu0
      %3052 = vmatpush.msra.mxu0 %v2624
      %3053 = vmatpush.msra.mxu0 %v2620
      %3054 = vmatpush.msra.mxu0 %v2616
      %3055 = vmatpush.msra.mxu0 %v2612
      %3056 = vmatpush.msra.mxu0 %v2608
      %3057 = vmatpush.msra.mxu0 %v2604
      %3058 = vmatpush.msra.mxu0 %v2600
      %3059 = vmatpush.msra.mxu0 %v2596
      %3060 = vmatpush.msra.mxu0 %v2592
      %3061 = vmatpush.msra.mxu0 %v2588
      %3062 = vmatpush.msra.mxu0 %v2584
      %3063 = vmatpush.msra.mxu0 %v2580
      %3064 = vmatpush.msra.mxu0 %v2576
      %3065 = vmatpush.msra.mxu0 %v2572
      %3066 = vmatpush.msra.mxu0 %v2568
      %3067 = vmatpush.msra.mxu0 %v2564
      %3068 = vmatmul.f32.gmra.mxu0 %v2490
      %v3069 = vpop.f32.mrf.mxu0
      %v3070 = vadd.f32 %v3047, %v3069
      %3071 = vmatmul.f32.gmra.mxu0 %v2494
      %v3072 = vpop.f32.mrf.mxu0
      %v3073 = vadd.f32 %v3050, %v3072
      %3074 = vdwg.mxu0
      %3075 = vmatpush.msra.mxu0 %v2688
      %3076 = vmatpush.msra.mxu0 %v2684
      %3077 = vmatpush.msra.mxu0 %v2680
      %3078 = vmatpush.msra.mxu0 %v2676
      %3079 = vmatpush.msra.mxu0 %v2672
      %3080 = vmatpush.msra.mxu0 %v2668
      %3081 = vmatpush.msra.mxu0 %v2664
      %3082 = vmatpush.msra.mxu0 %v2660
      %3083 = vmatpush.msra.mxu0 %v2656
      %3084 = vmatpush.msra.mxu0 %v2652
      %3085 = vmatpush.msra.mxu0 %v2648
      %3086 = vmatpush.msra.mxu0 %v2644
      %3087 = vmatpush.msra.mxu0 %v2640
      %3088 = vmatpush.msra.mxu0 %v2636
      %3089 = vmatpush.msra.mxu0 %v2632
      %3090 = vmatpush.msra.mxu0 %v2628
      %3091 = vmatmul.f32.gmra.mxu0 %v2491
      %v3092 = vpop.f32.mrf.mxu0
      %v3093 = vadd.f32 %v3070, %v3092
      %3094 = vmatmul.f32.gmra.mxu0 %v2495
      %v3095 = vpop.f32.mrf.mxu0
      %v3096 = vadd.f32 %v3073, %v3095
      %3097 = vdwg.mxu0
      %3098 = vmatpush.msra.mxu0 %v2752
      %3099 = vmatpush.msra.mxu0 %v2748
      %3100 = vmatpush.msra.mxu0 %v2744
      %3101 = vmatpush.msra.mxu0 %v2740
      %3102 = vmatpush.msra.mxu0 %v2736
      %3103 = vmatpush.msra.mxu0 %v2732
      %3104 = vmatpush.msra.mxu0 %v2728
      %3105 = vmatpush.msra.mxu0 %v2724
      %3106 = vmatpush.msra.mxu0 %v2720
      %3107 = vmatpush.msra.mxu0 %v2716
      %3108 = vmatpush.msra.mxu0 %v2712
      %3109 = vmatpush.msra.mxu0 %v2708
      %3110 = vmatpush.msra.mxu0 %v2704
      %3111 = vmatpush.msra.mxu0 %v2700
      %3112 = vmatpush.msra.mxu0 %v2696
      %3113 = vmatpush.msra.mxu0 %v2692
      %3114 = vmatmul.f32.gmra.mxu0 %v2492
      %v3115 = vpop.f32.mrf.mxu0
      %v3116 = vadd.f32 %v3093, %v3115
      %3117 = vmatmul.f32.gmra.mxu0 %v2496
      %v3118 = vpop.f32.mrf.mxu0
      %v3119 = vadd.f32 %v3096, %v3118
      %3120 = vdwg.mxu0
      %v3121 = vadd.f32 %v2840, %v2843
      %v3122 = vrot.slane %v3121, 4
      %v3123 = vadd.f32 %v3121, %v3122
      %v3124 = vrot.slane %v3123, 2
      %v3125 = vadd.f32 %v3123, %v3124
      %v3126 = vrot.slane %v3125, 1
      %v3127 = vadd.f32 %v3125, %v3126
      %v3128 = vadd.f32 %v2932, %v2935
      %v3129 = vrot.slane %v3128, 4
      %v3130 = vadd.f32 %v3128, %v3129
      %v3131 = vrot.slane %v3130, 2
      %v3132 = vadd.f32 %v3130, %v3131
      %v3133 = vrot.slane %v3132, 1
      %v3134 = vadd.f32 %v3132, %v3133
      %v3135 = vadd.f32 %v3024, %v3027
      %v3136 = vrot.slane %v3135, 4
      %v3137 = vadd.f32 %v3135, %v3136
      %v3138 = vrot.slane %v3137, 2
      %v3139 = vadd.f32 %v3137, %v3138
      %v3140 = vrot.slane %v3139, 1
      %v3141 = vadd.f32 %v3139, %v3140
      %v3142 = vadd.f32 %v3116, %v3119
      %v3143 = vrot.slane %v3142, 4
      %v3144 = vadd.f32 %v3142, %v3143
      %v3145 = vrot.slane %v3144, 2
      %v3146 = vadd.f32 %v3144, %v3145
      %v3147 = vrot.slane %v3146, 1
      %v3148 = vadd.f32 %v3146, %v3147
      %v3149 = vmul.f32 %v2489, %v2489
      %v3150 = vmul.f32 %v2490, %v2490
      %v3151 = vmul.f32 %v2491, %v2491
      %v3152 = vmul.f32 %v2492, %v2492
      %v3153 = vmul.f32 %v2493, %v2493
      %v3154 = vmul.f32 %v2494, %v2494
      %v3155 = vmul.f32 %v2495, %v2495
      %v3156 = vmul.f32 %v2496, %v2496
      %3157 = vmatpush.msra.mxu0 %v2557
      %3158 = vmatpush.msra.mxu0 %v2553
      %3159 = vmatpush.msra.mxu0 %v2549
      %3160 = vmatpush.msra.mxu0 %v2545
      %3161 = vmatpush.msra.mxu0 %v2541
      %3162 = vmatpush.msra.mxu0 %v2537
      %3163 = vmatpush.msra.mxu0 %v2533
      %3164 = vmatpush.msra.mxu0 %v2529
      %3165 = vmatpush.msra.mxu0 %v2525
      %3166 = vmatpush.msra.mxu0 %v2521
      %3167 = vmatpush.msra.mxu0 %v2517
      %3168 = vmatpush.msra.mxu0 %v2513
      %3169 = vmatpush.msra.mxu0 %v2509
      %3170 = vmatpush.msra.mxu0 %v2505
      %3171 = vmatpush.msra.mxu0 %v2501
      %3172 = vmatpush.msra.mxu0 %v2497
      %3173 = vmatmul.f32.gmra.mxu0 %v3149
      %v3174 = vpop.f32.mrf.mxu0
      %v3175 = vadd.f32 0.0, %v3174
      %3176 = vmatmul.f32.gmra.mxu0 %v3153
      %v3177 = vpop.f32.mrf.mxu0
      %v3178 = vadd.f32 0.0, %v3177
      %3179 = vdwg.mxu0
      %3180 = vmatpush.msra.mxu0 %v2621
      %3181 = vmatpush.msra.mxu0 %v2617
      %3182 = vmatpush.msra.mxu0 %v2613
      %3183 = vmatpush.msra.mxu0 %v2609
      %3184 = vmatpush.msra.mxu0 %v2605
      %3185 = vmatpush.msra.mxu0 %v2601
      %3186 = vmatpush.msra.mxu0 %v2597
      %3187 = vmatpush.msra.mxu0 %v2593
      %3188 = vmatpush.msra.mxu0 %v2589
      %3189 = vmatpush.msra.mxu0 %v2585
      %3190 = vmatpush.msra.mxu0 %v2581
      %3191 = vmatpush.msra.mxu0 %v2577
      %3192 = vmatpush.msra.mxu0 %v2573
      %3193 = vmatpush.msra.mxu0 %v2569
      %3194 = vmatpush.msra.mxu0 %v2565
      %3195 = vmatpush.msra.mxu0 %v2561
      %3196 = vmatmul.f32.gmra.mxu0 %v3150
      %v3197 = vpop.f32.mrf.mxu0
      %v3198 = vadd.f32 %v3175, %v3197
      %3199 = vmatmul.f32.gmra.mxu0 %v3154
      %v3200 = vpop.f32.mrf.mxu0
      %v3201 = vadd.f32 %v3178, %v3200
      %3202 = vdwg.mxu0
      %3203 = vmatpush.msra.mxu0 %v2685
      %3204 = vmatpush.msra.mxu0 %v2681
      %3205 = vmatpush.msra.mxu0 %v2677
      %3206 = vmatpush.msra.mxu0 %v2673
      %3207 = vmatpush.msra.mxu0 %v2669
      %3208 = vmatpush.msra.mxu0 %v2665
      %3209 = vmatpush.msra.mxu0 %v2661
      %3210 = vmatpush.msra.mxu0 %v2657
      %3211 = vmatpush.msra.mxu0 %v2653
      %3212 = vmatpush.msra.mxu0 %v2649
      %3213 = vmatpush.msra.mxu0 %v2645
      %3214 = vmatpush.msra.mxu0 %v2641
      %3215 = vmatpush.msra.mxu0 %v2637
      %3216 = vmatpush.msra.mxu0 %v2633
      %3217 = vmatpush.msra.mxu0 %v2629
      %3218 = vmatpush.msra.mxu0 %v2625
      %3219 = vmatmul.f32.gmra.mxu0 %v3151
      %v3220 = vpop.f32.mrf.mxu0
      %v3221 = vadd.f32 %v3198, %v3220
      %3222 = vmatmul.f32.gmra.mxu0 %v3155
      %v3223 = vpop.f32.mrf.mxu0
      %v3224 = vadd.f32 %v3201, %v3223
      %3225 = vdwg.mxu0
      %3226 = vmatpush.msra.mxu0 %v2749
      %3227 = vmatpush.msra.mxu0 %v2745
      %3228 = vmatpush.msra.mxu0 %v2741
      %3229 = vmatpush.msra.mxu0 %v2737
      %3230 = vmatpush.msra.mxu0 %v2733
      %3231 = vmatpush.msra.mxu0 %v2729
      %3232 = vmatpush.msra.mxu0 %v2725
      %3233 = vmatpush.msra.mxu0 %v2721
      %3234 = vmatpush.msra.mxu0 %v2717
      %3235 = vmatpush.msra.mxu0 %v2713
      %3236 = vmatpush.msra.mxu0 %v2709
      %3237 = vmatpush.msra.mxu0 %v2705
      %3238 = vmatpush.msra.mxu0 %v2701
      %3239 = vmatpush.msra.mxu0 %v2697
      %3240 = vmatpush.msra.mxu0 %v2693
      %3241 = vmatpush.msra.mxu0 %v2689
      %3242 = vmatmul.f32.gmra.mxu0 %v3152
      %v3243 = vpop.f32.mrf.mxu0
      %v3244 = vadd.f32 %v3221, %v3243
      %3245 = vmatmul.f32.gmra.mxu0 %v3156
      %v3246 = vpop.f32.mrf.mxu0
      %v3247 = vadd.f32 %v3224, %v3246
      %3248 = vdwg.mxu0
      %3249 = vmatpush.msra.mxu0 %v2558
      %3250 = vmatpush.msra.mxu0 %v2554
      %3251 = vmatpush.msra.mxu0 %v2550
      %3252 = vmatpush.msra.mxu0 %v2546
      %3253 = vmatpush.msra.mxu0 %v2542
      %3254 = vmatpush.msra.mxu0 %v2538
      %3255 = vmatpush.msra.mxu0 %v2534
      %3256 = vmatpush.msra.mxu0 %v2530
      %3257 = vmatpush.msra.mxu0 %v2526
      %3258 = vmatpush.msra.mxu0 %v2522
      %3259 = vmatpush.msra.mxu0 %v2518
      %3260 = vmatpush.msra.mxu0 %v2514
      %3261 = vmatpush.msra.mxu0 %v2510
      %3262 = vmatpush.msra.mxu0 %v2506
      %3263 = vmatpush.msra.mxu0 %v2502
      %3264 = vmatpush.msra.mxu0 %v2498
      %3265 = vmatmul.f32.gmra.mxu0 %v3149
      %v3266 = vpop.f32.mrf.mxu0
      %v3267 = vadd.f32 0.0, %v3266
      %3268 = vmatmul.f32.gmra.mxu0 %v3153
      %v3269 = vpop.f32.mrf.mxu0
      %v3270 = vadd.f32 0.0, %v3269
      %3271 = vdwg.mxu0
      %3272 = vmatpush.msra.mxu0 %v2622
      %3273 = vmatpush.msra.mxu0 %v2618
      %3274 = vmatpush.msra.mxu0 %v2614
      %3275 = vmatpush.msra.mxu0 %v2610
      %3276 = vmatpush.msra.mxu0 %v2606
      %3277 = vmatpush.msra.mxu0 %v2602
      %3278 = vmatpush.msra.mxu0 %v2598
      %3279 = vmatpush.msra.mxu0 %v2594
      %3280 = vmatpush.msra.mxu0 %v2590
      %3281 = vmatpush.msra.mxu0 %v2586
      %3282 = vmatpush.msra.mxu0 %v2582
      %3283 = vmatpush.msra.mxu0 %v2578
      %3284 = vmatpush.msra.mxu0 %v2574
      %3285 = vmatpush.msra.mxu0 %v2570
      %3286 = vmatpush.msra.mxu0 %v2566
      %3287 = vmatpush.msra.mxu0 %v2562
      %3288 = vmatmul.f32.gmra.mxu0 %v3150
      %v3289 = vpop.f32.mrf.mxu0
      %v3290 = vadd.f32 %v3267, %v3289
      %3291 = vmatmul.f32.gmra.mxu0 %v3154
      %v3292 = vpop.f32.mrf.mxu0
      %v3293 = vadd.f32 %v3270, %v3292
      %3294 = vdwg.mxu0
      %3295 = vmatpush.msra.mxu0 %v2686
      %3296 = vmatpush.msra.mxu0 %v2682
      %3297 = vmatpush.msra.mxu0 %v2678
      %3298 = vmatpush.msra.mxu0 %v2674
      %3299 = vmatpush.msra.mxu0 %v2670
      %3300 = vmatpush.msra.mxu0 %v2666
      %3301 = vmatpush.msra.mxu0 %v2662
      %3302 = vmatpush.msra.mxu0 %v2658
      %3303 = vmatpush.msra.mxu0 %v2654
      %3304 = vmatpush.msra.mxu0 %v2650
      %3305 = vmatpush.msra.mxu0 %v2646
      %3306 = vmatpush.msra.mxu0 %v2642
      %3307 = vmatpush.msra.mxu0 %v2638
      %3308 = vmatpush.msra.mxu0 %v2634
      %3309 = vmatpush.msra.mxu0 %v2630
      %3310 = vmatpush.msra.mxu0 %v2626
      %3311 = vmatmul.f32.gmra.mxu0 %v3151
      %v3312 = vpop.f32.mrf.mxu0
      %v3313 = vadd.f32 %v3290, %v3312
      %3314 = vmatmul.f32.gmra.mxu0 %v3155
      %v3315 = vpop.f32.mrf.mxu0
      %v3316 = vadd.f32 %v3293, %v3315
      %3317 = vdwg.mxu0
      %3318 = vmatpush.msra.mxu0 %v2750
      %3319 = vmatpush.msra.mxu0 %v2746
      %3320 = vmatpush.msra.mxu0 %v2742
      %3321 = vmatpush.msra.mxu0 %v2738
      %3322 = vmatpush.msra.mxu0 %v2734
      %3323 = vmatpush.msra.mxu0 %v2730
      %3324 = vmatpush.msra.mxu0 %v2726
      %3325 = vmatpush.msra.mxu0 %v2722
      %3326 = vmatpush.msra.mxu0 %v2718
      %3327 = vmatpush.msra.mxu0 %v2714
      %3328 = vmatpush.msra.mxu0 %v2710
      %3329 = vmatpush.msra.mxu0 %v2706
      %3330 = vmatpush.msra.mxu0 %v2702
      %3331 = vmatpush.msra.mxu0 %v2698
      %3332 = vmatpush.msra.mxu0 %v2694
      %3333 = vmatpush.msra.mxu0 %v2690
      %3334 = vmatmul.f32.gmra.mxu0 %v3152
      %v3335 = vpop.f32.mrf.mxu0
      %v3336 = vadd.f32 %v3313, %v3335
      %3337 = vmatmul.f32.gmra.mxu0 %v3156
      %v3338 = vpop.f32.mrf.mxu0
      %v3339 = vadd.f32 %v3316, %v3338
      %3340 = vdwg.mxu0
      %3341 = vmatpush.msra.mxu0 %v2559
      %3342 = vmatpush.msra.mxu0 %v2555
      %3343 = vmatpush.msra.mxu0 %v2551
      %3344 = vmatpush.msra.mxu0 %v2547
      %3345 = vmatpush.msra.mxu0 %v2543
      %3346 = vmatpush.msra.mxu0 %v2539
      %3347 = vmatpush.msra.mxu0 %v2535
      %3348 = vmatpush.msra.mxu0 %v2531
      %3349 = vmatpush.msra.mxu0 %v2527
      %3350 = vmatpush.msra.mxu0 %v2523
      %3351 = vmatpush.msra.mxu0 %v2519
      %3352 = vmatpush.msra.mxu0 %v2515
      %3353 = vmatpush.msra.mxu0 %v2511
      %3354 = vmatpush.msra.mxu0 %v2507
      %3355 = vmatpush.msra.mxu0 %v2503
      %3356 = vmatpush.msra.mxu0 %v2499
      %3357 = vmatmul.f32.gmra.mxu0 %v3149
      %v3358 = vpop.f32.mrf.mxu0
      %v3359 = vadd.f32 0.0, %v3358
      %3360 = vmatmul.f32.gmra.mxu0 %v3153
      %v3361 = vpop.f32.mrf.mxu0
      %v3362 = vadd.f32 0.0, %v3361
      %3363 = vdwg.mxu0
      %3364 = vmatpush.msra.mxu0 %v2623
      %3365 = vmatpush.msra.mxu0 %v2619
      %3366 = vmatpush.msra.mxu0 %v2615
      %3367 = vmatpush.msra.mxu0 %v2611
      %3368 = vmatpush.msra.mxu0 %v2607
      %3369 = vmatpush.msra.mxu0 %v2603
      %3370 = vmatpush.msra.mxu0 %v2599
      %3371 = vmatpush.msra.mxu0 %v2595
      %3372 = vmatpush.msra.mxu0 %v2591
      %3373 = vmatpush.msra.mxu0 %v2587
      %3374 = vmatpush.msra.mxu0 %v2583
      %3375 = vmatpush.msra.mxu0 %v2579
      %3376 = vmatpush.msra.mxu0 %v2575
      %3377 = vmatpush.msra.mxu0 %v2571
      %3378 = vmatpush.msra.mxu0 %v2567
      %3379 = vmatpush.msra.mxu0 %v2563
      %3380 = vmatmul.f32.gmra.mxu0 %v3150
      %v3381 = vpop.f32.mrf.mxu0
      %v3382 = vadd.f32 %v3359, %v3381
      %3383 = vmatmul.f32.gmra.mxu0 %v3154
      %v3384 = vpop.f32.mrf.mxu0
      %v3385 = vadd.f32 %v3362, %v3384
      %3386 = vdwg.mxu0
      %3387 = vmatpush.msra.mxu0 %v2687
      %3388 = vmatpush.msra.mxu0 %v2683
      %3389 = vmatpush.msra.mxu0 %v2679
      %3390 = vmatpush.msra.mxu0 %v2675
      %3391 = vmatpush.msra.mxu0 %v2671
      %3392 = vmatpush.msra.mxu0 %v2667
      %3393 = vmatpush.msra.mxu0 %v2663
      %3394 = vmatpush.msra.mxu0 %v2659
      %3395 = vmatpush.msra.mxu0 %v2655
      %3396 = vmatpush.msra.mxu0 %v2651
      %3397 = vmatpush.msra.mxu0 %v2647
      %3398 = vmatpush.msra.mxu0 %v2643
      %3399 = vmatpush.msra.mxu0 %v2639
      %3400 = vmatpush.msra.mxu0 %v2635
      %3401 = vmatpush.msra.mxu0 %v2631
      %3402 = vmatpush.msra.mxu0 %v2627
      %3403 = vmatmul.f32.gmra.mxu0 %v3151
      %v3404 = vpop.f32.mrf.mxu0
      %v3405 = vadd.f32 %v3382, %v3404
      %3406 = vmatmul.f32.gmra.mxu0 %v3155
      %v3407 = vpop.f32.mrf.mxu0
      %v3408 = vadd.f32 %v3385, %v3407
      %3409 = vdwg.mxu0
      %3410 = vmatpush.msra.mxu0 %v2751
      %3411 = vmatpush.msra.mxu0 %v2747
      %3412 = vmatpush.msra.mxu0 %v2743
      %3413 = vmatpush.msra.mxu0 %v2739
      %3414 = vmatpush.msra.mxu0 %v2735
      %3415 = vmatpush.msra.mxu0 %v2731
      %3416 = vmatpush.msra.mxu0 %v2727
      %3417 = vmatpush.msra.mxu0 %v2723
      %3418 = vmatpush.msra.mxu0 %v2719
      %3419 = vmatpush.msra.mxu0 %v2715
      %3420 = vmatpush.msra.mxu0 %v2711
      %3421 = vmatpush.msra.mxu0 %v2707
      %3422 = vmatpush.msra.mxu0 %v2703
      %3423 = vmatpush.msra.mxu0 %v2699
      %3424 = vmatpush.msra.mxu0 %v2695
      %3425 = vmatpush.msra.mxu0 %v2691
      %3426 = vmatmul.f32.gmra.mxu0 %v3152
      %v3427 = vpop.f32.mrf.mxu0
      %v3428 = vadd.f32 %v3405, %v3427
      %3429 = vmatmul.f32.gmra.mxu0 %v3156
      %v3430 = vpop.f32.mrf.mxu0
      %v3431 = vadd.f32 %v3408, %v3430
      %3432 = vdwg.mxu0
      %3433 = vmatpush.msra.mxu0 %v2560
      %3434 = vmatpush.msra.mxu0 %v2556
      %3435 = vmatpush.msra.mxu0 %v2552
      %3436 = vmatpush.msra.mxu0 %v2548
      %3437 = vmatpush.msra.mxu0 %v2544
      %3438 = vmatpush.msra.mxu0 %v2540
      %3439 = vmatpush.msra.mxu0 %v2536
      %3440 = vmatpush.msra.mxu0 %v2532
      %3441 = vmatpush.msra.mxu0 %v2528
      %3442 = vmatpush.msra.mxu0 %v2524
      %3443 = vmatpush.msra.mxu0 %v2520
      %3444 = vmatpush.msra.mxu0 %v2516
      %3445 = vmatpush.msra.mxu0 %v2512
      %3446 = vmatpush.msra.mxu0 %v2508
      %3447 = vmatpush.msra.mxu0 %v2504
      %3448 = vmatpush.msra.mxu0 %v2500
      %3449 = vmatmul.f32.gmra.mxu0 %v3149
      %v3450 = vpop.f32.mrf.mxu0
      %v3451 = vadd.f32 0.0, %v3450
      %3452 = vmatmul.f32.gmra.mxu0 %v3153
      %v3453 = vpop.f32.mrf.mxu0
      %v3454 = vadd.f32 0.0, %v3453
      %3455 = vdwg.mxu0
      %3456 = vmatpush.msra.mxu0 %v2624
      %3457 = vmatpush.msra.mxu0 %v2620
      %3458 = vmatpush.msra.mxu0 %v2616
      %3459 = vmatpush.msra.mxu0 %v2612
      %3460 = vmatpush.msra.mxu0 %v2608
      %3461 = vmatpush.msra.mxu0 %v2604
      %3462 = vmatpush.msra.mxu0 %v2600
      %3463 = vmatpush.msra.mxu0 %v2596
      %3464 = vmatpush.msra.mxu0 %v2592
      %3465 = vmatpush.msra.mxu0 %v2588
      %3466 = vmatpush.msra.mxu0 %v2584
      %3467 = vmatpush.msra.mxu0 %v2580
      %3468 = vmatpush.msra.mxu0 %v2576
      %3469 = vmatpush.msra.mxu0 %v2572
      %3470 = vmatpush.msra.mxu0 %v2568
      %3471 = vmatpush.msra.mxu0 %v2564
      %3472 = vmatmul.f32.gmra.mxu0 %v3150
      %v3473 = vpop.f32.mrf.mxu0
      %v3474 = vadd.f32 %v3451, %v3473
      %3475 = vmatmul.f32.gmra.mxu0 %v3154
      %v3476 = vpop.f32.mrf.mxu0
      %v3477 = vadd.f32 %v3454, %v3476
      %3478 = vdwg.mxu0
      %3479 = vmatpush.msra.mxu0 %v2688
      %3480 = vmatpush.msra.mxu0 %v2684
      %3481 = vmatpush.msra.mxu0 %v2680
      %3482 = vmatpush.msra.mxu0 %v2676
      %3483 = vmatpush.msra.mxu0 %v2672
      %3484 = vmatpush.msra.mxu0 %v2668
      %3485 = vmatpush.msra.mxu0 %v2664
      %3486 = vmatpush.msra.mxu0 %v2660
      %3487 = vmatpush.msra.mxu0 %v2656
      %3488 = vmatpush.msra.mxu0 %v2652
      %3489 = vmatpush.msra.mxu0 %v2648
      %3490 = vmatpush.msra.mxu0 %v2644
      %3491 = vmatpush.msra.mxu0 %v2640
      %3492 = vmatpush.msra.mxu0 %v2636
      %3493 = vmatpush.msra.mxu0 %v2632
      %3494 = vmatpush.msra.mxu0 %v2628
      %3495 = vmatmul.f32.gmra.mxu0 %v3151
      %v3496 = vpop.f32.mrf.mxu0
      %v3497 = vadd.f32 %v3474, %v3496
      %3498 = vmatmul.f32.gmra.mxu0 %v3155
      %v3499 = vpop.f32.mrf.mxu0
      %v3500 = vadd.f32 %v3477, %v3499
      %3501 = vdwg.mxu0
      %3502 = vmatpush.msra.mxu0 %v2752
      %3503 = vmatpush.msra.mxu0 %v2748
      %3504 = vmatpush.msra.mxu0 %v2744
      %3505 = vmatpush.msra.mxu0 %v2740
      %3506 = vmatpush.msra.mxu0 %v2736
      %3507 = vmatpush.msra.mxu0 %v2732
      %3508 = vmatpush.msra.mxu0 %v2728
      %3509 = vmatpush.msra.mxu0 %v2724
      %3510 = vmatpush.msra.mxu0 %v2720
      %3511 = vmatpush.msra.mxu0 %v2716
      %3512 = vmatpush.msra.mxu0 %v2712
      %3513 = vmatpush.msra.mxu0 %v2708
      %3514 = vmatpush.msra.mxu0 %v2704
      %3515 = vmatpush.msra.mxu0 %v2700
      %3516 = vmatpush.msra.mxu0 %v2696
      %3517 = vmatpush.msra.mxu0 %v2692
      %3518 = vmatmul.f32.gmra.mxu0 %v3152
      %v3519 = vpop.f32.mrf.mxu0
      %v3520 = vadd.f32 %v3497, %v3519
      %3521 = vmatmul.f32.gmra.mxu0 %v3156
      %v3522 = vpop.f32.mrf.mxu0
      %v3523 = vadd.f32 %v3500, %v3522
      %3524 = vdwg.mxu0
      %v3525 = vadd.f32 %v3244, %v3247
      %v3526 = vrot.slane %v3525, 4
      %v3527 = vadd.f32 %v3525, %v3526
      %v3528 = vrot.slane %v3527, 2
      %v3529 = vadd.f32 %v3527, %v3528
      %v3530 = vrot.slane %v3529, 1
      %v3531 = vadd.f32 %v3529, %v3530
      %v3532 = vadd.f32 %v3336, %v3339
      %v3533 = vrot.slane %v3532, 4
      %v3534 = vadd.f32 %v3532, %v3533
      %v3535 = vrot.slane %v3534, 2
      %v3536 = vadd.f32 %v3534, %v3535
      %v3537 = vrot.slane %v3536, 1
      %v3538 = vadd.f32 %v3536, %v3537
      %v3539 = vadd.f32 %v3428, %v3431
      %v3540 = vrot.slane %v3539, 4
      %v3541 = vadd.f32 %v3539, %v3540
      %v3542 = vrot.slane %v3541, 2
      %v3543 = vadd.f32 %v3541, %v3542
      %v3544 = vrot.slane %v3543, 1
      %v3545 = vadd.f32 %v3543, %v3544
      %v3546 = vadd.f32 %v3520, %v3523
      %v3547 = vrot.slane %v3546, 4
      %v3548 = vadd.f32 %v3546, %v3547
      %v3549 = vrot.slane %v3548, 2
      %v3550 = vadd.f32 %v3548, %v3549
      %v3551 = vrot.slane %v3550, 1
      %v3552 = vadd.f32 %v3550, %v3551
      %v3553 = vmul.f32 %v3127, %v3127
      %v3554 = vmul.f32 %v3134, %v3134
      %v3555 = vmul.f32 %v3141, %v3141
      %v3556 = vmul.f32 %v3148, %v3148
      %v3557 = vsub.f32 %v3531, %v3553
      %v3558 = vsub.f32 %v3538, %v3554
      %v3559 = vsub.f32 %v3545, %v3555
      %v3560 = vsub.f32 %v3552, %v3556
      %v3561 = vmax.f32 %v3557, 0.0
      %v3562 = vmax.f32 %v3558, 0.0
      %v3563 = vmax.f32 %v3559, 0.0
      %v3564 = vmax.f32 %v3560, 0.0
      %v3565 = vadd.f32 %v3561, 1e-05
      %v3566 = vadd.f32 %v3562, 1e-05
      %v3567 = vadd.f32 %v3563, 1e-05
      %v3568 = vadd.f32 %v3564, 1e-05
      %v3569 = vrsqrt.pop %v3565
      %v3570 = vmul.f32 %v3569, %v3565
      %v3571 = vmul.f32 %v3570, %v3569
      %v3572 = vmul.f32 0.5, %v3571
      %v3573 = vsub.f32 1.5, %v3572
      %v3574 = vmul.f32 %v3569, %v3573
      %vm3575 = vweird.f32 %v3565
      %vm3576 = vweird.f32 %v3569
      %vm3577 = vmor %vm3575, %vm3576
      %v3578 = vsel %vm3577, %v3569, %v3574
      %v3579 = vrsqrt.pop %v3566
      %v3580 = vmul.f32 %v3579, %v3566
      %v3581 = vmul.f32 %v3580, %v3579
      %v3582 = vmul.f32 0.5, %v3581
      %v3583 = vsub.f32 1.5, %v3582
      %v3584 = vmul.f32 %v3579, %v3583
      %vm3585 = vweird.f32 %v3566
      %vm3586 = vweird.f32 %v3579
      %vm3587 = vmor %vm3585, %vm3586
      %v3588 = vsel %vm3587, %v3579, %v3584
      %v3589 = vrsqrt.pop %v3567
      %v3590 = vmul.f32 %v3589, %v3567
      %v3591 = vmul.f32 %v3590, %v3589
      %v3592 = vmul.f32 0.5, %v3591
      %v3593 = vsub.f32 1.5, %v3592
      %v3594 = vmul.f32 %v3589, %v3593
      %vm3595 = vweird.f32 %v3567
      %vm3596 = vweird.f32 %v3589
      %vm3597 = vmor %vm3595, %vm3596
      %v3598 = vsel %vm3597, %v3589, %v3594
      %v3599 = vrsqrt.pop %v3568
      %v3600 = vmul.f32 %v3599, %v3568
      %v3601 = vmul.f32 %v3600, %v3599
      %v3602 = vmul.f32 0.5, %v3601
      %v3603 = vsub.f32 1.5, %v3602
      %v3604 = vmul.f32 %v3599, %v3603
      %vm3605 = vweird.f32 %v3568
      %vm3606 = vweird.f32 %v3599
      %vm3607 = vmor %vm3605, %vm3606
      %v3608 = vsel %vm3607, %v3599, %v3604
      %v3609 = vld [vmem:[%s5] sm:$0xf]
      %v3614 = vrot.slane %v3588, 7
      %v3615 = vrot.slane %v3598, 6
      %v3616 = vrot.slane %v3608, 5
      %vm3617 = vcmask 1040384
      %v3618 = vsel %vm3617, %v3578, %v3614
      %vm3619 = vcmask 1042434
      %v3620 = vsel %vm3619, %v3615, %v3616
      %vm3621 = vcmask 1041408
      %v3622 = vsel %vm3621, %v3618, %v3620
      %v3624 = vmul.f32 %v3609, %v3622
      %v3625 = vld [vmem:[%s6] sm:$0xf]
      %v3627 = vperm.slane %v3624, 0
      %v3628 = vperm.slane %v3624, 1
      %v3629 = vperm.slane %v3624, 2
      %v3630 = vperm.slane %v3624, 3
      %v3635 = vmul.f32 %v3127, %v3627
      %v3636 = vmul.f32 %v3134, %v3628
      %v3637 = vmul.f32 %v3141, %v3629
      %v3638 = vmul.f32 %v3148, %v3630
      %v3643 = vrot.slane %v3636, 7
      %v3644 = vrot.slane %v3637, 6
      %v3645 = vrot.slane %v3638, 5
      %v3646 = vsel %vm3617, %v3635, %v3643
      %v3647 = vsel %vm3619, %v3644, %v3645
      %v3648 = vsel %vm3621, %v3646, %v3647
      %v3650 = vsub.f32 %v3625, %v3648
      %v3651 = vmul.f32 %v2489, %v3627
      %v3652 = vmul.f32 %v2490, %v3628
      %v3653 = vmul.f32 %v2491, %v3629
      %v3654 = vmul.f32 %v2492, %v3630
      %v3655 = vmul.f32 %v2493, %v3627
      %v3656 = vmul.f32 %v2494, %v3628
      %v3657 = vmul.f32 %v2495, %v3629
      %v3658 = vmul.f32 %v2496, %v3630
      %v3660 = vperm.slane %v3650, 0
      %v3661 = vperm.slane %v3650, 1
      %v3662 = vperm.slane %v3650, 2
      %v3663 = vperm.slane %v3650, 3
      %v3668 = vadd.f32 %v3651, %v3660
      %v3669 = vadd.f32 %v3652, %v3661
      %v3670 = vadd.f32 %v3653, %v3662
      %v3671 = vadd.f32 %v3654, %v3663
      %v3672 = vadd.f32 %v3655, %v3660
      %v3673 = vadd.f32 %v3656, %v3661
      %v3674 = vadd.f32 %v3657, %v3662
      %v3675 = vadd.f32 %v3658, %v3663
      %v3676 = vxor.u32 %v3668, 2147483648
      %v3677 = vxor.u32 %v3669, 2147483648
      %v3678 = vxor.u32 %v3670, 2147483648
      %v3679 = vxor.u32 %v3671, 2147483648
      %v3680 = vxor.u32 %v3672, 2147483648
      %v3681 = vxor.u32 %v3673, 2147483648
      %v3682 = vxor.u32 %v3674, 2147483648
      %v3683 = vxor.u32 %v3675, 2147483648
      %v3684 = vmul.f32 %v3676, 1.442695
      %v3685 = vpow.pop %v3684
      %v3686 = vmul.f32 %v3677, 1.442695
      %v3687 = vpow.pop %v3686
      %v3688 = vmul.f32 %v3678, 1.442695
      %v3689 = vpow.pop %v3688
      %v3690 = vmul.f32 %v3679, 1.442695
      %v3691 = vpow.pop %v3690
      %v3692 = vmul.f32 %v3680, 1.442695
      %v3693 = vpow.pop %v3692
      %v3694 = vmul.f32 %v3681, 1.442695
      %v3695 = vpow.pop %v3694
      %v3696 = vmul.f32 %v3682, 1.442695
      %v3697 = vpow.pop %v3696
      %v3698 = vmul.f32 %v3683, 1.442695
      %v3699 = vpow.pop %v3698
      %v3700 = vadd.f32 %v3685, 1.0
      %v3701 = vadd.f32 %v3687, 1.0
      %v3702 = vadd.f32 %v3689, 1.0
      %v3703 = vadd.f32 %v3691, 1.0
      %v3704 = vadd.f32 %v3693, 1.0
      %v3705 = vadd.f32 %v3695, 1.0
      %v3706 = vadd.f32 %v3697, 1.0
      %v3707 = vadd.f32 %v3699, 1.0
      %v3708 = vrcp.pop %v3700
      %v3709 = vmul.f32 %v3700, %v3708
      %v3710 = vsub.f32 1.0, %v3709
      %v3711 = vmul.f32 %v3708, %v3710
      %v3712 = vadd.f32 %v3708, %v3711
      %vm3713 = vweird.f32 %v3700
      %vm3714 = vweird.f32 %v3708
      %vm3715 = vmor %vm3713, %vm3714
      %v3716 = vsel %vm3715, %v3708, %v3712
      %v3717 = vand.u32 2147483647, %v3700
      %vm3718 = vcmp.eq.f32.partialorder %v3717, 8.507059e+37
      %v3719 = vand.u32 %v3700, 2147483648
      %v3720 = vor.u32 1.1754944e-38, %v3719
      %v3721 = vsel %vm3718, %v3720, %v3716
      %v3722 = vmul.f32 1.0, %v3721
      %v3723 = vrcp.pop %v3701
      %v3724 = vmul.f32 %v3701, %v3723
      %v3725 = vsub.f32 1.0, %v3724
      %v3726 = vmul.f32 %v3723, %v3725
      %v3727 = vadd.f32 %v3723, %v3726
      %vm3728 = vweird.f32 %v3701
      %vm3729 = vweird.f32 %v3723
      %vm3730 = vmor %vm3728, %vm3729
      %v3731 = vsel %vm3730, %v3723, %v3727
      %v3732 = vand.u32 2147483647, %v3701
      %vm3733 = vcmp.eq.f32.partialorder %v3732, 8.507059e+37
      %v3734 = vand.u32 %v3701, 2147483648
      %v3735 = vor.u32 1.1754944e-38, %v3734
      %v3736 = vsel %vm3733, %v3735, %v3731
      %v3737 = vmul.f32 1.0, %v3736
      %v3738 = vrcp.pop %v3702
      %v3739 = vmul.f32 %v3702, %v3738
      %v3740 = vsub.f32 1.0, %v3739
      %v3741 = vmul.f32 %v3738, %v3740
      %v3742 = vadd.f32 %v3738, %v3741
      %vm3743 = vweird.f32 %v3702
      %vm3744 = vweird.f32 %v3738
      %vm3745 = vmor %vm3743, %vm3744
      %v3746 = vsel %vm3745, %v3738, %v3742
      %v3747 = vand.u32 2147483647, %v3702
      %vm3748 = vcmp.eq.f32.partialorder %v3747, 8.507059e+37
      %v3749 = vand.u32 %v3702, 2147483648
      %v3750 = vor.u32 1.1754944e-38, %v3749
      %v3751 = vsel %vm3748, %v3750, %v3746
      %v3752 = vmul.f32 1.0, %v3751
      %v3753 = vrcp.pop %v3703
      %v3754 = vmul.f32 %v3703, %v3753
      %v3755 = vsub.f32 1.0, %v3754
      %v3756 = vmul.f32 %v3753, %v3755
      %v3757 = vadd.f32 %v3753, %v3756
      %vm3758 = vweird.f32 %v3703
      %vm3759 = vweird.f32 %v3753
      %vm3760 = vmor %vm3758, %vm3759
      %v3761 = vsel %vm3760, %v3753, %v3757
      %v3762 = vand.u32 2147483647, %v3703
      %vm3763 = vcmp.eq.f32.partialorder %v3762, 8.507059e+37
      %v3764 = vand.u32 %v3703, 2147483648
      %v3765 = vor.u32 1.1754944e-38, %v3764
      %v3766 = vsel %vm3763, %v3765, %v3761
      %v3767 = vmul.f32 1.0, %v3766
      %v3768 = vrcp.pop %v3704
      %v3769 = vmul.f32 %v3704, %v3768
      %v3770 = vsub.f32 1.0, %v3769
      %v3771 = vmul.f32 %v3768, %v3770
      %v3772 = vadd.f32 %v3768, %v3771
      %vm3773 = vweird.f32 %v3704
      %vm3774 = vweird.f32 %v3768
      %vm3775 = vmor %vm3773, %vm3774
      %v3776 = vsel %vm3775, %v3768, %v3772
      %v3777 = vand.u32 2147483647, %v3704
      %vm3778 = vcmp.eq.f32.partialorder %v3777, 8.507059e+37
      %v3779 = vand.u32 %v3704, 2147483648
      %v3780 = vor.u32 1.1754944e-38, %v3779
      %v3781 = vsel %vm3778, %v3780, %v3776
      %v3782 = vmul.f32 1.0, %v3781
      %v3783 = vrcp.pop %v3705
      %v3784 = vmul.f32 %v3705, %v3783
      %v3785 = vsub.f32 1.0, %v3784
      %v3786 = vmul.f32 %v3783, %v3785
      %v3787 = vadd.f32 %v3783, %v3786
      %vm3788 = vweird.f32 %v3705
      %vm3789 = vweird.f32 %v3783
      %vm3790 = vmor %vm3788, %vm3789
      %v3791 = vsel %vm3790, %v3783, %v3787
      %v3792 = vand.u32 2147483647, %v3705
      %vm3793 = vcmp.eq.f32.partialorder %v3792, 8.507059e+37
      %v3794 = vand.u32 %v3705, 2147483648
      %v3795 = vor.u32 1.1754944e-38, %v3794
      %v3796 = vsel %vm3793, %v3795, %v3791
      %v3797 = vmul.f32 1.0, %v3796
      %v3798 = vrcp.pop %v3706
      %v3799 = vmul.f32 %v3706, %v3798
      %v3800 = vsub.f32 1.0, %v3799
      %v3801 = vmul.f32 %v3798, %v3800
      %v3802 = vadd.f32 %v3798, %v3801
      %vm3803 = vweird.f32 %v3706
      %vm3804 = vweird.f32 %v3798
      %vm3805 = vmor %vm3803, %vm3804
      %v3806 = vsel %vm3805, %v3798, %v3802
      %v3807 = vand.u32 2147483647, %v3706
      %vm3808 = vcmp.eq.f32.partialorder %v3807, 8.507059e+37
      %v3809 = vand.u32 %v3706, 2147483648
      %v3810 = vor.u32 1.1754944e-38, %v3809
      %v3811 = vsel %vm3808, %v3810, %v3806
      %v3812 = vmul.f32 1.0, %v3811
      %v3813 = vrcp.pop %v3707
      %v3814 = vmul.f32 %v3707, %v3813
      %v3815 = vsub.f32 1.0, %v3814
      %v3816 = vmul.f32 %v3813, %v3815
      %v3817 = vadd.f32 %v3813, %v3816
      %vm3818 = vweird.f32 %v3707
      %vm3819 = vweird.f32 %v3813
      %vm3820 = vmor %vm3818, %vm3819
      %v3821 = vsel %vm3820, %v3813, %v3817
      %v3822 = vand.u32 2147483647, %v3707
      %vm3823 = vcmp.eq.f32.partialorder %v3822, 8.507059e+37
      %v3824 = vand.u32 %v3707, 2147483648
      %v3825 = vor.u32 1.1754944e-38, %v3824
      %v3826 = vsel %vm3823, %v3825, %v3821
      %v3827 = vmul.f32 1.0, %v3826
      %v3828 = vmul.f32 %v3668, %v3722
      %v3829 = vmul.f32 %v3669, %v3737
      %v3830 = vmul.f32 %v3670, %v3752
      %v3831 = vmul.f32 %v3671, %v3767
      %v3832 = vmul.f32 %v3672, %v3782
      %v3833 = vmul.f32 %v3673, %v3797
      %v3834 = vmul.f32 %v3674, %v3812
      %v3835 = vmul.f32 %v3675, %v3827
      %3836 = vmatpush.msra.mxu0 0.0
      %3837 = vmatpush.msra.mxu0 0.0
      %3838 = vmatpush.msra.mxu0 0.0
      %3839 = vmatpush.msra.mxu0 0.0
      %3840 = vmatpush.msra.mxu0 0.0
      %3841 = vmatpush.msra.mxu0 0.0
      %3842 = vmatpush.msra.mxu0 0.0
      %3843 = vmatpush.msra.mxu0 0.0
      %3844 = vmatpush.msra.mxu0 0.0
      %3845 = vmatpush.msra.mxu0 0.0
      %3846 = vmatpush.msra.mxu0 0.0
      %3847 = vmatpush.msra.mxu0 0.0
      %3848 = vmatpush.msra.mxu0 0.0
      %3849 = vmatpush.msra.mxu0 0.0
      %3850 = vmatpush.msra.mxu0 %v3832
      %3851 = vmatpush.msra.mxu0 %v3828
      %3852 = vmatmul.f32.gmra.mxu0 %v399
      %v3853 = vpop.f32.mrf.mxu0
      %v3854 = vadd.f32 0.0, %v3853
      %3855 = vmatmul.f32.gmra.mxu0 %v402
      %v3856 = vpop.f32.mrf.mxu0
      %v3857 = vadd.f32 0.0, %v3856
      %3858 = vdwg.mxu0
      %3859 = vmatpush.msra.mxu0 0.0
      %3860 = vmatpush.msra.mxu0 0.0
      %3861 = vmatpush.msra.mxu0 0.0
      %3862 = vmatpush.msra.mxu0 0.0
      %3863 = vmatpush.msra.mxu0 0.0
      %3864 = vmatpush.msra.mxu0 0.0
      %3865 = vmatpush.msra.mxu0 0.0
      %3866 = vmatpush.msra.mxu0 0.0
      %3867 = vmatpush.msra.mxu0 0.0
      %3868 = vmatpush.msra.mxu0 0.0
      %3869 = vmatpush.msra.mxu0 0.0
      %3870 = vmatpush.msra.mxu0 0.0
      %3871 = vmatpush.msra.mxu0 0.0
      %3872 = vmatpush.msra.mxu0 0.0
      %3873 = vmatpush.msra.mxu0 %v3833
      %3874 = vmatpush.msra.mxu0 %v3829
      %3875 = vmatmul.f32.gmra.mxu0 %v399
      %v3876 = vpop.f32.mrf.mxu0
      %v3877 = vadd.f32 0.0, %v3876
      %3878 = vmatmul.f32.gmra.mxu0 %v402
      %v3879 = vpop.f32.mrf.mxu0
      %v3880 = vadd.f32 0.0, %v3879
      %3881 = vdwg.mxu0
      %3882 = vmatpush.msra.mxu0 0.0
      %3883 = vmatpush.msra.mxu0 0.0
      %3884 = vmatpush.msra.mxu0 0.0
      %3885 = vmatpush.msra.mxu0 0.0
      %3886 = vmatpush.msra.mxu0 0.0
      %3887 = vmatpush.msra.mxu0 0.0
      %3888 = vmatpush.msra.mxu0 0.0
      %3889 = vmatpush.msra.mxu0 0.0
      %3890 = vmatpush.msra.mxu0 0.0
      %3891 = vmatpush.msra.mxu0 0.0
      %3892 = vmatpush.msra.mxu0 0.0
      %3893 = vmatpush.msra.mxu0 0.0
      %3894 = vmatpush.msra.mxu0 0.0
      %3895 = vmatpush.msra.mxu0 0.0
      %3896 = vmatpush.msra.mxu0 %v3834
      %3897 = vmatpush.msra.mxu0 %v3830
      %3898 = vmatmul.f32.gmra.mxu0 %v399
      %v3899 = vpop.f32.mrf.mxu0
      %v3900 = vadd.f32 0.0, %v3899
      %3901 = vmatmul.f32.gmra.mxu0 %v402
      %v3902 = vpop.f32.mrf.mxu0
      %v3903 = vadd.f32 0.0, %v3902
      %3904 = vdwg.mxu0
      %3905 = vmatpush.msra.mxu0 0.0
      %3906 = vmatpush.msra.mxu0 0.0
      %3907 = vmatpush.msra.mxu0 0.0
      %3908 = vmatpush.msra.mxu0 0.0
      %3909 = vmatpush.msra.mxu0 0.0
      %3910 = vmatpush.msra.mxu0 0.0
      %3911 = vmatpush.msra.mxu0 0.0
      %3912 = vmatpush.msra.mxu0 0.0
      %3913 = vmatpush.msra.mxu0 0.0
      %3914 = vmatpush.msra.mxu0 0.0
      %3915 = vmatpush.msra.mxu0 0.0
      %3916 = vmatpush.msra.mxu0 0.0
      %3917 = vmatpush.msra.mxu0 0.0
      %3918 = vmatpush.msra.mxu0 0.0
      %3919 = vmatpush.msra.mxu0 %v3835
      %3920 = vmatpush.msra.mxu0 %v3831
      %3921 = vmatmul.f32.gmra.mxu0 %v399
      %v3922 = vpop.f32.mrf.mxu0
      %v3923 = vadd.f32 0.0, %v3922
      %3924 = vmatmul.f32.gmra.mxu0 %v402
      %v3925 = vpop.f32.mrf.mxu0
      %v3926 = vadd.f32 0.0, %v3925
      %3927 = vdwg.mxu0
      %3928 = vmatpush.msra.mxu0 0.0
      %3929 = vmatpush.msra.mxu0 0.0
      %3930 = vmatpush.msra.mxu0 0.0
      %3931 = vmatpush.msra.mxu0 0.0
      %3932 = vmatpush.msra.mxu0 0.0
      %3933 = vmatpush.msra.mxu0 0.0
      %3934 = vmatpush.msra.mxu0 0.0
      %3935 = vmatpush.msra.mxu0 0.0
      %3936 = vmatpush.msra.mxu0 0.0
      %3937 = vmatpush.msra.mxu0 0.0
      %3938 = vmatpush.msra.mxu0 0.0
      %3939 = vmatpush.msra.mxu0 0.0
      %3940 = vmatpush.msra.mxu0 0.0
      %3941 = vmatpush.msra.mxu0 0.0
      %3942 = vmatpush.msra.mxu0 %v3832
      %3943 = vmatpush.msra.mxu0 %v3828
      %3944 = vmatmul.f32.gmra.mxu0 %v500
      %v3945 = vpop.f32.mrf.mxu0
      %v3946 = vadd.f32 0.0, %v3945
      %3947 = vmatmul.f32.gmra.mxu0 %v503
      %v3948 = vpop.f32.mrf.mxu0
      %v3949 = vadd.f32 0.0, %v3948
      %3950 = vdwg.mxu0
      %3951 = vmatpush.msra.mxu0 0.0
      %3952 = vmatpush.msra.mxu0 0.0
      %3953 = vmatpush.msra.mxu0 0.0
      %3954 = vmatpush.msra.mxu0 0.0
      %3955 = vmatpush.msra.mxu0 0.0
      %3956 = vmatpush.msra.mxu0 0.0
      %3957 = vmatpush.msra.mxu0 0.0
      %3958 = vmatpush.msra.mxu0 0.0
      %3959 = vmatpush.msra.mxu0 0.0
      %3960 = vmatpush.msra.mxu0 0.0
      %3961 = vmatpush.msra.mxu0 0.0
      %3962 = vmatpush.msra.mxu0 0.0
      %3963 = vmatpush.msra.mxu0 0.0
      %3964 = vmatpush.msra.mxu0 0.0
      %3965 = vmatpush.msra.mxu0 %v3833
      %3966 = vmatpush.msra.mxu0 %v3829
      %3967 = vmatmul.f32.gmra.mxu0 %v500
      %v3968 = vpop.f32.mrf.mxu0
      %v3969 = vadd.f32 0.0, %v3968
      %3970 = vmatmul.f32.gmra.mxu0 %v503
      %v3971 = vpop.f32.mrf.mxu0
      %v3972 = vadd.f32 0.0, %v3971
      %3973 = vdwg.mxu0
      %3974 = vmatpush.msra.mxu0 0.0
      %3975 = vmatpush.msra.mxu0 0.0
      %3976 = vmatpush.msra.mxu0 0.0
      %3977 = vmatpush.msra.mxu0 0.0
      %3978 = vmatpush.msra.mxu0 0.0
      %3979 = vmatpush.msra.mxu0 0.0
      %3980 = vmatpush.msra.mxu0 0.0
      %3981 = vmatpush.msra.mxu0 0.0
      %3982 = vmatpush.msra.mxu0 0.0
      %3983 = vmatpush.msra.mxu0 0.0
      %3984 = vmatpush.msra.mxu0 0.0
      %3985 = vmatpush.msra.mxu0 0.0
      %3986 = vmatpush.msra.mxu0 0.0
      %3987 = vmatpush.msra.mxu0 0.0
      %3988 = vmatpush.msra.mxu0 %v3834
      %3989 = vmatpush.msra.mxu0 %v3830
      %3990 = vmatmul.f32.gmra.mxu0 %v500
      %v3991 = vpop.f32.mrf.mxu0
      %v3992 = vadd.f32 0.0, %v3991
      %3993 = vmatmul.f32.gmra.mxu0 %v503
      %v3994 = vpop.f32.mrf.mxu0
      %v3995 = vadd.f32 0.0, %v3994
      %3996 = vdwg.mxu0
      %3997 = vmatpush.msra.mxu0 0.0
      %3998 = vmatpush.msra.mxu0 0.0
      %3999 = vmatpush.msra.mxu0 0.0
      %4000 = vmatpush.msra.mxu0 0.0
      %4001 = vmatpush.msra.mxu0 0.0
      %4002 = vmatpush.msra.mxu0 0.0
      %4003 = vmatpush.msra.mxu0 0.0
      %4004 = vmatpush.msra.mxu0 0.0
      %4005 = vmatpush.msra.mxu0 0.0
      %4006 = vmatpush.msra.mxu0 0.0
      %4007 = vmatpush.msra.mxu0 0.0
      %4008 = vmatpush.msra.mxu0 0.0
      %4009 = vmatpush.msra.mxu0 0.0
      %4010 = vmatpush.msra.mxu0 0.0
      %4011 = vmatpush.msra.mxu0 %v3835
      %4012 = vmatpush.msra.mxu0 %v3831
      %4013 = vmatmul.f32.gmra.mxu0 %v500
      %v4014 = vpop.f32.mrf.mxu0
      %v4015 = vadd.f32 0.0, %v4014
      %4016 = vmatmul.f32.gmra.mxu0 %v503
      %v4017 = vpop.f32.mrf.mxu0
      %v4018 = vadd.f32 0.0, %v4017
      %4019 = vdwg.mxu0
      %v4020 = vld [vmem:[%s7] sm:$0xff]
      %v4021 = vld [vmem:[%s7 + $0x8] sm:$0xff]
      %v4022 = vld [vmem:[%s7 + $0x10] sm:$0xff]
      %v4023 = vld [vmem:[%s7 + $0x18] sm:$0xff]
      %v4024 = vld [vmem:[%s7 + $0x20] sm:$0xff]
      %v4025 = vld [vmem:[%s7 + $0x28] sm:$0xff]
      %v4026 = vld [vmem:[%s7 + $0x30] sm:$0xff]
      %v4027 = vld [vmem:[%s7 + $0x38] sm:$0xff]
      %v4028 = vld [vmem:[%s7 + $0x40] sm:$0xff]
      %v4029 = vld [vmem:[%s7 + $0x48] sm:$0xff]
      %v4030 = vld [vmem:[%s7 + $0x50] sm:$0xff]
      %v4031 = vld [vmem:[%s7 + $0x58] sm:$0xff]
      %v4032 = vld [vmem:[%s7 + $0x60] sm:$0xff]
      %v4033 = vld [vmem:[%s7 + $0x68] sm:$0xff]
      %v4034 = vld [vmem:[%s7 + $0x70] sm:$0xff]
      %v4035 = vld [vmem:[%s7 + $0x78] sm:$0xff]
      %v4036 = vld [vmem:[%s7 + $0x80] sm:$0xff]
      %v4037 = vld [vmem:[%s7 + $0x88] sm:$0xff]
      %v4038 = vld [vmem:[%s7 + $0x90] sm:$0xff]
      %v4039 = vld [vmem:[%s7 + $0x98] sm:$0xff]
      %v4040 = vld [vmem:[%s7 + $0xa0] sm:$0xff]
      %v4041 = vld [vmem:[%s7 + $0xa8] sm:$0xff]
      %v4042 = vld [vmem:[%s7 + $0xb0] sm:$0xff]
      %v4043 = vld [vmem:[%s7 + $0xb8] sm:$0xff]
      %v4044 = vld [vmem:[%s7 + $0xc0] sm:$0xff]
      %v4045 = vld [vmem:[%s7 + $0xc8] sm:$0xff]
      %v4046 = vld [vmem:[%s7 + $0xd0] sm:$0xff]
      %v4047 = vld [vmem:[%s7 + $0xd8] sm:$0xff]
      %v4048 = vld [vmem:[%s7 + $0xe0] sm:$0xff]
      %v4049 = vld [vmem:[%s7 + $0xe8] sm:$0xff]
      %v4050 = vld [vmem:[%s7 + $0xf0] sm:$0xff]
      %v4051 = vld [vmem:[%s7 + $0xf8] sm:$0xff]
      %v4052 = vld [vmem:[%s7 + $0x100] sm:$0xff]
      %v4053 = vld [vmem:[%s7 + $0x108] sm:$0xff]
      %v4054 = vld [vmem:[%s7 + $0x110] sm:$0xff]
      %v4055 = vld [vmem:[%s7 + $0x118] sm:$0xff]
      %v4056 = vld [vmem:[%s7 + $0x120] sm:$0xff]
      %v4057 = vld [vmem:[%s7 + $0x128] sm:$0xff]
      %v4058 = vld [vmem:[%s7 + $0x130] sm:$0xff]
      %v4059 = vld [vmem:[%s7 + $0x138] sm:$0xff]
      %v4060 = vld [vmem:[%s7 + $0x140] sm:$0xff]
      %v4061 = vld [vmem:[%s7 + $0x148] sm:$0xff]
      %v4062 = vld [vmem:[%s7 + $0x150] sm:$0xff]
      %v4063 = vld [vmem:[%s7 + $0x158] sm:$0xff]
      %v4064 = vld [vmem:[%s7 + $0x160] sm:$0xff]
      %v4065 = vld [vmem:[%s7 + $0x168] sm:$0xff]
      %v4066 = vld [vmem:[%s7 + $0x170] sm:$0xff]
      %v4067 = vld [vmem:[%s7 + $0x178] sm:$0xff]
      %v4068 = vld [vmem:[%s7 + $0x180] sm:$0xff]
      %v4069 = vld [vmem:[%s7 + $0x188] sm:$0xff]
      %v4070 = vld [vmem:[%s7 + $0x190] sm:$0xff]
      %v4071 = vld [vmem:[%s7 + $0x198] sm:$0xff]
      %v4072 = vld [vmem:[%s7 + $0x1a0] sm:$0xff]
      %v4073 = vld [vmem:[%s7 + $0x1a8] sm:$0xff]
      %v4074 = vld [vmem:[%s7 + $0x1b0] sm:$0xff]
      %v4075 = vld [vmem:[%s7 + $0x1b8] sm:$0xff]
      %v4076 = vld [vmem:[%s7 + $0x1c0] sm:$0xff]
      %v4077 = vld [vmem:[%s7 + $0x1c8] sm:$0xff]
      %v4078 = vld [vmem:[%s7 + $0x1d0] sm:$0xff]
      %v4079 = vld [vmem:[%s7 + $0x1d8] sm:$0xff]
      %v4080 = vld [vmem:[%s7 + $0x1e0] sm:$0xff]
      %v4081 = vld [vmem:[%s7 + $0x1e8] sm:$0xff]
      %v4082 = vld [vmem:[%s7 + $0x1f0] sm:$0xff]
      %v4083 = vld [vmem:[%s7 + $0x1f8] sm:$0xff]
      %v4084 = vld [vmem:[%s7 + $0x200] sm:$0xff]
      %v4085 = vld [vmem:[%s7 + $0x208] sm:$0xff]
      %v4086 = vld [vmem:[%s7 + $0x210] sm:$0xff]
      %v4087 = vld [vmem:[%s7 + $0x218] sm:$0xff]
      %v4088 = vld [vmem:[%s7 + $0x220] sm:$0xff]
      %v4089 = vld [vmem:[%s7 + $0x228] sm:$0xff]
      %v4090 = vld [vmem:[%s7 + $0x230] sm:$0xff]
      %v4091 = vld [vmem:[%s7 + $0x238] sm:$0xff]
      %v4092 = vld [vmem:[%s7 + $0x240] sm:$0xff]
      %v4093 = vld [vmem:[%s7 + $0x248] sm:$0xff]
      %v4094 = vld [vmem:[%s7 + $0x250] sm:$0xff]
      %v4095 = vld [vmem:[%s7 + $0x258] sm:$0xff]
      %v4096 = vld [vmem:[%s7 + $0x260] sm:$0xff]
      %v4097 = vld [vmem:[%s7 + $0x268] sm:$0xff]
      %v4098 = vld [vmem:[%s7 + $0x270] sm:$0xff]
      %v4099 = vld [vmem:[%s7 + $0x278] sm:$0xff]
      %v4100 = vld [vmem:[%s7 + $0x280] sm:$0xff]
      %v4101 = vld [vmem:[%s7 + $0x288] sm:$0xff]
      %v4102 = vld [vmem:[%s7 + $0x290] sm:$0xff]
      %v4103 = vld [vmem:[%s7 + $0x298] sm:$0xff]
      %v4104 = vld [vmem:[%s7 + $0x2a0] sm:$0xff]
      %v4105 = vld [vmem:[%s7 + $0x2a8] sm:$0xff]
      %v4106 = vld [vmem:[%s7 + $0x2b0] sm:$0xff]
      %v4107 = vld [vmem:[%s7 + $0x2b8] sm:$0xff]
      %v4108 = vld [vmem:[%s7 + $0x2c0] sm:$0xff]
      %v4109 = vld [vmem:[%s7 + $0x2c8] sm:$0xff]
      %v4110 = vld [vmem:[%s7 + $0x2d0] sm:$0xff]
      %v4111 = vld [vmem:[%s7 + $0x2d8] sm:$0xff]
      %v4112 = vld [vmem:[%s7 + $0x2e0] sm:$0xff]
      %v4113 = vld [vmem:[%s7 + $0x2e8] sm:$0xff]
      %v4114 = vld [vmem:[%s7 + $0x2f0] sm:$0xff]
      %v4115 = vld [vmem:[%s7 + $0x2f8] sm:$0xff]
      %v4116 = vld [vmem:[%s7 + $0x300] sm:$0xff]
      %v4117 = vld [vmem:[%s7 + $0x308] sm:$0xff]
      %v4118 = vld [vmem:[%s7 + $0x310] sm:$0xff]
      %v4119 = vld [vmem:[%s7 + $0x318] sm:$0xff]
      %v4120 = vld [vmem:[%s7 + $0x320] sm:$0xff]
      %v4121 = vld [vmem:[%s7 + $0x328] sm:$0xff]
      %v4122 = vld [vmem:[%s7 + $0x330] sm:$0xff]
      %v4123 = vld [vmem:[%s7 + $0x338] sm:$0xff]
      %v4124 = vld [vmem:[%s7 + $0x340] sm:$0xff]
      %v4125 = vld [vmem:[%s7 + $0x348] sm:$0xff]
      %v4126 = vld [vmem:[%s7 + $0x350] sm:$0xff]
      %v4127 = vld [vmem:[%s7 + $0x358] sm:$0xff]
      %v4128 = vld [vmem:[%s7 + $0x360] sm:$0xff]
      %v4129 = vld [vmem:[%s7 + $0x368] sm:$0xff]
      %v4130 = vld [vmem:[%s7 + $0x370] sm:$0xff]
      %v4131 = vld [vmem:[%s7 + $0x378] sm:$0xff]
      %v4132 = vld [vmem:[%s7 + $0x380] sm:$0xff]
      %v4133 = vld [vmem:[%s7 + $0x388] sm:$0xff]
      %v4134 = vld [vmem:[%s7 + $0x390] sm:$0xff]
      %v4135 = vld [vmem:[%s7 + $0x398] sm:$0xff]
      %v4136 = vld [vmem:[%s7 + $0x3a0] sm:$0xff]
      %v4137 = vld [vmem:[%s7 + $0x3a8] sm:$0xff]
      %v4138 = vld [vmem:[%s7 + $0x3b0] sm:$0xff]
      %v4139 = vld [vmem:[%s7 + $0x3b8] sm:$0xff]
      %v4140 = vld [vmem:[%s7 + $0x3c0] sm:$0xff]
      %v4141 = vld [vmem:[%s7 + $0x3c8] sm:$0xff]
      %v4142 = vld [vmem:[%s7 + $0x3d0] sm:$0xff]
      %v4143 = vld [vmem:[%s7 + $0x3d8] sm:$0xff]
      %v4144 = vld [vmem:[%s7 + $0x3e0] sm:$0xff]
      %v4145 = vld [vmem:[%s7 + $0x3e8] sm:$0xff]
      %v4146 = vld [vmem:[%s7 + $0x3f0] sm:$0xff]
      %v4147 = vld [vmem:[%s7 + $0x3f8] sm:$0xff]
      %v4148 = vld [vmem:[%s7 + $0x400] sm:$0xff]
      %v4149 = vld [vmem:[%s7 + $0x408] sm:$0xff]
      %v4150 = vld [vmem:[%s7 + $0x410] sm:$0xff]
      %v4151 = vld [vmem:[%s7 + $0x418] sm:$0xff]
      %v4152 = vld [vmem:[%s7 + $0x420] sm:$0xff]
      %v4153 = vld [vmem:[%s7 + $0x428] sm:$0xff]
      %v4154 = vld [vmem:[%s7 + $0x430] sm:$0xff]
      %v4155 = vld [vmem:[%s7 + $0x438] sm:$0xff]
      %v4156 = vld [vmem:[%s7 + $0x440] sm:$0xff]
      %v4157 = vld [vmem:[%s7 + $0x448] sm:$0xff]
      %v4158 = vld [vmem:[%s7 + $0x450] sm:$0xff]
      %v4159 = vld [vmem:[%s7 + $0x458] sm:$0xff]
      %v4160 = vld [vmem:[%s7 + $0x460] sm:$0xff]
      %v4161 = vld [vmem:[%s7 + $0x468] sm:$0xff]
      %v4162 = vld [vmem:[%s7 + $0x470] sm:$0xff]
      %v4163 = vld [vmem:[%s7 + $0x478] sm:$0xff]
      %v4164 = vld [vmem:[%s7 + $0x480] sm:$0xff]
      %v4165 = vld [vmem:[%s7 + $0x488] sm:$0xff]
      %v4166 = vld [vmem:[%s7 + $0x490] sm:$0xff]
      %v4167 = vld [vmem:[%s7 + $0x498] sm:$0xff]
      %v4168 = vld [vmem:[%s7 + $0x4a0] sm:$0xff]
      %v4169 = vld [vmem:[%s7 + $0x4a8] sm:$0xff]
      %v4170 = vld [vmem:[%s7 + $0x4b0] sm:$0xff]
      %v4171 = vld [vmem:[%s7 + $0x4b8] sm:$0xff]
      %v4172 = vld [vmem:[%s7 + $0x4c0] sm:$0xff]
      %v4173 = vld [vmem:[%s7 + $0x4c8] sm:$0xff]
      %v4174 = vld [vmem:[%s7 + $0x4d0] sm:$0xff]
      %v4175 = vld [vmem:[%s7 + $0x4d8] sm:$0xff]
      %v4176 = vld [vmem:[%s7 + $0x4e0] sm:$0xff]
      %v4177 = vld [vmem:[%s7 + $0x4e8] sm:$0xff]
      %v4178 = vld [vmem:[%s7 + $0x4f0] sm:$0xff]
      %v4179 = vld [vmem:[%s7 + $0x4f8] sm:$0xff]
      %v4180 = vld [vmem:[%s7 + $0x500] sm:$0xff]
      %v4181 = vld [vmem:[%s7 + $0x508] sm:$0xff]
      %v4182 = vld [vmem:[%s7 + $0x510] sm:$0xff]
      %v4183 = vld [vmem:[%s7 + $0x518] sm:$0xff]
      %v4184 = vld [vmem:[%s7 + $0x520] sm:$0xff]
      %v4185 = vld [vmem:[%s7 + $0x528] sm:$0xff]
      %v4186 = vld [vmem:[%s7 + $0x530] sm:$0xff]
      %v4187 = vld [vmem:[%s7 + $0x538] sm:$0xff]
      %v4188 = vld [vmem:[%s7 + $0x540] sm:$0xff]
      %v4189 = vld [vmem:[%s7 + $0x548] sm:$0xff]
      %v4190 = vld [vmem:[%s7 + $0x550] sm:$0xff]
      %v4191 = vld [vmem:[%s7 + $0x558] sm:$0xff]
      %v4192 = vld [vmem:[%s7 + $0x560] sm:$0xff]
      %v4193 = vld [vmem:[%s7 + $0x568] sm:$0xff]
      %v4194 = vld [vmem:[%s7 + $0x570] sm:$0xff]
      %v4195 = vld [vmem:[%s7 + $0x578] sm:$0xff]
      %v4196 = vld [vmem:[%s7 + $0x580] sm:$0xff]
      %v4197 = vld [vmem:[%s7 + $0x588] sm:$0xff]
      %v4198 = vld [vmem:[%s7 + $0x590] sm:$0xff]
      %v4199 = vld [vmem:[%s7 + $0x598] sm:$0xff]
      %v4200 = vld [vmem:[%s7 + $0x5a0] sm:$0xff]
      %v4201 = vld [vmem:[%s7 + $0x5a8] sm:$0xff]
      %v4202 = vld [vmem:[%s7 + $0x5b0] sm:$0xff]
      %v4203 = vld [vmem:[%s7 + $0x5b8] sm:$0xff]
      %v4204 = vld [vmem:[%s7 + $0x5c0] sm:$0xff]
      %v4205 = vld [vmem:[%s7 + $0x5c8] sm:$0xff]
      %v4206 = vld [vmem:[%s7 + $0x5d0] sm:$0xff]
      %v4207 = vld [vmem:[%s7 + $0x5d8] sm:$0xff]
      %v4208 = vld [vmem:[%s7 + $0x5e0] sm:$0xff]
      %v4209 = vld [vmem:[%s7 + $0x5e8] sm:$0xff]
      %v4210 = vld [vmem:[%s7 + $0x5f0] sm:$0xff]
      %v4211 = vld [vmem:[%s7 + $0x5f8] sm:$0xff]
      %v4212 = vld [vmem:[%s7 + $0x600] sm:$0xff]
      %v4213 = vld [vmem:[%s7 + $0x608] sm:$0xff]
      %v4214 = vld [vmem:[%s7 + $0x610] sm:$0xff]
      %v4215 = vld [vmem:[%s7 + $0x618] sm:$0xff]
      %v4216 = vld [vmem:[%s7 + $0x620] sm:$0xff]
      %v4217 = vld [vmem:[%s7 + $0x628] sm:$0xff]
      %v4218 = vld [vmem:[%s7 + $0x630] sm:$0xff]
      %v4219 = vld [vmem:[%s7 + $0x638] sm:$0xff]
      %v4220 = vld [vmem:[%s7 + $0x640] sm:$0xff]
      %v4221 = vld [vmem:[%s7 + $0x648] sm:$0xff]
      %v4222 = vld [vmem:[%s7 + $0x650] sm:$0xff]
      %v4223 = vld [vmem:[%s7 + $0x658] sm:$0xff]
      %v4224 = vld [vmem:[%s7 + $0x660] sm:$0xff]
      %v4225 = vld [vmem:[%s7 + $0x668] sm:$0xff]
      %v4226 = vld [vmem:[%s7 + $0x670] sm:$0xff]
      %v4227 = vld [vmem:[%s7 + $0x678] sm:$0xff]
      %v4228 = vld [vmem:[%s7 + $0x680] sm:$0xff]
      %v4229 = vld [vmem:[%s7 + $0x688] sm:$0xff]
      %v4230 = vld [vmem:[%s7 + $0x690] sm:$0xff]
      %v4231 = vld [vmem:[%s7 + $0x698] sm:$0xff]
      %v4232 = vld [vmem:[%s7 + $0x6a0] sm:$0xff]
      %v4233 = vld [vmem:[%s7 + $0x6a8] sm:$0xff]
      %v4234 = vld [vmem:[%s7 + $0x6b0] sm:$0xff]
      %v4235 = vld [vmem:[%s7 + $0x6b8] sm:$0xff]
      %v4236 = vld [vmem:[%s7 + $0x6c0] sm:$0xff]
      %v4237 = vld [vmem:[%s7 + $0x6c8] sm:$0xff]
      %v4238 = vld [vmem:[%s7 + $0x6d0] sm:$0xff]
      %v4239 = vld [vmem:[%s7 + $0x6d8] sm:$0xff]
      %v4240 = vld [vmem:[%s7 + $0x6e0] sm:$0xff]
      %v4241 = vld [vmem:[%s7 + $0x6e8] sm:$0xff]
      %v4242 = vld [vmem:[%s7 + $0x6f0] sm:$0xff]
      %v4243 = vld [vmem:[%s7 + $0x6f8] sm:$0xff]
      %v4244 = vld [vmem:[%s7 + $0x700] sm:$0xff]
      %v4245 = vld [vmem:[%s7 + $0x708] sm:$0xff]
      %v4246 = vld [vmem:[%s7 + $0x710] sm:$0xff]
      %v4247 = vld [vmem:[%s7 + $0x718] sm:$0xff]
      %v4248 = vld [vmem:[%s7 + $0x720] sm:$0xff]
      %v4249 = vld [vmem:[%s7 + $0x728] sm:$0xff]
      %v4250 = vld [vmem:[%s7 + $0x730] sm:$0xff]
      %v4251 = vld [vmem:[%s7 + $0x738] sm:$0xff]
      %v4252 = vld [vmem:[%s7 + $0x740] sm:$0xff]
      %v4253 = vld [vmem:[%s7 + $0x748] sm:$0xff]
      %v4254 = vld [vmem:[%s7 + $0x750] sm:$0xff]
      %v4255 = vld [vmem:[%s7 + $0x758] sm:$0xff]
      %v4256 = vld [vmem:[%s7 + $0x760] sm:$0xff]
      %v4257 = vld [vmem:[%s7 + $0x768] sm:$0xff]
      %v4258 = vld [vmem:[%s7 + $0x770] sm:$0xff]
      %v4259 = vld [vmem:[%s7 + $0x778] sm:$0xff]
      %v4260 = vld [vmem:[%s7 + $0x780] sm:$0xff]
      %v4261 = vld [vmem:[%s7 + $0x788] sm:$0xff]
      %v4262 = vld [vmem:[%s7 + $0x790] sm:$0xff]
      %v4263 = vld [vmem:[%s7 + $0x798] sm:$0xff]
      %v4264 = vld [vmem:[%s7 + $0x7a0] sm:$0xff]
      %v4265 = vld [vmem:[%s7 + $0x7a8] sm:$0xff]
      %v4266 = vld [vmem:[%s7 + $0x7b0] sm:$0xff]
      %v4267 = vld [vmem:[%s7 + $0x7b8] sm:$0xff]
      %v4268 = vld [vmem:[%s7 + $0x7c0] sm:$0xff]
      %v4269 = vld [vmem:[%s7 + $0x7c8] sm:$0xff]
      %v4270 = vld [vmem:[%s7 + $0x7d0] sm:$0xff]
      %v4271 = vld [vmem:[%s7 + $0x7d8] sm:$0xff]
      %v4272 = vld [vmem:[%s7 + $0x7e0] sm:$0xff]
      %v4273 = vld [vmem:[%s7 + $0x7e8] sm:$0xff]
      %v4274 = vld [vmem:[%s7 + $0x7f0] sm:$0xff]
      %v4275 = vld [vmem:[%s7 + $0x7f8] sm:$0xff]
      %s4276 = scalar_lea.vmem %s7, 2048
      %v4277 = vld [vmem:[%s4276] sm:$0xff]
      %v4278 = vld [vmem:[%s4276 + $0x8] sm:$0xff]
      %v4279 = vld [vmem:[%s4276 + $0x10] sm:$0xff]
      %v4280 = vld [vmem:[%s4276 + $0x18] sm:$0xff]
      %v4281 = vld [vmem:[%s4276 + $0x20] sm:$0xff]
      %v4282 = vld [vmem:[%s4276 + $0x28] sm:$0xff]
      %v4283 = vld [vmem:[%s4276 + $0x30] sm:$0xff]
      %v4284 = vld [vmem:[%s4276 + $0x38] sm:$0xff]
      %v4285 = vld [vmem:[%s4276 + $0x40] sm:$0xff]
      %v4286 = vld [vmem:[%s4276 + $0x48] sm:$0xff]
      %v4287 = vld [vmem:[%s4276 + $0x50] sm:$0xff]
      %v4288 = vld [vmem:[%s4276 + $0x58] sm:$0xff]
      %v4289 = vld [vmem:[%s4276 + $0x60] sm:$0xff]
      %v4290 = vld [vmem:[%s4276 + $0x68] sm:$0xff]
      %v4291 = vld [vmem:[%s4276 + $0x70] sm:$0xff]
      %v4292 = vld [vmem:[%s4276 + $0x78] sm:$0xff]
      %v4293 = vld [vmem:[%s4276 + $0x80] sm:$0xff]
      %v4294 = vld [vmem:[%s4276 + $0x88] sm:$0xff]
      %v4295 = vld [vmem:[%s4276 + $0x90] sm:$0xff]
      %v4296 = vld [vmem:[%s4276 + $0x98] sm:$0xff]
      %v4297 = vld [vmem:[%s4276 + $0xa0] sm:$0xff]
      %v4298 = vld [vmem:[%s4276 + $0xa8] sm:$0xff]
      %v4299 = vld [vmem:[%s4276 + $0xb0] sm:$0xff]
      %v4300 = vld [vmem:[%s4276 + $0xb8] sm:$0xff]
      %v4301 = vld [vmem:[%s4276 + $0xc0] sm:$0xff]
      %v4302 = vld [vmem:[%s4276 + $0xc8] sm:$0xff]
      %v4303 = vld [vmem:[%s4276 + $0xd0] sm:$0xff]
      %v4304 = vld [vmem:[%s4276 + $0xd8] sm:$0xff]
      %v4305 = vld [vmem:[%s4276 + $0xe0] sm:$0xff]
      %v4306 = vld [vmem:[%s4276 + $0xe8] sm:$0xff]
      %v4307 = vld [vmem:[%s4276 + $0xf0] sm:$0xff]
      %v4308 = vld [vmem:[%s4276 + $0xf8] sm:$0xff]
      %v4309 = vld [vmem:[%s4276 + $0x100] sm:$0xff]
      %v4310 = vld [vmem:[%s4276 + $0x108] sm:$0xff]
      %v4311 = vld [vmem:[%s4276 + $0x110] sm:$0xff]
      %v4312 = vld [vmem:[%s4276 + $0x118] sm:$0xff]
      %v4313 = vld [vmem:[%s4276 + $0x120] sm:$0xff]
      %v4314 = vld [vmem:[%s4276 + $0x128] sm:$0xff]
      %v4315 = vld [vmem:[%s4276 + $0x130] sm:$0xff]
      %v4316 = vld [vmem:[%s4276 + $0x138] sm:$0xff]
      %v4317 = vld [vmem:[%s4276 + $0x140] sm:$0xff]
      %v4318 = vld [vmem:[%s4276 + $0x148] sm:$0xff]
      %v4319 = vld [vmem:[%s4276 + $0x150] sm:$0xff]
      %v4320 = vld [vmem:[%s4276 + $0x158] sm:$0xff]
      %v4321 = vld [vmem:[%s4276 + $0x160] sm:$0xff]
      %v4322 = vld [vmem:[%s4276 + $0x168] sm:$0xff]
      %v4323 = vld [vmem:[%s4276 + $0x170] sm:$0xff]
      %v4324 = vld [vmem:[%s4276 + $0x178] sm:$0xff]
      %v4325 = vld [vmem:[%s4276 + $0x180] sm:$0xff]
      %v4326 = vld [vmem:[%s4276 + $0x188] sm:$0xff]
      %v4327 = vld [vmem:[%s4276 + $0x190] sm:$0xff]
      %v4328 = vld [vmem:[%s4276 + $0x198] sm:$0xff]
      %v4329 = vld [vmem:[%s4276 + $0x1a0] sm:$0xff]
      %v4330 = vld [vmem:[%s4276 + $0x1a8] sm:$0xff]
      %v4331 = vld [vmem:[%s4276 + $0x1b0] sm:$0xff]
      %v4332 = vld [vmem:[%s4276 + $0x1b8] sm:$0xff]
      %v4333 = vld [vmem:[%s4276 + $0x1c0] sm:$0xff]
      %v4334 = vld [vmem:[%s4276 + $0x1c8] sm:$0xff]
      %v4335 = vld [vmem:[%s4276 + $0x1d0] sm:$0xff]
      %v4336 = vld [vmem:[%s4276 + $0x1d8] sm:$0xff]
      %v4337 = vld [vmem:[%s4276 + $0x1e0] sm:$0xff]
      %v4338 = vld [vmem:[%s4276 + $0x1e8] sm:$0xff]
      %v4339 = vld [vmem:[%s4276 + $0x1f0] sm:$0xff]
      %v4340 = vld [vmem:[%s4276 + $0x1f8] sm:$0xff]
      %v4341 = vld [vmem:[%s4276 + $0x200] sm:$0xff]
      %v4342 = vld [vmem:[%s4276 + $0x208] sm:$0xff]
      %v4343 = vld [vmem:[%s4276 + $0x210] sm:$0xff]
      %v4344 = vld [vmem:[%s4276 + $0x218] sm:$0xff]
      %v4345 = vld [vmem:[%s4276 + $0x220] sm:$0xff]
      %v4346 = vld [vmem:[%s4276 + $0x228] sm:$0xff]
      %v4347 = vld [vmem:[%s4276 + $0x230] sm:$0xff]
      %v4348 = vld [vmem:[%s4276 + $0x238] sm:$0xff]
      %v4349 = vld [vmem:[%s4276 + $0x240] sm:$0xff]
      %v4350 = vld [vmem:[%s4276 + $0x248] sm:$0xff]
      %v4351 = vld [vmem:[%s4276 + $0x250] sm:$0xff]
      %v4352 = vld [vmem:[%s4276 + $0x258] sm:$0xff]
      %v4353 = vld [vmem:[%s4276 + $0x260] sm:$0xff]
      %v4354 = vld [vmem:[%s4276 + $0x268] sm:$0xff]
      %v4355 = vld [vmem:[%s4276 + $0x270] sm:$0xff]
      %v4356 = vld [vmem:[%s4276 + $0x278] sm:$0xff]
      %v4357 = vld [vmem:[%s4276 + $0x280] sm:$0xff]
      %v4358 = vld [vmem:[%s4276 + $0x288] sm:$0xff]
      %v4359 = vld [vmem:[%s4276 + $0x290] sm:$0xff]
      %v4360 = vld [vmem:[%s4276 + $0x298] sm:$0xff]
      %v4361 = vld [vmem:[%s4276 + $0x2a0] sm:$0xff]
      %v4362 = vld [vmem:[%s4276 + $0x2a8] sm:$0xff]
      %v4363 = vld [vmem:[%s4276 + $0x2b0] sm:$0xff]
      %v4364 = vld [vmem:[%s4276 + $0x2b8] sm:$0xff]
      %v4365 = vld [vmem:[%s4276 + $0x2c0] sm:$0xff]
      %v4366 = vld [vmem:[%s4276 + $0x2c8] sm:$0xff]
      %v4367 = vld [vmem:[%s4276 + $0x2d0] sm:$0xff]
      %v4368 = vld [vmem:[%s4276 + $0x2d8] sm:$0xff]
      %v4369 = vld [vmem:[%s4276 + $0x2e0] sm:$0xff]
      %v4370 = vld [vmem:[%s4276 + $0x2e8] sm:$0xff]
      %v4371 = vld [vmem:[%s4276 + $0x2f0] sm:$0xff]
      %v4372 = vld [vmem:[%s4276 + $0x2f8] sm:$0xff]
      %v4373 = vld [vmem:[%s4276 + $0x300] sm:$0xff]
      %v4374 = vld [vmem:[%s4276 + $0x308] sm:$0xff]
      %v4375 = vld [vmem:[%s4276 + $0x310] sm:$0xff]
      %v4376 = vld [vmem:[%s4276 + $0x318] sm:$0xff]
      %v4377 = vld [vmem:[%s4276 + $0x320] sm:$0xff]
      %v4378 = vld [vmem:[%s4276 + $0x328] sm:$0xff]
      %v4379 = vld [vmem:[%s4276 + $0x330] sm:$0xff]
      %v4380 = vld [vmem:[%s4276 + $0x338] sm:$0xff]
      %v4381 = vld [vmem:[%s4276 + $0x340] sm:$0xff]
      %v4382 = vld [vmem:[%s4276 + $0x348] sm:$0xff]
      %v4383 = vld [vmem:[%s4276 + $0x350] sm:$0xff]
      %v4384 = vld [vmem:[%s4276 + $0x358] sm:$0xff]
      %v4385 = vld [vmem:[%s4276 + $0x360] sm:$0xff]
      %v4386 = vld [vmem:[%s4276 + $0x368] sm:$0xff]
      %v4387 = vld [vmem:[%s4276 + $0x370] sm:$0xff]
      %v4388 = vld [vmem:[%s4276 + $0x378] sm:$0xff]
      %v4389 = vld [vmem:[%s4276 + $0x380] sm:$0xff]
      %v4390 = vld [vmem:[%s4276 + $0x388] sm:$0xff]
      %v4391 = vld [vmem:[%s4276 + $0x390] sm:$0xff]
      %v4392 = vld [vmem:[%s4276 + $0x398] sm:$0xff]
      %v4393 = vld [vmem:[%s4276 + $0x3a0] sm:$0xff]
      %v4394 = vld [vmem:[%s4276 + $0x3a8] sm:$0xff]
      %v4395 = vld [vmem:[%s4276 + $0x3b0] sm:$0xff]
      %v4396 = vld [vmem:[%s4276 + $0x3b8] sm:$0xff]
      %v4397 = vld [vmem:[%s4276 + $0x3c0] sm:$0xff]
      %v4398 = vld [vmem:[%s4276 + $0x3c8] sm:$0xff]
      %v4399 = vld [vmem:[%s4276 + $0x3d0] sm:$0xff]
      %v4400 = vld [vmem:[%s4276 + $0x3d8] sm:$0xff]
      %v4401 = vld [vmem:[%s4276 + $0x3e0] sm:$0xff]
      %v4402 = vld [vmem:[%s4276 + $0x3e8] sm:$0xff]
      %v4403 = vld [vmem:[%s4276 + $0x3f0] sm:$0xff]
      %v4404 = vld [vmem:[%s4276 + $0x3f8] sm:$0xff]
      %v4405 = vld [vmem:[%s4276 + $0x400] sm:$0xff]
      %v4406 = vld [vmem:[%s4276 + $0x408] sm:$0xff]
      %v4407 = vld [vmem:[%s4276 + $0x410] sm:$0xff]
      %v4408 = vld [vmem:[%s4276 + $0x418] sm:$0xff]
      %v4409 = vld [vmem:[%s4276 + $0x420] sm:$0xff]
      %v4410 = vld [vmem:[%s4276 + $0x428] sm:$0xff]
      %v4411 = vld [vmem:[%s4276 + $0x430] sm:$0xff]
      %v4412 = vld [vmem:[%s4276 + $0x438] sm:$0xff]
      %v4413 = vld [vmem:[%s4276 + $0x440] sm:$0xff]
      %v4414 = vld [vmem:[%s4276 + $0x448] sm:$0xff]
      %v4415 = vld [vmem:[%s4276 + $0x450] sm:$0xff]
      %v4416 = vld [vmem:[%s4276 + $0x458] sm:$0xff]
      %v4417 = vld [vmem:[%s4276 + $0x460] sm:$0xff]
      %v4418 = vld [vmem:[%s4276 + $0x468] sm:$0xff]
      %v4419 = vld [vmem:[%s4276 + $0x470] sm:$0xff]
      %v4420 = vld [vmem:[%s4276 + $0x478] sm:$0xff]
      %v4421 = vld [vmem:[%s4276 + $0x480] sm:$0xff]
      %v4422 = vld [vmem:[%s4276 + $0x488] sm:$0xff]
      %v4423 = vld [vmem:[%s4276 + $0x490] sm:$0xff]
      %v4424 = vld [vmem:[%s4276 + $0x498] sm:$0xff]
      %v4425 = vld [vmem:[%s4276 + $0x4a0] sm:$0xff]
      %v4426 = vld [vmem:[%s4276 + $0x4a8] sm:$0xff]
      %v4427 = vld [vmem:[%s4276 + $0x4b0] sm:$0xff]
      %v4428 = vld [vmem:[%s4276 + $0x4b8] sm:$0xff]
      %v4429 = vld [vmem:[%s4276 + $0x4c0] sm:$0xff]
      %v4430 = vld [vmem:[%s4276 + $0x4c8] sm:$0xff]
      %v4431 = vld [vmem:[%s4276 + $0x4d0] sm:$0xff]
      %v4432 = vld [vmem:[%s4276 + $0x4d8] sm:$0xff]
      %v4433 = vld [vmem:[%s4276 + $0x4e0] sm:$0xff]
      %v4434 = vld [vmem:[%s4276 + $0x4e8] sm:$0xff]
      %v4435 = vld [vmem:[%s4276 + $0x4f0] sm:$0xff]
      %v4436 = vld [vmem:[%s4276 + $0x4f8] sm:$0xff]
      %v4437 = vld [vmem:[%s4276 + $0x500] sm:$0xff]
      %v4438 = vld [vmem:[%s4276 + $0x508] sm:$0xff]
      %v4439 = vld [vmem:[%s4276 + $0x510] sm:$0xff]
      %v4440 = vld [vmem:[%s4276 + $0x518] sm:$0xff]
      %v4441 = vld [vmem:[%s4276 + $0x520] sm:$0xff]
      %v4442 = vld [vmem:[%s4276 + $0x528] sm:$0xff]
      %v4443 = vld [vmem:[%s4276 + $0x530] sm:$0xff]
      %v4444 = vld [vmem:[%s4276 + $0x538] sm:$0xff]
      %v4445 = vld [vmem:[%s4276 + $0x540] sm:$0xff]
      %v4446 = vld [vmem:[%s4276 + $0x548] sm:$0xff]
      %v4447 = vld [vmem:[%s4276 + $0x550] sm:$0xff]
      %v4448 = vld [vmem:[%s4276 + $0x558] sm:$0xff]
      %v4449 = vld [vmem:[%s4276 + $0x560] sm:$0xff]
      %v4450 = vld [vmem:[%s4276 + $0x568] sm:$0xff]
      %v4451 = vld [vmem:[%s4276 + $0x570] sm:$0xff]
      %v4452 = vld [vmem:[%s4276 + $0x578] sm:$0xff]
      %v4453 = vld [vmem:[%s4276 + $0x580] sm:$0xff]
      %v4454 = vld [vmem:[%s4276 + $0x588] sm:$0xff]
      %v4455 = vld [vmem:[%s4276 + $0x590] sm:$0xff]
      %v4456 = vld [vmem:[%s4276 + $0x598] sm:$0xff]
      %v4457 = vld [vmem:[%s4276 + $0x5a0] sm:$0xff]
      %v4458 = vld [vmem:[%s4276 + $0x5a8] sm:$0xff]
      %v4459 = vld [vmem:[%s4276 + $0x5b0] sm:$0xff]
      %v4460 = vld [vmem:[%s4276 + $0x5b8] sm:$0xff]
      %v4461 = vld [vmem:[%s4276 + $0x5c0] sm:$0xff]
      %v4462 = vld [vmem:[%s4276 + $0x5c8] sm:$0xff]
      %v4463 = vld [vmem:[%s4276 + $0x5d0] sm:$0xff]
      %v4464 = vld [vmem:[%s4276 + $0x5d8] sm:$0xff]
      %v4465 = vld [vmem:[%s4276 + $0x5e0] sm:$0xff]
      %v4466 = vld [vmem:[%s4276 + $0x5e8] sm:$0xff]
      %v4467 = vld [vmem:[%s4276 + $0x5f0] sm:$0xff]
      %v4468 = vld [vmem:[%s4276 + $0x5f8] sm:$0xff]
      %v4469 = vld [vmem:[%s4276 + $0x600] sm:$0xff]
      %v4470 = vld [vmem:[%s4276 + $0x608] sm:$0xff]
      %v4471 = vld [vmem:[%s4276 + $0x610] sm:$0xff]
      %v4472 = vld [vmem:[%s4276 + $0x618] sm:$0xff]
      %v4473 = vld [vmem:[%s4276 + $0x620] sm:$0xff]
      %v4474 = vld [vmem:[%s4276 + $0x628] sm:$0xff]
      %v4475 = vld [vmem:[%s4276 + $0x630] sm:$0xff]
      %v4476 = vld [vmem:[%s4276 + $0x638] sm:$0xff]
      %v4477 = vld [vmem:[%s4276 + $0x640] sm:$0xff]
      %v4478 = vld [vmem:[%s4276 + $0x648] sm:$0xff]
      %v4479 = vld [vmem:[%s4276 + $0x650] sm:$0xff]
      %v4480 = vld [vmem:[%s4276 + $0x658] sm:$0xff]
      %v4481 = vld [vmem:[%s4276 + $0x660] sm:$0xff]
      %v4482 = vld [vmem:[%s4276 + $0x668] sm:$0xff]
      %v4483 = vld [vmem:[%s4276 + $0x670] sm:$0xff]
      %v4484 = vld [vmem:[%s4276 + $0x678] sm:$0xff]
      %v4485 = vld [vmem:[%s4276 + $0x680] sm:$0xff]
      %v4486 = vld [vmem:[%s4276 + $0x688] sm:$0xff]
      %v4487 = vld [vmem:[%s4276 + $0x690] sm:$0xff]
      %v4488 = vld [vmem:[%s4276 + $0x698] sm:$0xff]
      %v4489 = vld [vmem:[%s4276 + $0x6a0] sm:$0xff]
      %v4490 = vld [vmem:[%s4276 + $0x6a8] sm:$0xff]
      %v4491 = vld [vmem:[%s4276 + $0x6b0] sm:$0xff]
      %v4492 = vld [vmem:[%s4276 + $0x6b8] sm:$0xff]
      %v4493 = vld [vmem:[%s4276 + $0x6c0] sm:$0xff]
      %v4494 = vld [vmem:[%s4276 + $0x6c8] sm:$0xff]
      %v4495 = vld [vmem:[%s4276 + $0x6d0] sm:$0xff]
      %v4496 = vld [vmem:[%s4276 + $0x6d8] sm:$0xff]
      %v4497 = vld [vmem:[%s4276 + $0x6e0] sm:$0xff]
      %v4498 = vld [vmem:[%s4276 + $0x6e8] sm:$0xff]
      %v4499 = vld [vmem:[%s4276 + $0x6f0] sm:$0xff]
      %v4500 = vld [vmem:[%s4276 + $0x6f8] sm:$0xff]
      %v4501 = vld [vmem:[%s4276 + $0x700] sm:$0xff]
      %v4502 = vld [vmem:[%s4276 + $0x708] sm:$0xff]
      %v4503 = vld [vmem:[%s4276 + $0x710] sm:$0xff]
      %v4504 = vld [vmem:[%s4276 + $0x718] sm:$0xff]
      %v4505 = vld [vmem:[%s4276 + $0x720] sm:$0xff]
      %v4506 = vld [vmem:[%s4276 + $0x728] sm:$0xff]
      %v4507 = vld [vmem:[%s4276 + $0x730] sm:$0xff]
      %v4508 = vld [vmem:[%s4276 + $0x738] sm:$0xff]
      %v4509 = vld [vmem:[%s4276 + $0x740] sm:$0xff]
      %v4510 = vld [vmem:[%s4276 + $0x748] sm:$0xff]
      %v4511 = vld [vmem:[%s4276 + $0x750] sm:$0xff]
      %v4512 = vld [vmem:[%s4276 + $0x758] sm:$0xff]
      %v4513 = vld [vmem:[%s4276 + $0x760] sm:$0xff]
      %v4514 = vld [vmem:[%s4276 + $0x768] sm:$0xff]
      %v4515 = vld [vmem:[%s4276 + $0x770] sm:$0xff]
      %v4516 = vld [vmem:[%s4276 + $0x778] sm:$0xff]
      %v4517 = vld [vmem:[%s4276 + $0x780] sm:$0xff]
      %v4518 = vld [vmem:[%s4276 + $0x788] sm:$0xff]
      %v4519 = vld [vmem:[%s4276 + $0x790] sm:$0xff]
      %v4520 = vld [vmem:[%s4276 + $0x798] sm:$0xff]
      %v4521 = vld [vmem:[%s4276 + $0x7a0] sm:$0xff]
      %v4522 = vld [vmem:[%s4276 + $0x7a8] sm:$0xff]
      %v4523 = vld [vmem:[%s4276 + $0x7b0] sm:$0xff]
      %v4524 = vld [vmem:[%s4276 + $0x7b8] sm:$0xff]
      %v4525 = vld [vmem:[%s4276 + $0x7c0] sm:$0xff]
      %v4526 = vld [vmem:[%s4276 + $0x7c8] sm:$0xff]
      %v4527 = vld [vmem:[%s4276 + $0x7d0] sm:$0xff]
      %v4528 = vld [vmem:[%s4276 + $0x7d8] sm:$0xff]
      %v4529 = vld [vmem:[%s4276 + $0x7e0] sm:$0xff]
      %v4530 = vld [vmem:[%s4276 + $0x7e8] sm:$0xff]
      %v4531 = vld [vmem:[%s4276 + $0x7f0] sm:$0xff]
      %v4532 = vld [vmem:[%s4276 + $0x7f8] sm:$0xff]
      %4533 = vmatpush.msra.mxu0 %v4337
      %4534 = vmatpush.msra.mxu0 %v4333
      %4535 = vmatpush.msra.mxu0 %v4329
      %4536 = vmatpush.msra.mxu0 %v4325
      %4537 = vmatpush.msra.mxu0 %v4321
      %4538 = vmatpush.msra.mxu0 %v4317
      %4539 = vmatpush.msra.mxu0 %v4313
      %4540 = vmatpush.msra.mxu0 %v4309
      %4541 = vmatpush.msra.mxu0 %v4305
      %4542 = vmatpush.msra.mxu0 %v4301
      %4543 = vmatpush.msra.mxu0 %v4297
      %4544 = vmatpush.msra.mxu0 %v4293
      %4545 = vmatpush.msra.mxu0 %v4289
      %4546 = vmatpush.msra.mxu0 %v4285
      %4547 = vmatpush.msra.mxu0 %v4281
      %4548 = vmatpush.msra.mxu0 %v4277
      %4549 = vmatmul.f32.gmra.mxu0 %v3828
      %v4550 = vpop.f32.mrf.mxu0
      %v4551 = vadd.f32 0.0, %v4550
      %4552 = vmatmul.f32.gmra.mxu0 %v3832
      %v4553 = vpop.f32.mrf.mxu0
      %v4554 = vadd.f32 0.0, %v4553
      %4555 = vdwg.mxu0
      %4556 = vmatpush.msra.mxu0 %v4401
      %4557 = vmatpush.msra.mxu0 %v4397
      %4558 = vmatpush.msra.mxu0 %v4393
      %4559 = vmatpush.msra.mxu0 %v4389
      %4560 = vmatpush.msra.mxu0 %v4385
      %4561 = vmatpush.msra.mxu0 %v4381
      %4562 = vmatpush.msra.mxu0 %v4377
      %4563 = vmatpush.msra.mxu0 %v4373
      %4564 = vmatpush.msra.mxu0 %v4369
      %4565 = vmatpush.msra.mxu0 %v4365
      %4566 = vmatpush.msra.mxu0 %v4361
      %4567 = vmatpush.msra.mxu0 %v4357
      %4568 = vmatpush.msra.mxu0 %v4353
      %4569 = vmatpush.msra.mxu0 %v4349
      %4570 = vmatpush.msra.mxu0 %v4345
      %4571 = vmatpush.msra.mxu0 %v4341
      %4572 = vmatmul.f32.gmra.mxu0 %v3829
      %v4573 = vpop.f32.mrf.mxu0
      %v4574 = vadd.f32 %v4551, %v4573
      %4575 = vmatmul.f32.gmra.mxu0 %v3833
      %v4576 = vpop.f32.mrf.mxu0
      %v4577 = vadd.f32 %v4554, %v4576
      %4578 = vdwg.mxu0
      %4579 = vmatpush.msra.mxu0 %v4465
      %4580 = vmatpush.msra.mxu0 %v4461
      %4581 = vmatpush.msra.mxu0 %v4457
      %4582 = vmatpush.msra.mxu0 %v4453
      %4583 = vmatpush.msra.mxu0 %v4449
      %4584 = vmatpush.msra.mxu0 %v4445
      %4585 = vmatpush.msra.mxu0 %v4441
      %4586 = vmatpush.msra.mxu0 %v4437
      %4587 = vmatpush.msra.mxu0 %v4433
      %4588 = vmatpush.msra.mxu0 %v4429
      %4589 = vmatpush.msra.mxu0 %v4425
      %4590 = vmatpush.msra.mxu0 %v4421
      %4591 = vmatpush.msra.mxu0 %v4417
      %4592 = vmatpush.msra.mxu0 %v4413
      %4593 = vmatpush.msra.mxu0 %v4409
      %4594 = vmatpush.msra.mxu0 %v4405
      %4595 = vmatmul.f32.gmra.mxu0 %v3830
      %v4596 = vpop.f32.mrf.mxu0
      %v4597 = vadd.f32 %v4574, %v4596
      %4598 = vmatmul.f32.gmra.mxu0 %v3834
      %v4599 = vpop.f32.mrf.mxu0
      %v4600 = vadd.f32 %v4577, %v4599
      %4601 = vdwg.mxu0
      %4602 = vmatpush.msra.mxu0 %v4529
      %4603 = vmatpush.msra.mxu0 %v4525
      %4604 = vmatpush.msra.mxu0 %v4521
      %4605 = vmatpush.msra.mxu0 %v4517
      %4606 = vmatpush.msra.mxu0 %v4513
      %4607 = vmatpush.msra.mxu0 %v4509
      %4608 = vmatpush.msra.mxu0 %v4505
      %4609 = vmatpush.msra.mxu0 %v4501
      %4610 = vmatpush.msra.mxu0 %v4497
      %4611 = vmatpush.msra.mxu0 %v4493
      %4612 = vmatpush.msra.mxu0 %v4489
      %4613 = vmatpush.msra.mxu0 %v4485
      %4614 = vmatpush.msra.mxu0 %v4481
      %4615 = vmatpush.msra.mxu0 %v4477
      %4616 = vmatpush.msra.mxu0 %v4473
      %4617 = vmatpush.msra.mxu0 %v4469
      %4618 = vmatmul.f32.gmra.mxu0 %v3831
      %v4619 = vpop.f32.mrf.mxu0
      %v4620 = vadd.f32 %v4597, %v4619
      %4621 = vmatmul.f32.gmra.mxu0 %v3835
      %v4622 = vpop.f32.mrf.mxu0
      %v4623 = vadd.f32 %v4600, %v4622
      %4624 = vdwg.mxu0
      %4625 = vmatpush.msra.mxu0 %v4338
      %4626 = vmatpush.msra.mxu0 %v4334
      %4627 = vmatpush.msra.mxu0 %v4330
      %4628 = vmatpush.msra.mxu0 %v4326
      %4629 = vmatpush.msra.mxu0 %v4322
      %4630 = vmatpush.msra.mxu0 %v4318
      %4631 = vmatpush.msra.mxu0 %v4314
      %4632 = vmatpush.msra.mxu0 %v4310
      %4633 = vmatpush.msra.mxu0 %v4306
      %4634 = vmatpush.msra.mxu0 %v4302
      %4635 = vmatpush.msra.mxu0 %v4298
      %4636 = vmatpush.msra.mxu0 %v4294
      %4637 = vmatpush.msra.mxu0 %v4290
      %4638 = vmatpush.msra.mxu0 %v4286
      %4639 = vmatpush.msra.mxu0 %v4282
      %4640 = vmatpush.msra.mxu0 %v4278
      %4641 = vmatmul.f32.gmra.mxu0 %v3828
      %v4642 = vpop.f32.mrf.mxu0
      %v4643 = vadd.f32 0.0, %v4642
      %4644 = vmatmul.f32.gmra.mxu0 %v3832
      %v4645 = vpop.f32.mrf.mxu0
      %v4646 = vadd.f32 0.0, %v4645
      %4647 = vdwg.mxu0
      %4648 = vmatpush.msra.mxu0 %v4402
      %4649 = vmatpush.msra.mxu0 %v4398
      %4650 = vmatpush.msra.mxu0 %v4394
      %4651 = vmatpush.msra.mxu0 %v4390
      %4652 = vmatpush.msra.mxu0 %v4386
      %4653 = vmatpush.msra.mxu0 %v4382
      %4654 = vmatpush.msra.mxu0 %v4378
      %4655 = vmatpush.msra.mxu0 %v4374
      %4656 = vmatpush.msra.mxu0 %v4370
      %4657 = vmatpush.msra.mxu0 %v4366
      %4658 = vmatpush.msra.mxu0 %v4362
      %4659 = vmatpush.msra.mxu0 %v4358
      %4660 = vmatpush.msra.mxu0 %v4354
      %4661 = vmatpush.msra.mxu0 %v4350
      %4662 = vmatpush.msra.mxu0 %v4346
      %4663 = vmatpush.msra.mxu0 %v4342
      %4664 = vmatmul.f32.gmra.mxu0 %v3829
      %v4665 = vpop.f32.mrf.mxu0
      %v4666 = vadd.f32 %v4643, %v4665
      %4667 = vmatmul.f32.gmra.mxu0 %v3833
      %v4668 = vpop.f32.mrf.mxu0
      %v4669 = vadd.f32 %v4646, %v4668
      %4670 = vdwg.mxu0
      %4671 = vmatpush.msra.mxu0 %v4466
      %4672 = vmatpush.msra.mxu0 %v4462
      %4673 = vmatpush.msra.mxu0 %v4458
      %4674 = vmatpush.msra.mxu0 %v4454
      %4675 = vmatpush.msra.mxu0 %v4450
      %4676 = vmatpush.msra.mxu0 %v4446
      %4677 = vmatpush.msra.mxu0 %v4442
      %4678 = vmatpush.msra.mxu0 %v4438
      %4679 = vmatpush.msra.mxu0 %v4434
      %4680 = vmatpush.msra.mxu0 %v4430
      %4681 = vmatpush.msra.mxu0 %v4426
      %4682 = vmatpush.msra.mxu0 %v4422
      %4683 = vmatpush.msra.mxu0 %v4418
      %4684 = vmatpush.msra.mxu0 %v4414
      %4685 = vmatpush.msra.mxu0 %v4410
      %4686 = vmatpush.msra.mxu0 %v4406
      %4687 = vmatmul.f32.gmra.mxu0 %v3830
      %v4688 = vpop.f32.mrf.mxu0
      %v4689 = vadd.f32 %v4666, %v4688
      %4690 = vmatmul.f32.gmra.mxu0 %v3834
      %v4691 = vpop.f32.mrf.mxu0
      %v4692 = vadd.f32 %v4669, %v4691
      %4693 = vdwg.mxu0
      %4694 = vmatpush.msra.mxu0 %v4530
      %4695 = vmatpush.msra.mxu0 %v4526
      %4696 = vmatpush.msra.mxu0 %v4522
      %4697 = vmatpush.msra.mxu0 %v4518
      %4698 = vmatpush.msra.mxu0 %v4514
      %4699 = vmatpush.msra.mxu0 %v4510
      %4700 = vmatpush.msra.mxu0 %v4506
      %4701 = vmatpush.msra.mxu0 %v4502
      %4702 = vmatpush.msra.mxu0 %v4498
      %4703 = vmatpush.msra.mxu0 %v4494
      %4704 = vmatpush.msra.mxu0 %v4490
      %4705 = vmatpush.msra.mxu0 %v4486
      %4706 = vmatpush.msra.mxu0 %v4482
      %4707 = vmatpush.msra.mxu0 %v4478
      %4708 = vmatpush.msra.mxu0 %v4474
      %4709 = vmatpush.msra.mxu0 %v4470
      %4710 = vmatmul.f32.gmra.mxu0 %v3831
      %v4711 = vpop.f32.mrf.mxu0
      %v4712 = vadd.f32 %v4689, %v4711
      %4713 = vmatmul.f32.gmra.mxu0 %v3835
      %v4714 = vpop.f32.mrf.mxu0
      %v4715 = vadd.f32 %v4692, %v4714
      %4716 = vdwg.mxu0
      %4717 = vmatpush.msra.mxu0 %v4339
      %4718 = vmatpush.msra.mxu0 %v4335
      %4719 = vmatpush.msra.mxu0 %v4331
      %4720 = vmatpush.msra.mxu0 %v4327
      %4721 = vmatpush.msra.mxu0 %v4323
      %4722 = vmatpush.msra.mxu0 %v4319
      %4723 = vmatpush.msra.mxu0 %v4315
      %4724 = vmatpush.msra.mxu0 %v4311
      %4725 = vmatpush.msra.mxu0 %v4307
      %4726 = vmatpush.msra.mxu0 %v4303
      %4727 = vmatpush.msra.mxu0 %v4299
      %4728 = vmatpush.msra.mxu0 %v4295
      %4729 = vmatpush.msra.mxu0 %v4291
      %4730 = vmatpush.msra.mxu0 %v4287
      %4731 = vmatpush.msra.mxu0 %v4283
      %4732 = vmatpush.msra.mxu0 %v4279
      %4733 = vmatmul.f32.gmra.mxu0 %v3828
      %v4734 = vpop.f32.mrf.mxu0
      %v4735 = vadd.f32 0.0, %v4734
      %4736 = vmatmul.f32.gmra.mxu0 %v3832
      %v4737 = vpop.f32.mrf.mxu0
      %v4738 = vadd.f32 0.0, %v4737
      %4739 = vdwg.mxu0
      %4740 = vmatpush.msra.mxu0 %v4403
      %4741 = vmatpush.msra.mxu0 %v4399
      %4742 = vmatpush.msra.mxu0 %v4395
      %4743 = vmatpush.msra.mxu0 %v4391
      %4744 = vmatpush.msra.mxu0 %v4387
      %4745 = vmatpush.msra.mxu0 %v4383
      %4746 = vmatpush.msra.mxu0 %v4379
      %4747 = vmatpush.msra.mxu0 %v4375
      %4748 = vmatpush.msra.mxu0 %v4371
      %4749 = vmatpush.msra.mxu0 %v4367
      %4750 = vmatpush.msra.mxu0 %v4363
      %4751 = vmatpush.msra.mxu0 %v4359
      %4752 = vmatpush.msra.mxu0 %v4355
      %4753 = vmatpush.msra.mxu0 %v4351
      %4754 = vmatpush.msra.mxu0 %v4347
      %4755 = vmatpush.msra.mxu0 %v4343
      %4756 = vmatmul.f32.gmra.mxu0 %v3829
      %v4757 = vpop.f32.mrf.mxu0
      %v4758 = vadd.f32 %v4735, %v4757
      %4759 = vmatmul.f32.gmra.mxu0 %v3833
      %v4760 = vpop.f32.mrf.mxu0
      %v4761 = vadd.f32 %v4738, %v4760
      %4762 = vdwg.mxu0
      %4763 = vmatpush.msra.mxu0 %v4467
      %4764 = vmatpush.msra.mxu0 %v4463
      %4765 = vmatpush.msra.mxu0 %v4459
      %4766 = vmatpush.msra.mxu0 %v4455
      %4767 = vmatpush.msra.mxu0 %v4451
      %4768 = vmatpush.msra.mxu0 %v4447
      %4769 = vmatpush.msra.mxu0 %v4443
      %4770 = vmatpush.msra.mxu0 %v4439
      %4771 = vmatpush.msra.mxu0 %v4435
      %4772 = vmatpush.msra.mxu0 %v4431
      %4773 = vmatpush.msra.mxu0 %v4427
      %4774 = vmatpush.msra.mxu0 %v4423
      %4775 = vmatpush.msra.mxu0 %v4419
      %4776 = vmatpush.msra.mxu0 %v4415
      %4777 = vmatpush.msra.mxu0 %v4411
      %4778 = vmatpush.msra.mxu0 %v4407
      %4779 = vmatmul.f32.gmra.mxu0 %v3830
      %v4780 = vpop.f32.mrf.mxu0
      %v4781 = vadd.f32 %v4758, %v4780
      %4782 = vmatmul.f32.gmra.mxu0 %v3834
      %v4783 = vpop.f32.mrf.mxu0
      %v4784 = vadd.f32 %v4761, %v4783
      %4785 = vdwg.mxu0
      %4786 = vmatpush.msra.mxu0 %v4531
      %4787 = vmatpush.msra.mxu0 %v4527
      %4788 = vmatpush.msra.mxu0 %v4523
      %4789 = vmatpush.msra.mxu0 %v4519
      %4790 = vmatpush.msra.mxu0 %v4515
      %4791 = vmatpush.msra.mxu0 %v4511
      %4792 = vmatpush.msra.mxu0 %v4507
      %4793 = vmatpush.msra.mxu0 %v4503
      %4794 = vmatpush.msra.mxu0 %v4499
      %4795 = vmatpush.msra.mxu0 %v4495
      %4796 = vmatpush.msra.mxu0 %v4491
      %4797 = vmatpush.msra.mxu0 %v4487
      %4798 = vmatpush.msra.mxu0 %v4483
      %4799 = vmatpush.msra.mxu0 %v4479
      %4800 = vmatpush.msra.mxu0 %v4475
      %4801 = vmatpush.msra.mxu0 %v4471
      %4802 = vmatmul.f32.gmra.mxu0 %v3831
      %v4803 = vpop.f32.mrf.mxu0
      %v4804 = vadd.f32 %v4781, %v4803
      %4805 = vmatmul.f32.gmra.mxu0 %v3835
      %v4806 = vpop.f32.mrf.mxu0
      %v4807 = vadd.f32 %v4784, %v4806
      %4808 = vdwg.mxu0
      %4809 = vmatpush.msra.mxu0 %v4340
      %4810 = vmatpush.msra.mxu0 %v4336
      %4811 = vmatpush.msra.mxu0 %v4332
      %4812 = vmatpush.msra.mxu0 %v4328
      %4813 = vmatpush.msra.mxu0 %v4324
      %4814 = vmatpush.msra.mxu0 %v4320
      %4815 = vmatpush.msra.mxu0 %v4316
      %4816 = vmatpush.msra.mxu0 %v4312
      %4817 = vmatpush.msra.mxu0 %v4308
      %4818 = vmatpush.msra.mxu0 %v4304
      %4819 = vmatpush.msra.mxu0 %v4300
      %4820 = vmatpush.msra.mxu0 %v4296
      %4821 = vmatpush.msra.mxu0 %v4292
      %4822 = vmatpush.msra.mxu0 %v4288
      %4823 = vmatpush.msra.mxu0 %v4284
      %4824 = vmatpush.msra.mxu0 %v4280
      %4825 = vmatmul.f32.gmra.mxu0 %v3828
      %v4826 = vpop.f32.mrf.mxu0
      %v4827 = vadd.f32 0.0, %v4826
      %4828 = vmatmul.f32.gmra.mxu0 %v3832
      %v4829 = vpop.f32.mrf.mxu0
      %v4830 = vadd.f32 0.0, %v4829
      %4831 = vdwg.mxu0
      %4832 = vmatpush.msra.mxu0 %v4404
      %4833 = vmatpush.msra.mxu0 %v4400
      %4834 = vmatpush.msra.mxu0 %v4396
      %4835 = vmatpush.msra.mxu0 %v4392
      %4836 = vmatpush.msra.mxu0 %v4388
      %4837 = vmatpush.msra.mxu0 %v4384
      %4838 = vmatpush.msra.mxu0 %v4380
      %4839 = vmatpush.msra.mxu0 %v4376
      %4840 = vmatpush.msra.mxu0 %v4372
      %4841 = vmatpush.msra.mxu0 %v4368
      %4842 = vmatpush.msra.mxu0 %v4364
      %4843 = vmatpush.msra.mxu0 %v4360
      %4844 = vmatpush.msra.mxu0 %v4356
      %4845 = vmatpush.msra.mxu0 %v4352
      %4846 = vmatpush.msra.mxu0 %v4348
      %4847 = vmatpush.msra.mxu0 %v4344
      %4848 = vmatmul.f32.gmra.mxu0 %v3829
      %v4849 = vpop.f32.mrf.mxu0
      %v4850 = vadd.f32 %v4827, %v4849
      %4851 = vmatmul.f32.gmra.mxu0 %v3833
      %v4852 = vpop.f32.mrf.mxu0
      %v4853 = vadd.f32 %v4830, %v4852
      %4854 = vdwg.mxu0
      %4855 = vmatpush.msra.mxu0 %v4468
      %4856 = vmatpush.msra.mxu0 %v4464
      %4857 = vmatpush.msra.mxu0 %v4460
      %4858 = vmatpush.msra.mxu0 %v4456
      %4859 = vmatpush.msra.mxu0 %v4452
      %4860 = vmatpush.msra.mxu0 %v4448
      %4861 = vmatpush.msra.mxu0 %v4444
      %4862 = vmatpush.msra.mxu0 %v4440
      %4863 = vmatpush.msra.mxu0 %v4436
      %4864 = vmatpush.msra.mxu0 %v4432
      %4865 = vmatpush.msra.mxu0 %v4428
      %4866 = vmatpush.msra.mxu0 %v4424
      %4867 = vmatpush.msra.mxu0 %v4420
      %4868 = vmatpush.msra.mxu0 %v4416
      %4869 = vmatpush.msra.mxu0 %v4412
      %4870 = vmatpush.msra.mxu0 %v4408
      %4871 = vmatmul.f32.gmra.mxu0 %v3830
      %v4872 = vpop.f32.mrf.mxu0
      %v4873 = vadd.f32 %v4850, %v4872
      %4874 = vmatmul.f32.gmra.mxu0 %v3834
      %v4875 = vpop.f32.mrf.mxu0
      %v4876 = vadd.f32 %v4853, %v4875
      %4877 = vdwg.mxu0
      %4878 = vmatpush.msra.mxu0 %v4532
      %4879 = vmatpush.msra.mxu0 %v4528
      %4880 = vmatpush.msra.mxu0 %v4524
      %4881 = vmatpush.msra.mxu0 %v4520
      %4882 = vmatpush.msra.mxu0 %v4516
      %4883 = vmatpush.msra.mxu0 %v4512
      %4884 = vmatpush.msra.mxu0 %v4508
      %4885 = vmatpush.msra.mxu0 %v4504
      %4886 = vmatpush.msra.mxu0 %v4500
      %4887 = vmatpush.msra.mxu0 %v4496
      %4888 = vmatpush.msra.mxu0 %v4492
      %4889 = vmatpush.msra.mxu0 %v4488
      %4890 = vmatpush.msra.mxu0 %v4484
      %4891 = vmatpush.msra.mxu0 %v4480
      %4892 = vmatpush.msra.mxu0 %v4476
      %4893 = vmatpush.msra.mxu0 %v4472
      %4894 = vmatmul.f32.gmra.mxu0 %v3831
      %v4895 = vpop.f32.mrf.mxu0
      %v4896 = vadd.f32 %v4873, %v4895
      %4897 = vmatmul.f32.gmra.mxu0 %v3835
      %v4898 = vpop.f32.mrf.mxu0
      %v4899 = vadd.f32 %v4876, %v4898
      %4900 = vdwg.mxu0
      %4901 = vmatpush.msra.mxu0 %v4080
      %4902 = vmatpush.msra.mxu0 %v4076
      %4903 = vmatpush.msra.mxu0 %v4072
      %4904 = vmatpush.msra.mxu0 %v4068
      %4905 = vmatpush.msra.mxu0 %v4064
      %4906 = vmatpush.msra.mxu0 %v4060
      %4907 = vmatpush.msra.mxu0 %v4056
      %4908 = vmatpush.msra.mxu0 %v4052
      %4909 = vmatpush.msra.mxu0 %v4048
      %4910 = vmatpush.msra.mxu0 %v4044
      %4911 = vmatpush.msra.mxu0 %v4040
      %4912 = vmatpush.msra.mxu0 %v4036
      %4913 = vmatpush.msra.mxu0 %v4032
      %4914 = vmatpush.msra.mxu0 %v4028
      %4915 = vmatpush.msra.mxu0 %v4024
      %4916 = vmatpush.msra.mxu0 %v4020
      %4917 = vmatmul.f32.gmra.mxu0 %v3854
      %v4918 = vpop.f32.mrf.mxu0
      %v4919 = vadd.f32 %v4620, %v4918
      %4920 = vmatmul.f32.gmra.mxu0 %v3857
      %v4921 = vpop.f32.mrf.mxu0
      %v4922 = vadd.f32 %v4623, %v4921
      %4923 = vdwg.mxu0
      %4924 = vmatpush.msra.mxu0 %v4144
      %4925 = vmatpush.msra.mxu0 %v4140
      %4926 = vmatpush.msra.mxu0 %v4136
      %4927 = vmatpush.msra.mxu0 %v4132
      %4928 = vmatpush.msra.mxu0 %v4128
      %4929 = vmatpush.msra.mxu0 %v4124
      %4930 = vmatpush.msra.mxu0 %v4120
      %4931 = vmatpush.msra.mxu0 %v4116
      %4932 = vmatpush.msra.mxu0 %v4112
      %4933 = vmatpush.msra.mxu0 %v4108
      %4934 = vmatpush.msra.mxu0 %v4104
      %4935 = vmatpush.msra.mxu0 %v4100
      %4936 = vmatpush.msra.mxu0 %v4096
      %4937 = vmatpush.msra.mxu0 %v4092
      %4938 = vmatpush.msra.mxu0 %v4088
      %4939 = vmatpush.msra.mxu0 %v4084
      %4940 = vmatmul.f32.gmra.mxu0 %v3877
      %v4941 = vpop.f32.mrf.mxu0
      %v4942 = vadd.f32 %v4919, %v4941
      %4943 = vmatmul.f32.gmra.mxu0 %v3880
      %v4944 = vpop.f32.mrf.mxu0
      %v4945 = vadd.f32 %v4922, %v4944
      %4946 = vdwg.mxu0
      %4947 = vmatpush.msra.mxu0 %v4208
      %4948 = vmatpush.msra.mxu0 %v4204
      %4949 = vmatpush.msra.mxu0 %v4200
      %4950 = vmatpush.msra.mxu0 %v4196
      %4951 = vmatpush.msra.mxu0 %v4192
      %4952 = vmatpush.msra.mxu0 %v4188
      %4953 = vmatpush.msra.mxu0 %v4184
      %4954 = vmatpush.msra.mxu0 %v4180
      %4955 = vmatpush.msra.mxu0 %v4176
      %4956 = vmatpush.msra.mxu0 %v4172
      %4957 = vmatpush.msra.mxu0 %v4168
      %4958 = vmatpush.msra.mxu0 %v4164
      %4959 = vmatpush.msra.mxu0 %v4160
      %4960 = vmatpush.msra.mxu0 %v4156
      %4961 = vmatpush.msra.mxu0 %v4152
      %4962 = vmatpush.msra.mxu0 %v4148
      %4963 = vmatmul.f32.gmra.mxu0 %v3900
      %v4964 = vpop.f32.mrf.mxu0
      %v4965 = vadd.f32 %v4942, %v4964
      %4966 = vmatmul.f32.gmra.mxu0 %v3903
      %v4967 = vpop.f32.mrf.mxu0
      %v4968 = vadd.f32 %v4945, %v4967
      %4969 = vdwg.mxu0
      %4970 = vmatpush.msra.mxu0 %v4272
      %4971 = vmatpush.msra.mxu0 %v4268
      %4972 = vmatpush.msra.mxu0 %v4264
      %4973 = vmatpush.msra.mxu0 %v4260
      %4974 = vmatpush.msra.mxu0 %v4256
      %4975 = vmatpush.msra.mxu0 %v4252
      %4976 = vmatpush.msra.mxu0 %v4248
      %4977 = vmatpush.msra.mxu0 %v4244
      %4978 = vmatpush.msra.mxu0 %v4240
      %4979 = vmatpush.msra.mxu0 %v4236
      %4980 = vmatpush.msra.mxu0 %v4232
      %4981 = vmatpush.msra.mxu0 %v4228
      %4982 = vmatpush.msra.mxu0 %v4224
      %4983 = vmatpush.msra.mxu0 %v4220
      %4984 = vmatpush.msra.mxu0 %v4216
      %4985 = vmatpush.msra.mxu0 %v4212
      %4986 = vmatmul.f32.gmra.mxu0 %v3923
      %v4987 = vpop.f32.mrf.mxu0
      %v4988 = vadd.f32 %v4965, %v4987
      %4989 = vmatmul.f32.gmra.mxu0 %v3926
      %v4990 = vpop.f32.mrf.mxu0
      %v4991 = vadd.f32 %v4968, %v4990
      %4992 = vdwg.mxu0
      %4993 = vmatpush.msra.mxu0 %v4081
      %4994 = vmatpush.msra.mxu0 %v4077
      %4995 = vmatpush.msra.mxu0 %v4073
      %4996 = vmatpush.msra.mxu0 %v4069
      %4997 = vmatpush.msra.mxu0 %v4065
      %4998 = vmatpush.msra.mxu0 %v4061
      %4999 = vmatpush.msra.mxu0 %v4057
      %5000 = vmatpush.msra.mxu0 %v4053
      %5001 = vmatpush.msra.mxu0 %v4049
      %5002 = vmatpush.msra.mxu0 %v4045
      %5003 = vmatpush.msra.mxu0 %v4041
      %5004 = vmatpush.msra.mxu0 %v4037
      %5005 = vmatpush.msra.mxu0 %v4033
      %5006 = vmatpush.msra.mxu0 %v4029
      %5007 = vmatpush.msra.mxu0 %v4025
      %5008 = vmatpush.msra.mxu0 %v4021
      %5009 = vmatmul.f32.gmra.mxu0 %v3854
      %v5010 = vpop.f32.mrf.mxu0
      %v5011 = vadd.f32 %v4712, %v5010
      %5012 = vmatmul.f32.gmra.mxu0 %v3857
      %v5013 = vpop.f32.mrf.mxu0
      %v5014 = vadd.f32 %v4715, %v5013
      %5015 = vdwg.mxu0
      %5016 = vmatpush.msra.mxu0 %v4145
      %5017 = vmatpush.msra.mxu0 %v4141
      %5018 = vmatpush.msra.mxu0 %v4137
      %5019 = vmatpush.msra.mxu0 %v4133
      %5020 = vmatpush.msra.mxu0 %v4129
      %5021 = vmatpush.msra.mxu0 %v4125
      %5022 = vmatpush.msra.mxu0 %v4121
      %5023 = vmatpush.msra.mxu0 %v4117
      %5024 = vmatpush.msra.mxu0 %v4113
      %5025 = vmatpush.msra.mxu0 %v4109
      %5026 = vmatpush.msra.mxu0 %v4105
      %5027 = vmatpush.msra.mxu0 %v4101
      %5028 = vmatpush.msra.mxu0 %v4097
      %5029 = vmatpush.msra.mxu0 %v4093
      %5030 = vmatpush.msra.mxu0 %v4089
      %5031 = vmatpush.msra.mxu0 %v4085
      %5032 = vmatmul.f32.gmra.mxu0 %v3877
      %v5033 = vpop.f32.mrf.mxu0
      %v5034 = vadd.f32 %v5011, %v5033
      %5035 = vmatmul.f32.gmra.mxu0 %v3880
      %v5036 = vpop.f32.mrf.mxu0
      %v5037 = vadd.f32 %v5014, %v5036
      %5038 = vdwg.mxu0
      %5039 = vmatpush.msra.mxu0 %v4209
      %5040 = vmatpush.msra.mxu0 %v4205
      %5041 = vmatpush.msra.mxu0 %v4201
      %5042 = vmatpush.msra.mxu0 %v4197
      %5043 = vmatpush.msra.mxu0 %v4193
      %5044 = vmatpush.msra.mxu0 %v4189
      %5045 = vmatpush.msra.mxu0 %v4185
      %5046 = vmatpush.msra.mxu0 %v4181
      %5047 = vmatpush.msra.mxu0 %v4177
      %5048 = vmatpush.msra.mxu0 %v4173
      %5049 = vmatpush.msra.mxu0 %v4169
      %5050 = vmatpush.msra.mxu0 %v4165
      %5051 = vmatpush.msra.mxu0 %v4161
      %5052 = vmatpush.msra.mxu0 %v4157
      %5053 = vmatpush.msra.mxu0 %v4153
      %5054 = vmatpush.msra.mxu0 %v4149
      %5055 = vmatmul.f32.gmra.mxu0 %v3900
      %v5056 = vpop.f32.mrf.mxu0
      %v5057 = vadd.f32 %v5034, %v5056
      %5058 = vmatmul.f32.gmra.mxu0 %v3903
      %v5059 = vpop.f32.mrf.mxu0
      %v5060 = vadd.f32 %v5037, %v5059
      %5061 = vdwg.mxu0
      %5062 = vmatpush.msra.mxu0 %v4273
      %5063 = vmatpush.msra.mxu0 %v4269
      %5064 = vmatpush.msra.mxu0 %v4265
      %5065 = vmatpush.msra.mxu0 %v4261
      %5066 = vmatpush.msra.mxu0 %v4257
      %5067 = vmatpush.msra.mxu0 %v4253
      %5068 = vmatpush.msra.mxu0 %v4249
      %5069 = vmatpush.msra.mxu0 %v4245
      %5070 = vmatpush.msra.mxu0 %v4241
      %5071 = vmatpush.msra.mxu0 %v4237
      %5072 = vmatpush.msra.mxu0 %v4233
      %5073 = vmatpush.msra.mxu0 %v4229
      %5074 = vmatpush.msra.mxu0 %v4225
      %5075 = vmatpush.msra.mxu0 %v4221
      %5076 = vmatpush.msra.mxu0 %v4217
      %5077 = vmatpush.msra.mxu0 %v4213
      %5078 = vmatmul.f32.gmra.mxu0 %v3923
      %v5079 = vpop.f32.mrf.mxu0
      %v5080 = vadd.f32 %v5057, %v5079
      %5081 = vmatmul.f32.gmra.mxu0 %v3926
      %v5082 = vpop.f32.mrf.mxu0
      %v5083 = vadd.f32 %v5060, %v5082
      %5084 = vdwg.mxu0
      %5085 = vmatpush.msra.mxu0 %v4082
      %5086 = vmatpush.msra.mxu0 %v4078
      %5087 = vmatpush.msra.mxu0 %v4074
      %5088 = vmatpush.msra.mxu0 %v4070
      %5089 = vmatpush.msra.mxu0 %v4066
      %5090 = vmatpush.msra.mxu0 %v4062
      %5091 = vmatpush.msra.mxu0 %v4058
      %5092 = vmatpush.msra.mxu0 %v4054
      %5093 = vmatpush.msra.mxu0 %v4050
      %5094 = vmatpush.msra.mxu0 %v4046
      %5095 = vmatpush.msra.mxu0 %v4042
      %5096 = vmatpush.msra.mxu0 %v4038
      %5097 = vmatpush.msra.mxu0 %v4034
      %5098 = vmatpush.msra.mxu0 %v4030
      %5099 = vmatpush.msra.mxu0 %v4026
      %5100 = vmatpush.msra.mxu0 %v4022
      %5101 = vmatmul.f32.gmra.mxu0 %v3854
      %v5102 = vpop.f32.mrf.mxu0
      %v5103 = vadd.f32 %v4804, %v5102
      %5104 = vmatmul.f32.gmra.mxu0 %v3857
      %v5105 = vpop.f32.mrf.mxu0
      %v5106 = vadd.f32 %v4807, %v5105
      %5107 = vdwg.mxu0
      %5108 = vmatpush.msra.mxu0 %v4146
      %5109 = vmatpush.msra.mxu0 %v4142
      %5110 = vmatpush.msra.mxu0 %v4138
      %5111 = vmatpush.msra.mxu0 %v4134
      %5112 = vmatpush.msra.mxu0 %v4130
      %5113 = vmatpush.msra.mxu0 %v4126
      %5114 = vmatpush.msra.mxu0 %v4122
      %5115 = vmatpush.msra.mxu0 %v4118
      %5116 = vmatpush.msra.mxu0 %v4114
      %5117 = vmatpush.msra.mxu0 %v4110
      %5118 = vmatpush.msra.mxu0 %v4106
      %5119 = vmatpush.msra.mxu0 %v4102
      %5120 = vmatpush.msra.mxu0 %v4098
      %5121 = vmatpush.msra.mxu0 %v4094
      %5122 = vmatpush.msra.mxu0 %v4090
      %5123 = vmatpush.msra.mxu0 %v4086
      %5124 = vmatmul.f32.gmra.mxu0 %v3877
      %v5125 = vpop.f32.mrf.mxu0
      %v5126 = vadd.f32 %v5103, %v5125
      %5127 = vmatmul.f32.gmra.mxu0 %v3880
      %v5128 = vpop.f32.mrf.mxu0
      %v5129 = vadd.f32 %v5106, %v5128
      %5130 = vdwg.mxu0
      %5131 = vmatpush.msra.mxu0 %v4210
      %5132 = vmatpush.msra.mxu0 %v4206
      %5133 = vmatpush.msra.mxu0 %v4202
      %5134 = vmatpush.msra.mxu0 %v4198
      %5135 = vmatpush.msra.mxu0 %v4194
      %5136 = vmatpush.msra.mxu0 %v4190
      %5137 = vmatpush.msra.mxu0 %v4186
      %5138 = vmatpush.msra.mxu0 %v4182
      %5139 = vmatpush.msra.mxu0 %v4178
      %5140 = vmatpush.msra.mxu0 %v4174
      %5141 = vmatpush.msra.mxu0 %v4170
      %5142 = vmatpush.msra.mxu0 %v4166
      %5143 = vmatpush.msra.mxu0 %v4162
      %5144 = vmatpush.msra.mxu0 %v4158
      %5145 = vmatpush.msra.mxu0 %v4154
      %5146 = vmatpush.msra.mxu0 %v4150
      %5147 = vmatmul.f32.gmra.mxu0 %v3900
      %v5148 = vpop.f32.mrf.mxu0
      %v5149 = vadd.f32 %v5126, %v5148
      %5150 = vmatmul.f32.gmra.mxu0 %v3903
      %v5151 = vpop.f32.mrf.mxu0
      %v5152 = vadd.f32 %v5129, %v5151
      %5153 = vdwg.mxu0
      %5154 = vmatpush.msra.mxu0 %v4274
      %5155 = vmatpush.msra.mxu0 %v4270
      %5156 = vmatpush.msra.mxu0 %v4266
      %5157 = vmatpush.msra.mxu0 %v4262
      %5158 = vmatpush.msra.mxu0 %v4258
      %5159 = vmatpush.msra.mxu0 %v4254
      %5160 = vmatpush.msra.mxu0 %v4250
      %5161 = vmatpush.msra.mxu0 %v4246
      %5162 = vmatpush.msra.mxu0 %v4242
      %5163 = vmatpush.msra.mxu0 %v4238
      %5164 = vmatpush.msra.mxu0 %v4234
      %5165 = vmatpush.msra.mxu0 %v4230
      %5166 = vmatpush.msra.mxu0 %v4226
      %5167 = vmatpush.msra.mxu0 %v4222
      %5168 = vmatpush.msra.mxu0 %v4218
      %5169 = vmatpush.msra.mxu0 %v4214
      %5170 = vmatmul.f32.gmra.mxu0 %v3923
      %v5171 = vpop.f32.mrf.mxu0
      %v5172 = vadd.f32 %v5149, %v5171
      %5173 = vmatmul.f32.gmra.mxu0 %v3926
      %v5174 = vpop.f32.mrf.mxu0
      %v5175 = vadd.f32 %v5152, %v5174
      %5176 = vdwg.mxu0
      %5177 = vmatpush.msra.mxu0 %v4083
      %5178 = vmatpush.msra.mxu0 %v4079
      %5179 = vmatpush.msra.mxu0 %v4075
      %5180 = vmatpush.msra.mxu0 %v4071
      %5181 = vmatpush.msra.mxu0 %v4067
      %5182 = vmatpush.msra.mxu0 %v4063
      %5183 = vmatpush.msra.mxu0 %v4059
      %5184 = vmatpush.msra.mxu0 %v4055
      %5185 = vmatpush.msra.mxu0 %v4051
      %5186 = vmatpush.msra.mxu0 %v4047
      %5187 = vmatpush.msra.mxu0 %v4043
      %5188 = vmatpush.msra.mxu0 %v4039
      %5189 = vmatpush.msra.mxu0 %v4035
      %5190 = vmatpush.msra.mxu0 %v4031
      %5191 = vmatpush.msra.mxu0 %v4027
      %5192 = vmatpush.msra.mxu0 %v4023
      %5193 = vmatmul.f32.gmra.mxu0 %v3854
      %v5194 = vpop.f32.mrf.mxu0
      %v5195 = vadd.f32 %v4896, %v5194
      %5196 = vmatmul.f32.gmra.mxu0 %v3857
      %v5197 = vpop.f32.mrf.mxu0
      %v5198 = vadd.f32 %v4899, %v5197
      %5199 = vdwg.mxu0
      %5200 = vmatpush.msra.mxu0 %v4147
      %5201 = vmatpush.msra.mxu0 %v4143
      %5202 = vmatpush.msra.mxu0 %v4139
      %5203 = vmatpush.msra.mxu0 %v4135
      %5204 = vmatpush.msra.mxu0 %v4131
      %5205 = vmatpush.msra.mxu0 %v4127
      %5206 = vmatpush.msra.mxu0 %v4123
      %5207 = vmatpush.msra.mxu0 %v4119
      %5208 = vmatpush.msra.mxu0 %v4115
      %5209 = vmatpush.msra.mxu0 %v4111
      %5210 = vmatpush.msra.mxu0 %v4107
      %5211 = vmatpush.msra.mxu0 %v4103
      %5212 = vmatpush.msra.mxu0 %v4099
      %5213 = vmatpush.msra.mxu0 %v4095
      %5214 = vmatpush.msra.mxu0 %v4091
      %5215 = vmatpush.msra.mxu0 %v4087
      %5216 = vmatmul.f32.gmra.mxu0 %v3877
      %v5217 = vpop.f32.mrf.mxu0
      %v5218 = vadd.f32 %v5195, %v5217
      %5219 = vmatmul.f32.gmra.mxu0 %v3880
      %v5220 = vpop.f32.mrf.mxu0
      %v5221 = vadd.f32 %v5198, %v5220
      %5222 = vdwg.mxu0
      %5223 = vmatpush.msra.mxu0 %v4211
      %5224 = vmatpush.msra.mxu0 %v4207
      %5225 = vmatpush.msra.mxu0 %v4203
      %5226 = vmatpush.msra.mxu0 %v4199
      %5227 = vmatpush.msra.mxu0 %v4195
      %5228 = vmatpush.msra.mxu0 %v4191
      %5229 = vmatpush.msra.mxu0 %v4187
      %5230 = vmatpush.msra.mxu0 %v4183
      %5231 = vmatpush.msra.mxu0 %v4179
      %5232 = vmatpush.msra.mxu0 %v4175
      %5233 = vmatpush.msra.mxu0 %v4171
      %5234 = vmatpush.msra.mxu0 %v4167
      %5235 = vmatpush.msra.mxu0 %v4163
      %5236 = vmatpush.msra.mxu0 %v4159
      %5237 = vmatpush.msra.mxu0 %v4155
      %5238 = vmatpush.msra.mxu0 %v4151
      %5239 = vmatmul.f32.gmra.mxu0 %v3900
      %v5240 = vpop.f32.mrf.mxu0
      %v5241 = vadd.f32 %v5218, %v5240
      %5242 = vmatmul.f32.gmra.mxu0 %v3903
      %v5243 = vpop.f32.mrf.mxu0
      %v5244 = vadd.f32 %v5221, %v5243
      %5245 = vdwg.mxu0
      %5246 = vmatpush.msra.mxu0 %v4275
      %5247 = vmatpush.msra.mxu0 %v4271
      %5248 = vmatpush.msra.mxu0 %v4267
      %5249 = vmatpush.msra.mxu0 %v4263
      %5250 = vmatpush.msra.mxu0 %v4259
      %5251 = vmatpush.msra.mxu0 %v4255
      %5252 = vmatpush.msra.mxu0 %v4251
      %5253 = vmatpush.msra.mxu0 %v4247
      %5254 = vmatpush.msra.mxu0 %v4243
      %5255 = vmatpush.msra.mxu0 %v4239
      %5256 = vmatpush.msra.mxu0 %v4235
      %5257 = vmatpush.msra.mxu0 %v4231
      %5258 = vmatpush.msra.mxu0 %v4227
      %5259 = vmatpush.msra.mxu0 %v4223
      %5260 = vmatpush.msra.mxu0 %v4219
      %5261 = vmatpush.msra.mxu0 %v4215
      %5262 = vmatmul.f32.gmra.mxu0 %v3923
      %v5263 = vpop.f32.mrf.mxu0
      %v5264 = vadd.f32 %v5241, %v5263
      %5265 = vmatmul.f32.gmra.mxu0 %v3926
      %v5266 = vpop.f32.mrf.mxu0
      %v5267 = vadd.f32 %v5244, %v5266
      %5268 = vdwg.mxu0
      %s5269 = scalar_lea.vmem %s7, 4096
      %v5270 = vld [vmem:[%s5269] sm:$0xff]
      %v5271 = vld [vmem:[%s5269 + $0x8] sm:$0xff]
      %v5272 = vld [vmem:[%s5269 + $0x10] sm:$0xff]
      %v5273 = vld [vmem:[%s5269 + $0x18] sm:$0xff]
      %v5274 = vld [vmem:[%s5269 + $0x20] sm:$0xff]
      %v5275 = vld [vmem:[%s5269 + $0x28] sm:$0xff]
      %v5276 = vld [vmem:[%s5269 + $0x30] sm:$0xff]
      %v5277 = vld [vmem:[%s5269 + $0x38] sm:$0xff]
      %v5278 = vld [vmem:[%s5269 + $0x40] sm:$0xff]
      %v5279 = vld [vmem:[%s5269 + $0x48] sm:$0xff]
      %v5280 = vld [vmem:[%s5269 + $0x50] sm:$0xff]
      %v5281 = vld [vmem:[%s5269 + $0x58] sm:$0xff]
      %v5282 = vld [vmem:[%s5269 + $0x60] sm:$0xff]
      %v5283 = vld [vmem:[%s5269 + $0x68] sm:$0xff]
      %v5284 = vld [vmem:[%s5269 + $0x70] sm:$0xff]
      %v5285 = vld [vmem:[%s5269 + $0x78] sm:$0xff]
      %v5286 = vld [vmem:[%s5269 + $0x80] sm:$0xff]
      %v5287 = vld [vmem:[%s5269 + $0x88] sm:$0xff]
      %v5288 = vld [vmem:[%s5269 + $0x90] sm:$0xff]
      %v5289 = vld [vmem:[%s5269 + $0x98] sm:$0xff]
      %v5290 = vld [vmem:[%s5269 + $0xa0] sm:$0xff]
      %v5291 = vld [vmem:[%s5269 + $0xa8] sm:$0xff]
      %v5292 = vld [vmem:[%s5269 + $0xb0] sm:$0xff]
      %v5293 = vld [vmem:[%s5269 + $0xb8] sm:$0xff]
      %v5294 = vld [vmem:[%s5269 + $0xc0] sm:$0xff]
      %v5295 = vld [vmem:[%s5269 + $0xc8] sm:$0xff]
      %v5296 = vld [vmem:[%s5269 + $0xd0] sm:$0xff]
      %v5297 = vld [vmem:[%s5269 + $0xd8] sm:$0xff]
      %v5298 = vld [vmem:[%s5269 + $0xe0] sm:$0xff]
      %v5299 = vld [vmem:[%s5269 + $0xe8] sm:$0xff]
      %v5300 = vld [vmem:[%s5269 + $0xf0] sm:$0xff]
      %v5301 = vld [vmem:[%s5269 + $0xf8] sm:$0xff]
      %v5302 = vld [vmem:[%s5269 + $0x100] sm:$0xff]
      %v5303 = vld [vmem:[%s5269 + $0x108] sm:$0xff]
      %v5304 = vld [vmem:[%s5269 + $0x110] sm:$0xff]
      %v5305 = vld [vmem:[%s5269 + $0x118] sm:$0xff]
      %v5306 = vld [vmem:[%s5269 + $0x120] sm:$0xff]
      %v5307 = vld [vmem:[%s5269 + $0x128] sm:$0xff]
      %v5308 = vld [vmem:[%s5269 + $0x130] sm:$0xff]
      %v5309 = vld [vmem:[%s5269 + $0x138] sm:$0xff]
      %v5310 = vld [vmem:[%s5269 + $0x140] sm:$0xff]
      %v5311 = vld [vmem:[%s5269 + $0x148] sm:$0xff]
      %v5312 = vld [vmem:[%s5269 + $0x150] sm:$0xff]
      %v5313 = vld [vmem:[%s5269 + $0x158] sm:$0xff]
      %v5314 = vld [vmem:[%s5269 + $0x160] sm:$0xff]
      %v5315 = vld [vmem:[%s5269 + $0x168] sm:$0xff]
      %v5316 = vld [vmem:[%s5269 + $0x170] sm:$0xff]
      %v5317 = vld [vmem:[%s5269 + $0x178] sm:$0xff]
      %v5318 = vld [vmem:[%s5269 + $0x180] sm:$0xff]
      %v5319 = vld [vmem:[%s5269 + $0x188] sm:$0xff]
      %v5320 = vld [vmem:[%s5269 + $0x190] sm:$0xff]
      %v5321 = vld [vmem:[%s5269 + $0x198] sm:$0xff]
      %v5322 = vld [vmem:[%s5269 + $0x1a0] sm:$0xff]
      %v5323 = vld [vmem:[%s5269 + $0x1a8] sm:$0xff]
      %v5324 = vld [vmem:[%s5269 + $0x1b0] sm:$0xff]
      %v5325 = vld [vmem:[%s5269 + $0x1b8] sm:$0xff]
      %v5326 = vld [vmem:[%s5269 + $0x1c0] sm:$0xff]
      %v5327 = vld [vmem:[%s5269 + $0x1c8] sm:$0xff]
      %v5328 = vld [vmem:[%s5269 + $0x1d0] sm:$0xff]
      %v5329 = vld [vmem:[%s5269 + $0x1d8] sm:$0xff]
      %v5330 = vld [vmem:[%s5269 + $0x1e0] sm:$0xff]
      %v5331 = vld [vmem:[%s5269 + $0x1e8] sm:$0xff]
      %v5332 = vld [vmem:[%s5269 + $0x1f0] sm:$0xff]
      %v5333 = vld [vmem:[%s5269 + $0x1f8] sm:$0xff]
      %v5334 = vld [vmem:[%s5269 + $0x200] sm:$0xff]
      %v5335 = vld [vmem:[%s5269 + $0x208] sm:$0xff]
      %v5336 = vld [vmem:[%s5269 + $0x210] sm:$0xff]
      %v5337 = vld [vmem:[%s5269 + $0x218] sm:$0xff]
      %v5338 = vld [vmem:[%s5269 + $0x220] sm:$0xff]
      %v5339 = vld [vmem:[%s5269 + $0x228] sm:$0xff]
      %v5340 = vld [vmem:[%s5269 + $0x230] sm:$0xff]
      %v5341 = vld [vmem:[%s5269 + $0x238] sm:$0xff]
      %v5342 = vld [vmem:[%s5269 + $0x240] sm:$0xff]
      %v5343 = vld [vmem:[%s5269 + $0x248] sm:$0xff]
      %v5344 = vld [vmem:[%s5269 + $0x250] sm:$0xff]
      %v5345 = vld [vmem:[%s5269 + $0x258] sm:$0xff]
      %v5346 = vld [vmem:[%s5269 + $0x260] sm:$0xff]
      %v5347 = vld [vmem:[%s5269 + $0x268] sm:$0xff]
      %v5348 = vld [vmem:[%s5269 + $0x270] sm:$0xff]
      %v5349 = vld [vmem:[%s5269 + $0x278] sm:$0xff]
      %v5350 = vld [vmem:[%s5269 + $0x280] sm:$0xff]
      %v5351 = vld [vmem:[%s5269 + $0x288] sm:$0xff]
      %v5352 = vld [vmem:[%s5269 + $0x290] sm:$0xff]
      %v5353 = vld [vmem:[%s5269 + $0x298] sm:$0xff]
      %v5354 = vld [vmem:[%s5269 + $0x2a0] sm:$0xff]
      %v5355 = vld [vmem:[%s5269 + $0x2a8] sm:$0xff]
      %v5356 = vld [vmem:[%s5269 + $0x2b0] sm:$0xff]
      %v5357 = vld [vmem:[%s5269 + $0x2b8] sm:$0xff]
      %v5358 = vld [vmem:[%s5269 + $0x2c0] sm:$0xff]
      %v5359 = vld [vmem:[%s5269 + $0x2c8] sm:$0xff]
      %v5360 = vld [vmem:[%s5269 + $0x2d0] sm:$0xff]
      %v5361 = vld [vmem:[%s5269 + $0x2d8] sm:$0xff]
      %v5362 = vld [vmem:[%s5269 + $0x2e0] sm:$0xff]
      %v5363 = vld [vmem:[%s5269 + $0x2e8] sm:$0xff]
      %v5364 = vld [vmem:[%s5269 + $0x2f0] sm:$0xff]
      %v5365 = vld [vmem:[%s5269 + $0x2f8] sm:$0xff]
      %v5366 = vld [vmem:[%s5269 + $0x300] sm:$0xff]
      %v5367 = vld [vmem:[%s5269 + $0x308] sm:$0xff]
      %v5368 = vld [vmem:[%s5269 + $0x310] sm:$0xff]
      %v5369 = vld [vmem:[%s5269 + $0x318] sm:$0xff]
      %v5370 = vld [vmem:[%s5269 + $0x320] sm:$0xff]
      %v5371 = vld [vmem:[%s5269 + $0x328] sm:$0xff]
      %v5372 = vld [vmem:[%s5269 + $0x330] sm:$0xff]
      %v5373 = vld [vmem:[%s5269 + $0x338] sm:$0xff]
      %v5374 = vld [vmem:[%s5269 + $0x340] sm:$0xff]
      %v5375 = vld [vmem:[%s5269 + $0x348] sm:$0xff]
      %v5376 = vld [vmem:[%s5269 + $0x350] sm:$0xff]
      %v5377 = vld [vmem:[%s5269 + $0x358] sm:$0xff]
      %v5378 = vld [vmem:[%s5269 + $0x360] sm:$0xff]
      %v5379 = vld [vmem:[%s5269 + $0x368] sm:$0xff]
      %v5380 = vld [vmem:[%s5269 + $0x370] sm:$0xff]
      %v5381 = vld [vmem:[%s5269 + $0x378] sm:$0xff]
      %v5382 = vld [vmem:[%s5269 + $0x380] sm:$0xff]
      %v5383 = vld [vmem:[%s5269 + $0x388] sm:$0xff]
      %v5384 = vld [vmem:[%s5269 + $0x390] sm:$0xff]
      %v5385 = vld [vmem:[%s5269 + $0x398] sm:$0xff]
      %v5386 = vld [vmem:[%s5269 + $0x3a0] sm:$0xff]
      %v5387 = vld [vmem:[%s5269 + $0x3a8] sm:$0xff]
      %v5388 = vld [vmem:[%s5269 + $0x3b0] sm:$0xff]
      %v5389 = vld [vmem:[%s5269 + $0x3b8] sm:$0xff]
      %v5390 = vld [vmem:[%s5269 + $0x3c0] sm:$0xff]
      %v5391 = vld [vmem:[%s5269 + $0x3c8] sm:$0xff]
      %v5392 = vld [vmem:[%s5269 + $0x3d0] sm:$0xff]
      %v5393 = vld [vmem:[%s5269 + $0x3d8] sm:$0xff]
      %v5394 = vld [vmem:[%s5269 + $0x3e0] sm:$0xff]
      %v5395 = vld [vmem:[%s5269 + $0x3e8] sm:$0xff]
      %v5396 = vld [vmem:[%s5269 + $0x3f0] sm:$0xff]
      %v5397 = vld [vmem:[%s5269 + $0x3f8] sm:$0xff]
      %v5398 = vld [vmem:[%s5269 + $0x400] sm:$0xff]
      %v5399 = vld [vmem:[%s5269 + $0x408] sm:$0xff]
      %v5400 = vld [vmem:[%s5269 + $0x410] sm:$0xff]
      %v5401 = vld [vmem:[%s5269 + $0x418] sm:$0xff]
      %v5402 = vld [vmem:[%s5269 + $0x420] sm:$0xff]
      %v5403 = vld [vmem:[%s5269 + $0x428] sm:$0xff]
      %v5404 = vld [vmem:[%s5269 + $0x430] sm:$0xff]
      %v5405 = vld [vmem:[%s5269 + $0x438] sm:$0xff]
      %v5406 = vld [vmem:[%s5269 + $0x440] sm:$0xff]
      %v5407 = vld [vmem:[%s5269 + $0x448] sm:$0xff]
      %v5408 = vld [vmem:[%s5269 + $0x450] sm:$0xff]
      %v5409 = vld [vmem:[%s5269 + $0x458] sm:$0xff]
      %v5410 = vld [vmem:[%s5269 + $0x460] sm:$0xff]
      %v5411 = vld [vmem:[%s5269 + $0x468] sm:$0xff]
      %v5412 = vld [vmem:[%s5269 + $0x470] sm:$0xff]
      %v5413 = vld [vmem:[%s5269 + $0x478] sm:$0xff]
      %v5414 = vld [vmem:[%s5269 + $0x480] sm:$0xff]
      %v5415 = vld [vmem:[%s5269 + $0x488] sm:$0xff]
      %v5416 = vld [vmem:[%s5269 + $0x490] sm:$0xff]
      %v5417 = vld [vmem:[%s5269 + $0x498] sm:$0xff]
      %v5418 = vld [vmem:[%s5269 + $0x4a0] sm:$0xff]
      %v5419 = vld [vmem:[%s5269 + $0x4a8] sm:$0xff]
      %v5420 = vld [vmem:[%s5269 + $0x4b0] sm:$0xff]
      %v5421 = vld [vmem:[%s5269 + $0x4b8] sm:$0xff]
      %v5422 = vld [vmem:[%s5269 + $0x4c0] sm:$0xff]
      %v5423 = vld [vmem:[%s5269 + $0x4c8] sm:$0xff]
      %v5424 = vld [vmem:[%s5269 + $0x4d0] sm:$0xff]
      %v5425 = vld [vmem:[%s5269 + $0x4d8] sm:$0xff]
      %v5426 = vld [vmem:[%s5269 + $0x4e0] sm:$0xff]
      %v5427 = vld [vmem:[%s5269 + $0x4e8] sm:$0xff]
      %v5428 = vld [vmem:[%s5269 + $0x4f0] sm:$0xff]
      %v5429 = vld [vmem:[%s5269 + $0x4f8] sm:$0xff]
      %v5430 = vld [vmem:[%s5269 + $0x500] sm:$0xff]
      %v5431 = vld [vmem:[%s5269 + $0x508] sm:$0xff]
      %v5432 = vld [vmem:[%s5269 + $0x510] sm:$0xff]
      %v5433 = vld [vmem:[%s5269 + $0x518] sm:$0xff]
      %v5434 = vld [vmem:[%s5269 + $0x520] sm:$0xff]
      %v5435 = vld [vmem:[%s5269 + $0x528] sm:$0xff]
      %v5436 = vld [vmem:[%s5269 + $0x530] sm:$0xff]
      %v5437 = vld [vmem:[%s5269 + $0x538] sm:$0xff]
      %v5438 = vld [vmem:[%s5269 + $0x540] sm:$0xff]
      %v5439 = vld [vmem:[%s5269 + $0x548] sm:$0xff]
      %v5440 = vld [vmem:[%s5269 + $0x550] sm:$0xff]
      %v5441 = vld [vmem:[%s5269 + $0x558] sm:$0xff]
      %v5442 = vld [vmem:[%s5269 + $0x560] sm:$0xff]
      %v5443 = vld [vmem:[%s5269 + $0x568] sm:$0xff]
      %v5444 = vld [vmem:[%s5269 + $0x570] sm:$0xff]
      %v5445 = vld [vmem:[%s5269 + $0x578] sm:$0xff]
      %v5446 = vld [vmem:[%s5269 + $0x580] sm:$0xff]
      %v5447 = vld [vmem:[%s5269 + $0x588] sm:$0xff]
      %v5448 = vld [vmem:[%s5269 + $0x590] sm:$0xff]
      %v5449 = vld [vmem:[%s5269 + $0x598] sm:$0xff]
      %v5450 = vld [vmem:[%s5269 + $0x5a0] sm:$0xff]
      %v5451 = vld [vmem:[%s5269 + $0x5a8] sm:$0xff]
      %v5452 = vld [vmem:[%s5269 + $0x5b0] sm:$0xff]
      %v5453 = vld [vmem:[%s5269 + $0x5b8] sm:$0xff]
      %v5454 = vld [vmem:[%s5269 + $0x5c0] sm:$0xff]
      %v5455 = vld [vmem:[%s5269 + $0x5c8] sm:$0xff]
      %v5456 = vld [vmem:[%s5269 + $0x5d0] sm:$0xff]
      %v5457 = vld [vmem:[%s5269 + $0x5d8] sm:$0xff]
      %v5458 = vld [vmem:[%s5269 + $0x5e0] sm:$0xff]
      %v5459 = vld [vmem:[%s5269 + $0x5e8] sm:$0xff]
      %v5460 = vld [vmem:[%s5269 + $0x5f0] sm:$0xff]
      %v5461 = vld [vmem:[%s5269 + $0x5f8] sm:$0xff]
      %v5462 = vld [vmem:[%s5269 + $0x600] sm:$0xff]
      %v5463 = vld [vmem:[%s5269 + $0x608] sm:$0xff]
      %v5464 = vld [vmem:[%s5269 + $0x610] sm:$0xff]
      %v5465 = vld [vmem:[%s5269 + $0x618] sm:$0xff]
      %v5466 = vld [vmem:[%s5269 + $0x620] sm:$0xff]
      %v5467 = vld [vmem:[%s5269 + $0x628] sm:$0xff]
      %v5468 = vld [vmem:[%s5269 + $0x630] sm:$0xff]
      %v5469 = vld [vmem:[%s5269 + $0x638] sm:$0xff]
      %v5470 = vld [vmem:[%s5269 + $0x640] sm:$0xff]
      %v5471 = vld [vmem:[%s5269 + $0x648] sm:$0xff]
      %v5472 = vld [vmem:[%s5269 + $0x650] sm:$0xff]
      %v5473 = vld [vmem:[%s5269 + $0x658] sm:$0xff]
      %v5474 = vld [vmem:[%s5269 + $0x660] sm:$0xff]
      %v5475 = vld [vmem:[%s5269 + $0x668] sm:$0xff]
      %v5476 = vld [vmem:[%s5269 + $0x670] sm:$0xff]
      %v5477 = vld [vmem:[%s5269 + $0x678] sm:$0xff]
      %v5478 = vld [vmem:[%s5269 + $0x680] sm:$0xff]
      %v5479 = vld [vmem:[%s5269 + $0x688] sm:$0xff]
      %v5480 = vld [vmem:[%s5269 + $0x690] sm:$0xff]
      %v5481 = vld [vmem:[%s5269 + $0x698] sm:$0xff]
      %v5482 = vld [vmem:[%s5269 + $0x6a0] sm:$0xff]
      %v5483 = vld [vmem:[%s5269 + $0x6a8] sm:$0xff]
      %v5484 = vld [vmem:[%s5269 + $0x6b0] sm:$0xff]
      %v5485 = vld [vmem:[%s5269 + $0x6b8] sm:$0xff]
      %v5486 = vld [vmem:[%s5269 + $0x6c0] sm:$0xff]
      %v5487 = vld [vmem:[%s5269 + $0x6c8] sm:$0xff]
      %v5488 = vld [vmem:[%s5269 + $0x6d0] sm:$0xff]
      %v5489 = vld [vmem:[%s5269 + $0x6d8] sm:$0xff]
      %v5490 = vld [vmem:[%s5269 + $0x6e0] sm:$0xff]
      %v5491 = vld [vmem:[%s5269 + $0x6e8] sm:$0xff]
      %v5492 = vld [vmem:[%s5269 + $0x6f0] sm:$0xff]
      %v5493 = vld [vmem:[%s5269 + $0x6f8] sm:$0xff]
      %v5494 = vld [vmem:[%s5269 + $0x700] sm:$0xff]
      %v5495 = vld [vmem:[%s5269 + $0x708] sm:$0xff]
      %v5496 = vld [vmem:[%s5269 + $0x710] sm:$0xff]
      %v5497 = vld [vmem:[%s5269 + $0x718] sm:$0xff]
      %v5498 = vld [vmem:[%s5269 + $0x720] sm:$0xff]
      %v5499 = vld [vmem:[%s5269 + $0x728] sm:$0xff]
      %v5500 = vld [vmem:[%s5269 + $0x730] sm:$0xff]
      %v5501 = vld [vmem:[%s5269 + $0x738] sm:$0xff]
      %v5502 = vld [vmem:[%s5269 + $0x740] sm:$0xff]
      %v5503 = vld [vmem:[%s5269 + $0x748] sm:$0xff]
      %v5504 = vld [vmem:[%s5269 + $0x750] sm:$0xff]
      %v5505 = vld [vmem:[%s5269 + $0x758] sm:$0xff]
      %v5506 = vld [vmem:[%s5269 + $0x760] sm:$0xff]
      %v5507 = vld [vmem:[%s5269 + $0x768] sm:$0xff]
      %v5508 = vld [vmem:[%s5269 + $0x770] sm:$0xff]
      %v5509 = vld [vmem:[%s5269 + $0x778] sm:$0xff]
      %v5510 = vld [vmem:[%s5269 + $0x780] sm:$0xff]
      %v5511 = vld [vmem:[%s5269 + $0x788] sm:$0xff]
      %v5512 = vld [vmem:[%s5269 + $0x790] sm:$0xff]
      %v5513 = vld [vmem:[%s5269 + $0x798] sm:$0xff]
      %v5514 = vld [vmem:[%s5269 + $0x7a0] sm:$0xff]
      %v5515 = vld [vmem:[%s5269 + $0x7a8] sm:$0xff]
      %v5516 = vld [vmem:[%s5269 + $0x7b0] sm:$0xff]
      %v5517 = vld [vmem:[%s5269 + $0x7b8] sm:$0xff]
      %v5518 = vld [vmem:[%s5269 + $0x7c0] sm:$0xff]
      %v5519 = vld [vmem:[%s5269 + $0x7c8] sm:$0xff]
      %v5520 = vld [vmem:[%s5269 + $0x7d0] sm:$0xff]
      %v5521 = vld [vmem:[%s5269 + $0x7d8] sm:$0xff]
      %v5522 = vld [vmem:[%s5269 + $0x7e0] sm:$0xff]
      %v5523 = vld [vmem:[%s5269 + $0x7e8] sm:$0xff]
      %v5524 = vld [vmem:[%s5269 + $0x7f0] sm:$0xff]
      %v5525 = vld [vmem:[%s5269 + $0x7f8] sm:$0xff]
      %5526 = vmatpush.msra.mxu0 %v5330
      %5527 = vmatpush.msra.mxu0 %v5326
      %5528 = vmatpush.msra.mxu0 %v5322
      %5529 = vmatpush.msra.mxu0 %v5318
      %5530 = vmatpush.msra.mxu0 %v5314
      %5531 = vmatpush.msra.mxu0 %v5310
      %5532 = vmatpush.msra.mxu0 %v5306
      %5533 = vmatpush.msra.mxu0 %v5302
      %5534 = vmatpush.msra.mxu0 %v5298
      %5535 = vmatpush.msra.mxu0 %v5294
      %5536 = vmatpush.msra.mxu0 %v5290
      %5537 = vmatpush.msra.mxu0 %v5286
      %5538 = vmatpush.msra.mxu0 %v5282
      %5539 = vmatpush.msra.mxu0 %v5278
      %5540 = vmatpush.msra.mxu0 %v5274
      %5541 = vmatpush.msra.mxu0 %v5270
      %5542 = vmatmul.f32.gmra.mxu0 %v3946
      %v5543 = vpop.f32.mrf.mxu0
      %v5544 = vadd.f32 0.0, %v5543
      %5545 = vmatmul.f32.gmra.mxu0 %v3949
      %v5546 = vpop.f32.mrf.mxu0
      %v5547 = vadd.f32 0.0, %v5546
      %5548 = vdwg.mxu0
      %5549 = vmatpush.msra.mxu0 %v5394
      %5550 = vmatpush.msra.mxu0 %v5390
      %5551 = vmatpush.msra.mxu0 %v5386
      %5552 = vmatpush.msra.mxu0 %v5382
      %5553 = vmatpush.msra.mxu0 %v5378
      %5554 = vmatpush.msra.mxu0 %v5374
      %5555 = vmatpush.msra.mxu0 %v5370
      %5556 = vmatpush.msra.mxu0 %v5366
      %5557 = vmatpush.msra.mxu0 %v5362
      %5558 = vmatpush.msra.mxu0 %v5358
      %5559 = vmatpush.msra.mxu0 %v5354
      %5560 = vmatpush.msra.mxu0 %v5350
      %5561 = vmatpush.msra.mxu0 %v5346
      %5562 = vmatpush.msra.mxu0 %v5342
      %5563 = vmatpush.msra.mxu0 %v5338
      %5564 = vmatpush.msra.mxu0 %v5334
      %5565 = vmatmul.f32.gmra.mxu0 %v3969
      %v5566 = vpop.f32.mrf.mxu0
      %v5567 = vadd.f32 %v5544, %v5566
      %5568 = vmatmul.f32.gmra.mxu0 %v3972
      %v5569 = vpop.f32.mrf.mxu0
      %v5570 = vadd.f32 %v5547, %v5569
      %5571 = vdwg.mxu0
      %5572 = vmatpush.msra.mxu0 %v5458
      %5573 = vmatpush.msra.mxu0 %v5454
      %5574 = vmatpush.msra.mxu0 %v5450
      %5575 = vmatpush.msra.mxu0 %v5446
      %5576 = vmatpush.msra.mxu0 %v5442
      %5577 = vmatpush.msra.mxu0 %v5438
      %5578 = vmatpush.msra.mxu0 %v5434
      %5579 = vmatpush.msra.mxu0 %v5430
      %5580 = vmatpush.msra.mxu0 %v5426
      %5581 = vmatpush.msra.mxu0 %v5422
      %5582 = vmatpush.msra.mxu0 %v5418
      %5583 = vmatpush.msra.mxu0 %v5414
      %5584 = vmatpush.msra.mxu0 %v5410
      %5585 = vmatpush.msra.mxu0 %v5406
      %5586 = vmatpush.msra.mxu0 %v5402
      %5587 = vmatpush.msra.mxu0 %v5398
      %5588 = vmatmul.f32.gmra.mxu0 %v3992
      %v5589 = vpop.f32.mrf.mxu0
      %v5590 = vadd.f32 %v5567, %v5589
      %5591 = vmatmul.f32.gmra.mxu0 %v3995
      %v5592 = vpop.f32.mrf.mxu0
      %v5593 = vadd.f32 %v5570, %v5592
      %5594 = vdwg.mxu0
      %5595 = vmatpush.msra.mxu0 %v5522
      %5596 = vmatpush.msra.mxu0 %v5518
      %5597 = vmatpush.msra.mxu0 %v5514
      %5598 = vmatpush.msra.mxu0 %v5510
      %5599 = vmatpush.msra.mxu0 %v5506
      %5600 = vmatpush.msra.mxu0 %v5502
      %5601 = vmatpush.msra.mxu0 %v5498
      %5602 = vmatpush.msra.mxu0 %v5494
      %5603 = vmatpush.msra.mxu0 %v5490
      %5604 = vmatpush.msra.mxu0 %v5486
      %5605 = vmatpush.msra.mxu0 %v5482
      %5606 = vmatpush.msra.mxu0 %v5478
      %5607 = vmatpush.msra.mxu0 %v5474
      %5608 = vmatpush.msra.mxu0 %v5470
      %5609 = vmatpush.msra.mxu0 %v5466
      %5610 = vmatpush.msra.mxu0 %v5462
      %5611 = vmatmul.f32.gmra.mxu0 %v4015
      %v5612 = vpop.f32.mrf.mxu0
      %v5613 = vadd.f32 %v5590, %v5612
      %5614 = vmatmul.f32.gmra.mxu0 %v4018
      %v5615 = vpop.f32.mrf.mxu0
      %v5616 = vadd.f32 %v5593, %v5615
      %5617 = vdwg.mxu0
      %5618 = vmatpush.msra.mxu0 %v5331
      %5619 = vmatpush.msra.mxu0 %v5327
      %5620 = vmatpush.msra.mxu0 %v5323
      %5621 = vmatpush.msra.mxu0 %v5319
      %5622 = vmatpush.msra.mxu0 %v5315
      %5623 = vmatpush.msra.mxu0 %v5311
      %5624 = vmatpush.msra.mxu0 %v5307
      %5625 = vmatpush.msra.mxu0 %v5303
      %5626 = vmatpush.msra.mxu0 %v5299
      %5627 = vmatpush.msra.mxu0 %v5295
      %5628 = vmatpush.msra.mxu0 %v5291
      %5629 = vmatpush.msra.mxu0 %v5287
      %5630 = vmatpush.msra.mxu0 %v5283
      %5631 = vmatpush.msra.mxu0 %v5279
      %5632 = vmatpush.msra.mxu0 %v5275
      %5633 = vmatpush.msra.mxu0 %v5271
      %5634 = vmatmul.f32.gmra.mxu0 %v3946
      %v5635 = vpop.f32.mrf.mxu0
      %v5636 = vadd.f32 0.0, %v5635
      %5637 = vmatmul.f32.gmra.mxu0 %v3949
      %v5638 = vpop.f32.mrf.mxu0
      %v5639 = vadd.f32 0.0, %v5638
      %5640 = vdwg.mxu0
      %5641 = vmatpush.msra.mxu0 %v5395
      %5642 = vmatpush.msra.mxu0 %v5391
      %5643 = vmatpush.msra.mxu0 %v5387
      %5644 = vmatpush.msra.mxu0 %v5383
      %5645 = vmatpush.msra.mxu0 %v5379
      %5646 = vmatpush.msra.mxu0 %v5375
      %5647 = vmatpush.msra.mxu0 %v5371
      %5648 = vmatpush.msra.mxu0 %v5367
      %5649 = vmatpush.msra.mxu0 %v5363
      %5650 = vmatpush.msra.mxu0 %v5359
      %5651 = vmatpush.msra.mxu0 %v5355
      %5652 = vmatpush.msra.mxu0 %v5351
      %5653 = vmatpush.msra.mxu0 %v5347
      %5654 = vmatpush.msra.mxu0 %v5343
      %5655 = vmatpush.msra.mxu0 %v5339
      %5656 = vmatpush.msra.mxu0 %v5335
      %5657 = vmatmul.f32.gmra.mxu0 %v3969
      %v5658 = vpop.f32.mrf.mxu0
      %v5659 = vadd.f32 %v5636, %v5658
      %5660 = vmatmul.f32.gmra.mxu0 %v3972
      %v5661 = vpop.f32.mrf.mxu0
      %v5662 = vadd.f32 %v5639, %v5661
      %5663 = vdwg.mxu0
      %5664 = vmatpush.msra.mxu0 %v5459
      %5665 = vmatpush.msra.mxu0 %v5455
      %5666 = vmatpush.msra.mxu0 %v5451
      %5667 = vmatpush.msra.mxu0 %v5447
      %5668 = vmatpush.msra.mxu0 %v5443
      %5669 = vmatpush.msra.mxu0 %v5439
      %5670 = vmatpush.msra.mxu0 %v5435
      %5671 = vmatpush.msra.mxu0 %v5431
      %5672 = vmatpush.msra.mxu0 %v5427
      %5673 = vmatpush.msra.mxu0 %v5423
      %5674 = vmatpush.msra.mxu0 %v5419
      %5675 = vmatpush.msra.mxu0 %v5415
      %5676 = vmatpush.msra.mxu0 %v5411
      %5677 = vmatpush.msra.mxu0 %v5407
      %5678 = vmatpush.msra.mxu0 %v5403
      %5679 = vmatpush.msra.mxu0 %v5399
      %5680 = vmatmul.f32.gmra.mxu0 %v3992
      %v5681 = vpop.f32.mrf.mxu0
      %v5682 = vadd.f32 %v5659, %v5681
      %5683 = vmatmul.f32.gmra.mxu0 %v3995
      %v5684 = vpop.f32.mrf.mxu0
      %v5685 = vadd.f32 %v5662, %v5684
      %5686 = vdwg.mxu0
      %5687 = vmatpush.msra.mxu0 %v5523
      %5688 = vmatpush.msra.mxu0 %v5519
      %5689 = vmatpush.msra.mxu0 %v5515
      %5690 = vmatpush.msra.mxu0 %v5511
      %5691 = vmatpush.msra.mxu0 %v5507
      %5692 = vmatpush.msra.mxu0 %v5503
      %5693 = vmatpush.msra.mxu0 %v5499
      %5694 = vmatpush.msra.mxu0 %v5495
      %5695 = vmatpush.msra.mxu0 %v5491
      %5696 = vmatpush.msra.mxu0 %v5487
      %5697 = vmatpush.msra.mxu0 %v5483
      %5698 = vmatpush.msra.mxu0 %v5479
      %5699 = vmatpush.msra.mxu0 %v5475
      %5700 = vmatpush.msra.mxu0 %v5471
      %5701 = vmatpush.msra.mxu0 %v5467
      %5702 = vmatpush.msra.mxu0 %v5463
      %5703 = vmatmul.f32.gmra.mxu0 %v4015
      %v5704 = vpop.f32.mrf.mxu0
      %v5705 = vadd.f32 %v5682, %v5704
      %5706 = vmatmul.f32.gmra.mxu0 %v4018
      %v5707 = vpop.f32.mrf.mxu0
      %v5708 = vadd.f32 %v5685, %v5707
      %5709 = vdwg.mxu0
      %5710 = vmatpush.msra.mxu0 %v5332
      %5711 = vmatpush.msra.mxu0 %v5328
      %5712 = vmatpush.msra.mxu0 %v5324
      %5713 = vmatpush.msra.mxu0 %v5320
      %5714 = vmatpush.msra.mxu0 %v5316
      %5715 = vmatpush.msra.mxu0 %v5312
      %5716 = vmatpush.msra.mxu0 %v5308
      %5717 = vmatpush.msra.mxu0 %v5304
      %5718 = vmatpush.msra.mxu0 %v5300
      %5719 = vmatpush.msra.mxu0 %v5296
      %5720 = vmatpush.msra.mxu0 %v5292
      %5721 = vmatpush.msra.mxu0 %v5288
      %5722 = vmatpush.msra.mxu0 %v5284
      %5723 = vmatpush.msra.mxu0 %v5280
      %5724 = vmatpush.msra.mxu0 %v5276
      %5725 = vmatpush.msra.mxu0 %v5272
      %5726 = vmatmul.f32.gmra.mxu0 %v3946
      %v5727 = vpop.f32.mrf.mxu0
      %v5728 = vadd.f32 0.0, %v5727
      %5729 = vmatmul.f32.gmra.mxu0 %v3949
      %v5730 = vpop.f32.mrf.mxu0
      %v5731 = vadd.f32 0.0, %v5730
      %5732 = vdwg.mxu0
      %5733 = vmatpush.msra.mxu0 %v5396
      %5734 = vmatpush.msra.mxu0 %v5392
      %5735 = vmatpush.msra.mxu0 %v5388
      %5736 = vmatpush.msra.mxu0 %v5384
      %5737 = vmatpush.msra.mxu0 %v5380
      %5738 = vmatpush.msra.mxu0 %v5376
      %5739 = vmatpush.msra.mxu0 %v5372
      %5740 = vmatpush.msra.mxu0 %v5368
      %5741 = vmatpush.msra.mxu0 %v5364
      %5742 = vmatpush.msra.mxu0 %v5360
      %5743 = vmatpush.msra.mxu0 %v5356
      %5744 = vmatpush.msra.mxu0 %v5352
      %5745 = vmatpush.msra.mxu0 %v5348
      %5746 = vmatpush.msra.mxu0 %v5344
      %5747 = vmatpush.msra.mxu0 %v5340
      %5748 = vmatpush.msra.mxu0 %v5336
      %5749 = vmatmul.f32.gmra.mxu0 %v3969
      %v5750 = vpop.f32.mrf.mxu0
      %v5751 = vadd.f32 %v5728, %v5750
      %5752 = vmatmul.f32.gmra.mxu0 %v3972
      %v5753 = vpop.f32.mrf.mxu0
      %v5754 = vadd.f32 %v5731, %v5753
      %5755 = vdwg.mxu0
      %5756 = vmatpush.msra.mxu0 %v5460
      %5757 = vmatpush.msra.mxu0 %v5456
      %5758 = vmatpush.msra.mxu0 %v5452
      %5759 = vmatpush.msra.mxu0 %v5448
      %5760 = vmatpush.msra.mxu0 %v5444
      %5761 = vmatpush.msra.mxu0 %v5440
      %5762 = vmatpush.msra.mxu0 %v5436
      %5763 = vmatpush.msra.mxu0 %v5432
      %5764 = vmatpush.msra.mxu0 %v5428
      %5765 = vmatpush.msra.mxu0 %v5424
      %5766 = vmatpush.msra.mxu0 %v5420
      %5767 = vmatpush.msra.mxu0 %v5416
      %5768 = vmatpush.msra.mxu0 %v5412
      %5769 = vmatpush.msra.mxu0 %v5408
      %5770 = vmatpush.msra.mxu0 %v5404
      %5771 = vmatpush.msra.mxu0 %v5400
      %5772 = vmatmul.f32.gmra.mxu0 %v3992
      %v5773 = vpop.f32.mrf.mxu0
      %v5774 = vadd.f32 %v5751, %v5773
      %5775 = vmatmul.f32.gmra.mxu0 %v3995
      %v5776 = vpop.f32.mrf.mxu0
      %v5777 = vadd.f32 %v5754, %v5776
      %5778 = vdwg.mxu0
      %5779 = vmatpush.msra.mxu0 %v5524
      %5780 = vmatpush.msra.mxu0 %v5520
      %5781 = vmatpush.msra.mxu0 %v5516
      %5782 = vmatpush.msra.mxu0 %v5512
      %5783 = vmatpush.msra.mxu0 %v5508
      %5784 = vmatpush.msra.mxu0 %v5504
      %5785 = vmatpush.msra.mxu0 %v5500
      %5786 = vmatpush.msra.mxu0 %v5496
      %5787 = vmatpush.msra.mxu0 %v5492
      %5788 = vmatpush.msra.mxu0 %v5488
      %5789 = vmatpush.msra.mxu0 %v5484
      %5790 = vmatpush.msra.mxu0 %v5480
      %5791 = vmatpush.msra.mxu0 %v5476
      %5792 = vmatpush.msra.mxu0 %v5472
      %5793 = vmatpush.msra.mxu0 %v5468
      %5794 = vmatpush.msra.mxu0 %v5464
      %5795 = vmatmul.f32.gmra.mxu0 %v4015
      %v5796 = vpop.f32.mrf.mxu0
      %v5797 = vadd.f32 %v5774, %v5796
      %5798 = vmatmul.f32.gmra.mxu0 %v4018
      %v5799 = vpop.f32.mrf.mxu0
      %v5800 = vadd.f32 %v5777, %v5799
      %5801 = vdwg.mxu0
      %5802 = vmatpush.msra.mxu0 %v5333
      %5803 = vmatpush.msra.mxu0 %v5329
      %5804 = vmatpush.msra.mxu0 %v5325
      %5805 = vmatpush.msra.mxu0 %v5321
      %5806 = vmatpush.msra.mxu0 %v5317
      %5807 = vmatpush.msra.mxu0 %v5313
      %5808 = vmatpush.msra.mxu0 %v5309
      %5809 = vmatpush.msra.mxu0 %v5305
      %5810 = vmatpush.msra.mxu0 %v5301
      %5811 = vmatpush.msra.mxu0 %v5297
      %5812 = vmatpush.msra.mxu0 %v5293
      %5813 = vmatpush.msra.mxu0 %v5289
      %5814 = vmatpush.msra.mxu0 %v5285
      %5815 = vmatpush.msra.mxu0 %v5281
      %5816 = vmatpush.msra.mxu0 %v5277
      %5817 = vmatpush.msra.mxu0 %v5273
      %5818 = vmatmul.f32.gmra.mxu0 %v3946
      %v5819 = vpop.f32.mrf.mxu0
      %v5820 = vadd.f32 0.0, %v5819
      %5821 = vmatmul.f32.gmra.mxu0 %v3949
      %v5822 = vpop.f32.mrf.mxu0
      %v5823 = vadd.f32 0.0, %v5822
      %5824 = vdwg.mxu0
      %5825 = vmatpush.msra.mxu0 %v5397
      %5826 = vmatpush.msra.mxu0 %v5393
      %5827 = vmatpush.msra.mxu0 %v5389
      %5828 = vmatpush.msra.mxu0 %v5385
      %5829 = vmatpush.msra.mxu0 %v5381
      %5830 = vmatpush.msra.mxu0 %v5377
      %5831 = vmatpush.msra.mxu0 %v5373
      %5832 = vmatpush.msra.mxu0 %v5369
      %5833 = vmatpush.msra.mxu0 %v5365
      %5834 = vmatpush.msra.mxu0 %v5361
      %5835 = vmatpush.msra.mxu0 %v5357
      %5836 = vmatpush.msra.mxu0 %v5353
      %5837 = vmatpush.msra.mxu0 %v5349
      %5838 = vmatpush.msra.mxu0 %v5345
      %5839 = vmatpush.msra.mxu0 %v5341
      %5840 = vmatpush.msra.mxu0 %v5337
      %5841 = vmatmul.f32.gmra.mxu0 %v3969
      %v5842 = vpop.f32.mrf.mxu0
      %v5843 = vadd.f32 %v5820, %v5842
      %5844 = vmatmul.f32.gmra.mxu0 %v3972
      %v5845 = vpop.f32.mrf.mxu0
      %v5846 = vadd.f32 %v5823, %v5845
      %5847 = vdwg.mxu0
      %5848 = vmatpush.msra.mxu0 %v5461
      %5849 = vmatpush.msra.mxu0 %v5457
      %5850 = vmatpush.msra.mxu0 %v5453
      %5851 = vmatpush.msra.mxu0 %v5449
      %5852 = vmatpush.msra.mxu0 %v5445
      %5853 = vmatpush.msra.mxu0 %v5441
      %5854 = vmatpush.msra.mxu0 %v5437
      %5855 = vmatpush.msra.mxu0 %v5433
      %5856 = vmatpush.msra.mxu0 %v5429
      %5857 = vmatpush.msra.mxu0 %v5425
      %5858 = vmatpush.msra.mxu0 %v5421
      %5859 = vmatpush.msra.mxu0 %v5417
      %5860 = vmatpush.msra.mxu0 %v5413
      %5861 = vmatpush.msra.mxu0 %v5409
      %5862 = vmatpush.msra.mxu0 %v5405
      %5863 = vmatpush.msra.mxu0 %v5401
      %5864 = vmatmul.f32.gmra.mxu0 %v3992
      %v5865 = vpop.f32.mrf.mxu0
      %v5866 = vadd.f32 %v5843, %v5865
      %5867 = vmatmul.f32.gmra.mxu0 %v3995
      %v5868 = vpop.f32.mrf.mxu0
      %v5869 = vadd.f32 %v5846, %v5868
      %5870 = vdwg.mxu0
      %5871 = vmatpush.msra.mxu0 %v5525
      %5872 = vmatpush.msra.mxu0 %v5521
      %5873 = vmatpush.msra.mxu0 %v5517
      %5874 = vmatpush.msra.mxu0 %v5513
      %5875 = vmatpush.msra.mxu0 %v5509
      %5876 = vmatpush.msra.mxu0 %v5505
      %5877 = vmatpush.msra.mxu0 %v5501
      %5878 = vmatpush.msra.mxu0 %v5497
      %5879 = vmatpush.msra.mxu0 %v5493
      %5880 = vmatpush.msra.mxu0 %v5489
      %5881 = vmatpush.msra.mxu0 %v5485
      %5882 = vmatpush.msra.mxu0 %v5481
      %5883 = vmatpush.msra.mxu0 %v5477
      %5884 = vmatpush.msra.mxu0 %v5473
      %5885 = vmatpush.msra.mxu0 %v5469
      %5886 = vmatpush.msra.mxu0 %v5465
      %5887 = vmatmul.f32.gmra.mxu0 %v4015
      %v5888 = vpop.f32.mrf.mxu0
      %v5889 = vadd.f32 %v5866, %v5888
      %5890 = vmatmul.f32.gmra.mxu0 %v4018
      %v5891 = vpop.f32.mrf.mxu0
      %v5892 = vadd.f32 %v5869, %v5891
      %5893 = vdwg.mxu0
      %v5894 = vadd.f32 %v4988, %v5613
      %v5895 = vadd.f32 %v5080, %v5705
      %v5896 = vadd.f32 %v5172, %v5797
      %v5897 = vadd.f32 %v5264, %v5889
      %v5898 = vadd.f32 %v4991, %v5616
      %v5899 = vadd.f32 %v5083, %v5708
      %v5900 = vadd.f32 %v5175, %v5800
      %v5901 = vadd.f32 %v5267, %v5892
      %v5902 = vld [vmem:[%s8] sm:$0xf]
      %v5904 = vperm.slane %v5902, 0
      %v5905 = vperm.slane %v5902, 1
      %v5906 = vperm.slane %v5902, 2
      %v5907 = vperm.slane %v5902, 3
      %v5912 = vadd.f32 %v5894, %v5904
      %v5913 = vadd.f32 %v5895, %v5905
      %v5914 = vadd.f32 %v5896, %v5906
      %v5915 = vadd.f32 %v5897, %v5907
      %v5916 = vadd.f32 %v5898, %v5904
      %v5917 = vadd.f32 %v5899, %v5905
      %v5918 = vadd.f32 %v5900, %v5906
      %v5919 = vadd.f32 %v5901, %v5907
      %5920 = vmatpush.msra.mxu0 %v2557
      %5921 = vmatpush.msra.mxu0 %v2553
      %5922 = vmatpush.msra.mxu0 %v2549
      %5923 = vmatpush.msra.mxu0 %v2545
      %5924 = vmatpush.msra.mxu0 %v2541
      %5925 = vmatpush.msra.mxu0 %v2537
      %5926 = vmatpush.msra.mxu0 %v2533
      %5927 = vmatpush.msra.mxu0 %v2529
      %5928 = vmatpush.msra.mxu0 %v2525
      %5929 = vmatpush.msra.mxu0 %v2521
      %5930 = vmatpush.msra.mxu0 %v2517
      %5931 = vmatpush.msra.mxu0 %v2513
      %5932 = vmatpush.msra.mxu0 %v2509
      %5933 = vmatpush.msra.mxu0 %v2505
      %5934 = vmatpush.msra.mxu0 %v2501
      %5935 = vmatpush.msra.mxu0 %v2497
      %5936 = vmatmul.f32.gmra.mxu0 %v5912
      %v5937 = vpop.f32.mrf.mxu0
      %v5938 = vadd.f32 0.0, %v5937
      %5939 = vmatmul.f32.gmra.mxu0 %v5916
      %v5940 = vpop.f32.mrf.mxu0
      %v5941 = vadd.f32 0.0, %v5940
      %5942 = vdwg.mxu0
      %5943 = vmatpush.msra.mxu0 %v2621
      %5944 = vmatpush.msra.mxu0 %v2617
      %5945 = vmatpush.msra.mxu0 %v2613
      %5946 = vmatpush.msra.mxu0 %v2609
      %5947 = vmatpush.msra.mxu0 %v2605
      %5948 = vmatpush.msra.mxu0 %v2601
      %5949 = vmatpush.msra.mxu0 %v2597
      %5950 = vmatpush.msra.mxu0 %v2593
      %5951 = vmatpush.msra.mxu0 %v2589
      %5952 = vmatpush.msra.mxu0 %v2585
      %5953 = vmatpush.msra.mxu0 %v2581
      %5954 = vmatpush.msra.mxu0 %v2577
      %5955 = vmatpush.msra.mxu0 %v2573
      %5956 = vmatpush.msra.mxu0 %v2569
      %5957 = vmatpush.msra.mxu0 %v2565
      %5958 = vmatpush.msra.mxu0 %v2561
      %5959 = vmatmul.f32.gmra.mxu0 %v5913
      %v5960 = vpop.f32.mrf.mxu0
      %v5961 = vadd.f32 %v5938, %v5960
      %5962 = vmatmul.f32.gmra.mxu0 %v5917
      %v5963 = vpop.f32.mrf.mxu0
      %v5964 = vadd.f32 %v5941, %v5963
      %5965 = vdwg.mxu0
      %5966 = vmatpush.msra.mxu0 %v2685
      %5967 = vmatpush.msra.mxu0 %v2681
      %5968 = vmatpush.msra.mxu0 %v2677
      %5969 = vmatpush.msra.mxu0 %v2673
      %5970 = vmatpush.msra.mxu0 %v2669
      %5971 = vmatpush.msra.mxu0 %v2665
      %5972 = vmatpush.msra.mxu0 %v2661
      %5973 = vmatpush.msra.mxu0 %v2657
      %5974 = vmatpush.msra.mxu0 %v2653
      %5975 = vmatpush.msra.mxu0 %v2649
      %5976 = vmatpush.msra.mxu0 %v2645
      %5977 = vmatpush.msra.mxu0 %v2641
      %5978 = vmatpush.msra.mxu0 %v2637
      %5979 = vmatpush.msra.mxu0 %v2633
      %5980 = vmatpush.msra.mxu0 %v2629
      %5981 = vmatpush.msra.mxu0 %v2625
      %5982 = vmatmul.f32.gmra.mxu0 %v5914
      %v5983 = vpop.f32.mrf.mxu0
      %v5984 = vadd.f32 %v5961, %v5983
      %5985 = vmatmul.f32.gmra.mxu0 %v5918
      %v5986 = vpop.f32.mrf.mxu0
      %v5987 = vadd.f32 %v5964, %v5986
      %5988 = vdwg.mxu0
      %5989 = vmatpush.msra.mxu0 %v2749
      %5990 = vmatpush.msra.mxu0 %v2745
      %5991 = vmatpush.msra.mxu0 %v2741
      %5992 = vmatpush.msra.mxu0 %v2737
      %5993 = vmatpush.msra.mxu0 %v2733
      %5994 = vmatpush.msra.mxu0 %v2729
      %5995 = vmatpush.msra.mxu0 %v2725
      %5996 = vmatpush.msra.mxu0 %v2721
      %5997 = vmatpush.msra.mxu0 %v2717
      %5998 = vmatpush.msra.mxu0 %v2713
      %5999 = vmatpush.msra.mxu0 %v2709
      %6000 = vmatpush.msra.mxu0 %v2705
      %6001 = vmatpush.msra.mxu0 %v2701
      %6002 = vmatpush.msra.mxu0 %v2697
      %6003 = vmatpush.msra.mxu0 %v2693
      %6004 = vmatpush.msra.mxu0 %v2689
      %6005 = vmatmul.f32.gmra.mxu0 %v5915
      %v6006 = vpop.f32.mrf.mxu0
      %v6007 = vadd.f32 %v5984, %v6006
      %6008 = vmatmul.f32.gmra.mxu0 %v5919
      %v6009 = vpop.f32.mrf.mxu0
      %v6010 = vadd.f32 %v5987, %v6009
      %6011 = vdwg.mxu0
      %6012 = vmatpush.msra.mxu0 %v2558
      %6013 = vmatpush.msra.mxu0 %v2554
      %6014 = vmatpush.msra.mxu0 %v2550
      %6015 = vmatpush.msra.mxu0 %v2546
      %6016 = vmatpush.msra.mxu0 %v2542
      %6017 = vmatpush.msra.mxu0 %v2538
      %6018 = vmatpush.msra.mxu0 %v2534
      %6019 = vmatpush.msra.mxu0 %v2530
      %6020 = vmatpush.msra.mxu0 %v2526
      %6021 = vmatpush.msra.mxu0 %v2522
      %6022 = vmatpush.msra.mxu0 %v2518
      %6023 = vmatpush.msra.mxu0 %v2514
      %6024 = vmatpush.msra.mxu0 %v2510
      %6025 = vmatpush.msra.mxu0 %v2506
      %6026 = vmatpush.msra.mxu0 %v2502
      %6027 = vmatpush.msra.mxu0 %v2498
      %6028 = vmatmul.f32.gmra.mxu0 %v5912
      %v6029 = vpop.f32.mrf.mxu0
      %v6030 = vadd.f32 0.0, %v6029
      %6031 = vmatmul.f32.gmra.mxu0 %v5916
      %v6032 = vpop.f32.mrf.mxu0
      %v6033 = vadd.f32 0.0, %v6032
      %6034 = vdwg.mxu0
      %6035 = vmatpush.msra.mxu0 %v2622
      %6036 = vmatpush.msra.mxu0 %v2618
      %6037 = vmatpush.msra.mxu0 %v2614
      %6038 = vmatpush.msra.mxu0 %v2610
      %6039 = vmatpush.msra.mxu0 %v2606
      %6040 = vmatpush.msra.mxu0 %v2602
      %6041 = vmatpush.msra.mxu0 %v2598
      %6042 = vmatpush.msra.mxu0 %v2594
      %6043 = vmatpush.msra.mxu0 %v2590
      %6044 = vmatpush.msra.mxu0 %v2586
      %6045 = vmatpush.msra.mxu0 %v2582
      %6046 = vmatpush.msra.mxu0 %v2578
      %6047 = vmatpush.msra.mxu0 %v2574
      %6048 = vmatpush.msra.mxu0 %v2570
      %6049 = vmatpush.msra.mxu0 %v2566
      %6050 = vmatpush.msra.mxu0 %v2562
      %6051 = vmatmul.f32.gmra.mxu0 %v5913
      %v6052 = vpop.f32.mrf.mxu0
      %v6053 = vadd.f32 %v6030, %v6052
      %6054 = vmatmul.f32.gmra.mxu0 %v5917
      %v6055 = vpop.f32.mrf.mxu0
      %v6056 = vadd.f32 %v6033, %v6055
      %6057 = vdwg.mxu0
      %6058 = vmatpush.msra.mxu0 %v2686
      %6059 = vmatpush.msra.mxu0 %v2682
      %6060 = vmatpush.msra.mxu0 %v2678
      %6061 = vmatpush.msra.mxu0 %v2674
      %6062 = vmatpush.msra.mxu0 %v2670
      %6063 = vmatpush.msra.mxu0 %v2666
      %6064 = vmatpush.msra.mxu0 %v2662
      %6065 = vmatpush.msra.mxu0 %v2658
      %6066 = vmatpush.msra.mxu0 %v2654
      %6067 = vmatpush.msra.mxu0 %v2650
      %6068 = vmatpush.msra.mxu0 %v2646
      %6069 = vmatpush.msra.mxu0 %v2642
      %6070 = vmatpush.msra.mxu0 %v2638
      %6071 = vmatpush.msra.mxu0 %v2634
      %6072 = vmatpush.msra.mxu0 %v2630
      %6073 = vmatpush.msra.mxu0 %v2626
      %6074 = vmatmul.f32.gmra.mxu0 %v5914
      %v6075 = vpop.f32.mrf.mxu0
      %v6076 = vadd.f32 %v6053, %v6075
      %6077 = vmatmul.f32.gmra.mxu0 %v5918
      %v6078 = vpop.f32.mrf.mxu0
      %v6079 = vadd.f32 %v6056, %v6078
      %6080 = vdwg.mxu0
      %6081 = vmatpush.msra.mxu0 %v2750
      %6082 = vmatpush.msra.mxu0 %v2746
      %6083 = vmatpush.msra.mxu0 %v2742
      %6084 = vmatpush.msra.mxu0 %v2738
      %6085 = vmatpush.msra.mxu0 %v2734
      %6086 = vmatpush.msra.mxu0 %v2730
      %6087 = vmatpush.msra.mxu0 %v2726
      %6088 = vmatpush.msra.mxu0 %v2722
      %6089 = vmatpush.msra.mxu0 %v2718
      %6090 = vmatpush.msra.mxu0 %v2714
      %6091 = vmatpush.msra.mxu0 %v2710
      %6092 = vmatpush.msra.mxu0 %v2706
      %6093 = vmatpush.msra.mxu0 %v2702
      %6094 = vmatpush.msra.mxu0 %v2698
      %6095 = vmatpush.msra.mxu0 %v2694
      %6096 = vmatpush.msra.mxu0 %v2690
      %6097 = vmatmul.f32.gmra.mxu0 %v5915
      %v6098 = vpop.f32.mrf.mxu0
      %v6099 = vadd.f32 %v6076, %v6098
      %6100 = vmatmul.f32.gmra.mxu0 %v5919
      %v6101 = vpop.f32.mrf.mxu0
      %v6102 = vadd.f32 %v6079, %v6101
      %6103 = vdwg.mxu0
      %6104 = vmatpush.msra.mxu0 %v2559
      %6105 = vmatpush.msra.mxu0 %v2555
      %6106 = vmatpush.msra.mxu0 %v2551
      %6107 = vmatpush.msra.mxu0 %v2547
      %6108 = vmatpush.msra.mxu0 %v2543
      %6109 = vmatpush.msra.mxu0 %v2539
      %6110 = vmatpush.msra.mxu0 %v2535
      %6111 = vmatpush.msra.mxu0 %v2531
      %6112 = vmatpush.msra.mxu0 %v2527
      %6113 = vmatpush.msra.mxu0 %v2523
      %6114 = vmatpush.msra.mxu0 %v2519
      %6115 = vmatpush.msra.mxu0 %v2515
      %6116 = vmatpush.msra.mxu0 %v2511
      %6117 = vmatpush.msra.mxu0 %v2507
      %6118 = vmatpush.msra.mxu0 %v2503
      %6119 = vmatpush.msra.mxu0 %v2499
      %6120 = vmatmul.f32.gmra.mxu0 %v5912
      %v6121 = vpop.f32.mrf.mxu0
      %v6122 = vadd.f32 0.0, %v6121
      %6123 = vmatmul.f32.gmra.mxu0 %v5916
      %v6124 = vpop.f32.mrf.mxu0
      %v6125 = vadd.f32 0.0, %v6124
      %6126 = vdwg.mxu0
      %6127 = vmatpush.msra.mxu0 %v2623
      %6128 = vmatpush.msra.mxu0 %v2619
      %6129 = vmatpush.msra.mxu0 %v2615
      %6130 = vmatpush.msra.mxu0 %v2611
      %6131 = vmatpush.msra.mxu0 %v2607
      %6132 = vmatpush.msra.mxu0 %v2603
      %6133 = vmatpush.msra.mxu0 %v2599
      %6134 = vmatpush.msra.mxu0 %v2595
      %6135 = vmatpush.msra.mxu0 %v2591
      %6136 = vmatpush.msra.mxu0 %v2587
      %6137 = vmatpush.msra.mxu0 %v2583
      %6138 = vmatpush.msra.mxu0 %v2579
      %6139 = vmatpush.msra.mxu0 %v2575
      %6140 = vmatpush.msra.mxu0 %v2571
      %6141 = vmatpush.msra.mxu0 %v2567
      %6142 = vmatpush.msra.mxu0 %v2563
      %6143 = vmatmul.f32.gmra.mxu0 %v5913
      %v6144 = vpop.f32.mrf.mxu0
      %v6145 = vadd.f32 %v6122, %v6144
      %6146 = vmatmul.f32.gmra.mxu0 %v5917
      %v6147 = vpop.f32.mrf.mxu0
      %v6148 = vadd.f32 %v6125, %v6147
      %6149 = vdwg.mxu0
      %6150 = vmatpush.msra.mxu0 %v2687
      %6151 = vmatpush.msra.mxu0 %v2683
      %6152 = vmatpush.msra.mxu0 %v2679
      %6153 = vmatpush.msra.mxu0 %v2675
      %6154 = vmatpush.msra.mxu0 %v2671
      %6155 = vmatpush.msra.mxu0 %v2667
      %6156 = vmatpush.msra.mxu0 %v2663
      %6157 = vmatpush.msra.mxu0 %v2659
      %6158 = vmatpush.msra.mxu0 %v2655
      %6159 = vmatpush.msra.mxu0 %v2651
      %6160 = vmatpush.msra.mxu0 %v2647
      %6161 = vmatpush.msra.mxu0 %v2643
      %6162 = vmatpush.msra.mxu0 %v2639
      %6163 = vmatpush.msra.mxu0 %v2635
      %6164 = vmatpush.msra.mxu0 %v2631
      %6165 = vmatpush.msra.mxu0 %v2627
      %6166 = vmatmul.f32.gmra.mxu0 %v5914
      %v6167 = vpop.f32.mrf.mxu0
      %v6168 = vadd.f32 %v6145, %v6167
      %6169 = vmatmul.f32.gmra.mxu0 %v5918
      %v6170 = vpop.f32.mrf.mxu0
      %v6171 = vadd.f32 %v6148, %v6170
      %6172 = vdwg.mxu0
      %6173 = vmatpush.msra.mxu0 %v2751
      %6174 = vmatpush.msra.mxu0 %v2747
      %6175 = vmatpush.msra.mxu0 %v2743
      %6176 = vmatpush.msra.mxu0 %v2739
      %6177 = vmatpush.msra.mxu0 %v2735
      %6178 = vmatpush.msra.mxu0 %v2731
      %6179 = vmatpush.msra.mxu0 %v2727
      %6180 = vmatpush.msra.mxu0 %v2723
      %6181 = vmatpush.msra.mxu0 %v2719
      %6182 = vmatpush.msra.mxu0 %v2715
      %6183 = vmatpush.msra.mxu0 %v2711
      %6184 = vmatpush.msra.mxu0 %v2707
      %6185 = vmatpush.msra.mxu0 %v2703
      %6186 = vmatpush.msra.mxu0 %v2699
      %6187 = vmatpush.msra.mxu0 %v2695
      %6188 = vmatpush.msra.mxu0 %v2691
      %6189 = vmatmul.f32.gmra.mxu0 %v5915
      %v6190 = vpop.f32.mrf.mxu0
      %v6191 = vadd.f32 %v6168, %v6190
      %6192 = vmatmul.f32.gmra.mxu0 %v5919
      %v6193 = vpop.f32.mrf.mxu0
      %v6194 = vadd.f32 %v6171, %v6193
      %6195 = vdwg.mxu0
      %6196 = vmatpush.msra.mxu0 %v2560
      %6197 = vmatpush.msra.mxu0 %v2556
      %6198 = vmatpush.msra.mxu0 %v2552
      %6199 = vmatpush.msra.mxu0 %v2548
      %6200 = vmatpush.msra.mxu0 %v2544
      %6201 = vmatpush.msra.mxu0 %v2540
      %6202 = vmatpush.msra.mxu0 %v2536
      %6203 = vmatpush.msra.mxu0 %v2532
      %6204 = vmatpush.msra.mxu0 %v2528
      %6205 = vmatpush.msra.mxu0 %v2524
      %6206 = vmatpush.msra.mxu0 %v2520
      %6207 = vmatpush.msra.mxu0 %v2516
      %6208 = vmatpush.msra.mxu0 %v2512
      %6209 = vmatpush.msra.mxu0 %v2508
      %6210 = vmatpush.msra.mxu0 %v2504
      %6211 = vmatpush.msra.mxu0 %v2500
      %6212 = vmatmul.f32.gmra.mxu0 %v5912
      %v6213 = vpop.f32.mrf.mxu0
      %v6214 = vadd.f32 0.0, %v6213
      %6215 = vmatmul.f32.gmra.mxu0 %v5916
      %v6216 = vpop.f32.mrf.mxu0
      %v6217 = vadd.f32 0.0, %v6216
      %6218 = vdwg.mxu0
      %6219 = vmatpush.msra.mxu0 %v2624
      %6220 = vmatpush.msra.mxu0 %v2620
      %6221 = vmatpush.msra.mxu0 %v2616
      %6222 = vmatpush.msra.mxu0 %v2612
      %6223 = vmatpush.msra.mxu0 %v2608
      %6224 = vmatpush.msra.mxu0 %v2604
      %6225 = vmatpush.msra.mxu0 %v2600
      %6226 = vmatpush.msra.mxu0 %v2596
      %6227 = vmatpush.msra.mxu0 %v2592
      %6228 = vmatpush.msra.mxu0 %v2588
      %6229 = vmatpush.msra.mxu0 %v2584
      %6230 = vmatpush.msra.mxu0 %v2580
      %6231 = vmatpush.msra.mxu0 %v2576
      %6232 = vmatpush.msra.mxu0 %v2572
      %6233 = vmatpush.msra.mxu0 %v2568
      %6234 = vmatpush.msra.mxu0 %v2564
      %6235 = vmatmul.f32.gmra.mxu0 %v5913
      %v6236 = vpop.f32.mrf.mxu0
      %v6237 = vadd.f32 %v6214, %v6236
      %6238 = vmatmul.f32.gmra.mxu0 %v5917
      %v6239 = vpop.f32.mrf.mxu0
      %v6240 = vadd.f32 %v6217, %v6239
      %6241 = vdwg.mxu0
      %6242 = vmatpush.msra.mxu0 %v2688
      %6243 = vmatpush.msra.mxu0 %v2684
      %6244 = vmatpush.msra.mxu0 %v2680
      %6245 = vmatpush.msra.mxu0 %v2676
      %6246 = vmatpush.msra.mxu0 %v2672
      %6247 = vmatpush.msra.mxu0 %v2668
      %6248 = vmatpush.msra.mxu0 %v2664
      %6249 = vmatpush.msra.mxu0 %v2660
      %6250 = vmatpush.msra.mxu0 %v2656
      %6251 = vmatpush.msra.mxu0 %v2652
      %6252 = vmatpush.msra.mxu0 %v2648
      %6253 = vmatpush.msra.mxu0 %v2644
      %6254 = vmatpush.msra.mxu0 %v2640
      %6255 = vmatpush.msra.mxu0 %v2636
      %6256 = vmatpush.msra.mxu0 %v2632
      %6257 = vmatpush.msra.mxu0 %v2628
      %6258 = vmatmul.f32.gmra.mxu0 %v5914
      %v6259 = vpop.f32.mrf.mxu0
      %v6260 = vadd.f32 %v6237, %v6259
      %6261 = vmatmul.f32.gmra.mxu0 %v5918
      %v6262 = vpop.f32.mrf.mxu0
      %v6263 = vadd.f32 %v6240, %v6262
      %6264 = vdwg.mxu0
      %6265 = vmatpush.msra.mxu0 %v2752
      %6266 = vmatpush.msra.mxu0 %v2748
      %6267 = vmatpush.msra.mxu0 %v2744
      %6268 = vmatpush.msra.mxu0 %v2740
      %6269 = vmatpush.msra.mxu0 %v2736
      %6270 = vmatpush.msra.mxu0 %v2732
      %6271 = vmatpush.msra.mxu0 %v2728
      %6272 = vmatpush.msra.mxu0 %v2724
      %6273 = vmatpush.msra.mxu0 %v2720
      %6274 = vmatpush.msra.mxu0 %v2716
      %6275 = vmatpush.msra.mxu0 %v2712
      %6276 = vmatpush.msra.mxu0 %v2708
      %6277 = vmatpush.msra.mxu0 %v2704
      %6278 = vmatpush.msra.mxu0 %v2700
      %6279 = vmatpush.msra.mxu0 %v2696
      %6280 = vmatpush.msra.mxu0 %v2692
      %6281 = vmatmul.f32.gmra.mxu0 %v5915
      %v6282 = vpop.f32.mrf.mxu0
      %v6283 = vadd.f32 %v6260, %v6282
      %6284 = vmatmul.f32.gmra.mxu0 %v5919
      %v6285 = vpop.f32.mrf.mxu0
      %v6286 = vadd.f32 %v6263, %v6285
      %6287 = vdwg.mxu0
      %v6288 = vadd.f32 %v6007, %v6010
      %v6289 = vrot.slane %v6288, 4
      %v6290 = vadd.f32 %v6288, %v6289
      %v6291 = vrot.slane %v6290, 2
      %v6292 = vadd.f32 %v6290, %v6291
      %v6293 = vrot.slane %v6292, 1
      %v6294 = vadd.f32 %v6292, %v6293
      %v6295 = vadd.f32 %v6099, %v6102
      %v6296 = vrot.slane %v6295, 4
      %v6297 = vadd.f32 %v6295, %v6296
      %v6298 = vrot.slane %v6297, 2
      %v6299 = vadd.f32 %v6297, %v6298
      %v6300 = vrot.slane %v6299, 1
      %v6301 = vadd.f32 %v6299, %v6300
      %v6302 = vadd.f32 %v6191, %v6194
      %v6303 = vrot.slane %v6302, 4
      %v6304 = vadd.f32 %v6302, %v6303
      %v6305 = vrot.slane %v6304, 2
      %v6306 = vadd.f32 %v6304, %v6305
      %v6307 = vrot.slane %v6306, 1
      %v6308 = vadd.f32 %v6306, %v6307
      %v6309 = vadd.f32 %v6283, %v6286
      %v6310 = vrot.slane %v6309, 4
      %v6311 = vadd.f32 %v6309, %v6310
      %v6312 = vrot.slane %v6311, 2
      %v6313 = vadd.f32 %v6311, %v6312
      %v6314 = vrot.slane %v6313, 1
      %v6315 = vadd.f32 %v6313, %v6314
      %v6316 = vmul.f32 %v5912, %v5912
      %v6317 = vmul.f32 %v5913, %v5913
      %v6318 = vmul.f32 %v5914, %v5914
      %v6319 = vmul.f32 %v5915, %v5915
      %v6320 = vmul.f32 %v5916, %v5916
      %v6321 = vmul.f32 %v5917, %v5917
      %v6322 = vmul.f32 %v5918, %v5918
      %v6323 = vmul.f32 %v5919, %v5919
      %6324 = vmatpush.msra.mxu0 %v2557
      %6325 = vmatpush.msra.mxu0 %v2553
      %6326 = vmatpush.msra.mxu0 %v2549
      %6327 = vmatpush.msra.mxu0 %v2545
      %6328 = vmatpush.msra.mxu0 %v2541
      %6329 = vmatpush.msra.mxu0 %v2537
      %6330 = vmatpush.msra.mxu0 %v2533
      %6331 = vmatpush.msra.mxu0 %v2529
      %6332 = vmatpush.msra.mxu0 %v2525
      %6333 = vmatpush.msra.mxu0 %v2521
      %6334 = vmatpush.msra.mxu0 %v2517
      %6335 = vmatpush.msra.mxu0 %v2513
      %6336 = vmatpush.msra.mxu0 %v2509
      %6337 = vmatpush.msra.mxu0 %v2505
      %6338 = vmatpush.msra.mxu0 %v2501
      %6339 = vmatpush.msra.mxu0 %v2497
      %6340 = vmatmul.f32.gmra.mxu0 %v6316
      %v6341 = vpop.f32.mrf.mxu0
      %v6342 = vadd.f32 0.0, %v6341
      %6343 = vmatmul.f32.gmra.mxu0 %v6320
      %v6344 = vpop.f32.mrf.mxu0
      %v6345 = vadd.f32 0.0, %v6344
      %6346 = vdwg.mxu0
      %6347 = vmatpush.msra.mxu0 %v2621
      %6348 = vmatpush.msra.mxu0 %v2617
      %6349 = vmatpush.msra.mxu0 %v2613
      %6350 = vmatpush.msra.mxu0 %v2609
      %6351 = vmatpush.msra.mxu0 %v2605
      %6352 = vmatpush.msra.mxu0 %v2601
      %6353 = vmatpush.msra.mxu0 %v2597
      %6354 = vmatpush.msra.mxu0 %v2593
      %6355 = vmatpush.msra.mxu0 %v2589
      %6356 = vmatpush.msra.mxu0 %v2585
      %6357 = vmatpush.msra.mxu0 %v2581
      %6358 = vmatpush.msra.mxu0 %v2577
      %6359 = vmatpush.msra.mxu0 %v2573
      %6360 = vmatpush.msra.mxu0 %v2569
      %6361 = vmatpush.msra.mxu0 %v2565
      %6362 = vmatpush.msra.mxu0 %v2561
      %6363 = vmatmul.f32.gmra.mxu0 %v6317
      %v6364 = vpop.f32.mrf.mxu0
      %v6365 = vadd.f32 %v6342, %v6364
      %6366 = vmatmul.f32.gmra.mxu0 %v6321
      %v6367 = vpop.f32.mrf.mxu0
      %v6368 = vadd.f32 %v6345, %v6367
      %6369 = vdwg.mxu0
      %6370 = vmatpush.msra.mxu0 %v2685
      %6371 = vmatpush.msra.mxu0 %v2681
      %6372 = vmatpush.msra.mxu0 %v2677
      %6373 = vmatpush.msra.mxu0 %v2673
      %6374 = vmatpush.msra.mxu0 %v2669
      %6375 = vmatpush.msra.mxu0 %v2665
      %6376 = vmatpush.msra.mxu0 %v2661
      %6377 = vmatpush.msra.mxu0 %v2657
      %6378 = vmatpush.msra.mxu0 %v2653
      %6379 = vmatpush.msra.mxu0 %v2649
      %6380 = vmatpush.msra.mxu0 %v2645
      %6381 = vmatpush.msra.mxu0 %v2641
      %6382 = vmatpush.msra.mxu0 %v2637
      %6383 = vmatpush.msra.mxu0 %v2633
      %6384 = vmatpush.msra.mxu0 %v2629
      %6385 = vmatpush.msra.mxu0 %v2625
      %6386 = vmatmul.f32.gmra.mxu0 %v6318
      %v6387 = vpop.f32.mrf.mxu0
      %v6388 = vadd.f32 %v6365, %v6387
      %6389 = vmatmul.f32.gmra.mxu0 %v6322
      %v6390 = vpop.f32.mrf.mxu0
      %v6391 = vadd.f32 %v6368, %v6390
      %6392 = vdwg.mxu0
      %6393 = vmatpush.msra.mxu0 %v2749
      %6394 = vmatpush.msra.mxu0 %v2745
      %6395 = vmatpush.msra.mxu0 %v2741
      %6396 = vmatpush.msra.mxu0 %v2737
      %6397 = vmatpush.msra.mxu0 %v2733
      %6398 = vmatpush.msra.mxu0 %v2729
      %6399 = vmatpush.msra.mxu0 %v2725
      %6400 = vmatpush.msra.mxu0 %v2721
      %6401 = vmatpush.msra.mxu0 %v2717
      %6402 = vmatpush.msra.mxu0 %v2713
      %6403 = vmatpush.msra.mxu0 %v2709
      %6404 = vmatpush.msra.mxu0 %v2705
      %6405 = vmatpush.msra.mxu0 %v2701
      %6406 = vmatpush.msra.mxu0 %v2697
      %6407 = vmatpush.msra.mxu0 %v2693
      %6408 = vmatpush.msra.mxu0 %v2689
      %6409 = vmatmul.f32.gmra.mxu0 %v6319
      %v6410 = vpop.f32.mrf.mxu0
      %v6411 = vadd.f32 %v6388, %v6410
      %6412 = vmatmul.f32.gmra.mxu0 %v6323
      %v6413 = vpop.f32.mrf.mxu0
      %v6414 = vadd.f32 %v6391, %v6413
      %6415 = vdwg.mxu0
      %6416 = vmatpush.msra.mxu0 %v2558
      %6417 = vmatpush.msra.mxu0 %v2554
      %6418 = vmatpush.msra.mxu0 %v2550
      %6419 = vmatpush.msra.mxu0 %v2546
      %6420 = vmatpush.msra.mxu0 %v2542
      %6421 = vmatpush.msra.mxu0 %v2538
      %6422 = vmatpush.msra.mxu0 %v2534
      %6423 = vmatpush.msra.mxu0 %v2530
      %6424 = vmatpush.msra.mxu0 %v2526
      %6425 = vmatpush.msra.mxu0 %v2522
      %6426 = vmatpush.msra.mxu0 %v2518
      %6427 = vmatpush.msra.mxu0 %v2514
      %6428 = vmatpush.msra.mxu0 %v2510
      %6429 = vmatpush.msra.mxu0 %v2506
      %6430 = vmatpush.msra.mxu0 %v2502
      %6431 = vmatpush.msra.mxu0 %v2498
      %6432 = vmatmul.f32.gmra.mxu0 %v6316
      %v6433 = vpop.f32.mrf.mxu0
      %v6434 = vadd.f32 0.0, %v6433
      %6435 = vmatmul.f32.gmra.mxu0 %v6320
      %v6436 = vpop.f32.mrf.mxu0
      %v6437 = vadd.f32 0.0, %v6436
      %6438 = vdwg.mxu0
      %6439 = vmatpush.msra.mxu0 %v2622
      %6440 = vmatpush.msra.mxu0 %v2618
      %6441 = vmatpush.msra.mxu0 %v2614
      %6442 = vmatpush.msra.mxu0 %v2610
      %6443 = vmatpush.msra.mxu0 %v2606
      %6444 = vmatpush.msra.mxu0 %v2602
      %6445 = vmatpush.msra.mxu0 %v2598
      %6446 = vmatpush.msra.mxu0 %v2594
      %6447 = vmatpush.msra.mxu0 %v2590
      %6448 = vmatpush.msra.mxu0 %v2586
      %6449 = vmatpush.msra.mxu0 %v2582
      %6450 = vmatpush.msra.mxu0 %v2578
      %6451 = vmatpush.msra.mxu0 %v2574
      %6452 = vmatpush.msra.mxu0 %v2570
      %6453 = vmatpush.msra.mxu0 %v2566
      %6454 = vmatpush.msra.mxu0 %v2562
      %6455 = vmatmul.f32.gmra.mxu0 %v6317
      %v6456 = vpop.f32.mrf.mxu0
      %v6457 = vadd.f32 %v6434, %v6456
      %6458 = vmatmul.f32.gmra.mxu0 %v6321
      %v6459 = vpop.f32.mrf.mxu0
      %v6460 = vadd.f32 %v6437, %v6459
      %6461 = vdwg.mxu0
      %6462 = vmatpush.msra.mxu0 %v2686
      %6463 = vmatpush.msra.mxu0 %v2682
      %6464 = vmatpush.msra.mxu0 %v2678
      %6465 = vmatpush.msra.mxu0 %v2674
      %6466 = vmatpush.msra.mxu0 %v2670
      %6467 = vmatpush.msra.mxu0 %v2666
      %6468 = vmatpush.msra.mxu0 %v2662
      %6469 = vmatpush.msra.mxu0 %v2658
      %6470 = vmatpush.msra.mxu0 %v2654
      %6471 = vmatpush.msra.mxu0 %v2650
      %6472 = vmatpush.msra.mxu0 %v2646
      %6473 = vmatpush.msra.mxu0 %v2642
      %6474 = vmatpush.msra.mxu0 %v2638
      %6475 = vmatpush.msra.mxu0 %v2634
      %6476 = vmatpush.msra.mxu0 %v2630
      %6477 = vmatpush.msra.mxu0 %v2626
      %6478 = vmatmul.f32.gmra.mxu0 %v6318
      %v6479 = vpop.f32.mrf.mxu0
      %v6480 = vadd.f32 %v6457, %v6479
      %6481 = vmatmul.f32.gmra.mxu0 %v6322
      %v6482 = vpop.f32.mrf.mxu0
      %v6483 = vadd.f32 %v6460, %v6482
      %6484 = vdwg.mxu0
      %6485 = vmatpush.msra.mxu0 %v2750
      %6486 = vmatpush.msra.mxu0 %v2746
      %6487 = vmatpush.msra.mxu0 %v2742
      %6488 = vmatpush.msra.mxu0 %v2738
      %6489 = vmatpush.msra.mxu0 %v2734
      %6490 = vmatpush.msra.mxu0 %v2730
      %6491 = vmatpush.msra.mxu0 %v2726
      %6492 = vmatpush.msra.mxu0 %v2722
      %6493 = vmatpush.msra.mxu0 %v2718
      %6494 = vmatpush.msra.mxu0 %v2714
      %6495 = vmatpush.msra.mxu0 %v2710
      %6496 = vmatpush.msra.mxu0 %v2706
      %6497 = vmatpush.msra.mxu0 %v2702
      %6498 = vmatpush.msra.mxu0 %v2698
      %6499 = vmatpush.msra.mxu0 %v2694
      %6500 = vmatpush.msra.mxu0 %v2690
      %6501 = vmatmul.f32.gmra.mxu0 %v6319
      %v6502 = vpop.f32.mrf.mxu0
      %v6503 = vadd.f32 %v6480, %v6502
      %6504 = vmatmul.f32.gmra.mxu0 %v6323
      %v6505 = vpop.f32.mrf.mxu0
      %v6506 = vadd.f32 %v6483, %v6505
      %6507 = vdwg.mxu0
      %6508 = vmatpush.msra.mxu0 %v2559
      %6509 = vmatpush.msra.mxu0 %v2555
      %6510 = vmatpush.msra.mxu0 %v2551
      %6511 = vmatpush.msra.mxu0 %v2547
      %6512 = vmatpush.msra.mxu0 %v2543
      %6513 = vmatpush.msra.mxu0 %v2539
      %6514 = vmatpush.msra.mxu0 %v2535
      %6515 = vmatpush.msra.mxu0 %v2531
      %6516 = vmatpush.msra.mxu0 %v2527
      %6517 = vmatpush.msra.mxu0 %v2523
      %6518 = vmatpush.msra.mxu0 %v2519
      %6519 = vmatpush.msra.mxu0 %v2515
      %6520 = vmatpush.msra.mxu0 %v2511
      %6521 = vmatpush.msra.mxu0 %v2507
      %6522 = vmatpush.msra.mxu0 %v2503
      %6523 = vmatpush.msra.mxu0 %v2499
      %6524 = vmatmul.f32.gmra.mxu0 %v6316
      %v6525 = vpop.f32.mrf.mxu0
      %v6526 = vadd.f32 0.0, %v6525
      %6527 = vmatmul.f32.gmra.mxu0 %v6320
      %v6528 = vpop.f32.mrf.mxu0
      %v6529 = vadd.f32 0.0, %v6528
      %6530 = vdwg.mxu0
      %6531 = vmatpush.msra.mxu0 %v2623
      %6532 = vmatpush.msra.mxu0 %v2619
      %6533 = vmatpush.msra.mxu0 %v2615
      %6534 = vmatpush.msra.mxu0 %v2611
      %6535 = vmatpush.msra.mxu0 %v2607
      %6536 = vmatpush.msra.mxu0 %v2603
      %6537 = vmatpush.msra.mxu0 %v2599
      %6538 = vmatpush.msra.mxu0 %v2595
      %6539 = vmatpush.msra.mxu0 %v2591
      %6540 = vmatpush.msra.mxu0 %v2587
      %6541 = vmatpush.msra.mxu0 %v2583
      %6542 = vmatpush.msra.mxu0 %v2579
      %6543 = vmatpush.msra.mxu0 %v2575
      %6544 = vmatpush.msra.mxu0 %v2571
      %6545 = vmatpush.msra.mxu0 %v2567
      %6546 = vmatpush.msra.mxu0 %v2563
      %6547 = vmatmul.f32.gmra.mxu0 %v6317
      %v6548 = vpop.f32.mrf.mxu0
      %v6549 = vadd.f32 %v6526, %v6548
      %6550 = vmatmul.f32.gmra.mxu0 %v6321
      %v6551 = vpop.f32.mrf.mxu0
      %v6552 = vadd.f32 %v6529, %v6551
      %6553 = vdwg.mxu0
      %6554 = vmatpush.msra.mxu0 %v2687
      %6555 = vmatpush.msra.mxu0 %v2683
      %6556 = vmatpush.msra.mxu0 %v2679
      %6557 = vmatpush.msra.mxu0 %v2675
      %6558 = vmatpush.msra.mxu0 %v2671
      %6559 = vmatpush.msra.mxu0 %v2667
      %6560 = vmatpush.msra.mxu0 %v2663
      %6561 = vmatpush.msra.mxu0 %v2659
      %6562 = vmatpush.msra.mxu0 %v2655
      %6563 = vmatpush.msra.mxu0 %v2651
      %6564 = vmatpush.msra.mxu0 %v2647
      %6565 = vmatpush.msra.mxu0 %v2643
      %6566 = vmatpush.msra.mxu0 %v2639
      %6567 = vmatpush.msra.mxu0 %v2635
      %6568 = vmatpush.msra.mxu0 %v2631
      %6569 = vmatpush.msra.mxu0 %v2627
      %6570 = vmatmul.f32.gmra.mxu0 %v6318
      %v6571 = vpop.f32.mrf.mxu0
      %v6572 = vadd.f32 %v6549, %v6571
      %6573 = vmatmul.f32.gmra.mxu0 %v6322
      %v6574 = vpop.f32.mrf.mxu0
      %v6575 = vadd.f32 %v6552, %v6574
      %6576 = vdwg.mxu0
      %6577 = vmatpush.msra.mxu0 %v2751
      %6578 = vmatpush.msra.mxu0 %v2747
      %6579 = vmatpush.msra.mxu0 %v2743
      %6580 = vmatpush.msra.mxu0 %v2739
      %6581 = vmatpush.msra.mxu0 %v2735
      %6582 = vmatpush.msra.mxu0 %v2731
      %6583 = vmatpush.msra.mxu0 %v2727
      %6584 = vmatpush.msra.mxu0 %v2723
      %6585 = vmatpush.msra.mxu0 %v2719
      %6586 = vmatpush.msra.mxu0 %v2715
      %6587 = vmatpush.msra.mxu0 %v2711
      %6588 = vmatpush.msra.mxu0 %v2707
      %6589 = vmatpush.msra.mxu0 %v2703
      %6590 = vmatpush.msra.mxu0 %v2699
      %6591 = vmatpush.msra.mxu0 %v2695
      %6592 = vmatpush.msra.mxu0 %v2691
      %6593 = vmatmul.f32.gmra.mxu0 %v6319
      %v6594 = vpop.f32.mrf.mxu0
      %v6595 = vadd.f32 %v6572, %v6594
      %6596 = vmatmul.f32.gmra.mxu0 %v6323
      %v6597 = vpop.f32.mrf.mxu0
      %v6598 = vadd.f32 %v6575, %v6597
      %6599 = vdwg.mxu0
      %6600 = vmatpush.msra.mxu0 %v2560
      %6601 = vmatpush.msra.mxu0 %v2556
      %6602 = vmatpush.msra.mxu0 %v2552
      %6603 = vmatpush.msra.mxu0 %v2548
      %6604 = vmatpush.msra.mxu0 %v2544
      %6605 = vmatpush.msra.mxu0 %v2540
      %6606 = vmatpush.msra.mxu0 %v2536
      %6607 = vmatpush.msra.mxu0 %v2532
      %6608 = vmatpush.msra.mxu0 %v2528
      %6609 = vmatpush.msra.mxu0 %v2524
      %6610 = vmatpush.msra.mxu0 %v2520
      %6611 = vmatpush.msra.mxu0 %v2516
      %6612 = vmatpush.msra.mxu0 %v2512
      %6613 = vmatpush.msra.mxu0 %v2508
      %6614 = vmatpush.msra.mxu0 %v2504
      %6615 = vmatpush.msra.mxu0 %v2500
      %6616 = vmatmul.f32.gmra.mxu0 %v6316
      %v6617 = vpop.f32.mrf.mxu0
      %v6618 = vadd.f32 0.0, %v6617
      %6619 = vmatmul.f32.gmra.mxu0 %v6320
      %v6620 = vpop.f32.mrf.mxu0
      %v6621 = vadd.f32 0.0, %v6620
      %6622 = vdwg.mxu0
      %6623 = vmatpush.msra.mxu0 %v2624
      %6624 = vmatpush.msra.mxu0 %v2620
      %6625 = vmatpush.msra.mxu0 %v2616
      %6626 = vmatpush.msra.mxu0 %v2612
      %6627 = vmatpush.msra.mxu0 %v2608
      %6628 = vmatpush.msra.mxu0 %v2604
      %6629 = vmatpush.msra.mxu0 %v2600
      %6630 = vmatpush.msra.mxu0 %v2596
      %6631 = vmatpush.msra.mxu0 %v2592
      %6632 = vmatpush.msra.mxu0 %v2588
      %6633 = vmatpush.msra.mxu0 %v2584
      %6634 = vmatpush.msra.mxu0 %v2580
      %6635 = vmatpush.msra.mxu0 %v2576
      %6636 = vmatpush.msra.mxu0 %v2572
      %6637 = vmatpush.msra.mxu0 %v2568
      %6638 = vmatpush.msra.mxu0 %v2564
      %6639 = vmatmul.f32.gmra.mxu0 %v6317
      %v6640 = vpop.f32.mrf.mxu0
      %v6641 = vadd.f32 %v6618, %v6640
      %6642 = vmatmul.f32.gmra.mxu0 %v6321
      %v6643 = vpop.f32.mrf.mxu0
      %v6644 = vadd.f32 %v6621, %v6643
      %6645 = vdwg.mxu0
      %6646 = vmatpush.msra.mxu0 %v2688
      %6647 = vmatpush.msra.mxu0 %v2684
      %6648 = vmatpush.msra.mxu0 %v2680
      %6649 = vmatpush.msra.mxu0 %v2676
      %6650 = vmatpush.msra.mxu0 %v2672
      %6651 = vmatpush.msra.mxu0 %v2668
      %6652 = vmatpush.msra.mxu0 %v2664
      %6653 = vmatpush.msra.mxu0 %v2660
      %6654 = vmatpush.msra.mxu0 %v2656
      %6655 = vmatpush.msra.mxu0 %v2652
      %6656 = vmatpush.msra.mxu0 %v2648
      %6657 = vmatpush.msra.mxu0 %v2644
      %6658 = vmatpush.msra.mxu0 %v2640
      %6659 = vmatpush.msra.mxu0 %v2636
      %6660 = vmatpush.msra.mxu0 %v2632
      %6661 = vmatpush.msra.mxu0 %v2628
      %6662 = vmatmul.f32.gmra.mxu0 %v6318
      %v6663 = vpop.f32.mrf.mxu0
      %v6664 = vadd.f32 %v6641, %v6663
      %6665 = vmatmul.f32.gmra.mxu0 %v6322
      %v6666 = vpop.f32.mrf.mxu0
      %v6667 = vadd.f32 %v6644, %v6666
      %6668 = vdwg.mxu0
      %6669 = vmatpush.msra.mxu0 %v2752
      %6670 = vmatpush.msra.mxu0 %v2748
      %6671 = vmatpush.msra.mxu0 %v2744
      %6672 = vmatpush.msra.mxu0 %v2740
      %6673 = vmatpush.msra.mxu0 %v2736
      %6674 = vmatpush.msra.mxu0 %v2732
      %6675 = vmatpush.msra.mxu0 %v2728
      %6676 = vmatpush.msra.mxu0 %v2724
      %6677 = vmatpush.msra.mxu0 %v2720
      %6678 = vmatpush.msra.mxu0 %v2716
      %6679 = vmatpush.msra.mxu0 %v2712
      %6680 = vmatpush.msra.mxu0 %v2708
      %6681 = vmatpush.msra.mxu0 %v2704
      %6682 = vmatpush.msra.mxu0 %v2700
      %6683 = vmatpush.msra.mxu0 %v2696
      %6684 = vmatpush.msra.mxu0 %v2692
      %6685 = vmatmul.f32.gmra.mxu0 %v6319
      %v6686 = vpop.f32.mrf.mxu0
      %v6687 = vadd.f32 %v6664, %v6686
      %6688 = vmatmul.f32.gmra.mxu0 %v6323
      %v6689 = vpop.f32.mrf.mxu0
      %v6690 = vadd.f32 %v6667, %v6689
      %6691 = vdwg.mxu0
      %v6692 = vadd.f32 %v6411, %v6414
      %v6693 = vrot.slane %v6692, 4
      %v6694 = vadd.f32 %v6692, %v6693
      %v6695 = vrot.slane %v6694, 2
      %v6696 = vadd.f32 %v6694, %v6695
      %v6697 = vrot.slane %v6696, 1
      %v6698 = vadd.f32 %v6696, %v6697
      %v6699 = vadd.f32 %v6503, %v6506
      %v6700 = vrot.slane %v6699, 4
      %v6701 = vadd.f32 %v6699, %v6700
      %v6702 = vrot.slane %v6701, 2
      %v6703 = vadd.f32 %v6701, %v6702
      %v6704 = vrot.slane %v6703, 1
      %v6705 = vadd.f32 %v6703, %v6704
      %v6706 = vadd.f32 %v6595, %v6598
      %v6707 = vrot.slane %v6706, 4
      %v6708 = vadd.f32 %v6706, %v6707
      %v6709 = vrot.slane %v6708, 2
      %v6710 = vadd.f32 %v6708, %v6709
      %v6711 = vrot.slane %v6710, 1
      %v6712 = vadd.f32 %v6710, %v6711
      %v6713 = vadd.f32 %v6687, %v6690
      %v6714 = vrot.slane %v6713, 4
      %v6715 = vadd.f32 %v6713, %v6714
      %v6716 = vrot.slane %v6715, 2
      %v6717 = vadd.f32 %v6715, %v6716
      %v6718 = vrot.slane %v6717, 1
      %v6719 = vadd.f32 %v6717, %v6718
      %v6720 = vmul.f32 %v6294, %v6294
      %v6721 = vmul.f32 %v6301, %v6301
      %v6722 = vmul.f32 %v6308, %v6308
      %v6723 = vmul.f32 %v6315, %v6315
      %v6724 = vsub.f32 %v6698, %v6720
      %v6725 = vsub.f32 %v6705, %v6721
      %v6726 = vsub.f32 %v6712, %v6722
      %v6727 = vsub.f32 %v6719, %v6723
      %v6728 = vmax.f32 %v6724, 0.0
      %v6729 = vmax.f32 %v6725, 0.0
      %v6730 = vmax.f32 %v6726, 0.0
      %v6731 = vmax.f32 %v6727, 0.0
      %v6732 = vadd.f32 %v6728, 1e-05
      %v6733 = vadd.f32 %v6729, 1e-05
      %v6734 = vadd.f32 %v6730, 1e-05
      %v6735 = vadd.f32 %v6731, 1e-05
      %v6736 = vrsqrt.pop %v6732
      %v6737 = vmul.f32 %v6736, %v6732
      %v6738 = vmul.f32 %v6737, %v6736
      %v6739 = vmul.f32 0.5, %v6738
      %v6740 = vsub.f32 1.5, %v6739
      %v6741 = vmul.f32 %v6736, %v6740
      %vm6742 = vweird.f32 %v6732
      %vm6743 = vweird.f32 %v6736
      %vm6744 = vmor %vm6742, %vm6743
      %v6745 = vsel %vm6744, %v6736, %v6741
      %v6746 = vrsqrt.pop %v6733
      %v6747 = vmul.f32 %v6746, %v6733
      %v6748 = vmul.f32 %v6747, %v6746
      %v6749 = vmul.f32 0.5, %v6748
      %v6750 = vsub.f32 1.5, %v6749
      %v6751 = vmul.f32 %v6746, %v6750
      %vm6752 = vweird.f32 %v6733
      %vm6753 = vweird.f32 %v6746
      %vm6754 = vmor %vm6752, %vm6753
      %v6755 = vsel %vm6754, %v6746, %v6751
      %v6756 = vrsqrt.pop %v6734
      %v6757 = vmul.f32 %v6756, %v6734
      %v6758 = vmul.f32 %v6757, %v6756
      %v6759 = vmul.f32 0.5, %v6758
      %v6760 = vsub.f32 1.5, %v6759
      %v6761 = vmul.f32 %v6756, %v6760
      %vm6762 = vweird.f32 %v6734
      %vm6763 = vweird.f32 %v6756
      %vm6764 = vmor %vm6762, %vm6763
      %v6765 = vsel %vm6764, %v6756, %v6761
      %v6766 = vrsqrt.pop %v6735
      %v6767 = vmul.f32 %v6766, %v6735
      %v6768 = vmul.f32 %v6767, %v6766
      %v6769 = vmul.f32 0.5, %v6768
      %v6770 = vsub.f32 1.5, %v6769
      %v6771 = vmul.f32 %v6766, %v6770
      %vm6772 = vweird.f32 %v6735
      %vm6773 = vweird.f32 %v6766
      %vm6774 = vmor %vm6772, %vm6773
      %v6775 = vsel %vm6774, %v6766, %v6771
      %v6776 = vld [vmem:[%s9] sm:$0xf]
      %v6781 = vrot.slane %v6755, 7
      %v6782 = vrot.slane %v6765, 6
      %v6783 = vrot.slane %v6775, 5
      %v6784 = vsel %vm3617, %v6745, %v6781
      %v6785 = vsel %vm3619, %v6782, %v6783
      %v6786 = vsel %vm3621, %v6784, %v6785
      %v6788 = vmul.f32 %v6776, %v6786
      %v6789 = vld [vmem:[%s10] sm:$0xf]
      %v6791 = vperm.slane %v6788, 0
      %v6792 = vperm.slane %v6788, 1
      %v6793 = vperm.slane %v6788, 2
      %v6794 = vperm.slane %v6788, 3
      %v6799 = vmul.f32 %v6294, %v6791
      %v6800 = vmul.f32 %v6301, %v6792
      %v6801 = vmul.f32 %v6308, %v6793
      %v6802 = vmul.f32 %v6315, %v6794
      %v6807 = vrot.slane %v6800, 7
      %v6808 = vrot.slane %v6801, 6
      %v6809 = vrot.slane %v6802, 5
      %v6810 = vsel %vm3617, %v6799, %v6807
      %v6811 = vsel %vm3619, %v6808, %v6809
      %v6812 = vsel %vm3621, %v6810, %v6811
      %v6814 = vsub.f32 %v6789, %v6812
      %v6815 = vmul.f32 %v5912, %v6791
      %v6816 = vmul.f32 %v5913, %v6792
      %v6817 = vmul.f32 %v5914, %v6793
      %v6818 = vmul.f32 %v5915, %v6794
      %v6819 = vmul.f32 %v5916, %v6791
      %v6820 = vmul.f32 %v5917, %v6792
      %v6821 = vmul.f32 %v5918, %v6793
      %v6822 = vmul.f32 %v5919, %v6794
      %v6824 = vperm.slane %v6814, 0
      %v6825 = vperm.slane %v6814, 1
      %v6826 = vperm.slane %v6814, 2
      %v6827 = vperm.slane %v6814, 3
      %v6832 = vadd.f32 %v6815, %v6824
      %v6833 = vadd.f32 %v6816, %v6825
      %v6834 = vadd.f32 %v6817, %v6826
      %v6835 = vadd.f32 %v6818, %v6827
      %v6836 = vadd.f32 %v6819, %v6824
      %v6837 = vadd.f32 %v6820, %v6825
      %v6838 = vadd.f32 %v6821, %v6826
      %v6839 = vadd.f32 %v6822, %v6827
      %v6840 = vxor.u32 %v6832, 2147483648
      %v6841 = vxor.u32 %v6833, 2147483648
      %v6842 = vxor.u32 %v6834, 2147483648
      %v6843 = vxor.u32 %v6835, 2147483648
      %v6844 = vxor.u32 %v6836, 2147483648
      %v6845 = vxor.u32 %v6837, 2147483648
      %v6846 = vxor.u32 %v6838, 2147483648
      %v6847 = vxor.u32 %v6839, 2147483648
      %v6848 = vmul.f32 %v6840, 1.442695
      %v6849 = vpow.pop %v6848
      %v6850 = vmul.f32 %v6841, 1.442695
      %v6851 = vpow.pop %v6850
      %v6852 = vmul.f32 %v6842, 1.442695
      %v6853 = vpow.pop %v6852
      %v6854 = vmul.f32 %v6843, 1.442695
      %v6855 = vpow.pop %v6854
      %v6856 = vmul.f32 %v6844, 1.442695
      %v6857 = vpow.pop %v6856
      %v6858 = vmul.f32 %v6845, 1.442695
      %v6859 = vpow.pop %v6858
      %v6860 = vmul.f32 %v6846, 1.442695
      %v6861 = vpow.pop %v6860
      %v6862 = vmul.f32 %v6847, 1.442695
      %v6863 = vpow.pop %v6862
      %v6864 = vadd.f32 %v6849, 1.0
      %v6865 = vadd.f32 %v6851, 1.0
      %v6866 = vadd.f32 %v6853, 1.0
      %v6867 = vadd.f32 %v6855, 1.0
      %v6868 = vadd.f32 %v6857, 1.0
      %v6869 = vadd.f32 %v6859, 1.0
      %v6870 = vadd.f32 %v6861, 1.0
      %v6871 = vadd.f32 %v6863, 1.0
      %v6872 = vrcp.pop %v6864
      %v6873 = vmul.f32 %v6864, %v6872
      %v6874 = vsub.f32 1.0, %v6873
      %v6875 = vmul.f32 %v6872, %v6874
      %v6876 = vadd.f32 %v6872, %v6875
      %vm6877 = vweird.f32 %v6864
      %vm6878 = vweird.f32 %v6872
      %vm6879 = vmor %vm6877, %vm6878
      %v6880 = vsel %vm6879, %v6872, %v6876
      %v6881 = vand.u32 2147483647, %v6864
      %vm6882 = vcmp.eq.f32.partialorder %v6881, 8.507059e+37
      %v6883 = vand.u32 %v6864, 2147483648
      %v6884 = vor.u32 1.1754944e-38, %v6883
      %v6885 = vsel %vm6882, %v6884, %v6880
      %v6886 = vmul.f32 1.0, %v6885
      %v6887 = vrcp.pop %v6865
      %v6888 = vmul.f32 %v6865, %v6887
      %v6889 = vsub.f32 1.0, %v6888
      %v6890 = vmul.f32 %v6887, %v6889
      %v6891 = vadd.f32 %v6887, %v6890
      %vm6892 = vweird.f32 %v6865
      %vm6893 = vweird.f32 %v6887
      %vm6894 = vmor %vm6892, %vm6893
      %v6895 = vsel %vm6894, %v6887, %v6891
      %v6896 = vand.u32 2147483647, %v6865
      %vm6897 = vcmp.eq.f32.partialorder %v6896, 8.507059e+37
      %v6898 = vand.u32 %v6865, 2147483648
      %v6899 = vor.u32 1.1754944e-38, %v6898
      %v6900 = vsel %vm6897, %v6899, %v6895
      %v6901 = vmul.f32 1.0, %v6900
      %v6902 = vrcp.pop %v6866
      %v6903 = vmul.f32 %v6866, %v6902
      %v6904 = vsub.f32 1.0, %v6903
      %v6905 = vmul.f32 %v6902, %v6904
      %v6906 = vadd.f32 %v6902, %v6905
      %vm6907 = vweird.f32 %v6866
      %vm6908 = vweird.f32 %v6902
      %vm6909 = vmor %vm6907, %vm6908
      %v6910 = vsel %vm6909, %v6902, %v6906
      %v6911 = vand.u32 2147483647, %v6866
      %vm6912 = vcmp.eq.f32.partialorder %v6911, 8.507059e+37
      %v6913 = vand.u32 %v6866, 2147483648
      %v6914 = vor.u32 1.1754944e-38, %v6913
      %v6915 = vsel %vm6912, %v6914, %v6910
      %v6916 = vmul.f32 1.0, %v6915
      %v6917 = vrcp.pop %v6867
      %v6918 = vmul.f32 %v6867, %v6917
      %v6919 = vsub.f32 1.0, %v6918
      %v6920 = vmul.f32 %v6917, %v6919
      %v6921 = vadd.f32 %v6917, %v6920
      %vm6922 = vweird.f32 %v6867
      %vm6923 = vweird.f32 %v6917
      %vm6924 = vmor %vm6922, %vm6923
      %v6925 = vsel %vm6924, %v6917, %v6921
      %v6926 = vand.u32 2147483647, %v6867
      %vm6927 = vcmp.eq.f32.partialorder %v6926, 8.507059e+37
      %v6928 = vand.u32 %v6867, 2147483648
      %v6929 = vor.u32 1.1754944e-38, %v6928
      %v6930 = vsel %vm6927, %v6929, %v6925
      %v6931 = vmul.f32 1.0, %v6930
      %v6932 = vrcp.pop %v6868
      %v6933 = vmul.f32 %v6868, %v6932
      %v6934 = vsub.f32 1.0, %v6933
      %v6935 = vmul.f32 %v6932, %v6934
      %v6936 = vadd.f32 %v6932, %v6935
      %vm6937 = vweird.f32 %v6868
      %vm6938 = vweird.f32 %v6932
      %vm6939 = vmor %vm6937, %vm6938
      %v6940 = vsel %vm6939, %v6932, %v6936
      %v6941 = vand.u32 2147483647, %v6868
      %vm6942 = vcmp.eq.f32.partialorder %v6941, 8.507059e+37
      %v6943 = vand.u32 %v6868, 2147483648
      %v6944 = vor.u32 1.1754944e-38, %v6943
      %v6945 = vsel %vm6942, %v6944, %v6940
      %v6946 = vmul.f32 1.0, %v6945
      %v6947 = vrcp.pop %v6869
      %v6948 = vmul.f32 %v6869, %v6947
      %v6949 = vsub.f32 1.0, %v6948
      %v6950 = vmul.f32 %v6947, %v6949
      %v6951 = vadd.f32 %v6947, %v6950
      %vm6952 = vweird.f32 %v6869
      %vm6953 = vweird.f32 %v6947
      %vm6954 = vmor %vm6952, %vm6953
      %v6955 = vsel %vm6954, %v6947, %v6951
      %v6956 = vand.u32 2147483647, %v6869
      %vm6957 = vcmp.eq.f32.partialorder %v6956, 8.507059e+37
      %v6958 = vand.u32 %v6869, 2147483648
      %v6959 = vor.u32 1.1754944e-38, %v6958
      %v6960 = vsel %vm6957, %v6959, %v6955
      %v6961 = vmul.f32 1.0, %v6960
      %v6962 = vrcp.pop %v6870
      %v6963 = vmul.f32 %v6870, %v6962
      %v6964 = vsub.f32 1.0, %v6963
      %v6965 = vmul.f32 %v6962, %v6964
      %v6966 = vadd.f32 %v6962, %v6965
      %vm6967 = vweird.f32 %v6870
      %vm6968 = vweird.f32 %v6962
      %vm6969 = vmor %vm6967, %vm6968
      %v6970 = vsel %vm6969, %v6962, %v6966
      %v6971 = vand.u32 2147483647, %v6870
      %vm6972 = vcmp.eq.f32.partialorder %v6971, 8.507059e+37
      %v6973 = vand.u32 %v6870, 2147483648
      %v6974 = vor.u32 1.1754944e-38, %v6973
      %v6975 = vsel %vm6972, %v6974, %v6970
      %v6976 = vmul.f32 1.0, %v6975
      %v6977 = vrcp.pop %v6871
      %v6978 = vmul.f32 %v6871, %v6977
      %v6979 = vsub.f32 1.0, %v6978
      %v6980 = vmul.f32 %v6977, %v6979
      %v6981 = vadd.f32 %v6977, %v6980
      %vm6982 = vweird.f32 %v6871
      %vm6983 = vweird.f32 %v6977
      %vm6984 = vmor %vm6982, %vm6983
      %v6985 = vsel %vm6984, %v6977, %v6981
      %v6986 = vand.u32 2147483647, %v6871
      %vm6987 = vcmp.eq.f32.partialorder %v6986, 8.507059e+37
      %v6988 = vand.u32 %v6871, 2147483648
      %v6989 = vor.u32 1.1754944e-38, %v6988
      %v6990 = vsel %vm6987, %v6989, %v6985
      %v6991 = vmul.f32 1.0, %v6990
      %v6992 = vmul.f32 %v6832, %v6886
      %v6993 = vmul.f32 %v6833, %v6901
      %v6994 = vmul.f32 %v6834, %v6916
      %v6995 = vmul.f32 %v6835, %v6931
      %v6996 = vmul.f32 %v6836, %v6946
      %v6997 = vmul.f32 %v6837, %v6961
      %v6998 = vmul.f32 %v6838, %v6976
      %v6999 = vmul.f32 %v6839, %v6991
      %v7000 = vadd.f32 %v6992, %v387
      %v7001 = vadd.f32 %v6993, %v388
      %v7002 = vadd.f32 %v6994, %v389
      %v7003 = vadd.f32 %v6995, %v390
      %v7004 = vadd.f32 %v6996, %v391
      %v7005 = vadd.f32 %v6997, %v392
      %v7006 = vadd.f32 %v6998, %v393
      %v7007 = vadd.f32 %v6999, %v394
      %7008 = vst [vmem:[%s386] sm:$0xff] %v7000
      %7009 = vst [vmem:[%s386 + $0x8] sm:$0xff] %v7001
      %7010 = vst [vmem:[%s386 + $0x10] sm:$0xff] %v7002
      %7011 = vst [vmem:[%s386 + $0x18] sm:$0xff] %v7003
      %7012 = vst [vmem:[%s386 + $0x20] sm:$0xff] %v7004
      %7013 = vst [vmem:[%s386 + $0x28] sm:$0xff] %v7005
      %7014 = vst [vmem:[%s386 + $0x30] sm:$0xff] %v7006
      %7015 = vst [vmem:[%s386 + $0x38] sm:$0xff] %v7007
      %p7016 = scmp.lt.s32.totalorder %s22, 1
      %s7017 = scalar_select %p7016, %s22, 1
      %s7018 = smul.addr %s7017, 8
      %s7019 = smul.addr %s7018, 8
      %s7020 = scalar_lea.vmem %s11, %s7019
      // Predicated region
      $region65: #{resblock_pallas.1} parent=63 // pred_check
        %p7021 = pneg %p276
      $region66: #{resblock_pallas.1} parent=63 // pred_check_branch
        %7023 = sbr.rel (%p7021) target = $region68
      $region67: #{resblock_pallas.1} parent=63 // pred_region
        _
      $region68: #{resblock_pallas.1} parent=63 // pred_fallthru
        _
    $region64: #{resblock_pallas.1} parent=5 // pred_fallthru
      _
    %p7024 = scmp.le.s32.totalorder 2, %s17
    // Predicated region
    $region69: #{resblock_pallas.1} parent=5 // pred_check
      %p7025 = pneg %p7024
    $region70: #{resblock_pallas.1} parent=5 // pred_check_branch
      %7027 = sbr.rel (%p7025) target = $region72
    $region71: #{resblock_pallas.1} parent=5 // pred_region
      %s7028 = ssub.s32 %s17, 2
      // Predicated region
      $region73: #{resblock_pallas.1} parent=71 // pred_check
        %p7029 = pneg %p282
      $region74: #{resblock_pallas.1} parent=71 // pred_check_branch
        %7031 = sbr.rel (%p7029) target = $region76
      $region75: #{resblock_pallas.1} parent=71 // pred_region
        %p7032 = scmp.lt.s32.totalorder %s23, 1
        %s7033 = scalar_select %p7032, %s23, 1
        %s7034 = smul.addr %s7033, 8
        %s7035 = smul.addr %s7034, 8
        %s7036 = scalar_lea.vmem %s11, %s7035
      $region76: #{resblock_pallas.1} parent=71 // pred_fallthru
        _
    $region72: #{resblock_pallas.1} parent=5 // pred_fallthru
      _
  $region6: #{resblock_pallas.1} parent=0 // loop_footer
    %s21 = sadd.s32 1, %s17
  $region7: #{resblock_pallas.1} parent=0 // loop_footer_branch
    %16 = sbr.rel target = $region3
  $region8: #{resblock_pallas.1} parent=0 // loop_exit
    _

</llo_original>
